<compile_context>
chip_gen: v5e
topology: v5e:2x2
jax: 0.10.0
libtpu: 0.0.40
codegen_flags: <defaults>
</compile_context>

<pallas_src>
import math

import jax
import jax.numpy as jnp
from jax.experimental import pallas as pl
from jax.experimental.pallas import tpu as pltpu

LN_EPS = 1e-5
INV_SQRT2 = 1.0 / math.sqrt(2.0)
PADW = 8  # sublane-aligned left/right halo pad on the W axis of the scratch


# ---------------- fused CBlock kernel ----------------

def _make_cblock_kernel(H, W, C, K, compute_dtype):
    HW = H * W
    base = PADW - K // 2  # column offset of tap (dy, dx=0) inside the scratch

    def kernel(x_ref, g1_ref, bt1_ref, w1_ref, b1_ref, wk_ref, ba_ref,
               w2_ref, b2_ref, g2_ref, bt2_ref, wf1_ref, bf1_ref,
               wf2_ref, bf2_ref, o_ref, pad_ref, flat_ref):
        x = x_ref[0]                                     # (HW, C) tokens, f32

        # ---- branch 1: LayerNorm1 -> conv1 (1x1) ----
        mu = jnp.mean(x, axis=-1, keepdims=True)
        var = jnp.mean((x - mu) ** 2, axis=-1, keepdims=True)
        xn = (x - mu) * jax.lax.rsqrt(var + LN_EPS) * g1_ref[...] + bt1_ref[...]
        y1 = (jnp.dot(xn.astype(compute_dtype), w1_ref[...].astype(compute_dtype),
                      preferred_element_type=jnp.float32) + b1_ref[...])

        # ---- depthwise KxK (SAME, zero pad) on a VMEM halo scratch ----
        pad_ref[...] = jnp.zeros_like(pad_ref)
        for h in range(H):   # scatter token rows into the spatial interior
            pad_ref[K // 2 + h, PADW:PADW + W, :] = y1[h * W:(h + 1) * W, :]

        xp = pad_ref[...]                                # (H+K-1, W+2*PADW, C)
        wk = wk_ref[...]                                 # (K, K, C)
        acc = jnp.zeros((H, W, C), jnp.float32)
        for dy in range(K):
            for dx in range(K):
                acc = acc + xp[dy:dy + H, base + dx:base + dx + W, :] * wk[dy, dx]

        for h in range(H):   # gather spatial rows back to token-major layout
            flat_ref[h * W:(h + 1) * W, :] = acc[h]
        y2 = flat_ref[...] + ba_ref[...]                 # (HW, C)

        # ---- conv2 (1x1) + residual ----
        x1 = x + (jnp.dot(y2.astype(compute_dtype), w2_ref[...].astype(compute_dtype),
                          preferred_element_type=jnp.float32) + b2_ref[...])

        # ---- branch 2: LayerNorm2 -> fc1 -> exact GELU -> fc2 + residual ----
        mu2 = jnp.mean(x1, axis=-1, keepdims=True)
        var2 = jnp.mean((x1 - mu2) ** 2, axis=-1, keepdims=True)
        xn2 = (x1 - mu2) * jax.lax.rsqrt(var2 + LN_EPS) * g2_ref[...] + bt2_ref[...]
        hdn = (jnp.dot(xn2.astype(compute_dtype), wf1_ref[...].astype(compute_dtype),
                       preferred_element_type=jnp.float32) + bf1_ref[...])
        hdn = 0.5 * hdn * (1.0 + jax.lax.erf(hdn * INV_SQRT2))  # nn.GELU (exact)
        o_ref[0] = x1 + (jnp.dot(hdn.astype(compute_dtype),
                                 wf2_ref[...].astype(compute_dtype),
                                 preferred_element_type=jnp.float32) + bf2_ref[...])

    return kernel


# ---------------- wrapper ----------------

def cblock_forward(x_nchw, p, compute_dtype=jnp.float32):
    """CBlock forward (mask=None path). x_nchw: (B, C, H, W) float32."""
    B, C, H, W = x_nchw.shape
    K = 5
    Ch = p["w_fc1_t"].shape[1]
    HW = H * W

    # Token-major layout (channels on the lane axis); reshape is layout-free.
    x_tok = jnp.transpose(x_nchw, (0, 2, 3, 1)).reshape(B, HW, C)

    kernel = _make_cblock_kernel(H, W, C, K, compute_dtype)

    def cvec(n):
        return pl.BlockSpec((1, n), lambda b: (0, 0))

    def full2(r, c):
        return pl.BlockSpec((r, c), lambda b: (0, 0))

    out_tok = pl.pallas_call(
        kernel,
        out_shape=jax.ShapeDtypeStruct((B, HW, C), jnp.float32),
        grid=(B,),
        in_specs=[
            pl.BlockSpec((1, HW, C), lambda b: (b, 0, 0)),   # x tokens
            cvec(C), cvec(C),                                # norm1 gamma/beta
            full2(C, C), cvec(C),                            # conv1 w^T, b
            pl.BlockSpec((K, K, C), lambda b: (0, 0, 0)),    # depthwise (K,K,C)
            cvec(C),                                         # depthwise bias
            full2(C, C), cvec(C),                            # conv2 w^T, b
            cvec(C), cvec(C),                                # norm2 gamma/beta
            full2(C, Ch), cvec(Ch),                          # fc1 w^T, b
            full2(Ch, C), cvec(C),                           # fc2 w^T, b
        ],
        out_specs=pl.BlockSpec((1, HW, C), lambda b: (b, 0, 0)),
        scratch_shapes=[
            pltpu.VMEM((H + K - 1, W + 2 * PADW, C), jnp.float32),  # halo buffer
            pltpu.VMEM((HW, C), jnp.float32),                       # flat dw output
        ],
        input_output_aliases={0: 0},
        compiler_params=pltpu.CompilerParams(dimension_semantics=("parallel",)),
    )(x_tok, p["g1"], p["bt1"], p["w_conv1_t"], p["b_conv1"],
      p["w_attn_kkc"], p["b_attn"], p["w_conv2_t"], p["b_conv2"],
      p["g2"], p["bt2"], p["w_fc1_t"], p["b_fc1"], p["w_fc2_t"], p["b_fc2"])

    return jnp.transpose(out_tok.reshape(B, H, W, C), (0, 3, 1, 2))  # back to NCHW


# ---------------- pure-JAX reference (for verification) ----------------

def _reference(x, raw):
    B, C, H, W = x.shape

    def ln(t, g, b):
        m = t.mean(-1, keepdims=True)
        v = ((t - m) ** 2).mean(-1, keepdims=True)
        return (t - m) / jnp.sqrt(v + LN_EPS) * g + b

    t = ln(x.transpose(0, 2, 3, 1), raw["g1"], raw["bt1"]).transpose(0, 3, 1, 2)
    t = jnp.einsum("bchw,oc->bohw", t, raw["w_conv1"]) + raw["b_conv1"][None, :, None, None]
    t = jax.lax.conv_general_dilated(
        t, raw["w_attn"], (1, 1), "SAME", feature_group_count=C,
        dimension_numbers=("NCHW", "OIHW", "NCHW")) + raw["b_attn"][None, :, None, None]
    t = jnp.einsum("bchw,oc->bohw", t, raw["w_conv2"]) + raw["b_conv2"][None, :, None, None]
    x = x + t

    t = ln(x.transpose(0, 2, 3, 1), raw["g2"], raw["bt2"]).transpose(0, 3, 1, 2)
    t = jnp.einsum("bchw,oc->bohw", t, raw["w_fc1"]) + raw["b_fc1"][None, :, None, None]
    t = jax.nn.gelu(t, approximate=False)
    t = jnp.einsum("bchw,oc->bohw", t, raw["w_fc2"]) + raw["b_fc2"][None, :, None, None]
    return x + t


# ---------------- parameter construction ----------------

def _make_params(key, dim, mlp_ratio=4.0):
    hidden = int(dim * mlp_ratio)
    ks = jax.random.split(key, 16)
    s = 0.1
    raw = {
        "g1": 1.0 + s * jax.random.normal(ks[0], (dim,), jnp.float32),
        "bt1": s * jax.random.normal(ks[1], (dim,), jnp.float32),
        "w_conv1": s * jax.random.normal(ks[2], (dim, dim), jnp.float32),     # (Cout, Cin)
        "b_conv1": s * jax.random.normal(ks[3], (dim,), jnp.float32),
        "w_attn": s * jax.random.normal(ks[4], (dim, 1, 5, 5), jnp.float32),  # depthwise OIHW
        "b_attn": s * jax.random.normal(ks[5], (dim,), jnp.float32),
        "w_conv2": s * jax.random.normal(ks[6], (dim, dim), jnp.float32),
        "b_conv2": s * jax.random.normal(ks[7], (dim,), jnp.float32),
        "g2": 1.0 + s * jax.random.normal(ks[8], (dim,), jnp.float32),
        "bt2": s * jax.random.normal(ks[9], (dim,), jnp.float32),
        "w_fc1": s * jax.random.normal(ks[10], (hidden, dim), jnp.float32),
        "b_fc1": s * jax.random.normal(ks[11], (hidden,), jnp.float32),
        "w_fc2": s * jax.random.normal(ks[12], (dim, hidden), jnp.float32),
        "b_fc2": s * jax.random.normal(ks[13], (dim,), jnp.float32),
    }
    # Kernel-friendly layout: 1x1-conv weights pre-transposed to (Cin, Cout);
    # 1-D vectors as (1, C); depthwise weight as (K, K, C).
    kp = {
        "g1": raw["g1"][None, :], "bt1": raw["bt1"][None, :],
        "w_conv1_t": raw["w_conv1"].T, "b_conv1": raw["b_conv1"][None, :],
        "w_attn_kkc": jnp.transpose(raw["w_attn"][:, 0], (1, 2, 0)),
        "b_attn": raw["b_attn"][None, :],
        "w_conv2_t": raw["w_conv2"].T, "b_conv2": raw["b_conv2"][None, :],
        "g2": raw["g2"][None, :], "bt2": raw["bt2"][None, :],
        "w_fc1_t": raw["w_fc1"].T, "b_fc1": raw["b_fc1"][None, :],
        "w_fc2_t": raw["w_fc2"].T, "b_fc2": raw["b_fc2"][None, :],
    }
    return raw, kp


if __name__ == "__main__":
    B, C, H, W = 2, 32, 16, 16   # dim=32 -> mlp hidden = 128
    key = jax.random.PRNGKey(0)
    kx, kp = jax.random.split(key)
    x = jax.random.normal(kx, (B, C, H, W), jnp.float32)
    raw, params = _make_params(kp, C)

    fwd = jax.jit(cblock_forward)
    out = jax.block_until_ready(fwd(x, params))
    ref = jax.block_until_ready(_reference(x, raw))

    assert out.shape == (B, C, H, W)
    max_err = float(jnp.max(jnp.abs(out - ref)))
    assert jnp.allclose(out, ref, atol=2e-4, rtol=2e-4), max_err
    print("KERNEL_OK")
</pallas_src>

<mosaic_0001>
module attributes {stable_mosaic.version = 11 : i64} {
  func.func @kernel(%arg0: i32, %arg1: memref<1x256x32xf32, #tpu.memory_space<vmem>>, %arg2: memref<1x32xf32, #tpu.memory_space<vmem>>, %arg3: memref<1x32xf32, #tpu.memory_space<vmem>>, %arg4: memref<32x32xf32, #tpu.memory_space<vmem>>, %arg5: memref<1x32xf32, #tpu.memory_space<vmem>>, %arg6: memref<5x5x32xf32, #tpu.memory_space<vmem>>, %arg7: memref<1x32xf32, #tpu.memory_space<vmem>>, %arg8: memref<32x32xf32, #tpu.memory_space<vmem>>, %arg9: memref<1x32xf32, #tpu.memory_space<vmem>>, %arg10: memref<1x32xf32, #tpu.memory_space<vmem>>, %arg11: memref<1x32xf32, #tpu.memory_space<vmem>>, %arg12: memref<32x128xf32, #tpu.memory_space<vmem>>, %arg13: memref<1x128xf32, #tpu.memory_space<vmem>>, %arg14: memref<128x32xf32, #tpu.memory_space<vmem>>, %arg15: memref<1x32xf32, #tpu.memory_space<vmem>>, %arg16: memref<1x256x32xf32, #tpu.memory_space<vmem>>, %arg17: memref<20x32x32xf32, #tpu.memory_space<vmem>>, %arg18: memref<256x32xf32, #tpu.memory_space<vmem>>) attributes {dimension_semantics = [#tpu.dimension_semantics<parallel>], iteration_bounds = array<i64: 2>, scalar_prefetch = 0 : i64, scratch_operands = 2 : i64, tpu.core_type = #tpu.core_type<tc>, window_params = [{transform_indices = @transform_0, window_bounds = array<i64: 1, 256, 32>}, {pipeline_mode = #tpu.pipeline_mode<synchronous>, transform_indices = @transform_1, window_bounds = array<i64: 1, 32>}, {pipeline_mode = #tpu.pipeline_mode<synchronous>, transform_indices = @transform_2, window_bounds = array<i64: 1, 32>}, {pipeline_mode = #tpu.pipeline_mode<synchronous>, transform_indices = @transform_3, window_bounds = array<i64: 32, 32>}, {pipeline_mode = #tpu.pipeline_mode<synchronous>, transform_indices = @transform_4, window_bounds = array<i64: 1, 32>}, {pipeline_mode = #tpu.pipeline_mode<synchronous>, transform_indices = @transform_5, window_bounds = array<i64: 5, 5, 32>}, {pipeline_mode = #tpu.pipeline_mode<synchronous>, transform_indices = @transform_6, window_bounds = array<i64: 1, 32>}, {pipeline_mode = #tpu.pipeline_mode<synchronous>, transform_indices = @transform_7, window_bounds = array<i64: 32, 32>}, {pipeline_mode = #tpu.pipeline_mode<synchronous>, transform_indices = @transform_8, window_bounds = array<i64: 1, 32>}, {pipeline_mode = #tpu.pipeline_mode<synchronous>, transform_indices = @transform_9, window_bounds = array<i64: 1, 32>}, {pipeline_mode = #tpu.pipeline_mode<synchronous>, transform_indices = @transform_10, window_bounds = array<i64: 1, 32>}, {pipeline_mode = #tpu.pipeline_mode<synchronous>, transform_indices = @transform_11, window_bounds = array<i64: 32, 128>}, {pipeline_mode = #tpu.pipeline_mode<synchronous>, transform_indices = @transform_12, window_bounds = array<i64: 1, 128>}, {pipeline_mode = #tpu.pipeline_mode<synchronous>, transform_indices = @transform_13, window_bounds = array<i64: 128, 32>}, {pipeline_mode = #tpu.pipeline_mode<synchronous>, transform_indices = @transform_14, window_bounds = array<i64: 1, 32>}, {transform_indices = @transform_15, window_bounds = array<i64: 1, 256, 32>}]} {
    %c0 = arith.constant 0 : index
    %c0_0 = arith.constant 0 : index
    %c0_1 = arith.constant 0 : index
    %0 = vector.load %arg1[%c0, %c0_0, %c0_1] : memref<1x256x32xf32, #tpu.memory_space<vmem>>, vector<1x256x32xf32>
    %1 = vector.shape_cast %0 : vector<1x256x32xf32> to vector<256x32xf32>
    %cst = arith.constant dense<0.000000e+00> : vector<256xf32>
    %2 = vector.multi_reduction <add>, %1, %cst [1] : vector<256x32xf32> to vector<256xf32>
    %3 = vector.shape_cast %2 : vector<256xf32> to vector<256x1xf32>
    %cst_2 = arith.constant 3.200000e+01 : f32
    %4 = vector.broadcast %cst_2 : f32 to vector<256x1xf32>
    %5 = arith.divf %3, %4 : vector<256x1xf32>
    %6 = vector.broadcast %5 : vector<256x1xf32> to vector<256x32xf32>
    %7 = arith.subf %1, %6 : vector<256x32xf32>
    %8 = arith.mulf %7, %7 : vector<256x32xf32>
    %cst_3 = arith.constant dense<0.000000e+00> : vector<256xf32>
    %9 = vector.multi_reduction <add>, %8, %cst_3 [1] : vector<256x32xf32> to vector<256xf32>
    %10 = vector.shape_cast %9 : vector<256xf32> to vector<256x1xf32>
    %cst_4 = arith.constant 3.200000e+01 : f32
    %11 = vector.broadcast %cst_4 : f32 to vector<256x1xf32>
    %12 = arith.divf %10, %11 : vector<256x1xf32>
    %13 = vector.broadcast %5 : vector<256x1xf32> to vector<256x32xf32>
    %14 = arith.subf %1, %13 : vector<256x32xf32>
    %cst_5 = arith.constant 9.99999974E-6 : f32
    %15 = vector.broadcast %cst_5 : f32 to vector<256x1xf32>
    %16 = arith.addf %12, %15 : vector<256x1xf32>
    %17 = math.rsqrt %16 : vector<256x1xf32>
    %18 = vector.broadcast %17 : vector<256x1xf32> to vector<256x32xf32>
    %19 = arith.mulf %14, %18 : vector<256x32xf32>
    %c0_6 = arith.constant 0 : index
    %c0_7 = arith.constant 0 : index
    %20 = vector.load %arg2[%c0_6, %c0_7] : memref<1x32xf32, #tpu.memory_space<vmem>>, vector<1x32xf32>
    %21 = vector.broadcast %20 : vector<1x32xf32> to vector<256x32xf32>
    %22 = arith.mulf %19, %21 : vector<256x32xf32>
    %c0_8 = arith.constant 0 : index
    %c0_9 = arith.constant 0 : index
    %23 = vector.load %arg3[%c0_8, %c0_9] : memref<1x32xf32, #tpu.memory_space<vmem>>, vector<1x32xf32>
    %24 = vector.broadcast %23 : vector<1x32xf32> to vector<256x32xf32>
    %25 = arith.addf %22, %24 : vector<256x32xf32>
    %c0_10 = arith.constant 0 : index
    %c0_11 = arith.constant 0 : index
    %26 = vector.load %arg4[%c0_10, %c0_11] : memref<32x32xf32, #tpu.memory_space<vmem>>, vector<32x32xf32>
    %cst_12 = arith.constant dense<0.000000e+00> : vector<256x32xf32>
    %27 = tpu.matmul %25, %26, %cst_12 {dimension_numbers = #tpu.dot_dimension_numbers<[1], [0], [0], [1], [0, 0, 1, 1], [], []>} : vector<256x32xf32>, vector<32x32xf32>, vector<256x32xf32> -> vector<256x32xf32>
    %c0_13 = arith.constant 0 : index
    %c0_14 = arith.constant 0 : index
    %28 = vector.load %arg5[%c0_13, %c0_14] : memref<1x32xf32, #tpu.memory_space<vmem>>, vector<1x32xf32>
    %29 = vector.broadcast %28 : vector<1x32xf32> to vector<256x32xf32>
    %30 = arith.addf %27, %29 : vector<256x32xf32>
    %cst_15 = arith.constant 0.000000e+00 : f32
    %31 = vector.broadcast %cst_15 : f32 to vector<20x32x32xf32>
    %c0_16 = arith.constant 0 : index
    %c0_17 = arith.constant 0 : index
    %c0_18 = arith.constant 0 : index
    %32 = vector.load %arg17[%c0_16, %c0_17, %c0_18] : memref<20x32x32xf32, #tpu.memory_space<vmem>>, vector<20x32x32xf32>
    tpu.vector_store %arg17[%c0_16, %c0_17, %c0_18], %31 {strides = array<i32>} : memref<20x32x32xf32, #tpu.memory_space<vmem>>, vector<20x32x32xf32>,
    %33 = vector.extract_strided_slice %30 {offsets = [0, 0], sizes = [16, 32], strides = [1, 1]} : vector<256x32xf32> to vector<16x32xf32>
    %c2 = arith.constant 2 : index
    %c8 = arith.constant 8 : index
    %c0_19 = arith.constant 0 : index
    %34 = vector.load %arg17[%c2, %c8, %c0_19] : memref<20x32x32xf32, #tpu.memory_space<vmem>>, vector<1x16x32xf32>
    %35 = vector.shape_cast %34 : vector<1x16x32xf32> to vector<16x32xf32>
    %36 = vector.shape_cast %33 : vector<16x32xf32> to vector<1x16x32xf32>
    tpu.vector_store %arg17[%c2, %c8, %c0_19], %36 {strides = array<i32>} : memref<20x32x32xf32, #tpu.memory_space<vmem>>, vector<1x16x32xf32>,
    %37 = vector.extract_strided_slice %30 {offsets = [16, 0], sizes = [16, 32], strides = [1, 1]} : vector<256x32xf32> to vector<16x32xf32>
    %c3 = arith.constant 3 : index
    %c8_20 = arith.constant 8 : index
    %c0_21 = arith.constant 0 : index
    %38 = vector.load %arg17[%c3, %c8_20, %c0_21] : memref<20x32x32xf32, #tpu.memory_space<vmem>>, vector<1x16x32xf32>
    %39 = vector.shape_cast %38 : vector<1x16x32xf32> to vector<16x32xf32>
    %40 = vector.shape_cast %37 : vector<16x32xf32> to vector<1x16x32xf32>
    tpu.vector_store %arg17[%c3, %c8_20, %c0_21], %40 {strides = array<i32>} : memref<20x32x32xf32, #tpu.memory_space<vmem>>, vector<1x16x32xf32>,
    %41 = vector.extract_strided_slice %30 {offsets = [32, 0], sizes = [16, 32], strides = [1, 1]} : vector<256x32xf32> to vector<16x32xf32>
    %c4 = arith.constant 4 : index
    %c8_22 = arith.constant 8 : index
    %c0_23 = arith.constant 0 : index
    %42 = vector.load %arg17[%c4, %c8_22, %c0_23] : memref<20x32x32xf32, #tpu.memory_space<vmem>>, vector<1x16x32xf32>
    %43 = vector.shape_cast %42 : vector<1x16x32xf32> to vector<16x32xf32>
    %44 = vector.shape_cast %41 : vector<16x32xf32> to vector<1x16x32xf32>
    tpu.vector_store %arg17[%c4, %c8_22, %c0_23], %44 {strides = array<i32>} : memref<20x32x32xf32, #tpu.memory_space<vmem>>, vector<1x16x32xf32>,
    %45 = vector.extract_strided_slice %30 {offsets = [48, 0], sizes = [16, 32], strides = [1, 1]} : vector<256x32xf32> to vector<16x32xf32>
    %c5 = arith.constant 5 : index
    %c8_24 = arith.constant 8 : index
    %c0_25 = arith.constant 0 : index
    %46 = vector.load %arg17[%c5, %c8_24, %c0_25] : memref<20x32x32xf32, #tpu.memory_space<vmem>>, vector<1x16x32xf32>
    %47 = vector.shape_cast %46 : vector<1x16x32xf32> to vector<16x32xf32>
    %48 = vector.shape_cast %45 : vector<16x32xf32> to vector<1x16x32xf32>
    tpu.vector_store %arg17[%c5, %c8_24, %c0_25], %48 {strides = array<i32>} : memref<20x32x32xf32, #tpu.memory_space<vmem>>, vector<1x16x32xf32>,
    %49 = vector.extract_strided_slice %30 {offsets = [64, 0], sizes = [16, 32], strides = [1, 1]} : vector<256x32xf32> to vector<16x32xf32>
    %c6 = arith.constant 6 : index
    %c8_26 = arith.constant 8 : index
    %c0_27 = arith.constant 0 : index
    %50 = vector.load %arg17[%c6, %c8_26, %c0_27] : memref<20x32x32xf32, #tpu.memory_space<vmem>>, vector<1x16x32xf32>
    %51 = vector.shape_cast %50 : vector<1x16x32xf32> to vector<16x32xf32>
    %52 = vector.shape_cast %49 : vector<16x32xf32> to vector<1x16x32xf32>
    tpu.vector_store %arg17[%c6, %c8_26, %c0_27], %52 {strides = array<i32>} : memref<20x32x32xf32, #tpu.memory_space<vmem>>, vector<1x16x32xf32>,
    %53 = vector.extract_strided_slice %30 {offsets = [80, 0], sizes = [16, 32], strides = [1, 1]} : vector<256x32xf32> to vector<16x32xf32>
    %c7 = arith.constant 7 : index
    %c8_28 = arith.constant 8 : index
    %c0_29 = arith.constant 0 : index
    %54 = vector.load %arg17[%c7, %c8_28, %c0_29] : memref<20x32x32xf32, #tpu.memory_space<vmem>>, vector<1x16x32xf32>
    %55 = vector.shape_cast %54 : vector<1x16x32xf32> to vector<16x32xf32>
    %56 = vector.shape_cast %53 : vector<16x32xf32> to vector<1x16x32xf32>
    tpu.vector_store %arg17[%c7, %c8_28, %c0_29], %56 {strides = array<i32>} : memref<20x32x32xf32, #tpu.memory_space<vmem>>, vector<1x16x32xf32>,
    %57 = vector.extract_strided_slice %30 {offsets = [96, 0], sizes = [16, 32], strides = [1, 1]} : vector<256x32xf32> to vector<16x32xf32>
    %c8_30 = arith.constant 8 : index
    %c8_31 = arith.constant 8 : index
    %c0_32 = arith.constant 0 : index
    %58 = vector.load %arg17[%c8_30, %c8_31, %c0_32] : memref<20x32x32xf32, #tpu.memory_space<vmem>>, vector<1x16x32xf32>
    %59 = vector.shape_cast %58 : vector<1x16x32xf32> to vector<16x32xf32>
    %60 = vector.shape_cast %57 : vector<16x32xf32> to vector<1x16x32xf32>
    tpu.vector_store %arg17[%c8_30, %c8_31, %c0_32], %60 {strides = array<i32>} : memref<20x32x32xf32, #tpu.memory_space<vmem>>, vector<1x16x32xf32>,
    %61 = vector.extract_strided_slice %30 {offsets = [112, 0], sizes = [16, 32], strides = [1, 1]} : vector<256x32xf32> to vector<16x32xf32>
    %c9 = arith.constant 9 : index
    %c8_33 = arith.constant 8 : index
    %c0_34 = arith.constant 0 : index
    %62 = vector.load %arg17[%c9, %c8_33, %c0_34] : memref<20x32x32xf32, #tpu.memory_space<vmem>>, vector<1x16x32xf32>
    %63 = vector.shape_cast %62 : vector<1x16x32xf32> to vector<16x32xf32>
    %64 = vector.shape_cast %61 : vector<16x32xf32> to vector<1x16x32xf32>
    tpu.vector_store %arg17[%c9, %c8_33, %c0_34], %64 {strides = array<i32>} : memref<20x32x32xf32, #tpu.memory_space<vmem>>, vector<1x16x32xf32>,
    %65 = vector.extract_strided_slice %30 {offsets = [128, 0], sizes = [16, 32], strides = [1, 1]} : vector<256x32xf32> to vector<16x32xf32>
    %c10 = arith.constant 10 : index
    %c8_35 = arith.constant 8 : index
    %c0_36 = arith.constant 0 : index
    %66 = vector.load %arg17[%c10, %c8_35, %c0_36] : memref<20x32x32xf32, #tpu.memory_space<vmem>>, vector<1x16x32xf32>
    %67 = vector.shape_cast %66 : vector<1x16x32xf32> to vector<16x32xf32>
    %68 = vector.shape_cast %65 : vector<16x32xf32> to vector<1x16x32xf32>
    tpu.vector_store %arg17[%c10, %c8_35, %c0_36], %68 {strides = array<i32>} : memref<20x32x32xf32, #tpu.memory_space<vmem>>, vector<1x16x32xf32>,
    %69 = vector.extract_strided_slice %30 {offsets = [144, 0], sizes = [16, 32], strides = [1, 1]} : vector<256x32xf32> to vector<16x32xf32>
    %c11 = arith.constant 11 : index
    %c8_37 = arith.constant 8 : index
    %c0_38 = arith.constant 0 : index
    %70 = vector.load %arg17[%c11, %c8_37, %c0_38] : memref<20x32x32xf32, #tpu.memory_space<vmem>>, vector<1x16x32xf32>
    %71 = vector.shape_cast %70 : vector<1x16x32xf32> to vector<16x32xf32>
    %72 = vector.shape_cast %69 : vector<16x32xf32> to vector<1x16x32xf32>
    tpu.vector_store %arg17[%c11, %c8_37, %c0_38], %72 {strides = array<i32>} : memref<20x32x32xf32, #tpu.memory_space<vmem>>, vector<1x16x32xf32>,
    %73 = vector.extract_strided_slice %30 {offsets = [160, 0], sizes = [16, 32], strides = [1, 1]} : vector<256x32xf32> to vector<16x32xf32>
    %c12 = arith.constant 12 : index
    %c8_39 = arith.constant 8 : index
    %c0_40 = arith.constant 0 : index
    %74 = vector.load %arg17[%c12, %c8_39, %c0_40] : memref<20x32x32xf32, #tpu.memory_space<vmem>>, vector<1x16x32xf32>
    %75 = vector.shape_cast %74 : vector<1x16x32xf32> to vector<16x32xf32>
    %76 = vector.shape_cast %73 : vector<16x32xf32> to vector<1x16x32xf32>
    tpu.vector_store %arg17[%c12, %c8_39, %c0_40], %76 {strides = array<i32>} : memref<20x32x32xf32, #tpu.memory_space<vmem>>, vector<1x16x32xf32>,
    %77 = vector.extract_strided_slice %30 {offsets = [176, 0], sizes = [16, 32], strides = [1, 1]} : vector<256x32xf32> to vector<16x32xf32>
    %c13 = arith.constant 13 : index
    %c8_41 = arith.constant 8 : index
    %c0_42 = arith.constant 0 : index
    %78 = vector.load %arg17[%c13, %c8_41, %c0_42] : memref<20x32x32xf32, #tpu.memory_space<vmem>>, vector<1x16x32xf32>
    %79 = vector.shape_cast %78 : vector<1x16x32xf32> to vector<16x32xf32>
    %80 = vector.shape_cast %77 : vector<16x32xf32> to vector<1x16x32xf32>
    tpu.vector_store %arg17[%c13, %c8_41, %c0_42], %80 {strides = array<i32>} : memref<20x32x32xf32, #tpu.memory_space<vmem>>, vector<1x16x32xf32>,
    %81 = vector.extract_strided_slice %30 {offsets = [192, 0], sizes = [16, 32], strides = [1, 1]} : vector<256x32xf32> to vector<16x32xf32>
    %c14 = arith.constant 14 : index
    %c8_43 = arith.constant 8 : index
    %c0_44 = arith.constant 0 : index
    %82 = vector.load %arg17[%c14, %c8_43, %c0_44] : memref<20x32x32xf32, #tpu.memory_space<vmem>>, vector<1x16x32xf32>
    %83 = vector.shape_cast %82 : vector<1x16x32xf32> to vector<16x32xf32>
    %84 = vector.shape_cast %81 : vector<16x32xf32> to vector<1x16x32xf32>
    tpu.vector_store %arg17[%c14, %c8_43, %c0_44], %84 {strides = array<i32>} : memref<20x32x32xf32, #tpu.memory_space<vmem>>, vector<1x16x32xf32>,
    %85 = vector.extract_strided_slice %30 {offsets = [208, 0], sizes = [16, 32], strides = [1, 1]} : vector<256x32xf32> to vector<16x32xf32>
    %c15 = arith.constant 15 : index
    %c8_45 = arith.constant 8 : index
    %c0_46 = arith.constant 0 : index
    %86 = vector.load %arg17[%c15, %c8_45, %c0_46] : memref<20x32x32xf32, #tpu.memory_space<vmem>>, vector<1x16x32xf32>
    %87 = vector.shape_cast %86 : vector<1x16x32xf32> to vector<16x32xf32>
    %88 = vector.shape_cast %85 : vector<16x32xf32> to vector<1x16x32xf32>
    tpu.vector_store %arg17[%c15, %c8_45, %c0_46], %88 {strides = array<i32>} : memref<20x32x32xf32, #tpu.memory_space<vmem>>, vector<1x16x32xf32>,
    %89 = vector.extract_strided_slice %30 {offsets = [224, 0], sizes = [16, 32], strides = [1, 1]} : vector<256x32xf32> to vector<16x32xf32>
    %c16 = arith.constant 16 : index
    %c8_47 = arith.constant 8 : index
    %c0_48 = arith.constant 0 : index
    %90 = vector.load %arg17[%c16, %c8_47, %c0_48] : memref<20x32x32xf32, #tpu.memory_space<vmem>>, vector<1x16x32xf32>
    %91 = vector.shape_cast %90 : vector<1x16x32xf32> to vector<16x32xf32>
    %92 = vector.shape_cast %89 : vector<16x32xf32> to vector<1x16x32xf32>
    tpu.vector_store %arg17[%c16, %c8_47, %c0_48], %92 {strides = array<i32>} : memref<20x32x32xf32, #tpu.memory_space<vmem>>, vector<1x16x32xf32>,
    %93 = vector.extract_strided_slice %30 {offsets = [240, 0], sizes = [16, 32], strides = [1, 1]} : vector<256x32xf32> to vector<16x32xf32>
    %c17 = arith.constant 17 : index
    %c8_49 = arith.constant 8 : index
    %c0_50 = arith.constant 0 : index
    %94 = vector.load %arg17[%c17, %c8_49, %c0_50] : memref<20x32x32xf32, #tpu.memory_space<vmem>>, vector<1x16x32xf32>
    %95 = vector.shape_cast %94 : vector<1x16x32xf32> to vector<16x32xf32>
    %96 = vector.shape_cast %93 : vector<16x32xf32> to vector<1x16x32xf32>
    tpu.vector_store %arg17[%c17, %c8_49, %c0_50], %96 {strides = array<i32>} : memref<20x32x32xf32, #tpu.memory_space<vmem>>, vector<1x16x32xf32>,
    %c0_51 = arith.constant 0 : index
    %c0_52 = arith.constant 0 : index
    %c0_53 = arith.constant 0 : index
    %97 = vector.load %arg17[%c0_51, %c0_52, %c0_53] : memref<20x32x32xf32, #tpu.memory_space<vmem>>, vector<20x32x32xf32>
    %c0_54 = arith.constant 0 : index
    %c0_55 = arith.constant 0 : index
    %c0_56 = arith.constant 0 : index
    %98 = vector.load %arg6[%c0_54, %c0_55, %c0_56] : memref<5x5x32xf32, #tpu.memory_space<vmem>>, vector<5x5x32xf32>
    %cst_57 = arith.constant 0.000000e+00 : f32
    %99 = vector.broadcast %cst_57 : f32 to vector<16x16x32xf32>
    %100 = vector.extract_strided_slice %97 {offsets = [0, 6, 0], sizes = [16, 16, 32], strides = [1, 1, 1]} : vector<20x32x32xf32> to vector<16x16x32xf32>
    %101 = vector.extract_strided_slice %98 {offsets = [0, 0, 0], sizes = [1, 1, 32], strides = [1, 1, 1]} : vector<5x5x32xf32> to vector<1x1x32xf32>
    %102 = vector.shape_cast %101 : vector<1x1x32xf32> to vector<32xf32>
    %103 = vector.shape_cast %102 : vector<32xf32> to vector<1x1x32xf32>
    %104 = vector.broadcast %103 : vector<1x1x32xf32> to vector<16x16x32xf32>
    %105 = arith.mulf %100, %104 : vector<16x16x32xf32>
    %106 = arith.addf %99, %105 : vector<16x16x32xf32>
    %107 = vector.extract_strided_slice %97 {offsets = [0, 7, 0], sizes = [16, 16, 32], strides = [1, 1, 1]} : vector<20x32x32xf32> to vector<16x16x32xf32>
    %108 = vector.extract_strided_slice %98 {offsets = [0, 1, 0], sizes = [1, 1, 32], strides = [1, 1, 1]} : vector<5x5x32xf32> to vector<1x1x32xf32>
    %109 = vector.shape_cast %108 : vector<1x1x32xf32> to vector<32xf32>
    %110 = vector.shape_cast %109 : vector<32xf32> to vector<1x1x32xf32>
    %111 = vector.broadcast %110 : vector<1x1x32xf32> to vector<16x16x32xf32>
    %112 = arith.mulf %107, %111 : vector<16x16x32xf32>
    %113 = arith.addf %106, %112 : vector<16x16x32xf32>
    %114 = vector.extract_strided_slice %97 {offsets = [0, 8, 0], sizes = [16, 16, 32], strides = [1, 1, 1]} : vector<20x32x32xf32> to vector<16x16x32xf32>
    %115 = vector.extract_strided_slice %98 {offsets = [0, 2, 0], sizes = [1, 1, 32], strides = [1, 1, 1]} : vector<5x5x32xf32> to vector<1x1x32xf32>
    %116 = vector.shape_cast %115 : vector<1x1x32xf32> to vector<32xf32>
    %117 = vector.shape_cast %116 : vector<32xf32> to vector<1x1x32xf32>
    %118 = vector.broadcast %117 : vector<1x1x32xf32> to vector<16x16x32xf32>
    %119 = arith.mulf %114, %118 : vector<16x16x32xf32>
    %120 = arith.addf %113, %119 : vector<16x16x32xf32>
    %121 = vector.extract_strided_slice %97 {offsets = [0, 9, 0], sizes = [16, 16, 32], strides = [1, 1, 1]} : vector<20x32x32xf32> to vector<16x16x32xf32>
    %122 = vector.extract_strided_slice %98 {offsets = [0, 3, 0], sizes = [1, 1, 32], strides = [1, 1, 1]} : vector<5x5x32xf32> to vector<1x1x32xf32>
    %123 = vector.shape_cast %122 : vector<1x1x32xf32> to vector<32xf32>
    %124 = vector.shape_cast %123 : vector<32xf32> to vector<1x1x32xf32>
    %125 = vector.broadcast %124 : vector<1x1x32xf32> to vector<16x16x32xf32>
    %126 = arith.mulf %121, %125 : vector<16x16x32xf32>
    %127 = arith.addf %120, %126 : vector<16x16x32xf32>
    %128 = vector.extract_strided_slice %97 {offsets = [0, 10, 0], sizes = [16, 16, 32], strides = [1, 1, 1]} : vector<20x32x32xf32> to vector<16x16x32xf32>
    %129 = vector.extract_strided_slice %98 {offsets = [0, 4, 0], sizes = [1, 1, 32], strides = [1, 1, 1]} : vector<5x5x32xf32> to vector<1x1x32xf32>
    %130 = vector.shape_cast %129 : vector<1x1x32xf32> to vector<32xf32>
    %131 = vector.shape_cast %130 : vector<32xf32> to vector<1x1x32xf32>
    %132 = vector.broadcast %131 : vector<1x1x32xf32> to vector<16x16x32xf32>
    %133 = arith.mulf %128, %132 : vector<16x16x32xf32>
    %134 = arith.addf %127, %133 : vector<16x16x32xf32>
    %135 = vector.extract_strided_slice %97 {offsets = [1, 6, 0], sizes = [16, 16, 32], strides = [1, 1, 1]} : vector<20x32x32xf32> to vector<16x16x32xf32>
    %136 = vector.extract_strided_slice %98 {offsets = [1, 0, 0], sizes = [1, 1, 32], strides = [1, 1, 1]} : vector<5x5x32xf32> to vector<1x1x32xf32>
    %137 = vector.shape_cast %136 : vector<1x1x32xf32> to vector<32xf32>
    %138 = vector.shape_cast %137 : vector<32xf32> to vector<1x1x32xf32>
    %139 = vector.broadcast %138 : vector<1x1x32xf32> to vector<16x16x32xf32>
    %140 = arith.mulf %135, %139 : vector<16x16x32xf32>
    %141 = arith.addf %134, %140 : vector<16x16x32xf32>
    %142 = vector.extract_strided_slice %97 {offsets = [1, 7, 0], sizes = [16, 16, 32], strides = [1, 1, 1]} : vector<20x32x32xf32> to vector<16x16x32xf32>
    %143 = vector.extract_strided_slice %98 {offsets = [1, 1, 0], sizes = [1, 1, 32], strides = [1, 1, 1]} : vector<5x5x32xf32> to vector<1x1x32xf32>
    %144 = vector.shape_cast %143 : vector<1x1x32xf32> to vector<32xf32>
    %145 = vector.shape_cast %144 : vector<32xf32> to vector<1x1x32xf32>
    %146 = vector.broadcast %145 : vector<1x1x32xf32> to vector<16x16x32xf32>
    %147 = arith.mulf %142, %146 : vector<16x16x32xf32>
    %148 = arith.addf %141, %147 : vector<16x16x32xf32>
    %149 = vector.extract_strided_slice %97 {offsets = [1, 8, 0], sizes = [16, 16, 32], strides = [1, 1, 1]} : vector<20x32x32xf32> to vector<16x16x32xf32>
    %150 = vector.extract_strided_slice %98 {offsets = [1, 2, 0], sizes = [1, 1, 32], strides = [1, 1, 1]} : vector<5x5x32xf32> to vector<1x1x32xf32>
    %151 = vector.shape_cast %150 : vector<1x1x32xf32> to vector<32xf32>
    %152 = vector.shape_cast %151 : vector<32xf32> to vector<1x1x32xf32>
    %153 = vector.broadcast %152 : vector<1x1x32xf32> to vector<16x16x32xf32>
    %154 = arith.mulf %149, %153 : vector<16x16x32xf32>
    %155 = arith.addf %148, %154 : vector<16x16x32xf32>
    %156 = vector.extract_strided_slice %97 {offsets = [1, 9, 0], sizes = [16, 16, 32], strides = [1, 1, 1]} : vector<20x32x32xf32> to vector<16x16x32xf32>
    %157 = vector.extract_strided_slice %98 {offsets = [1, 3, 0], sizes = [1, 1, 32], strides = [1, 1, 1]} : vector<5x5x32xf32> to vector<1x1x32xf32>
    %158 = vector.shape_cast %157 : vector<1x1x32xf32> to vector<32xf32>
    %159 = vector.shape_cast %158 : vector<32xf32> to vector<1x1x32xf32>
    %160 = vector.broadcast %159 : vector<1x1x32xf32> to vector<16x16x32xf32>
    %161 = arith.mulf %156, %160 : vector<16x16x32xf32>
    %162 = arith.addf %155, %161 : vector<16x16x32xf32>
    %163 = vector.extract_strided_slice %97 {offsets = [1, 10, 0], sizes = [16, 16, 32], strides = [1, 1, 1]} : vector<20x32x32xf32> to vector<16x16x32xf32>
    %164 = vector.extract_strided_slice %98 {offsets = [1, 4, 0], sizes = [1, 1, 32], strides = [1, 1, 1]} : vector<5x5x32xf32> to vector<1x1x32xf32>
    %165 = vector.shape_cast %164 : vector<1x1x32xf32> to vector<32xf32>
    %166 = vector.shape_cast %165 : vector<32xf32> to vector<1x1x32xf32>
    %167 = vector.broadcast %166 : vector<1x1x32xf32> to vector<16x16x32xf32>
    %168 = arith.mulf %163, %167 : vector<16x16x32xf32>
    %169 = arith.addf %162, %168 : vector<16x16x32xf32>
    %170 = vector.extract_strided_slice %97 {offsets = [2, 6, 0], sizes = [16, 16, 32], strides = [1, 1, 1]} : vector<20x32x32xf32> to vector<16x16x32xf32>
    %171 = vector.extract_strided_slice %98 {offsets = [2, 0, 0], sizes = [1, 1, 32], strides = [1, 1, 1]} : vector<5x5x32xf32> to vector<1x1x32xf32>
    %172 = vector.shape_cast %171 : vector<1x1x32xf32> to vector<32xf32>
    %173 = vector.shape_cast %172 : vector<32xf32> to vector<1x1x32xf32>
    %174 = vector.broadcast %173 : vector<1x1x32xf32> to vector<16x16x32xf32>
    %175 = arith.mulf %170, %174 : vector<16x16x32xf32>
    %176 = arith.addf %169, %175 : vector<16x16x32xf32>
    %177 = vector.extract_strided_slice %97 {offsets = [2, 7, 0], sizes = [16, 16, 32], strides = [1, 1, 1]} : vector<20x32x32xf32> to vector<16x16x32xf32>
    %178 = vector.extract_strided_slice %98 {offsets = [2, 1, 0], sizes = [1, 1, 32], strides = [1, 1, 1]} : vector<5x5x32xf32> to vector<1x1x32xf32>
    %179 = vector.shape_cast %178 : vector<1x1x32xf32> to vector<32xf32>
    %180 = vector.shape_cast %179 : vector<32xf32> to vector<1x1x32xf32>
    %181 = vector.broadcast %180 : vector<1x1x32xf32> to vector<16x16x32xf32>
    %182 = arith.mulf %177, %181 : vector<16x16x32xf32>
    %183 = arith.addf %176, %182 : vector<16x16x32xf32>
    %184 = vector.extract_strided_slice %97 {offsets = [2, 8, 0], sizes = [16, 16, 32], strides = [1, 1, 1]} : vector<20x32x32xf32> to vector<16x16x32xf32>
    %185 = vector.extract_strided_slice %98 {offsets = [2, 2, 0], sizes = [1, 1, 32], strides = [1, 1, 1]} : vector<5x5x32xf32> to vector<1x1x32xf32>
    %186 = vector.shape_cast %185 : vector<1x1x32xf32> to vector<32xf32>
    %187 = vector.shape_cast %186 : vector<32xf32> to vector<1x1x32xf32>
    %188 = vector.broadcast %187 : vector<1x1x32xf32> to vector<16x16x32xf32>
    %189 = arith.mulf %184, %188 : vector<16x16x32xf32>
    %190 = arith.addf %183, %189 : vector<16x16x32xf32>
    %191 = vector.extract_strided_slice %97 {offsets = [2, 9, 0], sizes = [16, 16, 32], strides = [1, 1, 1]} : vector<20x32x32xf32> to vector<16x16x32xf32>
    %192 = vector.extract_strided_slice %98 {offsets = [2, 3, 0], sizes = [1, 1, 32], strides = [1, 1, 1]} : vector<5x5x32xf32> to vector<1x1x32xf32>
    %193 = vector.shape_cast %192 : vector<1x1x32xf32> to vector<32xf32>
    %194 = vector.shape_cast %193 : vector<32xf32> to vector<1x1x32xf32>
    %195 = vector.broadcast %194 : vector<1x1x32xf32> to vector<16x16x32xf32>
    %196 = arith.mulf %191, %195 : vector<16x16x32xf32>
    %197 = arith.addf %190, %196 : vector<16x16x32xf32>
    %198 = vector.extract_strided_slice %97 {offsets = [2, 10, 0], sizes = [16, 16, 32], strides = [1, 1, 1]} : vector<20x32x32xf32> to vector<16x16x32xf32>
    %199 = vector.extract_strided_slice %98 {offsets = [2, 4, 0], sizes = [1, 1, 32], strides = [1, 1, 1]} : vector<5x5x32xf32> to vector<1x1x32xf32>
    %200 = vector.shape_cast %199 : vector<1x1x32xf32> to vector<32xf32>
    %201 = vector.shape_cast %200 : vector<32xf32> to vector<1x1x32xf32>
    %202 = vector.broadcast %201 : vector<1x1x32xf32> to vector<16x16x32xf32>
    %203 = arith.mulf %198, %202 : vector<16x16x32xf32>
    %204 = arith.addf %197, %203 : vector<16x16x32xf32>
    %205 = vector.extract_strided_slice %97 {offsets = [3, 6, 0], sizes = [16, 16, 32], strides = [1, 1, 1]} : vector<20x32x32xf32> to vector<16x16x32xf32>
    %206 = vector.extract_strided_slice %98 {offsets = [3, 0, 0], sizes = [1, 1, 32], strides = [1, 1, 1]} : vector<5x5x32xf32> to vector<1x1x32xf32>
    %207 = vector.shape_cast %206 : vector<1x1x32xf32> to vector<32xf32>
    %208 = vector.shape_cast %207 : vector<32xf32> to vector<1x1x32xf32>
    %209 = vector.broadcast %208 : vector<1x1x32xf32> to vector<16x16x32xf32>
    %210 = arith.mulf %205, %209 : vector<16x16x32xf32>
    %211 = arith.addf %204, %210 : vector<16x16x32xf32>
    %212 = vector.extract_strided_slice %97 {offsets = [3, 7, 0], sizes = [16, 16, 32], strides = [1, 1, 1]} : vector<20x32x32xf32> to vector<16x16x32xf32>
    %213 = vector.extract_strided_slice %98 {offsets = [3, 1, 0], sizes = [1, 1, 32], strides = [1, 1, 1]} : vector<5x5x32xf32> to vector<1x1x32xf32>
    %214 = vector.shape_cast %213 : vector<1x1x32xf32> to vector<32xf32>
    %215 = vector.shape_cast %214 : vector<32xf32> to vector<1x1x32xf32>
    %216 = vector.broadcast %215 : vector<1x1x32xf32> to vector<16x16x32xf32>
    %217 = arith.mulf %212, %216 : vector<16x16x32xf32>
    %218 = arith.addf %211, %217 : vector<16x16x32xf32>
    %219 = vector.extract_strided_slice %97 {offsets = [3, 8, 0], sizes = [16, 16, 32], strides = [1, 1, 1]} : vector<20x32x32xf32> to vector<16x16x32xf32>
    %220 = vector.extract_strided_slice %98 {offsets = [3, 2, 0], sizes = [1, 1, 32], strides = [1, 1, 1]} : vector<5x5x32xf32> to vector<1x1x32xf32>
    %221 = vector.shape_cast %220 : vector<1x1x32xf32> to vector<32xf32>
    %222 = vector.shape_cast %221 : vector<32xf32> to vector<1x1x32xf32>
    %223 = vector.broadcast %222 : vector<1x1x32xf32> to vector<16x16x32xf32>
    %224 = arith.mulf %219, %223 : vector<16x16x32xf32>
    %225 = arith.addf %218, %224 : vector<16x16x32xf32>
    %226 = vector.extract_strided_slice %97 {offsets = [3, 9, 0], sizes = [16, 16, 32], strides = [1, 1, 1]} : vector<20x32x32xf32> to vector<16x16x32xf32>
    %227 = vector.extract_strided_slice %98 {offsets = [3, 3, 0], sizes = [1, 1, 32], strides = [1, 1, 1]} : vector<5x5x32xf32> to vector<1x1x32xf32>
    %228 = vector.shape_cast %227 : vector<1x1x32xf32> to vector<32xf32>
    %229 = vector.shape_cast %228 : vector<32xf32> to vector<1x1x32xf32>
    %230 = vector.broadcast %229 : vector<1x1x32xf32> to vector<16x16x32xf32>
    %231 = arith.mulf %226, %230 : vector<16x16x32xf32>
    %232 = arith.addf %225, %231 : vector<16x16x32xf32>
    %233 = vector.extract_strided_slice %97 {offsets = [3, 10, 0], sizes = [16, 16, 32], strides = [1, 1, 1]} : vector<20x32x32xf32> to vector<16x16x32xf32>
    %234 = vector.extract_strided_slice %98 {offsets = [3, 4, 0], sizes = [1, 1, 32], strides = [1, 1, 1]} : vector<5x5x32xf32> to vector<1x1x32xf32>
    %235 = vector.shape_cast %234 : vector<1x1x32xf32> to vector<32xf32>
    %236 = vector.shape_cast %235 : vector<32xf32> to vector<1x1x32xf32>
    %237 = vector.broadcast %236 : vector<1x1x32xf32> to vector<16x16x32xf32>
    %238 = arith.mulf %233, %237 : vector<16x16x32xf32>
    %239 = arith.addf %232, %238 : vector<16x16x32xf32>
    %240 = vector.extract_strided_slice %97 {offsets = [4, 6, 0], sizes = [16, 16, 32], strides = [1, 1, 1]} : vector<20x32x32xf32> to vector<16x16x32xf32>
    %241 = vector.extract_strided_slice %98 {offsets = [4, 0, 0], sizes = [1, 1, 32], strides = [1, 1, 1]} : vector<5x5x32xf32> to vector<1x1x32xf32>
    %242 = vector.shape_cast %241 : vector<1x1x32xf32> to vector<32xf32>
    %243 = vector.shape_cast %242 : vector<32xf32> to vector<1x1x32xf32>
    %244 = vector.broadcast %243 : vector<1x1x32xf32> to vector<16x16x32xf32>
    %245 = arith.mulf %240, %244 : vector<16x16x32xf32>
    %246 = arith.addf %239, %245 : vector<16x16x32xf32>
    %247 = vector.extract_strided_slice %97 {offsets = [4, 7, 0], sizes = [16, 16, 32], strides = [1, 1, 1]} : vector<20x32x32xf32> to vector<16x16x32xf32>
    %248 = vector.extract_strided_slice %98 {offsets = [4, 1, 0], sizes = [1, 1, 32], strides = [1, 1, 1]} : vector<5x5x32xf32> to vector<1x1x32xf32>
    %249 = vector.shape_cast %248 : vector<1x1x32xf32> to vector<32xf32>
    %250 = vector.shape_cast %249 : vector<32xf32> to vector<1x1x32xf32>
    %251 = vector.broadcast %250 : vector<1x1x32xf32> to vector<16x16x32xf32>
    %252 = arith.mulf %247, %251 : vector<16x16x32xf32>
    %253 = arith.addf %246, %252 : vector<16x16x32xf32>
    %254 = vector.extract_strided_slice %97 {offsets = [4, 8, 0], sizes = [16, 16, 32], strides = [1, 1, 1]} : vector<20x32x32xf32> to vector<16x16x32xf32>
    %255 = vector.extract_strided_slice %98 {offsets = [4, 2, 0], sizes = [1, 1, 32], strides = [1, 1, 1]} : vector<5x5x32xf32> to vector<1x1x32xf32>
    %256 = vector.shape_cast %255 : vector<1x1x32xf32> to vector<32xf32>
    %257 = vector.shape_cast %256 : vector<32xf32> to vector<1x1x32xf32>
    %258 = vector.broadcast %257 : vector<1x1x32xf32> to vector<16x16x32xf32>
    %259 = arith.mulf %254, %258 : vector<16x16x32xf32>
    %260 = arith.addf %253, %259 : vector<16x16x32xf32>
    %261 = vector.extract_strided_slice %97 {offsets = [4, 9, 0], sizes = [16, 16, 32], strides = [1, 1, 1]} : vector<20x32x32xf32> to vector<16x16x32xf32>
    %262 = vector.extract_strided_slice %98 {offsets = [4, 3, 0], sizes = [1, 1, 32], strides = [1, 1, 1]} : vector<5x5x32xf32> to vector<1x1x32xf32>
    %263 = vector.shape_cast %262 : vector<1x1x32xf32> to vector<32xf32>
    %264 = vector.shape_cast %263 : vector<32xf32> to vector<1x1x32xf32>
    %265 = vector.broadcast %264 : vector<1x1x32xf32> to vector<16x16x32xf32>
    %266 = arith.mulf %261, %265 : vector<16x16x32xf32>
    %267 = arith.addf %260, %266 : vector<16x16x32xf32>
    %268 = vector.extract_strided_slice %97 {offsets = [4, 10, 0], sizes = [16, 16, 32], strides = [1, 1, 1]} : vector<20x32x32xf32> to vector<16x16x32xf32>
    %269 = vector.extract_strided_slice %98 {offsets = [4, 4, 0], sizes = [1, 1, 32], strides = [1, 1, 1]} : vector<5x5x32xf32> to vector<1x1x32xf32>
    %270 = vector.shape_cast %269 : vector<1x1x32xf32> to vector<32xf32>
    %271 = vector.shape_cast %270 : vector<32xf32> to vector<1x1x32xf32>
    %272 = vector.broadcast %271 : vector<1x1x32xf32> to vector<16x16x32xf32>
    %273 = arith.mulf %268, %272 : vector<16x16x32xf32>
    %274 = arith.addf %267, %273 : vector<16x16x32xf32>
    %275 = vector.extract_strided_slice %274 {offsets = [0, 0, 0], sizes = [1, 16, 32], strides = [1, 1, 1]} : vector<16x16x32xf32> to vector<1x16x32xf32>
    %276 = vector.shape_cast %275 : vector<1x16x32xf32> to vector<16x32xf32>
    %c0_58 = arith.constant 0 : index
    %c0_59 = arith.constant 0 : index
    %277 = vector.load %arg18[%c0_58, %c0_59] : memref<256x32xf32, #tpu.memory_space<vmem>>, vector<16x32xf32>
    tpu.vector_store %arg18[%c0_58, %c0_59], %276 {strides = array<i32>} : memref<256x32xf32, #tpu.memory_space<vmem>>, vector<16x32xf32>,
    %278 = vector.extract_strided_slice %274 {offsets = [1, 0, 0], sizes = [1, 16, 32], strides = [1, 1, 1]} : vector<16x16x32xf32> to vector<1x16x32xf32>
    %279 = vector.shape_cast %278 : vector<1x16x32xf32> to vector<16x32xf32>
    %c16_60 = arith.constant 16 : index
    %c0_61 = arith.constant 0 : index
    %280 = vector.load %arg18[%c16_60, %c0_61] : memref<256x32xf32, #tpu.memory_space<vmem>>, vector<16x32xf32>
    tpu.vector_store %arg18[%c16_60, %c0_61], %279 {strides = array<i32>} : memref<256x32xf32, #tpu.memory_space<vmem>>, vector<16x32xf32>,
    %281 = vector.extract_strided_slice %274 {offsets = [2, 0, 0], sizes = [1, 16, 32], strides = [1, 1, 1]} : vector<16x16x32xf32> to vector<1x16x32xf32>
    %282 = vector.shape_cast %281 : vector<1x16x32xf32> to vector<16x32xf32>
    %c32 = arith.constant 32 : index
    %c0_62 = arith.constant 0 : index
    %283 = vector.load %arg18[%c32, %c0_62] : memref<256x32xf32, #tpu.memory_space<vmem>>, vector<16x32xf32>
    tpu.vector_store %arg18[%c32, %c0_62], %282 {strides = array<i32>} : memref<256x32xf32, #tpu.memory_space<vmem>>, vector<16x32xf32>,
    %284 = vector.extract_strided_slice %274 {offsets = [3, 0, 0], sizes = [1, 16, 32], strides = [1, 1, 1]} : vector<16x16x32xf32> to vector<1x16x32xf32>
    %285 = vector.shape_cast %284 : vector<1x16x32xf32> to vector<16x32xf32>
    %c48 = arith.constant 48 : index
    %c0_63 = arith.constant 0 : index
    %286 = vector.load %arg18[%c48, %c0_63] : memref<256x32xf32, #tpu.memory_space<vmem>>, vector<16x32xf32>
    tpu.vector_store %arg18[%c48, %c0_63], %285 {strides = array<i32>} : memref<256x32xf32, #tpu.memory_space<vmem>>, vector<16x32xf32>,
    %287 = vector.extract_strided_slice %274 {offsets = [4, 0, 0], sizes = [1, 16, 32], strides = [1, 1, 1]} : vector<16x16x32xf32> to vector<1x16x32xf32>
    %288 = vector.shape_cast %287 : vector<1x16x32xf32> to vector<16x32xf32>
    %c64 = arith.constant 64 : index
    %c0_64 = arith.constant 0 : index
    %289 = vector.load %arg18[%c64, %c0_64] : memref<256x32xf32, #tpu.memory_space<vmem>>, vector<16x32xf32>
    tpu.vector_store %arg18[%c64, %c0_64], %288 {strides = array<i32>} : memref<256x32xf32, #tpu.memory_space<vmem>>, vector<16x32xf32>,
    %290 = vector.extract_strided_slice %274 {offsets = [5, 0, 0], sizes = [1, 16, 32], strides = [1, 1, 1]} : vector<16x16x32xf32> to vector<1x16x32xf32>
    %291 = vector.shape_cast %290 : vector<1x16x32xf32> to vector<16x32xf32>
    %c80 = arith.constant 80 : index
    %c0_65 = arith.constant 0 : index
    %292 = vector.load %arg18[%c80, %c0_65] : memref<256x32xf32, #tpu.memory_space<vmem>>, vector<16x32xf32>
    tpu.vector_store %arg18[%c80, %c0_65], %291 {strides = array<i32>} : memref<256x32xf32, #tpu.memory_space<vmem>>, vector<16x32xf32>,
    %293 = vector.extract_strided_slice %274 {offsets = [6, 0, 0], sizes = [1, 16, 32], strides = [1, 1, 1]} : vector<16x16x32xf32> to vector<1x16x32xf32>
    %294 = vector.shape_cast %293 : vector<1x16x32xf32> to vector<16x32xf32>
    %c96 = arith.constant 96 : index
    %c0_66 = arith.constant 0 : index
    %295 = vector.load %arg18[%c96, %c0_66] : memref<256x32xf32, #tpu.memory_space<vmem>>, vector<16x32xf32>
    tpu.vector_store %arg18[%c96, %c0_66], %294 {strides = array<i32>} : memref<256x32xf32, #tpu.memory_space<vmem>>, vector<16x32xf32>,
    %296 = vector.extract_strided_slice %274 {offsets = [7, 0, 0], sizes = [1, 16, 32], strides = [1, 1, 1]} : vector<16x16x32xf32> to vector<1x16x32xf32>
    %297 = vector.shape_cast %296 : vector<1x16x32xf32> to vector<16x32xf32>
    %c112 = arith.constant 112 : index
    %c0_67 = arith.constant 0 : index
    %298 = vector.load %arg18[%c112, %c0_67] : memref<256x32xf32, #tpu.memory_space<vmem>>, vector<16x32xf32>
    tpu.vector_store %arg18[%c112, %c0_67], %297 {strides = array<i32>} : memref<256x32xf32, #tpu.memory_space<vmem>>, vector<16x32xf32>,
    %299 = vector.extract_strided_slice %274 {offsets = [8, 0, 0], sizes = [1, 16, 32], strides = [1, 1, 1]} : vector<16x16x32xf32> to vector<1x16x32xf32>
    %300 = vector.shape_cast %299 : vector<1x16x32xf32> to vector<16x32xf32>
    %c128 = arith.constant 128 : index
    %c0_68 = arith.constant 0 : index
    %301 = vector.load %arg18[%c128, %c0_68] : memref<256x32xf32, #tpu.memory_space<vmem>>, vector<16x32xf32>
    tpu.vector_store %arg18[%c128, %c0_68], %300 {strides = array<i32>} : memref<256x32xf32, #tpu.memory_space<vmem>>, vector<16x32xf32>,
    %302 = vector.extract_strided_slice %274 {offsets = [9, 0, 0], sizes = [1, 16, 32], strides = [1, 1, 1]} : vector<16x16x32xf32> to vector<1x16x32xf32>
    %303 = vector.shape_cast %302 : vector<1x16x32xf32> to vector<16x32xf32>
    %c144 = arith.constant 144 : index
    %c0_69 = arith.constant 0 : index
    %304 = vector.load %arg18[%c144, %c0_69] : memref<256x32xf32, #tpu.memory_space<vmem>>, vector<16x32xf32>
    tpu.vector_store %arg18[%c144, %c0_69], %303 {strides = array<i32>} : memref<256x32xf32, #tpu.memory_space<vmem>>, vector<16x32xf32>,
    %305 = vector.extract_strided_slice %274 {offsets = [10, 0, 0], sizes = [1, 16, 32], strides = [1, 1, 1]} : vector<16x16x32xf32> to vector<1x16x32xf32>
    %306 = vector.shape_cast %305 : vector<1x16x32xf32> to vector<16x32xf32>
    %c160 = arith.constant 160 : index
    %c0_70 = arith.constant 0 : index
    %307 = vector.load %arg18[%c160, %c0_70] : memref<256x32xf32, #tpu.memory_space<vmem>>, vector<16x32xf32>
    tpu.vector_store %arg18[%c160, %c0_70], %306 {strides = array<i32>} : memref<256x32xf32, #tpu.memory_space<vmem>>, vector<16x32xf32>,
    %308 = vector.extract_strided_slice %274 {offsets = [11, 0, 0], sizes = [1, 16, 32], strides = [1, 1, 1]} : vector<16x16x32xf32> to vector<1x16x32xf32>
    %309 = vector.shape_cast %308 : vector<1x16x32xf32> to vector<16x32xf32>
    %c176 = arith.constant 176 : index
    %c0_71 = arith.constant 0 : index
    %310 = vector.load %arg18[%c176, %c0_71] : memref<256x32xf32, #tpu.memory_space<vmem>>, vector<16x32xf32>
    tpu.vector_store %arg18[%c176, %c0_71], %309 {strides = array<i32>} : memref<256x32xf32, #tpu.memory_space<vmem>>, vector<16x32xf32>,
    %311 = vector.extract_strided_slice %274 {offsets = [12, 0, 0], sizes = [1, 16, 32], strides = [1, 1, 1]} : vector<16x16x32xf32> to vector<1x16x32xf32>
    %312 = vector.shape_cast %311 : vector<1x16x32xf32> to vector<16x32xf32>
    %c192 = arith.constant 192 : index
    %c0_72 = arith.constant 0 : index
    %313 = vector.load %arg18[%c192, %c0_72] : memref<256x32xf32, #tpu.memory_space<vmem>>, vector<16x32xf32>
    tpu.vector_store %arg18[%c192, %c0_72], %312 {strides = array<i32>} : memref<256x32xf32, #tpu.memory_space<vmem>>, vector<16x32xf32>,
    %314 = vector.extract_strided_slice %274 {offsets = [13, 0, 0], sizes = [1, 16, 32], strides = [1, 1, 1]} : vector<16x16x32xf32> to vector<1x16x32xf32>
    %315 = vector.shape_cast %314 : vector<1x16x32xf32> to vector<16x32xf32>
    %c208 = arith.constant 208 : index
    %c0_73 = arith.constant 0 : index
    %316 = vector.load %arg18[%c208, %c0_73] : memref<256x32xf32, #tpu.memory_space<vmem>>, vector<16x32xf32>
    tpu.vector_store %arg18[%c208, %c0_73], %315 {strides = array<i32>} : memref<256x32xf32, #tpu.memory_space<vmem>>, vector<16x32xf32>,
    %317 = vector.extract_strided_slice %274 {offsets = [14, 0, 0], sizes = [1, 16, 32], strides = [1, 1, 1]} : vector<16x16x32xf32> to vector<1x16x32xf32>
    %318 = vector.shape_cast %317 : vector<1x16x32xf32> to vector<16x32xf32>
    %c224 = arith.constant 224 : index
    %c0_74 = arith.constant 0 : index
    %319 = vector.load %arg18[%c224, %c0_74] : memref<256x32xf32, #tpu.memory_space<vmem>>, vector<16x32xf32>
    tpu.vector_store %arg18[%c224, %c0_74], %318 {strides = array<i32>} : memref<256x32xf32, #tpu.memory_space<vmem>>, vector<16x32xf32>,
    %320 = vector.extract_strided_slice %274 {offsets = [15, 0, 0], sizes = [1, 16, 32], strides = [1, 1, 1]} : vector<16x16x32xf32> to vector<1x16x32xf32>
    %321 = vector.shape_cast %320 : vector<1x16x32xf32> to vector<16x32xf32>
    %c240 = arith.constant 240 : index
    %c0_75 = arith.constant 0 : index
    %322 = vector.load %arg18[%c240, %c0_75] : memref<256x32xf32, #tpu.memory_space<vmem>>, vector<16x32xf32>
    tpu.vector_store %arg18[%c240, %c0_75], %321 {strides = array<i32>} : memref<256x32xf32, #tpu.memory_space<vmem>>, vector<16x32xf32>,
    %c0_76 = arith.constant 0 : index
    %c0_77 = arith.constant 0 : index
    %323 = vector.load %arg18[%c0_76, %c0_77] : memref<256x32xf32, #tpu.memory_space<vmem>>, vector<256x32xf32>
    %c0_78 = arith.constant 0 : index
    %c0_79 = arith.constant 0 : index
    %324 = vector.load %arg7[%c0_78, %c0_79] : memref<1x32xf32, #tpu.memory_space<vmem>>, vector<1x32xf32>
    %325 = vector.broadcast %324 : vector<1x32xf32> to vector<256x32xf32>
    %326 = arith.addf %323, %325 : vector<256x32xf32>
    %c0_80 = arith.constant 0 : index
    %c0_81 = arith.constant 0 : index
    %327 = vector.load %arg8[%c0_80, %c0_81] : memref<32x32xf32, #tpu.memory_space<vmem>>, vector<32x32xf32>
    %cst_82 = arith.constant dense<0.000000e+00> : vector<256x32xf32>
    %328 = tpu.matmul %326, %327, %cst_82 {dimension_numbers = #tpu.dot_dimension_numbers<[1], [0], [0], [1], [0, 0, 1, 1], [], []>} : vector<256x32xf32>, vector<32x32xf32>, vector<256x32xf32> -> vector<256x32xf32>
    %c0_83 = arith.constant 0 : index
    %c0_84 = arith.constant 0 : index
    %329 = vector.load %arg9[%c0_83, %c0_84] : memref<1x32xf32, #tpu.memory_space<vmem>>, vector<1x32xf32>
    %330 = vector.broadcast %329 : vector<1x32xf32> to vector<256x32xf32>
    %331 = arith.addf %328, %330 : vector<256x32xf32>
    %332 = arith.addf %1, %331 : vector<256x32xf32>
    %cst_85 = arith.constant dense<0.000000e+00> : vector<256xf32>
    %333 = vector.multi_reduction <add>, %332, %cst_85 [1] : vector<256x32xf32> to vector<256xf32>
    %334 = vector.shape_cast %333 : vector<256xf32> to vector<256x1xf32>
    %cst_86 = arith.constant 3.200000e+01 : f32
    %335 = vector.broadcast %cst_86 : f32 to vector<256x1xf32>
    %336 = arith.divf %334, %335 : vector<256x1xf32>
    %337 = vector.broadcast %336 : vector<256x1xf32> to vector<256x32xf32>
    %338 = arith.subf %332, %337 : vector<256x32xf32>
    %339 = arith.mulf %338, %338 : vector<256x32xf32>
    %cst_87 = arith.constant dense<0.000000e+00> : vector<256xf32>
    %340 = vector.multi_reduction <add>, %339, %cst_87 [1] : vector<256x32xf32> to vector<256xf32>
    %341 = vector.shape_cast %340 : vector<256xf32> to vector<256x1xf32>
    %cst_88 = arith.constant 3.200000e+01 : f32
    %342 = vector.broadcast %cst_88 : f32 to vector<256x1xf32>
    %343 = arith.divf %341, %342 : vector<256x1xf32>
    %344 = vector.broadcast %336 : vector<256x1xf32> to vector<256x32xf32>
    %345 = arith.subf %332, %344 : vector<256x32xf32>
    %cst_89 = arith.constant 9.99999974E-6 : f32
    %346 = vector.broadcast %cst_89 : f32 to vector<256x1xf32>
    %347 = arith.addf %343, %346 : vector<256x1xf32>
    %348 = math.rsqrt %347 : vector<256x1xf32>
    %349 = vector.broadcast %348 : vector<256x1xf32> to vector<256x32xf32>
    %350 = arith.mulf %345, %349 : vector<256x32xf32>
    %c0_90 = arith.constant 0 : index
    %c0_91 = arith.constant 0 : index
    %351 = vector.load %arg10[%c0_90, %c0_91] : memref<1x32xf32, #tpu.memory_space<vmem>>, vector<1x32xf32>
    %352 = vector.broadcast %351 : vector<1x32xf32> to vector<256x32xf32>
    %353 = arith.mulf %350, %352 : vector<256x32xf32>
    %c0_92 = arith.constant 0 : index
    %c0_93 = arith.constant 0 : index
    %354 = vector.load %arg11[%c0_92, %c0_93] : memref<1x32xf32, #tpu.memory_space<vmem>>, vector<1x32xf32>
    %355 = vector.broadcast %354 : vector<1x32xf32> to vector<256x32xf32>
    %356 = arith.addf %353, %355 : vector<256x32xf32>
    %c0_94 = arith.constant 0 : index
    %c0_95 = arith.constant 0 : index
    %357 = vector.load %arg12[%c0_94, %c0_95] : memref<32x128xf32, #tpu.memory_space<vmem>>, vector<32x128xf32>
    %cst_96 = arith.constant dense<0.000000e+00> : vector<256x128xf32>
    %358 = tpu.matmul %356, %357, %cst_96 {dimension_numbers = #tpu.dot_dimension_numbers<[1], [0], [0], [1], [0, 0, 1, 1], [], []>} : vector<256x32xf32>, vector<32x128xf32>, vector<256x128xf32> -> vector<256x128xf32>
    %c0_97 = arith.constant 0 : index
    %c0_98 = arith.constant 0 : index
    %359 = vector.load %arg13[%c0_97, %c0_98] : memref<1x128xf32, #tpu.memory_space<vmem>>, vector<1x128xf32>
    %360 = vector.broadcast %359 : vector<1x128xf32> to vector<256x128xf32>
    %361 = arith.addf %358, %360 : vector<256x128xf32>
    %cst_99 = arith.constant 5.000000e-01 : f32
    %362 = vector.broadcast %cst_99 : f32 to vector<256x128xf32>
    %363 = arith.mulf %362, %361 : vector<256x128xf32>
    %cst_100 = arith.constant 0.707106769 : f32
    %364 = vector.broadcast %cst_100 : f32 to vector<256x128xf32>
    %365 = arith.mulf %361, %364 : vector<256x128xf32>
    %366 = math.erf %365 : vector<256x128xf32>
    %cst_101 = arith.constant 1.000000e+00 : f32
    %367 = vector.broadcast %cst_101 : f32 to vector<256x128xf32>
    %368 = arith.addf %367, %366 : vector<256x128xf32>
    %369 = arith.mulf %363, %368 : vector<256x128xf32>
    %c0_102 = arith.constant 0 : index
    %c0_103 = arith.constant 0 : index
    %370 = vector.load %arg14[%c0_102, %c0_103] : memref<128x32xf32, #tpu.memory_space<vmem>>, vector<128x32xf32>
    %cst_104 = arith.constant dense<0.000000e+00> : vector<256x32xf32>
    %371 = tpu.matmul %369, %370, %cst_104 {dimension_numbers = #tpu.dot_dimension_numbers<[1], [0], [0], [1], [0, 0, 1, 1], [], []>} : vector<256x128xf32>, vector<128x32xf32>, vector<256x32xf32> -> vector<256x32xf32>
    %c0_105 = arith.constant 0 : index
    %c0_106 = arith.constant 0 : index
    %372 = vector.load %arg15[%c0_105, %c0_106] : memref<1x32xf32, #tpu.memory_space<vmem>>, vector<1x32xf32>
    %373 = vector.broadcast %372 : vector<1x32xf32> to vector<256x32xf32>
    %374 = arith.addf %371, %373 : vector<256x32xf32>
    %375 = arith.addf %332, %374 : vector<256x32xf32>
    %c0_107 = arith.constant 0 : index
    %c0_108 = arith.constant 0 : index
    %c0_109 = arith.constant 0 : index
    %376 = vector.load %arg16[%c0_107, %c0_108, %c0_109] : memref<1x256x32xf32, #tpu.memory_space<vmem>>, vector<1x256x32xf32>
    %377 = vector.shape_cast %376 : vector<1x256x32xf32> to vector<256x32xf32>
    %378 = vector.shape_cast %375 : vector<256x32xf32> to vector<1x256x32xf32>
    tpu.vector_store %arg16[%c0_107, %c0_108, %c0_109], %378 {strides = array<i32>} : memref<1x256x32xf32, #tpu.memory_space<vmem>>, vector<1x256x32xf32>,
    return
  }
  func.func @transform_0(%arg0: i32) -> (i32, i32, i32) {
    %c0_i32 = arith.constant 0 : i32
    %c0_i32_0 = arith.constant 0 : i32
    %c0_i32_1 = arith.constant 0 : i32
    return %arg0, %c0_i32, %c0_i32_0 : i32, i32, i32
  }
  func.func @transform_1(%arg0: i32) -> (i32, i32) {
    %c0_i32 = arith.constant 0 : i32
    %c0_i32_0 = arith.constant 0 : i32
    %c0_i32_1 = arith.constant 0 : i32
    return %c0_i32, %c0_i32_0 : i32, i32
  }
  func.func @transform_2(%arg0: i32) -> (i32, i32) {
    %c0_i32 = arith.constant 0 : i32
    %c0_i32_0 = arith.constant 0 : i32
    %c0_i32_1 = arith.constant 0 : i32
    return %c0_i32, %c0_i32_0 : i32, i32
  }
  func.func @transform_3(%arg0: i32) -> (i32, i32) {
    %c0_i32 = arith.constant 0 : i32
    %c0_i32_0 = arith.constant 0 : i32
    %c0_i32_1 = arith.constant 0 : i32
    return %c0_i32, %c0_i32_0 : i32, i32
  }
  func.func @transform_4(%arg0: i32) -> (i32, i32) {
    %c0_i32 = arith.constant 0 : i32
    %c0_i32_0 = arith.constant 0 : i32
    %c0_i32_1 = arith.constant 0 : i32
    return %c0_i32, %c0_i32_0 : i32, i32
  }
  func.func @transform_5(%arg0: i32) -> (i32, i32, i32) {
    %c0_i32 = arith.constant 0 : i32
    %c0_i32_0 = arith.constant 0 : i32
    %c0_i32_1 = arith.constant 0 : i32
    %c0_i32_2 = arith.constant 0 : i32
    return %c0_i32, %c0_i32_0, %c0_i32_1 : i32, i32, i32
  }
  func.func @transform_6(%arg0: i32) -> (i32, i32) {
    %c0_i32 = arith.constant 0 : i32
    %c0_i32_0 = arith.constant 0 : i32
    %c0_i32_1 = arith.constant 0 : i32
    return %c0_i32, %c0_i32_0 : i32, i32
  }
  func.func @transform_7(%arg0: i32) -> (i32, i32) {
    %c0_i32 = arith.constant 0 : i32
    %c0_i32_0 = arith.constant 0 : i32
    %c0_i32_1 = arith.constant 0 : i32
    return %c0_i32, %c0_i32_0 : i32, i32
  }
  func.func @transform_8(%arg0: i32) -> (i32, i32) {
    %c0_i32 = arith.constant 0 : i32
    %c0_i32_0 = arith.constant 0 : i32
    %c0_i32_1 = arith.constant 0 : i32
    return %c0_i32, %c0_i32_0 : i32, i32
  }
  func.func @transform_9(%arg0: i32) -> (i32, i32) {
    %c0_i32 = arith.constant 0 : i32
    %c0_i32_0 = arith.constant 0 : i32
    %c0_i32_1 = arith.constant 0 : i32
    return %c0_i32, %c0_i32_0 : i32, i32
  }
  func.func @transform_10(%arg0: i32) -> (i32, i32) {
    %c0_i32 = arith.constant 0 : i32
    %c0_i32_0 = arith.constant 0 : i32
    %c0_i32_1 = arith.constant 0 : i32
    return %c0_i32, %c0_i32_0 : i32, i32
  }
  func.func @transform_11(%arg0: i32) -> (i32, i32) {
    %c0_i32 = arith.constant 0 : i32
    %c0_i32_0 = arith.constant 0 : i32
    %c0_i32_1 = arith.constant 0 : i32
    return %c0_i32, %c0_i32_0 : i32, i32
  }
  func.func @transform_12(%arg0: i32) -> (i32, i32) {
    %c0_i32 = arith.constant 0 : i32
    %c0_i32_0 = arith.constant 0 : i32
    %c0_i32_1 = arith.constant 0 : i32
    return %c0_i32, %c0_i32_0 : i32, i32
  }
  func.func @transform_13(%arg0: i32) -> (i32, i32) {
    %c0_i32 = arith.constant 0 : i32
    %c0_i32_0 = arith.constant 0 : i32
    %c0_i32_1 = arith.constant 0 : i32
    return %c0_i32, %c0_i32_0 : i32, i32
  }
  func.func @transform_14(%arg0: i32) -> (i32, i32) {
    %c0_i32 = arith.constant 0 : i32
    %c0_i32_0 = arith.constant 0 : i32
    %c0_i32_1 = arith.constant 0 : i32
    return %c0_i32, %c0_i32_0 : i32, i32
  }
  func.func @transform_15(%arg0: i32) -> (i32, i32, i32) {
    %c0_i32 = arith.constant 0 : i32
    %c0_i32_0 = arith.constant 0 : i32
    %c0_i32_1 = arith.constant 0 : i32
    return %arg0, %c0_i32, %c0_i32_0 : i32, i32, i32
  }
}

</mosaic_0001>

<llo_original>
// kernel: cblock_forward.1
$region0: #{cblock_forward.1}
  #allocation0 [shape = 'u32[]', space=smem, size = 0x4, offset = 0x4, fixed_abs, tag = 'smem constant byte address 0x4 - core index']
  #allocation1 [shape = 'u32[72,128]{1,0:T(1,128)}', space=vmem, size = 0x9000, scoped, tag = 'internal scratch']
  #allocation2 [shape = 'f32[20,32,32]{2,1,0:T(8,128)}', space=vmem, size = 0x50000, scoped, tag = 'scratch operand']
  #allocation3 [shape = 'f32[256,32]{1,0:T(8,128)}', space=vmem, size = 0x20000, scoped, tag = 'scratch operand']
  %s0 = inlined_call_operand.vmem [shape: f32[2,256,32], index: 0, kind: input, shape index: {}, may-alias: {0,15}]
  %s1 = inlined_call_operand.vmem [shape: f32[1,32], index: 1, kind: input, shape index: {}]
  %s2 = inlined_call_operand.vmem [shape: f32[1,32], index: 2, kind: input, shape index: {}]
  %s3 = inlined_call_operand.vmem [shape: f32[32,32], index: 3, kind: input, shape index: {}]
  %s4 = inlined_call_operand.vmem [shape: f32[1,32], index: 4, kind: input, shape index: {}]
  %s5 = inlined_call_operand.vmem [shape: f32[5,5,32], index: 5, kind: input, shape index: {}]
  %s6 = inlined_call_operand.vmem [shape: f32[1,32], index: 6, kind: input, shape index: {}]
  %s7 = inlined_call_operand.vmem [shape: f32[32,32], index: 7, kind: input, shape index: {}]
  %s8 = inlined_call_operand.vmem [shape: f32[1,32], index: 8, kind: input, shape index: {}]
  %s9 = inlined_call_operand.vmem [shape: f32[1,32], index: 9, kind: input, shape index: {}]
  %s10 = inlined_call_operand.vmem [shape: f32[1,32], index: 10, kind: input, shape index: {}]
  %s11 = inlined_call_operand.vmem [shape: f32[32,128], index: 11, kind: input, shape index: {}]
  %s12 = inlined_call_operand.vmem [shape: f32[1,128], index: 12, kind: input, shape index: {}]
  %s13 = inlined_call_operand.vmem [shape: f32[128,32], index: 13, kind: input, shape index: {}]
  %s14 = inlined_call_operand.vmem [shape: f32[1,32], index: 14, kind: input, shape index: {}]
  %s15 = inlined_call_operand.vmem [shape: f32[2,256,32], index: 15, kind: output, shape index: {}, may-alias: {0,15}]
  %s16 = sld [smem:[#allocation0]]
  $region93: #{cblock_forward.1} parent=0
    _
  %s18 = ssub.s32 1, %s16
  %s19 = scalar_select 0, %s18, %s16
  loop: start=0, step=1, limit=4
  $region2: #{cblock_forward.1} parent=0 // loop_pre_header
    _
  $region3: #{cblock_forward.1} parent=0 // loop_header
    %s21 = sphi 0, %s25
    %p22 = scmp.ge.s32.totalorder %s21, 4
    %s31 = sphi 0, %s33
    %s34 = sphi 0, %s31
    %s35 = sphi 0, %s34
    %s51 = sphi 0, %s35
    %s55 = sphi 0, %s55
    %s57 = sphi 0, %s55
    %s58 = sphi 0, %s57
    %s72 = sphi 0, %s58
    %s76 = sphi 0, %s76
    %s78 = sphi 0, %s76
    %s79 = sphi 0, %s78
    %s93 = sphi 0, %s79
    %s97 = sphi 0, %s97
    %s99 = sphi 0, %s97
    %s100 = sphi 0, %s99
    %s114 = sphi 0, %s100
    %s118 = sphi 0, %s118
    %s120 = sphi 0, %s118
    %s121 = sphi 0, %s120
    %s135 = sphi 0, %s121
    %s139 = sphi 0, %s139
    %s141 = sphi 0, %s139
    %s142 = sphi 0, %s141
    %s156 = sphi 0, %s142
    %s160 = sphi 0, %s160
    %s162 = sphi 0, %s160
    %s163 = sphi 0, %s162
    %s177 = sphi 0, %s163
    %s181 = sphi 0, %s181
    %s183 = sphi 0, %s181
    %s184 = sphi 0, %s183
    %s198 = sphi 0, %s184
    %s202 = sphi 0, %s202
    %s204 = sphi 0, %s202
    %s205 = sphi 0, %s204
    %s219 = sphi 0, %s205
    %s223 = sphi 0, %s223
    %s225 = sphi 0, %s223
    %s226 = sphi 0, %s225
    %s240 = sphi 0, %s226
    %s244 = sphi 0, %s244
    %s246 = sphi 0, %s244
    %s247 = sphi 0, %s246
    %s261 = sphi 0, %s247
    %s265 = sphi 0, %s265
    %s267 = sphi 0, %s265
    %s268 = sphi 0, %s267
    %s282 = sphi 0, %s268
    %s286 = sphi 0, %s286
    %s288 = sphi 0, %s286
    %s289 = sphi 0, %s288
    %s303 = sphi 0, %s289
    %s307 = sphi 0, %s307
    %s309 = sphi 0, %s307
    %s310 = sphi 0, %s309
    %s324 = sphi 0, %s310
    %s328 = sphi 0, %s328
    %s330 = sphi 0, %s328
    %s331 = sphi 0, %s330
    %s345 = sphi 0, %s331
    %s351 = sphi 0, %s353
    %s354 = sphi 0, %s351
    %s355 = sphi 0, %s354
    %s371 = sphi 0, %s355
  $region4: #{cblock_forward.1} parent=0 // loop_header_branch
    %24 = sbr.rel (%p22) target = $region8
  $region5: #{cblock_forward.1} parent=0 // loop_body
    %s26 = ssub.s32 %s21, 1
    %s27 = ssub.s32 %s21, 2
    %s28 = sadd.s32 %s21, 1
    %s29 = ssub.s32 %s21, %s28
    %p30 = scmp.eq.s32.totalorder %s29, 0
    %s32 = sadd.s32 %s31, 1
    %s33 = scalar_select %p30, %s31, %s32
    %p36 = pneg %p30
    %p37 = scmp.eq.s32.totalorder %s21, 1
    %p38 = por %p36, %p37
    %p39 = scmp.ne.s32.totalorder %s31, %s34
    %p40 = scmp.eq.s32.totalorder %s21, 0
    %p41 = por %p39, %p40
    %p42 = scmp.ne.s32.totalorder %s31, %s34
    %p43 = scmp.eq.s32.totalorder %s26, 1
    %p44 = por %p42, %p43
    %p45 = scmp.ne.s32.totalorder %s34, %s35
    %p46 = scmp.eq.s32.totalorder %s26, 0
    %p47 = por %p45, %p46
    %p48 = scmp.ne.s32.totalorder %s34, %s35
    %p49 = scmp.eq.s32.totalorder %s27, 1
    %p50 = por %p48, %p49
    %p52 = scmp.ne.s32.totalorder %s35, %s51
    %p53 = scmp.eq.s32.totalorder %s27, 0
    %p54 = por %p52, %p53
    %s56 = sadd.s32 %s55, 1
    %p59 = scmp.eq.s32.totalorder %s21, 1
    %p60 = scmp.ne.s32.totalorder %s55, %s57
    %p61 = scmp.eq.s32.totalorder %s21, 0
    %p62 = por %p60, %p61
    %p63 = scmp.ne.s32.totalorder %s55, %s57
    %p64 = scmp.eq.s32.totalorder %s26, 1
    %p65 = por %p63, %p64
    %p66 = scmp.ne.s32.totalorder %s57, %s58
    %p67 = scmp.eq.s32.totalorder %s26, 0
    %p68 = por %p66, %p67
    %p69 = scmp.ne.s32.totalorder %s57, %s58
    %p70 = scmp.eq.s32.totalorder %s27, 1
    %p71 = por %p69, %p70
    %p73 = scmp.ne.s32.totalorder %s58, %s72
    %p74 = scmp.eq.s32.totalorder %s27, 0
    %p75 = por %p73, %p74
    %s77 = sadd.s32 %s76, 1
    %p80 = scmp.eq.s32.totalorder %s21, 1
    %p81 = scmp.ne.s32.totalorder %s76, %s78
    %p82 = scmp.eq.s32.totalorder %s21, 0
    %p83 = por %p81, %p82
    %p84 = scmp.ne.s32.totalorder %s76, %s78
    %p85 = scmp.eq.s32.totalorder %s26, 1
    %p86 = por %p84, %p85
    %p87 = scmp.ne.s32.totalorder %s78, %s79
    %p88 = scmp.eq.s32.totalorder %s26, 0
    %p89 = por %p87, %p88
    %p90 = scmp.ne.s32.totalorder %s78, %s79
    %p91 = scmp.eq.s32.totalorder %s27, 1
    %p92 = por %p90, %p91
    %p94 = scmp.ne.s32.totalorder %s79, %s93
    %p95 = scmp.eq.s32.totalorder %s27, 0
    %p96 = por %p94, %p95
    %s98 = sadd.s32 %s97, 1
    %p101 = scmp.eq.s32.totalorder %s21, 1
    %p102 = scmp.ne.s32.totalorder %s97, %s99
    %p103 = scmp.eq.s32.totalorder %s21, 0
    %p104 = por %p102, %p103
    %p105 = scmp.ne.s32.totalorder %s97, %s99
    %p106 = scmp.eq.s32.totalorder %s26, 1
    %p107 = por %p105, %p106
    %p108 = scmp.ne.s32.totalorder %s99, %s100
    %p109 = scmp.eq.s32.totalorder %s26, 0
    %p110 = por %p108, %p109
    %p111 = scmp.ne.s32.totalorder %s99, %s100
    %p112 = scmp.eq.s32.totalorder %s27, 1
    %p113 = por %p111, %p112
    %p115 = scmp.ne.s32.totalorder %s100, %s114
    %p116 = scmp.eq.s32.totalorder %s27, 0
    %p117 = por %p115, %p116
    %s119 = sadd.s32 %s118, 1
    %p122 = scmp.eq.s32.totalorder %s21, 1
    %p123 = scmp.ne.s32.totalorder %s118, %s120
    %p124 = scmp.eq.s32.totalorder %s21, 0
    %p125 = por %p123, %p124
    %p126 = scmp.ne.s32.totalorder %s118, %s120
    %p127 = scmp.eq.s32.totalorder %s26, 1
    %p128 = por %p126, %p127
    %p129 = scmp.ne.s32.totalorder %s120, %s121
    %p130 = scmp.eq.s32.totalorder %s26, 0
    %p131 = por %p129, %p130
    %p132 = scmp.ne.s32.totalorder %s120, %s121
    %p133 = scmp.eq.s32.totalorder %s27, 1
    %p134 = por %p132, %p133
    %p136 = scmp.ne.s32.totalorder %s121, %s135
    %p137 = scmp.eq.s32.totalorder %s27, 0
    %p138 = por %p136, %p137
    %s140 = sadd.s32 %s139, 1
    %p143 = scmp.eq.s32.totalorder %s21, 1
    %p144 = scmp.ne.s32.totalorder %s139, %s141
    %p145 = scmp.eq.s32.totalorder %s21, 0
    %p146 = por %p144, %p145
    %p147 = scmp.ne.s32.totalorder %s139, %s141
    %p148 = scmp.eq.s32.totalorder %s26, 1
    %p149 = por %p147, %p148
    %p150 = scmp.ne.s32.totalorder %s141, %s142
    %p151 = scmp.eq.s32.totalorder %s26, 0
    %p152 = por %p150, %p151
    %p153 = scmp.ne.s32.totalorder %s141, %s142
    %p154 = scmp.eq.s32.totalorder %s27, 1
    %p155 = por %p153, %p154
    %p157 = scmp.ne.s32.totalorder %s142, %s156
    %p158 = scmp.eq.s32.totalorder %s27, 0
    %p159 = por %p157, %p158
    %s161 = sadd.s32 %s160, 1
    %p164 = scmp.eq.s32.totalorder %s21, 1
    %p165 = scmp.ne.s32.totalorder %s160, %s162
    %p166 = scmp.eq.s32.totalorder %s21, 0
    %p167 = por %p165, %p166
    %p168 = scmp.ne.s32.totalorder %s160, %s162
    %p169 = scmp.eq.s32.totalorder %s26, 1
    %p170 = por %p168, %p169
    %p171 = scmp.ne.s32.totalorder %s162, %s163
    %p172 = scmp.eq.s32.totalorder %s26, 0
    %p173 = por %p171, %p172
    %p174 = scmp.ne.s32.totalorder %s162, %s163
    %p175 = scmp.eq.s32.totalorder %s27, 1
    %p176 = por %p174, %p175
    %p178 = scmp.ne.s32.totalorder %s163, %s177
    %p179 = scmp.eq.s32.totalorder %s27, 0
    %p180 = por %p178, %p179
    %s182 = sadd.s32 %s181, 1
    %p185 = scmp.eq.s32.totalorder %s21, 1
    %p186 = scmp.ne.s32.totalorder %s181, %s183
    %p187 = scmp.eq.s32.totalorder %s21, 0
    %p188 = por %p186, %p187
    %p189 = scmp.ne.s32.totalorder %s181, %s183
    %p190 = scmp.eq.s32.totalorder %s26, 1
    %p191 = por %p189, %p190
    %p192 = scmp.ne.s32.totalorder %s183, %s184
    %p193 = scmp.eq.s32.totalorder %s26, 0
    %p194 = por %p192, %p193
    %p195 = scmp.ne.s32.totalorder %s183, %s184
    %p196 = scmp.eq.s32.totalorder %s27, 1
    %p197 = por %p195, %p196
    %p199 = scmp.ne.s32.totalorder %s184, %s198
    %p200 = scmp.eq.s32.totalorder %s27, 0
    %p201 = por %p199, %p200
    %s203 = sadd.s32 %s202, 1
    %p206 = scmp.eq.s32.totalorder %s21, 1
    %p207 = scmp.ne.s32.totalorder %s202, %s204
    %p208 = scmp.eq.s32.totalorder %s21, 0
    %p209 = por %p207, %p208
    %p210 = scmp.ne.s32.totalorder %s202, %s204
    %p211 = scmp.eq.s32.totalorder %s26, 1
    %p212 = por %p210, %p211
    %p213 = scmp.ne.s32.totalorder %s204, %s205
    %p214 = scmp.eq.s32.totalorder %s26, 0
    %p215 = por %p213, %p214
    %p216 = scmp.ne.s32.totalorder %s204, %s205
    %p217 = scmp.eq.s32.totalorder %s27, 1
    %p218 = por %p216, %p217
    %p220 = scmp.ne.s32.totalorder %s205, %s219
    %p221 = scmp.eq.s32.totalorder %s27, 0
    %p222 = por %p220, %p221
    %s224 = sadd.s32 %s223, 1
    %p227 = scmp.eq.s32.totalorder %s21, 1
    %p228 = scmp.ne.s32.totalorder %s223, %s225
    %p229 = scmp.eq.s32.totalorder %s21, 0
    %p230 = por %p228, %p229
    %p231 = scmp.ne.s32.totalorder %s223, %s225
    %p232 = scmp.eq.s32.totalorder %s26, 1
    %p233 = por %p231, %p232
    %p234 = scmp.ne.s32.totalorder %s225, %s226
    %p235 = scmp.eq.s32.totalorder %s26, 0
    %p236 = por %p234, %p235
    %p237 = scmp.ne.s32.totalorder %s225, %s226
    %p238 = scmp.eq.s32.totalorder %s27, 1
    %p239 = por %p237, %p238
    %p241 = scmp.ne.s32.totalorder %s226, %s240
    %p242 = scmp.eq.s32.totalorder %s27, 0
    %p243 = por %p241, %p242
    %s245 = sadd.s32 %s244, 1
    %p248 = scmp.eq.s32.totalorder %s21, 1
    %p249 = scmp.ne.s32.totalorder %s244, %s246
    %p250 = scmp.eq.s32.totalorder %s21, 0
    %p251 = por %p249, %p250
    %p252 = scmp.ne.s32.totalorder %s244, %s246
    %p253 = scmp.eq.s32.totalorder %s26, 1
    %p254 = por %p252, %p253
    %p255 = scmp.ne.s32.totalorder %s246, %s247
    %p256 = scmp.eq.s32.totalorder %s26, 0
    %p257 = por %p255, %p256
    %p258 = scmp.ne.s32.totalorder %s246, %s247
    %p259 = scmp.eq.s32.totalorder %s27, 1
    %p260 = por %p258, %p259
    %p262 = scmp.ne.s32.totalorder %s247, %s261
    %p263 = scmp.eq.s32.totalorder %s27, 0
    %p264 = por %p262, %p263
    %s266 = sadd.s32 %s265, 1
    %p269 = scmp.eq.s32.totalorder %s21, 1
    %p270 = scmp.ne.s32.totalorder %s265, %s267
    %p271 = scmp.eq.s32.totalorder %s21, 0
    %p272 = por %p270, %p271
    %p273 = scmp.ne.s32.totalorder %s265, %s267
    %p274 = scmp.eq.s32.totalorder %s26, 1
    %p275 = por %p273, %p274
    %p276 = scmp.ne.s32.totalorder %s267, %s268
    %p277 = scmp.eq.s32.totalorder %s26, 0
    %p278 = por %p276, %p277
    %p279 = scmp.ne.s32.totalorder %s267, %s268
    %p280 = scmp.eq.s32.totalorder %s27, 1
    %p281 = por %p279, %p280
    %p283 = scmp.ne.s32.totalorder %s268, %s282
    %p284 = scmp.eq.s32.totalorder %s27, 0
    %p285 = por %p283, %p284
    %s287 = sadd.s32 %s286, 1
    %p290 = scmp.eq.s32.totalorder %s21, 1
    %p291 = scmp.ne.s32.totalorder %s286, %s288
    %p292 = scmp.eq.s32.totalorder %s21, 0
    %p293 = por %p291, %p292
    %p294 = scmp.ne.s32.totalorder %s286, %s288
    %p295 = scmp.eq.s32.totalorder %s26, 1
    %p296 = por %p294, %p295
    %p297 = scmp.ne.s32.totalorder %s288, %s289
    %p298 = scmp.eq.s32.totalorder %s26, 0
    %p299 = por %p297, %p298
    %p300 = scmp.ne.s32.totalorder %s288, %s289
    %p301 = scmp.eq.s32.totalorder %s27, 1
    %p302 = por %p300, %p301
    %p304 = scmp.ne.s32.totalorder %s289, %s303
    %p305 = scmp.eq.s32.totalorder %s27, 0
    %p306 = por %p304, %p305
    %s308 = sadd.s32 %s307, 1
    %p311 = scmp.eq.s32.totalorder %s21, 1
    %p312 = scmp.ne.s32.totalorder %s307, %s309
    %p313 = scmp.eq.s32.totalorder %s21, 0
    %p314 = por %p312, %p313
    %p315 = scmp.ne.s32.totalorder %s307, %s309
    %p316 = scmp.eq.s32.totalorder %s26, 1
    %p317 = por %p315, %p316
    %p318 = scmp.ne.s32.totalorder %s309, %s310
    %p319 = scmp.eq.s32.totalorder %s26, 0
    %p320 = por %p318, %p319
    %p321 = scmp.ne.s32.totalorder %s309, %s310
    %p322 = scmp.eq.s32.totalorder %s27, 1
    %p323 = por %p321, %p322
    %p325 = scmp.ne.s32.totalorder %s310, %s324
    %p326 = scmp.eq.s32.totalorder %s27, 0
    %p327 = por %p325, %p326
    %s329 = sadd.s32 %s328, 1
    %p332 = scmp.eq.s32.totalorder %s21, 1
    %p333 = scmp.ne.s32.totalorder %s328, %s330
    %p334 = scmp.eq.s32.totalorder %s21, 0
    %p335 = por %p333, %p334
    %p336 = scmp.ne.s32.totalorder %s328, %s330
    %p337 = scmp.eq.s32.totalorder %s26, 1
    %p338 = por %p336, %p337
    %p339 = scmp.ne.s32.totalorder %s330, %s331
    %p340 = scmp.eq.s32.totalorder %s26, 0
    %p341 = por %p339, %p340
    %p342 = scmp.ne.s32.totalorder %s330, %s331
    %p343 = scmp.eq.s32.totalorder %s27, 1
    %p344 = por %p342, %p343
    %p346 = scmp.ne.s32.totalorder %s331, %s345
    %p347 = scmp.eq.s32.totalorder %s27, 0
    %p348 = por %p346, %p347
    %s349 = ssub.s32 %s21, %s28
    %p350 = scmp.eq.s32.totalorder %s349, 0
    %s352 = sadd.s32 %s351, 1
    %s353 = scalar_select %p350, %s351, %s352
    %p356 = pneg %p350
    %p357 = scmp.eq.s32.totalorder %s21, 1
    %p358 = por %p356, %p357
    %p359 = scmp.ne.s32.totalorder %s351, %s354
    %p360 = scmp.eq.s32.totalorder %s21, 0
    %p361 = por %p359, %p360
    %p362 = scmp.ne.s32.totalorder %s351, %s354
    %p363 = scmp.eq.s32.totalorder %s26, 1
    %p364 = por %p362, %p363
    %p365 = scmp.ne.s32.totalorder %s354, %s355
    %p366 = scmp.eq.s32.totalorder %s26, 0
    %p367 = por %p365, %p366
    %p368 = scmp.ne.s32.totalorder %s354, %s355
    %p369 = scmp.eq.s32.totalorder %s27, 1
    %p370 = por %p368, %p369
    %p372 = scmp.ne.s32.totalorder %s355, %s371
    %p373 = scmp.eq.s32.totalorder %s27, 0
    %p374 = por %p372, %p373
    %p375 = scmp.le.s32.totalorder 1, %s21
    %p376 = scmp.lt.s32.totalorder %s21, 3
    %p377 = pnand %p375, %p376
    %p378 = pneg %p377
    // Predicated region
    $region9: #{cblock_forward.1} parent=5 // pred_check
      _
    $region10: #{cblock_forward.1} parent=5 // pred_check_branch
      %380 = sbr.rel (%p377) target = $region12
    $region11: #{cblock_forward.1} parent=5 // pred_region
      %s381 = ssub.s32 %s21, 1
      // Predicated region
      $region13: #{cblock_forward.1} parent=11 // pred_check
        %p382 = pneg %p68
      $region14: #{cblock_forward.1} parent=11 // pred_check_branch
        %384 = sbr.rel (%p382) target = $region16
      $region15: #{cblock_forward.1} parent=11 // pred_region
        _
      $region16: #{cblock_forward.1} parent=11 // pred_fallthru
        _
      // Predicated region
      $region17: #{cblock_forward.1} parent=11 // pred_check
        %p385 = pneg %p89
      $region18: #{cblock_forward.1} parent=11 // pred_check_branch
        %387 = sbr.rel (%p385) target = $region20
      $region19: #{cblock_forward.1} parent=11 // pred_region
        _
      $region20: #{cblock_forward.1} parent=11 // pred_fallthru
        _
      // Predicated region
      $region21: #{cblock_forward.1} parent=11 // pred_check
        %p388 = pneg %p110
      $region22: #{cblock_forward.1} parent=11 // pred_check_branch
        %390 = sbr.rel (%p388) target = $region24
      $region23: #{cblock_forward.1} parent=11 // pred_region
        _
      $region24: #{cblock_forward.1} parent=11 // pred_fallthru
        _
      // Predicated region
      $region25: #{cblock_forward.1} parent=11 // pred_check
        %p391 = pneg %p131
      $region26: #{cblock_forward.1} parent=11 // pred_check_branch
        %393 = sbr.rel (%p391) target = $region28
      $region27: #{cblock_forward.1} parent=11 // pred_region
        _
      $region28: #{cblock_forward.1} parent=11 // pred_fallthru
        _
      // Predicated region
      $region29: #{cblock_forward.1} parent=11 // pred_check
        %p394 = pneg %p152
      $region30: #{cblock_forward.1} parent=11 // pred_check_branch
        %396 = sbr.rel (%p394) target = $region32
      $region31: #{cblock_forward.1} parent=11 // pred_region
        _
      $region32: #{cblock_forward.1} parent=11 // pred_fallthru
        _
      // Predicated region
      $region33: #{cblock_forward.1} parent=11 // pred_check
        %p397 = pneg %p173
      $region34: #{cblock_forward.1} parent=11 // pred_check_branch
        %399 = sbr.rel (%p397) target = $region36
      $region35: #{cblock_forward.1} parent=11 // pred_region
        _
      $region36: #{cblock_forward.1} parent=11 // pred_fallthru
        _
      // Predicated region
      $region37: #{cblock_forward.1} parent=11 // pred_check
        %p400 = pneg %p194
      $region38: #{cblock_forward.1} parent=11 // pred_check_branch
        %402 = sbr.rel (%p400) target = $region40
      $region39: #{cblock_forward.1} parent=11 // pred_region
        _
      $region40: #{cblock_forward.1} parent=11 // pred_fallthru
        _
      // Predicated region
      $region41: #{cblock_forward.1} parent=11 // pred_check
        %p403 = pneg %p215
      $region42: #{cblock_forward.1} parent=11 // pred_check_branch
        %405 = sbr.rel (%p403) target = $region44
      $region43: #{cblock_forward.1} parent=11 // pred_region
        _
      $region44: #{cblock_forward.1} parent=11 // pred_fallthru
        _
      // Predicated region
      $region45: #{cblock_forward.1} parent=11 // pred_check
        %p406 = pneg %p236
      $region46: #{cblock_forward.1} parent=11 // pred_check_branch
        %408 = sbr.rel (%p406) target = $region48
      $region47: #{cblock_forward.1} parent=11 // pred_region
        _
      $region48: #{cblock_forward.1} parent=11 // pred_fallthru
        _
      // Predicated region
      $region49: #{cblock_forward.1} parent=11 // pred_check
        %p409 = pneg %p257
      $region50: #{cblock_forward.1} parent=11 // pred_check_branch
        %411 = sbr.rel (%p409) target = $region52
      $region51: #{cblock_forward.1} parent=11 // pred_region
        _
      $region52: #{cblock_forward.1} parent=11 // pred_fallthru
        _
      // Predicated region
      $region53: #{cblock_forward.1} parent=11 // pred_check
        %p412 = pneg %p278
      $region54: #{cblock_forward.1} parent=11 // pred_check_branch
        %414 = sbr.rel (%p412) target = $region56
      $region55: #{cblock_forward.1} parent=11 // pred_region
        _
      $region56: #{cblock_forward.1} parent=11 // pred_fallthru
        _
      // Predicated region
      $region57: #{cblock_forward.1} parent=11 // pred_check
        %p415 = pneg %p299
      $region58: #{cblock_forward.1} parent=11 // pred_check_branch
        %417 = sbr.rel (%p415) target = $region60
      $region59: #{cblock_forward.1} parent=11 // pred_region
        _
      $region60: #{cblock_forward.1} parent=11 // pred_fallthru
        _
      // Predicated region
      $region61: #{cblock_forward.1} parent=11 // pred_check
        %p418 = pneg %p320
      $region62: #{cblock_forward.1} parent=11 // pred_check_branch
        %420 = sbr.rel (%p418) target = $region64
      $region63: #{cblock_forward.1} parent=11 // pred_region
        _
      $region64: #{cblock_forward.1} parent=11 // pred_fallthru
        _
      // Predicated region
      $region65: #{cblock_forward.1} parent=11 // pred_check
        %p421 = pneg %p341
      $region66: #{cblock_forward.1} parent=11 // pred_check_branch
        %423 = sbr.rel (%p421) target = $region68
      $region67: #{cblock_forward.1} parent=11 // pred_region
        _
      $region68: #{cblock_forward.1} parent=11 // pred_fallthru
        _
    $region12: #{cblock_forward.1} parent=5 // pred_fallthru
      _
    %p424 = scmp.lt.s32.totalorder %s21, 2
    // Predicated region
    $region69: #{cblock_forward.1} parent=5 // pred_check
      %p425 = pneg %p424
    $region70: #{cblock_forward.1} parent=5 // pred_check_branch
      %427 = sbr.rel (%p425) target = $region72
    $region71: #{cblock_forward.1} parent=5 // pred_region
      // Predicated region
      $region73: #{cblock_forward.1} parent=71 // pred_check
        %p428 = pneg %p41
      $region74: #{cblock_forward.1} parent=71 // pred_check_branch
        %430 = sbr.rel (%p428) target = $region76
      $region75: #{cblock_forward.1} parent=71 // pred_region
        %p431 = scmp.lt.s32.totalorder %s21, 1
        %s432 = scalar_select %p431, %s21, 1
        %s433 = smul.addr %s432, 32
        %s434 = smul.addr %s433, 8
        %s435 = scalar_lea.vmem %s0, %s434
      $region76: #{cblock_forward.1} parent=71 // pred_fallthru
        _
    $region72: #{cblock_forward.1} parent=5 // pred_fallthru
      _
    %p436 = scmp.le.s32.totalorder 1, %s21
    %p437 = scmp.lt.s32.totalorder %s21, 3
    %p438 = pnand %p436, %p437
    %p439 = pneg %p438
    // Predicated region
    $region77: #{cblock_forward.1} parent=5 // pred_check
      _
    $region78: #{cblock_forward.1} parent=5 // pred_check_branch
      %441 = sbr.rel (%p438) target = $region80
    $region79: #{cblock_forward.1} parent=5 // pred_region
      %s442 = ssub.s32 %s21, 1
      %p443 = scmp.lt.s32.totalorder %s26, 1
      %s444 = scalar_select %p443, %s26, 1
      %s445 = smul.addr %s444, 32
      %s446 = smul.addr %s445, 8
      %s447 = scalar_lea.vmem %s0, %s446
      %p448 = pneg %p47
      %p449 = pneg %p44
      %p450 = pneg %p68
      %p451 = pneg %p65
      %p452 = pneg %p89
      %p453 = pneg %p86
      %p454 = pneg %p110
      %p455 = pneg %p107
      %p456 = pneg %p131
      %p457 = pneg %p128
      %p458 = pneg %p152
      %p459 = pneg %p149
      %p460 = pneg %p173
      %p461 = pneg %p170
      %p462 = pneg %p194
      %p463 = pneg %p191
      %p464 = pneg %p215
      %p465 = pneg %p212
      %p466 = pneg %p236
      %p467 = pneg %p233
      %p468 = pneg %p257
      %p469 = pneg %p254
      %p470 = pneg %p278
      %p471 = pneg %p275
      %p472 = pneg %p299
      %p473 = pneg %p296
      %p474 = pneg %p320
      %p475 = pneg %p317
      %p476 = pneg %p341
      %p477 = pneg %p338
      %p478 = pneg %p367
      %p479 = pneg %p364
      %p480 = scmp.lt.s32.totalorder %s26, 1
      %s481 = scalar_select %p480, %s26, 1
      %s482 = smul.addr %s481, 32
      %s483 = smul.addr %s482, 8
      %s484 = scalar_lea.vmem %s15, %s483
      %p485 = scmp.lt.s32.totalorder %s26, 1
      %s486 = scalar_select %p485, %s26, 1
      %s487 = smul.addr %s486, 32
      %s488 = smul.addr %s487, 8
      %s489 = scalar_lea.vmem %s0, %s488
      %p490 = scmp.lt.s32.totalorder %s26, 1
      %s491 = scalar_select %p490, %s26, 1
      %s492 = smul.addr %s491, 32
      %s493 = smul.addr %s492, 8
      %s494 = scalar_lea.vmem %s15, %s493
      %v495 = vld [vmem:[%s489] sm:$0xff]
      %v496 = vld [vmem:[%s489 + $0x8] sm:$0xff]
      %v497 = vld [vmem:[%s489 + $0x10] sm:$0xff]
      %v498 = vld [vmem:[%s489 + $0x18] sm:$0xff]
      %v499 = vld [vmem:[%s489 + $0x20] sm:$0xff]
      %v500 = vld [vmem:[%s489 + $0x28] sm:$0xff]
      %v501 = vld [vmem:[%s489 + $0x30] sm:$0xff]
      %v502 = vld [vmem:[%s489 + $0x38] sm:$0xff]
      %v503 = vld [vmem:[%s489 + $0x40] sm:$0xff]
      %v504 = vld [vmem:[%s489 + $0x48] sm:$0xff]
      %v505 = vld [vmem:[%s489 + $0x50] sm:$0xff]
      %v506 = vld [vmem:[%s489 + $0x58] sm:$0xff]
      %v507 = vld [vmem:[%s489 + $0x60] sm:$0xff]
      %v508 = vld [vmem:[%s489 + $0x68] sm:$0xff]
      %v509 = vld [vmem:[%s489 + $0x70] sm:$0xff]
      %v510 = vld [vmem:[%s489 + $0x78] sm:$0xff]
      %v511 = vld [vmem:[%s489 + $0x80] sm:$0xff]
      %v512 = vld [vmem:[%s489 + $0x88] sm:$0xff]
      %v513 = vld [vmem:[%s489 + $0x90] sm:$0xff]
      %v514 = vld [vmem:[%s489 + $0x98] sm:$0xff]
      %v515 = vld [vmem:[%s489 + $0xa0] sm:$0xff]
      %v516 = vld [vmem:[%s489 + $0xa8] sm:$0xff]
      %v517 = vld [vmem:[%s489 + $0xb0] sm:$0xff]
      %v518 = vld [vmem:[%s489 + $0xb8] sm:$0xff]
      %v519 = vld [vmem:[%s489 + $0xc0] sm:$0xff]
      %v520 = vld [vmem:[%s489 + $0xc8] sm:$0xff]
      %v521 = vld [vmem:[%s489 + $0xd0] sm:$0xff]
      %v522 = vld [vmem:[%s489 + $0xd8] sm:$0xff]
      %v523 = vld [vmem:[%s489 + $0xe0] sm:$0xff]
      %v524 = vld [vmem:[%s489 + $0xe8] sm:$0xff]
      %v525 = vld [vmem:[%s489 + $0xf0] sm:$0xff]
      %v526 = vld [vmem:[%s489 + $0xf8] sm:$0xff]
      %vm527 = vcmask 261120
      %v528 = vsel %vm527, %v495, 0.0
      %529 = vadd.xlane.f32.xlu0 %v528
      %v530 = vpop.xlane.xlu0 %529
      %v531 = vsel %vm527, %v496, 0.0
      %532 = vadd.xlane.f32.xlu0 %v531
      %v533 = vpop.xlane.xlu0 %532
      %v534 = vsel %vm527, %v497, 0.0
      %535 = vadd.xlane.f32.xlu0 %v534
      %v536 = vpop.xlane.xlu0 %535
      %v537 = vsel %vm527, %v498, 0.0
      %538 = vadd.xlane.f32.xlu0 %v537
      %v539 = vpop.xlane.xlu0 %538
      %v540 = vsel %vm527, %v499, 0.0
      %541 = vadd.xlane.f32.xlu0 %v540
      %v542 = vpop.xlane.xlu0 %541
      %v543 = vsel %vm527, %v500, 0.0
      %544 = vadd.xlane.f32.xlu0 %v543
      %v545 = vpop.xlane.xlu0 %544
      %v546 = vsel %vm527, %v501, 0.0
      %547 = vadd.xlane.f32.xlu0 %v546
      %v548 = vpop.xlane.xlu0 %547
      %v549 = vsel %vm527, %v502, 0.0
      %550 = vadd.xlane.f32.xlu0 %v549
      %v551 = vpop.xlane.xlu0 %550
      %v552 = vsel %vm527, %v503, 0.0
      %553 = vadd.xlane.f32.xlu0 %v552
      %v554 = vpop.xlane.xlu0 %553
      %v555 = vsel %vm527, %v504, 0.0
      %556 = vadd.xlane.f32.xlu0 %v555
      %v557 = vpop.xlane.xlu0 %556
      %v558 = vsel %vm527, %v505, 0.0
      %559 = vadd.xlane.f32.xlu0 %v558
      %v560 = vpop.xlane.xlu0 %559
      %v561 = vsel %vm527, %v506, 0.0
      %562 = vadd.xlane.f32.xlu0 %v561
      %v563 = vpop.xlane.xlu0 %562
      %v564 = vsel %vm527, %v507, 0.0
      %565 = vadd.xlane.f32.xlu0 %v564
      %v566 = vpop.xlane.xlu0 %565
      %v567 = vsel %vm527, %v508, 0.0
      %568 = vadd.xlane.f32.xlu0 %v567
      %v569 = vpop.xlane.xlu0 %568
      %v570 = vsel %vm527, %v509, 0.0
      %571 = vadd.xlane.f32.xlu0 %v570
      %v572 = vpop.xlane.xlu0 %571
      %v573 = vsel %vm527, %v510, 0.0
      %574 = vadd.xlane.f32.xlu0 %v573
      %v575 = vpop.xlane.xlu0 %574
      %v576 = vsel %vm527, %v511, 0.0
      %577 = vadd.xlane.f32.xlu0 %v576
      %v578 = vpop.xlane.xlu0 %577
      %v579 = vsel %vm527, %v512, 0.0
      %580 = vadd.xlane.f32.xlu0 %v579
      %v581 = vpop.xlane.xlu0 %580
      %v582 = vsel %vm527, %v513, 0.0
      %583 = vadd.xlane.f32.xlu0 %v582
      %v584 = vpop.xlane.xlu0 %583
      %v585 = vsel %vm527, %v514, 0.0
      %586 = vadd.xlane.f32.xlu0 %v585
      %v587 = vpop.xlane.xlu0 %586
      %v588 = vsel %vm527, %v515, 0.0
      %589 = vadd.xlane.f32.xlu0 %v588
      %v590 = vpop.xlane.xlu0 %589
      %v591 = vsel %vm527, %v516, 0.0
      %592 = vadd.xlane.f32.xlu0 %v591
      %v593 = vpop.xlane.xlu0 %592
      %v594 = vsel %vm527, %v517, 0.0
      %595 = vadd.xlane.f32.xlu0 %v594
      %v596 = vpop.xlane.xlu0 %595
      %v597 = vsel %vm527, %v518, 0.0
      %598 = vadd.xlane.f32.xlu0 %v597
      %v599 = vpop.xlane.xlu0 %598
      %v600 = vsel %vm527, %v519, 0.0
      %601 = vadd.xlane.f32.xlu0 %v600
      %v602 = vpop.xlane.xlu0 %601
      %v603 = vsel %vm527, %v520, 0.0
      %604 = vadd.xlane.f32.xlu0 %v603
      %v605 = vpop.xlane.xlu0 %604
      %v606 = vsel %vm527, %v521, 0.0
      %607 = vadd.xlane.f32.xlu0 %v606
      %v608 = vpop.xlane.xlu0 %607
      %v609 = vsel %vm527, %v522, 0.0
      %610 = vadd.xlane.f32.xlu0 %v609
      %v611 = vpop.xlane.xlu0 %610
      %v612 = vsel %vm527, %v523, 0.0
      %613 = vadd.xlane.f32.xlu0 %v612
      %v614 = vpop.xlane.xlu0 %613
      %v615 = vsel %vm527, %v524, 0.0
      %616 = vadd.xlane.f32.xlu0 %v615
      %v617 = vpop.xlane.xlu0 %616
      %v618 = vsel %vm527, %v525, 0.0
      %619 = vadd.xlane.f32.xlu0 %v618
      %v620 = vpop.xlane.xlu0 %619
      %v621 = vsel %vm527, %v526, 0.0
      %622 = vadd.xlane.f32.xlu0 %v621
      %v623 = vpop.xlane.xlu0 %622
      %v624 = vrcp.pop 32.0
      %v625 = vmul.f32 32.0, %v624
      %v626 = vsub.f32 1.0, %v625
      %v627 = vmul.f32 %v624, %v626
      %v628 = vadd.f32 %v624, %v627
      %vm629 = vweird.f32 %v624
      %v630 = vsel %vm629, %v624, %v628
      %v631 = vmul.f32 %v530, %v630
      %v632 = vmul.f32 %v533, %v630
      %v633 = vmul.f32 %v536, %v630
      %v634 = vmul.f32 %v539, %v630
      %v635 = vmul.f32 %v542, %v630
      %v636 = vmul.f32 %v545, %v630
      %v637 = vmul.f32 %v548, %v630
      %v638 = vmul.f32 %v551, %v630
      %v639 = vmul.f32 %v554, %v630
      %v640 = vmul.f32 %v557, %v630
      %v641 = vmul.f32 %v560, %v630
      %v642 = vmul.f32 %v563, %v630
      %v643 = vmul.f32 %v566, %v630
      %v644 = vmul.f32 %v569, %v630
      %v645 = vmul.f32 %v572, %v630
      %v646 = vmul.f32 %v575, %v630
      %v647 = vmul.f32 %v578, %v630
      %v648 = vmul.f32 %v581, %v630
      %v649 = vmul.f32 %v584, %v630
      %v650 = vmul.f32 %v587, %v630
      %v651 = vmul.f32 %v590, %v630
      %v652 = vmul.f32 %v593, %v630
      %v653 = vmul.f32 %v596, %v630
      %v654 = vmul.f32 %v599, %v630
      %v655 = vmul.f32 %v602, %v630
      %v656 = vmul.f32 %v605, %v630
      %v657 = vmul.f32 %v608, %v630
      %v658 = vmul.f32 %v611, %v630
      %v659 = vmul.f32 %v614, %v630
      %v660 = vmul.f32 %v617, %v630
      %v661 = vmul.f32 %v620, %v630
      %v662 = vmul.f32 %v623, %v630
      %v663 = vsub.f32 %v495, %v631
      %v664 = vsub.f32 %v496, %v632
      %v665 = vsub.f32 %v497, %v633
      %v666 = vsub.f32 %v498, %v634
      %v667 = vsub.f32 %v499, %v635
      %v668 = vsub.f32 %v500, %v636
      %v669 = vsub.f32 %v501, %v637
      %v670 = vsub.f32 %v502, %v638
      %v671 = vsub.f32 %v503, %v639
      %v672 = vsub.f32 %v504, %v640
      %v673 = vsub.f32 %v505, %v641
      %v674 = vsub.f32 %v506, %v642
      %v675 = vsub.f32 %v507, %v643
      %v676 = vsub.f32 %v508, %v644
      %v677 = vsub.f32 %v509, %v645
      %v678 = vsub.f32 %v510, %v646
      %v679 = vsub.f32 %v511, %v647
      %v680 = vsub.f32 %v512, %v648
      %v681 = vsub.f32 %v513, %v649
      %v682 = vsub.f32 %v514, %v650
      %v683 = vsub.f32 %v515, %v651
      %v684 = vsub.f32 %v516, %v652
      %v685 = vsub.f32 %v517, %v653
      %v686 = vsub.f32 %v518, %v654
      %v687 = vsub.f32 %v519, %v655
      %v688 = vsub.f32 %v520, %v656
      %v689 = vsub.f32 %v521, %v657
      %v690 = vsub.f32 %v522, %v658
      %v691 = vsub.f32 %v523, %v659
      %v692 = vsub.f32 %v524, %v660
      %v693 = vsub.f32 %v525, %v661
      %v694 = vsub.f32 %v526, %v662
      %v695 = vmul.f32 %v663, %v663
      %v696 = vmul.f32 %v664, %v664
      %v697 = vmul.f32 %v665, %v665
      %v698 = vmul.f32 %v666, %v666
      %v699 = vmul.f32 %v667, %v667
      %v700 = vmul.f32 %v668, %v668
      %v701 = vmul.f32 %v669, %v669
      %v702 = vmul.f32 %v670, %v670
      %v703 = vmul.f32 %v671, %v671
      %v704 = vmul.f32 %v672, %v672
      %v705 = vmul.f32 %v673, %v673
      %v706 = vmul.f32 %v674, %v674
      %v707 = vmul.f32 %v675, %v675
      %v708 = vmul.f32 %v676, %v676
      %v709 = vmul.f32 %v677, %v677
      %v710 = vmul.f32 %v678, %v678
      %v711 = vmul.f32 %v679, %v679
      %v712 = vmul.f32 %v680, %v680
      %v713 = vmul.f32 %v681, %v681
      %v714 = vmul.f32 %v682, %v682
      %v715 = vmul.f32 %v683, %v683
      %v716 = vmul.f32 %v684, %v684
      %v717 = vmul.f32 %v685, %v685
      %v718 = vmul.f32 %v686, %v686
      %v719 = vmul.f32 %v687, %v687
      %v720 = vmul.f32 %v688, %v688
      %v721 = vmul.f32 %v689, %v689
      %v722 = vmul.f32 %v690, %v690
      %v723 = vmul.f32 %v691, %v691
      %v724 = vmul.f32 %v692, %v692
      %v725 = vmul.f32 %v693, %v693
      %v726 = vmul.f32 %v694, %v694
      %v727 = vsel %vm527, %v695, 0.0
      %728 = vadd.xlane.f32.xlu0 %v727
      %v729 = vpop.xlane.xlu0 %728
      %v730 = vsel %vm527, %v696, 0.0
      %731 = vadd.xlane.f32.xlu0 %v730
      %v732 = vpop.xlane.xlu0 %731
      %v733 = vsel %vm527, %v697, 0.0
      %734 = vadd.xlane.f32.xlu0 %v733
      %v735 = vpop.xlane.xlu0 %734
      %v736 = vsel %vm527, %v698, 0.0
      %737 = vadd.xlane.f32.xlu0 %v736
      %v738 = vpop.xlane.xlu0 %737
      %v739 = vsel %vm527, %v699, 0.0
      %740 = vadd.xlane.f32.xlu0 %v739
      %v741 = vpop.xlane.xlu0 %740
      %v742 = vsel %vm527, %v700, 0.0
      %743 = vadd.xlane.f32.xlu0 %v742
      %v744 = vpop.xlane.xlu0 %743
      %v745 = vsel %vm527, %v701, 0.0
      %746 = vadd.xlane.f32.xlu0 %v745
      %v747 = vpop.xlane.xlu0 %746
      %v748 = vsel %vm527, %v702, 0.0
      %749 = vadd.xlane.f32.xlu0 %v748
      %v750 = vpop.xlane.xlu0 %749
      %v751 = vsel %vm527, %v703, 0.0
      %752 = vadd.xlane.f32.xlu0 %v751
      %v753 = vpop.xlane.xlu0 %752
      %v754 = vsel %vm527, %v704, 0.0
      %755 = vadd.xlane.f32.xlu0 %v754
      %v756 = vpop.xlane.xlu0 %755
      %v757 = vsel %vm527, %v705, 0.0
      %758 = vadd.xlane.f32.xlu0 %v757
      %v759 = vpop.xlane.xlu0 %758
      %v760 = vsel %vm527, %v706, 0.0
      %761 = vadd.xlane.f32.xlu0 %v760
      %v762 = vpop.xlane.xlu0 %761
      %v763 = vsel %vm527, %v707, 0.0
      %764 = vadd.xlane.f32.xlu0 %v763
      %v765 = vpop.xlane.xlu0 %764
      %v766 = vsel %vm527, %v708, 0.0
      %767 = vadd.xlane.f32.xlu0 %v766
      %v768 = vpop.xlane.xlu0 %767
      %v769 = vsel %vm527, %v709, 0.0
      %770 = vadd.xlane.f32.xlu0 %v769
      %v771 = vpop.xlane.xlu0 %770
      %v772 = vsel %vm527, %v710, 0.0
      %773 = vadd.xlane.f32.xlu0 %v772
      %v774 = vpop.xlane.xlu0 %773
      %v775 = vsel %vm527, %v711, 0.0
      %776 = vadd.xlane.f32.xlu0 %v775
      %v777 = vpop.xlane.xlu0 %776
      %v778 = vsel %vm527, %v712, 0.0
      %779 = vadd.xlane.f32.xlu0 %v778
      %v780 = vpop.xlane.xlu0 %779
      %v781 = vsel %vm527, %v713, 0.0
      %782 = vadd.xlane.f32.xlu0 %v781
      %v783 = vpop.xlane.xlu0 %782
      %v784 = vsel %vm527, %v714, 0.0
      %785 = vadd.xlane.f32.xlu0 %v784
      %v786 = vpop.xlane.xlu0 %785
      %v787 = vsel %vm527, %v715, 0.0
      %788 = vadd.xlane.f32.xlu0 %v787
      %v789 = vpop.xlane.xlu0 %788
      %v790 = vsel %vm527, %v716, 0.0
      %791 = vadd.xlane.f32.xlu0 %v790
      %v792 = vpop.xlane.xlu0 %791
      %v793 = vsel %vm527, %v717, 0.0
      %794 = vadd.xlane.f32.xlu0 %v793
      %v795 = vpop.xlane.xlu0 %794
      %v796 = vsel %vm527, %v718, 0.0
      %797 = vadd.xlane.f32.xlu0 %v796
      %v798 = vpop.xlane.xlu0 %797
      %v799 = vsel %vm527, %v719, 0.0
      %800 = vadd.xlane.f32.xlu0 %v799
      %v801 = vpop.xlane.xlu0 %800
      %v802 = vsel %vm527, %v720, 0.0
      %803 = vadd.xlane.f32.xlu0 %v802
      %v804 = vpop.xlane.xlu0 %803
      %v805 = vsel %vm527, %v721, 0.0
      %806 = vadd.xlane.f32.xlu0 %v805
      %v807 = vpop.xlane.xlu0 %806
      %v808 = vsel %vm527, %v722, 0.0
      %809 = vadd.xlane.f32.xlu0 %v808
      %v810 = vpop.xlane.xlu0 %809
      %v811 = vsel %vm527, %v723, 0.0
      %812 = vadd.xlane.f32.xlu0 %v811
      %v813 = vpop.xlane.xlu0 %812
      %v814 = vsel %vm527, %v724, 0.0
      %815 = vadd.xlane.f32.xlu0 %v814
      %v816 = vpop.xlane.xlu0 %815
      %v817 = vsel %vm527, %v725, 0.0
      %818 = vadd.xlane.f32.xlu0 %v817
      %v819 = vpop.xlane.xlu0 %818
      %v820 = vsel %vm527, %v726, 0.0
      %821 = vadd.xlane.f32.xlu0 %v820
      %v822 = vpop.xlane.xlu0 %821
      %v823 = vmul.f32 %v729, %v630
      %v824 = vmul.f32 %v732, %v630
      %v825 = vmul.f32 %v735, %v630
      %v826 = vmul.f32 %v738, %v630
      %v827 = vmul.f32 %v741, %v630
      %v828 = vmul.f32 %v744, %v630
      %v829 = vmul.f32 %v747, %v630
      %v830 = vmul.f32 %v750, %v630
      %v831 = vmul.f32 %v753, %v630
      %v832 = vmul.f32 %v756, %v630
      %v833 = vmul.f32 %v759, %v630
      %v834 = vmul.f32 %v762, %v630
      %v835 = vmul.f32 %v765, %v630
      %v836 = vmul.f32 %v768, %v630
      %v837 = vmul.f32 %v771, %v630
      %v838 = vmul.f32 %v774, %v630
      %v839 = vmul.f32 %v777, %v630
      %v840 = vmul.f32 %v780, %v630
      %v841 = vmul.f32 %v783, %v630
      %v842 = vmul.f32 %v786, %v630
      %v843 = vmul.f32 %v789, %v630
      %v844 = vmul.f32 %v792, %v630
      %v845 = vmul.f32 %v795, %v630
      %v846 = vmul.f32 %v798, %v630
      %v847 = vmul.f32 %v801, %v630
      %v848 = vmul.f32 %v804, %v630
      %v849 = vmul.f32 %v807, %v630
      %v850 = vmul.f32 %v810, %v630
      %v851 = vmul.f32 %v813, %v630
      %v852 = vmul.f32 %v816, %v630
      %v853 = vmul.f32 %v819, %v630
      %v854 = vmul.f32 %v822, %v630
      %v855 = vadd.f32 %v823, 1e-05
      %v856 = vadd.f32 %v824, 1e-05
      %v857 = vadd.f32 %v825, 1e-05
      %v858 = vadd.f32 %v826, 1e-05
      %v859 = vadd.f32 %v827, 1e-05
      %v860 = vadd.f32 %v828, 1e-05
      %v861 = vadd.f32 %v829, 1e-05
      %v862 = vadd.f32 %v830, 1e-05
      %v863 = vadd.f32 %v831, 1e-05
      %v864 = vadd.f32 %v832, 1e-05
      %v865 = vadd.f32 %v833, 1e-05
      %v866 = vadd.f32 %v834, 1e-05
      %v867 = vadd.f32 %v835, 1e-05
      %v868 = vadd.f32 %v836, 1e-05
      %v869 = vadd.f32 %v837, 1e-05
      %v870 = vadd.f32 %v838, 1e-05
      %v871 = vadd.f32 %v839, 1e-05
      %v872 = vadd.f32 %v840, 1e-05
      %v873 = vadd.f32 %v841, 1e-05
      %v874 = vadd.f32 %v842, 1e-05
      %v875 = vadd.f32 %v843, 1e-05
      %v876 = vadd.f32 %v844, 1e-05
      %v877 = vadd.f32 %v845, 1e-05
      %v878 = vadd.f32 %v846, 1e-05
      %v879 = vadd.f32 %v847, 1e-05
      %v880 = vadd.f32 %v848, 1e-05
      %v881 = vadd.f32 %v849, 1e-05
      %v882 = vadd.f32 %v850, 1e-05
      %v883 = vadd.f32 %v851, 1e-05
      %v884 = vadd.f32 %v852, 1e-05
      %v885 = vadd.f32 %v853, 1e-05
      %v886 = vadd.f32 %v854, 1e-05
      %v887 = vrsqrt.pop %v855
      %v888 = vmul.f32 %v887, %v855
      %v889 = vmul.f32 %v888, %v887
      %v890 = vmul.f32 0.5, %v889
      %v891 = vsub.f32 1.5, %v890
      %v892 = vmul.f32 %v887, %v891
      %vm893 = vweird.f32 %v855
      %vm894 = vweird.f32 %v887
      %vm895 = vmor %vm893, %vm894
      %v896 = vsel %vm895, %v887, %v892
      %v897 = vrsqrt.pop %v856
      %v898 = vmul.f32 %v897, %v856
      %v899 = vmul.f32 %v898, %v897
      %v900 = vmul.f32 0.5, %v899
      %v901 = vsub.f32 1.5, %v900
      %v902 = vmul.f32 %v897, %v901
      %vm903 = vweird.f32 %v856
      %vm904 = vweird.f32 %v897
      %vm905 = vmor %vm903, %vm904
      %v906 = vsel %vm905, %v897, %v902
      %v907 = vrsqrt.pop %v857
      %v908 = vmul.f32 %v907, %v857
      %v909 = vmul.f32 %v908, %v907
      %v910 = vmul.f32 0.5, %v909
      %v911 = vsub.f32 1.5, %v910
      %v912 = vmul.f32 %v907, %v911
      %vm913 = vweird.f32 %v857
      %vm914 = vweird.f32 %v907
      %vm915 = vmor %vm913, %vm914
      %v916 = vsel %vm915, %v907, %v912
      %v917 = vrsqrt.pop %v858
      %v918 = vmul.f32 %v917, %v858
      %v919 = vmul.f32 %v918, %v917
      %v920 = vmul.f32 0.5, %v919
      %v921 = vsub.f32 1.5, %v920
      %v922 = vmul.f32 %v917, %v921
      %vm923 = vweird.f32 %v858
      %vm924 = vweird.f32 %v917
      %vm925 = vmor %vm923, %vm924
      %v926 = vsel %vm925, %v917, %v922
      %v927 = vrsqrt.pop %v859
      %v928 = vmul.f32 %v927, %v859
      %v929 = vmul.f32 %v928, %v927
      %v930 = vmul.f32 0.5, %v929
      %v931 = vsub.f32 1.5, %v930
      %v932 = vmul.f32 %v927, %v931
      %vm933 = vweird.f32 %v859
      %vm934 = vweird.f32 %v927
      %vm935 = vmor %vm933, %vm934
      %v936 = vsel %vm935, %v927, %v932
      %v937 = vrsqrt.pop %v860
      %v938 = vmul.f32 %v937, %v860
      %v939 = vmul.f32 %v938, %v937
      %v940 = vmul.f32 0.5, %v939
      %v941 = vsub.f32 1.5, %v940
      %v942 = vmul.f32 %v937, %v941
      %vm943 = vweird.f32 %v860
      %vm944 = vweird.f32 %v937
      %vm945 = vmor %vm943, %vm944
      %v946 = vsel %vm945, %v937, %v942
      %v947 = vrsqrt.pop %v861
      %v948 = vmul.f32 %v947, %v861
      %v949 = vmul.f32 %v948, %v947
      %v950 = vmul.f32 0.5, %v949
      %v951 = vsub.f32 1.5, %v950
      %v952 = vmul.f32 %v947, %v951
      %vm953 = vweird.f32 %v861
      %vm954 = vweird.f32 %v947
      %vm955 = vmor %vm953, %vm954
      %v956 = vsel %vm955, %v947, %v952
      %v957 = vrsqrt.pop %v862
      %v958 = vmul.f32 %v957, %v862
      %v959 = vmul.f32 %v958, %v957
      %v960 = vmul.f32 0.5, %v959
      %v961 = vsub.f32 1.5, %v960
      %v962 = vmul.f32 %v957, %v961
      %vm963 = vweird.f32 %v862
      %vm964 = vweird.f32 %v957
      %vm965 = vmor %vm963, %vm964
      %v966 = vsel %vm965, %v957, %v962
      %v967 = vrsqrt.pop %v863
      %v968 = vmul.f32 %v967, %v863
      %v969 = vmul.f32 %v968, %v967
      %v970 = vmul.f32 0.5, %v969
      %v971 = vsub.f32 1.5, %v970
      %v972 = vmul.f32 %v967, %v971
      %vm973 = vweird.f32 %v863
      %vm974 = vweird.f32 %v967
      %vm975 = vmor %vm973, %vm974
      %v976 = vsel %vm975, %v967, %v972
      %v977 = vrsqrt.pop %v864
      %v978 = vmul.f32 %v977, %v864
      %v979 = vmul.f32 %v978, %v977
      %v980 = vmul.f32 0.5, %v979
      %v981 = vsub.f32 1.5, %v980
      %v982 = vmul.f32 %v977, %v981
      %vm983 = vweird.f32 %v864
      %vm984 = vweird.f32 %v977
      %vm985 = vmor %vm983, %vm984
      %v986 = vsel %vm985, %v977, %v982
      %v987 = vrsqrt.pop %v865
      %v988 = vmul.f32 %v987, %v865
      %v989 = vmul.f32 %v988, %v987
      %v990 = vmul.f32 0.5, %v989
      %v991 = vsub.f32 1.5, %v990
      %v992 = vmul.f32 %v987, %v991
      %vm993 = vweird.f32 %v865
      %vm994 = vweird.f32 %v987
      %vm995 = vmor %vm993, %vm994
      %v996 = vsel %vm995, %v987, %v992
      %v997 = vrsqrt.pop %v866
      %v998 = vmul.f32 %v997, %v866
      %v999 = vmul.f32 %v998, %v997
      %v1000 = vmul.f32 0.5, %v999
      %v1001 = vsub.f32 1.5, %v1000
      %v1002 = vmul.f32 %v997, %v1001
      %vm1003 = vweird.f32 %v866
      %vm1004 = vweird.f32 %v997
      %vm1005 = vmor %vm1003, %vm1004
      %v1006 = vsel %vm1005, %v997, %v1002
      %v1007 = vrsqrt.pop %v867
      %v1008 = vmul.f32 %v1007, %v867
      %v1009 = vmul.f32 %v1008, %v1007
      %v1010 = vmul.f32 0.5, %v1009
      %v1011 = vsub.f32 1.5, %v1010
      %v1012 = vmul.f32 %v1007, %v1011
      %vm1013 = vweird.f32 %v867
      %vm1014 = vweird.f32 %v1007
      %vm1015 = vmor %vm1013, %vm1014
      %v1016 = vsel %vm1015, %v1007, %v1012
      %v1017 = vrsqrt.pop %v868
      %v1018 = vmul.f32 %v1017, %v868
      %v1019 = vmul.f32 %v1018, %v1017
      %v1020 = vmul.f32 0.5, %v1019
      %v1021 = vsub.f32 1.5, %v1020
      %v1022 = vmul.f32 %v1017, %v1021
      %vm1023 = vweird.f32 %v868
      %vm1024 = vweird.f32 %v1017
      %vm1025 = vmor %vm1023, %vm1024
      %v1026 = vsel %vm1025, %v1017, %v1022
      %v1027 = vrsqrt.pop %v869
      %v1028 = vmul.f32 %v1027, %v869
      %v1029 = vmul.f32 %v1028, %v1027
      %v1030 = vmul.f32 0.5, %v1029
      %v1031 = vsub.f32 1.5, %v1030
      %v1032 = vmul.f32 %v1027, %v1031
      %vm1033 = vweird.f32 %v869
      %vm1034 = vweird.f32 %v1027
      %vm1035 = vmor %vm1033, %vm1034
      %v1036 = vsel %vm1035, %v1027, %v1032
      %v1037 = vrsqrt.pop %v870
      %v1038 = vmul.f32 %v1037, %v870
      %v1039 = vmul.f32 %v1038, %v1037
      %v1040 = vmul.f32 0.5, %v1039
      %v1041 = vsub.f32 1.5, %v1040
      %v1042 = vmul.f32 %v1037, %v1041
      %vm1043 = vweird.f32 %v870
      %vm1044 = vweird.f32 %v1037
      %vm1045 = vmor %vm1043, %vm1044
      %v1046 = vsel %vm1045, %v1037, %v1042
      %v1047 = vrsqrt.pop %v871
      %v1048 = vmul.f32 %v1047, %v871
      %v1049 = vmul.f32 %v1048, %v1047
      %v1050 = vmul.f32 0.5, %v1049
      %v1051 = vsub.f32 1.5, %v1050
      %v1052 = vmul.f32 %v1047, %v1051
      %vm1053 = vweird.f32 %v871
      %vm1054 = vweird.f32 %v1047
      %vm1055 = vmor %vm1053, %vm1054
      %v1056 = vsel %vm1055, %v1047, %v1052
      %v1057 = vrsqrt.pop %v872
      %v1058 = vmul.f32 %v1057, %v872
      %v1059 = vmul.f32 %v1058, %v1057
      %v1060 = vmul.f32 0.5, %v1059
      %v1061 = vsub.f32 1.5, %v1060
      %v1062 = vmul.f32 %v1057, %v1061
      %vm1063 = vweird.f32 %v872
      %vm1064 = vweird.f32 %v1057
      %vm1065 = vmor %vm1063, %vm1064
      %v1066 = vsel %vm1065, %v1057, %v1062
      %v1067 = vrsqrt.pop %v873
      %v1068 = vmul.f32 %v1067, %v873
      %v1069 = vmul.f32 %v1068, %v1067
      %v1070 = vmul.f32 0.5, %v1069
      %v1071 = vsub.f32 1.5, %v1070
      %v1072 = vmul.f32 %v1067, %v1071
      %vm1073 = vweird.f32 %v873
      %vm1074 = vweird.f32 %v1067
      %vm1075 = vmor %vm1073, %vm1074
      %v1076 = vsel %vm1075, %v1067, %v1072
      %v1077 = vrsqrt.pop %v874
      %v1078 = vmul.f32 %v1077, %v874
      %v1079 = vmul.f32 %v1078, %v1077
      %v1080 = vmul.f32 0.5, %v1079
      %v1081 = vsub.f32 1.5, %v1080
      %v1082 = vmul.f32 %v1077, %v1081
      %vm1083 = vweird.f32 %v874
      %vm1084 = vweird.f32 %v1077
      %vm1085 = vmor %vm1083, %vm1084
      %v1086 = vsel %vm1085, %v1077, %v1082
      %v1087 = vrsqrt.pop %v875
      %v1088 = vmul.f32 %v1087, %v875
      %v1089 = vmul.f32 %v1088, %v1087
      %v1090 = vmul.f32 0.5, %v1089
      %v1091 = vsub.f32 1.5, %v1090
      %v1092 = vmul.f32 %v1087, %v1091
      %vm1093 = vweird.f32 %v875
      %vm1094 = vweird.f32 %v1087
      %vm1095 = vmor %vm1093, %vm1094
      %v1096 = vsel %vm1095, %v1087, %v1092
      %v1097 = vrsqrt.pop %v876
      %v1098 = vmul.f32 %v1097, %v876
      %v1099 = vmul.f32 %v1098, %v1097
      %v1100 = vmul.f32 0.5, %v1099
      %v1101 = vsub.f32 1.5, %v1100
      %v1102 = vmul.f32 %v1097, %v1101
      %vm1103 = vweird.f32 %v876
      %vm1104 = vweird.f32 %v1097
      %vm1105 = vmor %vm1103, %vm1104
      %v1106 = vsel %vm1105, %v1097, %v1102
      %v1107 = vrsqrt.pop %v877
      %v1108 = vmul.f32 %v1107, %v877
      %v1109 = vmul.f32 %v1108, %v1107
      %v1110 = vmul.f32 0.5, %v1109
      %v1111 = vsub.f32 1.5, %v1110
      %v1112 = vmul.f32 %v1107, %v1111
      %vm1113 = vweird.f32 %v877
      %vm1114 = vweird.f32 %v1107
      %vm1115 = vmor %vm1113, %vm1114
      %v1116 = vsel %vm1115, %v1107, %v1112
      %v1117 = vrsqrt.pop %v878
      %v1118 = vmul.f32 %v1117, %v878
      %v1119 = vmul.f32 %v1118, %v1117
      %v1120 = vmul.f32 0.5, %v1119
      %v1121 = vsub.f32 1.5, %v1120
      %v1122 = vmul.f32 %v1117, %v1121
      %vm1123 = vweird.f32 %v878
      %vm1124 = vweird.f32 %v1117
      %vm1125 = vmor %vm1123, %vm1124
      %v1126 = vsel %vm1125, %v1117, %v1122
      %v1127 = vrsqrt.pop %v879
      %v1128 = vmul.f32 %v1127, %v879
      %v1129 = vmul.f32 %v1128, %v1127
      %v1130 = vmul.f32 0.5, %v1129
      %v1131 = vsub.f32 1.5, %v1130
      %v1132 = vmul.f32 %v1127, %v1131
      %vm1133 = vweird.f32 %v879
      %vm1134 = vweird.f32 %v1127
      %vm1135 = vmor %vm1133, %vm1134
      %v1136 = vsel %vm1135, %v1127, %v1132
      %v1137 = vrsqrt.pop %v880
      %v1138 = vmul.f32 %v1137, %v880
      %v1139 = vmul.f32 %v1138, %v1137
      %v1140 = vmul.f32 0.5, %v1139
      %v1141 = vsub.f32 1.5, %v1140
      %v1142 = vmul.f32 %v1137, %v1141
      %vm1143 = vweird.f32 %v880
      %vm1144 = vweird.f32 %v1137
      %vm1145 = vmor %vm1143, %vm1144
      %v1146 = vsel %vm1145, %v1137, %v1142
      %v1147 = vrsqrt.pop %v881
      %v1148 = vmul.f32 %v1147, %v881
      %v1149 = vmul.f32 %v1148, %v1147
      %v1150 = vmul.f32 0.5, %v1149
      %v1151 = vsub.f32 1.5, %v1150
      %v1152 = vmul.f32 %v1147, %v1151
      %vm1153 = vweird.f32 %v881
      %vm1154 = vweird.f32 %v1147
      %vm1155 = vmor %vm1153, %vm1154
      %v1156 = vsel %vm1155, %v1147, %v1152
      %v1157 = vrsqrt.pop %v882
      %v1158 = vmul.f32 %v1157, %v882
      %v1159 = vmul.f32 %v1158, %v1157
      %v1160 = vmul.f32 0.5, %v1159
      %v1161 = vsub.f32 1.5, %v1160
      %v1162 = vmul.f32 %v1157, %v1161
      %vm1163 = vweird.f32 %v882
      %vm1164 = vweird.f32 %v1157
      %vm1165 = vmor %vm1163, %vm1164
      %v1166 = vsel %vm1165, %v1157, %v1162
      %v1167 = vrsqrt.pop %v883
      %v1168 = vmul.f32 %v1167, %v883
      %v1169 = vmul.f32 %v1168, %v1167
      %v1170 = vmul.f32 0.5, %v1169
      %v1171 = vsub.f32 1.5, %v1170
      %v1172 = vmul.f32 %v1167, %v1171
      %vm1173 = vweird.f32 %v883
      %vm1174 = vweird.f32 %v1167
      %vm1175 = vmor %vm1173, %vm1174
      %v1176 = vsel %vm1175, %v1167, %v1172
      %v1177 = vrsqrt.pop %v884
      %v1178 = vmul.f32 %v1177, %v884
      %v1179 = vmul.f32 %v1178, %v1177
      %v1180 = vmul.f32 0.5, %v1179
      %v1181 = vsub.f32 1.5, %v1180
      %v1182 = vmul.f32 %v1177, %v1181
      %vm1183 = vweird.f32 %v884
      %vm1184 = vweird.f32 %v1177
      %vm1185 = vmor %vm1183, %vm1184
      %v1186 = vsel %vm1185, %v1177, %v1182
      %v1187 = vrsqrt.pop %v885
      %v1188 = vmul.f32 %v1187, %v885
      %v1189 = vmul.f32 %v1188, %v1187
      %v1190 = vmul.f32 0.5, %v1189
      %v1191 = vsub.f32 1.5, %v1190
      %v1192 = vmul.f32 %v1187, %v1191
      %vm1193 = vweird.f32 %v885
      %vm1194 = vweird.f32 %v1187
      %vm1195 = vmor %vm1193, %vm1194
      %v1196 = vsel %vm1195, %v1187, %v1192
      %v1197 = vrsqrt.pop %v886
      %v1198 = vmul.f32 %v1197, %v886
      %v1199 = vmul.f32 %v1198, %v1197
      %v1200 = vmul.f32 0.5, %v1199
      %v1201 = vsub.f32 1.5, %v1200
      %v1202 = vmul.f32 %v1197, %v1201
      %vm1203 = vweird.f32 %v886
      %vm1204 = vweird.f32 %v1197
      %vm1205 = vmor %vm1203, %vm1204
      %v1206 = vsel %vm1205, %v1197, %v1202
      %v1207 = vmul.f32 %v663, %v896
      %v1208 = vmul.f32 %v664, %v906
      %v1209 = vmul.f32 %v665, %v916
      %v1210 = vmul.f32 %v666, %v926
      %v1211 = vmul.f32 %v667, %v936
      %v1212 = vmul.f32 %v668, %v946
      %v1213 = vmul.f32 %v669, %v956
      %v1214 = vmul.f32 %v670, %v966
      %v1215 = vmul.f32 %v671, %v976
      %v1216 = vmul.f32 %v672, %v986
      %v1217 = vmul.f32 %v673, %v996
      %v1218 = vmul.f32 %v674, %v1006
      %v1219 = vmul.f32 %v675, %v1016
      %v1220 = vmul.f32 %v676, %v1026
      %v1221 = vmul.f32 %v677, %v1036
      %v1222 = vmul.f32 %v678, %v1046
      %v1223 = vmul.f32 %v679, %v1056
      %v1224 = vmul.f32 %v680, %v1066
      %v1225 = vmul.f32 %v681, %v1076
      %v1226 = vmul.f32 %v682, %v1086
      %v1227 = vmul.f32 %v683, %v1096
      %v1228 = vmul.f32 %v684, %v1106
      %v1229 = vmul.f32 %v685, %v1116
      %v1230 = vmul.f32 %v686, %v1126
      %v1231 = vmul.f32 %v687, %v1136
      %v1232 = vmul.f32 %v688, %v1146
      %v1233 = vmul.f32 %v689, %v1156
      %v1234 = vmul.f32 %v690, %v1166
      %v1235 = vmul.f32 %v691, %v1176
      %v1236 = vmul.f32 %v692, %v1186
      %v1237 = vmul.f32 %v693, %v1196
      %v1238 = vmul.f32 %v694, %v1206
      %v1239 = vld [vmem:[%s1] sm:$0x1]
      %v1241 = vperm.slane %v1239, 0
      %v1243 = vmul.f32 %v1207, %v1241
      %v1244 = vmul.f32 %v1208, %v1241
      %v1245 = vmul.f32 %v1209, %v1241
      %v1246 = vmul.f32 %v1210, %v1241
      %v1247 = vmul.f32 %v1211, %v1241
      %v1248 = vmul.f32 %v1212, %v1241
      %v1249 = vmul.f32 %v1213, %v1241
      %v1250 = vmul.f32 %v1214, %v1241
      %v1251 = vmul.f32 %v1215, %v1241
      %v1252 = vmul.f32 %v1216, %v1241
      %v1253 = vmul.f32 %v1217, %v1241
      %v1254 = vmul.f32 %v1218, %v1241
      %v1255 = vmul.f32 %v1219, %v1241
      %v1256 = vmul.f32 %v1220, %v1241
      %v1257 = vmul.f32 %v1221, %v1241
      %v1258 = vmul.f32 %v1222, %v1241
      %v1259 = vmul.f32 %v1223, %v1241
      %v1260 = vmul.f32 %v1224, %v1241
      %v1261 = vmul.f32 %v1225, %v1241
      %v1262 = vmul.f32 %v1226, %v1241
      %v1263 = vmul.f32 %v1227, %v1241
      %v1264 = vmul.f32 %v1228, %v1241
      %v1265 = vmul.f32 %v1229, %v1241
      %v1266 = vmul.f32 %v1230, %v1241
      %v1267 = vmul.f32 %v1231, %v1241
      %v1268 = vmul.f32 %v1232, %v1241
      %v1269 = vmul.f32 %v1233, %v1241
      %v1270 = vmul.f32 %v1234, %v1241
      %v1271 = vmul.f32 %v1235, %v1241
      %v1272 = vmul.f32 %v1236, %v1241
      %v1273 = vmul.f32 %v1237, %v1241
      %v1274 = vmul.f32 %v1238, %v1241
      %v1275 = vld [vmem:[%s2] sm:$0x1]
      %v1277 = vperm.slane %v1275, 0
      %v1279 = vadd.f32 %v1243, %v1277
      %v1280 = vadd.f32 %v1244, %v1277
      %v1281 = vadd.f32 %v1245, %v1277
      %v1282 = vadd.f32 %v1246, %v1277
      %v1283 = vadd.f32 %v1247, %v1277
      %v1284 = vadd.f32 %v1248, %v1277
      %v1285 = vadd.f32 %v1249, %v1277
      %v1286 = vadd.f32 %v1250, %v1277
      %v1287 = vadd.f32 %v1251, %v1277
      %v1288 = vadd.f32 %v1252, %v1277
      %v1289 = vadd.f32 %v1253, %v1277
      %v1290 = vadd.f32 %v1254, %v1277
      %v1291 = vadd.f32 %v1255, %v1277
      %v1292 = vadd.f32 %v1256, %v1277
      %v1293 = vadd.f32 %v1257, %v1277
      %v1294 = vadd.f32 %v1258, %v1277
      %v1295 = vadd.f32 %v1259, %v1277
      %v1296 = vadd.f32 %v1260, %v1277
      %v1297 = vadd.f32 %v1261, %v1277
      %v1298 = vadd.f32 %v1262, %v1277
      %v1299 = vadd.f32 %v1263, %v1277
      %v1300 = vadd.f32 %v1264, %v1277
      %v1301 = vadd.f32 %v1265, %v1277
      %v1302 = vadd.f32 %v1266, %v1277
      %v1303 = vadd.f32 %v1267, %v1277
      %v1304 = vadd.f32 %v1268, %v1277
      %v1305 = vadd.f32 %v1269, %v1277
      %v1306 = vadd.f32 %v1270, %v1277
      %v1307 = vadd.f32 %v1271, %v1277
      %v1308 = vadd.f32 %v1272, %v1277
      %v1309 = vadd.f32 %v1273, %v1277
      %v1310 = vadd.f32 %v1274, %v1277
      %v1311 = vld [vmem:[%s3] sm:$0xff]
      %v1312 = vld [vmem:[%s3 + $0x8] sm:$0xff]
      %v1313 = vld [vmem:[%s3 + $0x10] sm:$0xff]
      %v1314 = vld [vmem:[%s3 + $0x18] sm:$0xff]
      %v1315 = vld [vmem:[%s4] sm:$0x1]
      %v1317 = vperm.slane %v1315, 0
      %v1320 = vsel %vm527, %v1279, 0
      %v1323 = vsel %vm527, %v1280, 0
      %v1326 = vsel %vm527, %v1281, 0
      %v1329 = vsel %vm527, %v1282, 0
      %v1332 = vsel %vm527, %v1283, 0
      %v1335 = vsel %vm527, %v1284, 0
      %v1338 = vsel %vm527, %v1285, 0
      %v1341 = vsel %vm527, %v1286, 0
      %v1344 = vsel %vm527, %v1287, 0
      %v1347 = vsel %vm527, %v1288, 0
      %v1350 = vsel %vm527, %v1289, 0
      %v1353 = vsel %vm527, %v1290, 0
      %v1356 = vsel %vm527, %v1291, 0
      %v1359 = vsel %vm527, %v1292, 0
      %v1362 = vsel %vm527, %v1293, 0
      %v1365 = vsel %vm527, %v1294, 0
      %v1368 = vsel %vm527, %v1295, 0
      %v1371 = vsel %vm527, %v1296, 0
      %v1374 = vsel %vm527, %v1297, 0
      %v1377 = vsel %vm527, %v1298, 0
      %v1380 = vsel %vm527, %v1299, 0
      %v1383 = vsel %vm527, %v1300, 0
      %v1386 = vsel %vm527, %v1301, 0
      %v1389 = vsel %vm527, %v1302, 0
      %v1392 = vsel %vm527, %v1303, 0
      %v1395 = vsel %vm527, %v1304, 0
      %v1398 = vsel %vm527, %v1305, 0
      %v1401 = vsel %vm527, %v1306, 0
      %v1404 = vsel %vm527, %v1307, 0
      %v1407 = vsel %vm527, %v1308, 0
      %v1410 = vsel %vm527, %v1309, 0
      %v1413 = vsel %vm527, %v1310, 0
      %1415 = vmatpush.msra.mxu0 0.0
      %1416 = vmatpush.msra.mxu0 0.0
      %1417 = vmatpush.msra.mxu0 0.0
      %1418 = vmatpush.msra.mxu0 0.0
      %1419 = vmatpush.msra.mxu0 0.0
      %1420 = vmatpush.msra.mxu0 0.0
      %1421 = vmatpush.msra.mxu0 0.0
      %1422 = vmatpush.msra.mxu0 0.0
      %1423 = vmatpush.msra.mxu0 0.0
      %1424 = vmatpush.msra.mxu0 0.0
      %1425 = vmatpush.msra.mxu0 0.0
      %1426 = vmatpush.msra.mxu0 0.0
      %1427 = vmatpush.msra.mxu0 %v1314
      %1428 = vmatpush.msra.mxu0 %v1313
      %1429 = vmatpush.msra.mxu0 %v1312
      %1430 = vmatpush.msra.mxu0 %v1311
      %1431 = vmatmul.f32.gmra.mxu0 %v1320
      %v1432 = vpop.f32.mrf.mxu0
      %v1433 = vadd.f32 %v1317, %v1432
      %1434 = vmatmul.f32.gmra.mxu0 %v1323
      %v1435 = vpop.f32.mrf.mxu0
      %v1436 = vadd.f32 %v1317, %v1435
      %1437 = vmatmul.f32.gmra.mxu0 %v1326
      %v1438 = vpop.f32.mrf.mxu0
      %v1439 = vadd.f32 %v1317, %v1438
      %1440 = vmatmul.f32.gmra.mxu0 %v1329
      %v1441 = vpop.f32.mrf.mxu0
      %v1442 = vadd.f32 %v1317, %v1441
      %1443 = vmatmul.f32.gmra.mxu0 %v1332
      %v1444 = vpop.f32.mrf.mxu0
      %v1445 = vadd.f32 %v1317, %v1444
      %1446 = vmatmul.f32.gmra.mxu0 %v1335
      %v1447 = vpop.f32.mrf.mxu0
      %v1448 = vadd.f32 %v1317, %v1447
      %1449 = vmatmul.f32.gmra.mxu0 %v1338
      %v1450 = vpop.f32.mrf.mxu0
      %v1451 = vadd.f32 %v1317, %v1450
      %1452 = vmatmul.f32.gmra.mxu0 %v1341
      %v1453 = vpop.f32.mrf.mxu0
      %v1454 = vadd.f32 %v1317, %v1453
      %1455 = vmatmul.f32.gmra.mxu0 %v1344
      %v1456 = vpop.f32.mrf.mxu0
      %v1457 = vadd.f32 %v1317, %v1456
      %1458 = vmatmul.f32.gmra.mxu0 %v1347
      %v1459 = vpop.f32.mrf.mxu0
      %v1460 = vadd.f32 %v1317, %v1459
      %1461 = vmatmul.f32.gmra.mxu0 %v1350
      %v1462 = vpop.f32.mrf.mxu0
      %v1463 = vadd.f32 %v1317, %v1462
      %1464 = vmatmul.f32.gmra.mxu0 %v1353
      %v1465 = vpop.f32.mrf.mxu0
      %v1466 = vadd.f32 %v1317, %v1465
      %1467 = vmatmul.f32.gmra.mxu0 %v1356
      %v1468 = vpop.f32.mrf.mxu0
      %v1469 = vadd.f32 %v1317, %v1468
      %1470 = vmatmul.f32.gmra.mxu0 %v1359
      %v1471 = vpop.f32.mrf.mxu0
      %v1472 = vadd.f32 %v1317, %v1471
      %1473 = vmatmul.f32.gmra.mxu0 %v1362
      %v1474 = vpop.f32.mrf.mxu0
      %v1475 = vadd.f32 %v1317, %v1474
      %1476 = vmatmul.f32.gmra.mxu0 %v1365
      %v1477 = vpop.f32.mrf.mxu0
      %v1478 = vadd.f32 %v1317, %v1477
      %1479 = vmatmul.f32.gmra.mxu0 %v1368
      %v1480 = vpop.f32.mrf.mxu0
      %v1481 = vadd.f32 %v1317, %v1480
      %1482 = vmatmul.f32.gmra.mxu0 %v1371
      %v1483 = vpop.f32.mrf.mxu0
      %v1484 = vadd.f32 %v1317, %v1483
      %1485 = vmatmul.f32.gmra.mxu0 %v1374
      %v1486 = vpop.f32.mrf.mxu0
      %v1487 = vadd.f32 %v1317, %v1486
      %1488 = vmatmul.f32.gmra.mxu0 %v1377
      %v1489 = vpop.f32.mrf.mxu0
      %v1490 = vadd.f32 %v1317, %v1489
      %1491 = vmatmul.f32.gmra.mxu0 %v1380
      %v1492 = vpop.f32.mrf.mxu0
      %v1493 = vadd.f32 %v1317, %v1492
      %1494 = vmatmul.f32.gmra.mxu0 %v1383
      %v1495 = vpop.f32.mrf.mxu0
      %v1496 = vadd.f32 %v1317, %v1495
      %1497 = vmatmul.f32.gmra.mxu0 %v1386
      %v1498 = vpop.f32.mrf.mxu0
      %v1499 = vadd.f32 %v1317, %v1498
      %1500 = vmatmul.f32.gmra.mxu0 %v1389
      %v1501 = vpop.f32.mrf.mxu0
      %v1502 = vadd.f32 %v1317, %v1501
      %1503 = vmatmul.f32.gmra.mxu0 %v1392
      %v1504 = vpop.f32.mrf.mxu0
      %v1505 = vadd.f32 %v1317, %v1504
      %1506 = vmatmul.f32.gmra.mxu0 %v1395
      %v1507 = vpop.f32.mrf.mxu0
      %v1508 = vadd.f32 %v1317, %v1507
      %1509 = vmatmul.f32.gmra.mxu0 %v1398
      %v1510 = vpop.f32.mrf.mxu0
      %v1511 = vadd.f32 %v1317, %v1510
      %1512 = vmatmul.f32.gmra.mxu0 %v1401
      %v1513 = vpop.f32.mrf.mxu0
      %v1514 = vadd.f32 %v1317, %v1513
      %1515 = vmatmul.f32.gmra.mxu0 %v1404
      %v1516 = vpop.f32.mrf.mxu0
      %v1517 = vadd.f32 %v1317, %v1516
      %1518 = vmatmul.f32.gmra.mxu0 %v1407
      %v1519 = vpop.f32.mrf.mxu0
      %v1520 = vadd.f32 %v1317, %v1519
      %1521 = vmatmul.f32.gmra.mxu0 %v1410
      %v1522 = vpop.f32.mrf.mxu0
      %v1523 = vadd.f32 %v1317, %v1522
      %1524 = vmatmul.f32.gmra.mxu0 %v1413
      %v1525 = vpop.f32.mrf.mxu0
      %v1526 = vadd.f32 %v1317, %v1525
      %1527 = vdwg.mxu0
      %1528 = vst.msk [vmem:[#allocation2] sm:$0xff] %vm527, 0.0
      %1529 = vst.msk [vmem:[#allocation2 + $0x8] sm:$0xff] %vm527, 0.0
      %1530 = vst.msk [vmem:[#allocation2 + $0x10] sm:$0xff] %vm527, 0.0
      %1531 = vst.msk [vmem:[#allocation2 + $0x18] sm:$0xff] %vm527, 0.0
      %1532 = vst.msk [vmem:[#allocation2 + $0x20] sm:$0xff] %vm527, 0.0
      %1533 = vst.msk [vmem:[#allocation2 + $0x28] sm:$0xff] %vm527, 0.0
      %1534 = vst.msk [vmem:[#allocation2 + $0x30] sm:$0xff] %vm527, 0.0
      %1535 = vst.msk [vmem:[#allocation2 + $0x38] sm:$0xff] %vm527, 0.0
      %1536 = vst.msk [vmem:[#allocation2 + $0x40] sm:$0xff] %vm527, 0.0
      %1537 = vst.msk [vmem:[#allocation2 + $0x48] sm:$0xff] %vm527, 0.0
      %1538 = vst.msk [vmem:[#allocation2 + $0x50] sm:$0xff] %vm527, 0.0
      %1539 = vst.msk [vmem:[#allocation2 + $0x58] sm:$0xff] %vm527, 0.0
      %1540 = vst.msk [vmem:[#allocation2 + $0x60] sm:$0xff] %vm527, 0.0
      %1541 = vst.msk [vmem:[#allocation2 + $0x68] sm:$0xff] %vm527, 0.0
      %1542 = vst.msk [vmem:[#allocation2 + $0x70] sm:$0xff] %vm527, 0.0
      %1543 = vst.msk [vmem:[#allocation2 + $0x78] sm:$0xff] %vm527, 0.0
      %1544 = vst.msk [vmem:[#allocation2 + $0x80] sm:$0xff] %vm527, 0.0
      %1545 = vst.msk [vmem:[#allocation2 + $0x88] sm:$0xff] %vm527, 0.0
      %1546 = vst.msk [vmem:[#allocation2 + $0x90] sm:$0xff] %vm527, 0.0
      %1547 = vst.msk [vmem:[#allocation2 + $0x98] sm:$0xff] %vm527, 0.0
      %1548 = vst.msk [vmem:[#allocation2 + $0xa0] sm:$0xff] %vm527, 0.0
      %1549 = vst.msk [vmem:[#allocation2 + $0xa8] sm:$0xff] %vm527, 0.0
      %1550 = vst.msk [vmem:[#allocation2 + $0xb0] sm:$0xff] %vm527, 0.0
      %1551 = vst.msk [vmem:[#allocation2 + $0xb8] sm:$0xff] %vm527, 0.0
      %1552 = vst.msk [vmem:[#allocation2 + $0xc0] sm:$0xff] %vm527, 0.0
      %1553 = vst.msk [vmem:[#allocation2 + $0xc8] sm:$0xff] %vm527, 0.0
      %1554 = vst.msk [vmem:[#allocation2 + $0xd0] sm:$0xff] %vm527, 0.0
      %1555 = vst.msk [vmem:[#allocation2 + $0xd8] sm:$0xff] %vm527, 0.0
      %1556 = vst.msk [vmem:[#allocation2 + $0xe0] sm:$0xff] %vm527, 0.0
      %1557 = vst.msk [vmem:[#allocation2 + $0xe8] sm:$0xff] %vm527, 0.0
      %1558 = vst.msk [vmem:[#allocation2 + $0xf0] sm:$0xff] %vm527, 0.0
      %1559 = vst.msk [vmem:[#allocation2 + $0xf8] sm:$0xff] %vm527, 0.0
      %1560 = vst.msk [vmem:[#allocation2 + $0x100] sm:$0xff] %vm527, 0.0
      %1561 = vst.msk [vmem:[#allocation2 + $0x108] sm:$0xff] %vm527, 0.0
      %1562 = vst.msk [vmem:[#allocation2 + $0x110] sm:$0xff] %vm527, 0.0
      %1563 = vst.msk [vmem:[#allocation2 + $0x118] sm:$0xff] %vm527, 0.0
      %1564 = vst.msk [vmem:[#allocation2 + $0x120] sm:$0xff] %vm527, 0.0
      %1565 = vst.msk [vmem:[#allocation2 + $0x128] sm:$0xff] %vm527, 0.0
      %1566 = vst.msk [vmem:[#allocation2 + $0x130] sm:$0xff] %vm527, 0.0
      %1567 = vst.msk [vmem:[#allocation2 + $0x138] sm:$0xff] %vm527, 0.0
      %1568 = vst.msk [vmem:[#allocation2 + $0x140] sm:$0xff] %vm527, 0.0
      %1569 = vst.msk [vmem:[#allocation2 + $0x148] sm:$0xff] %vm527, 0.0
      %1570 = vst.msk [vmem:[#allocation2 + $0x150] sm:$0xff] %vm527, 0.0
      %1571 = vst.msk [vmem:[#allocation2 + $0x158] sm:$0xff] %vm527, 0.0
      %1572 = vst.msk [vmem:[#allocation2 + $0x160] sm:$0xff] %vm527, 0.0
      %1573 = vst.msk [vmem:[#allocation2 + $0x168] sm:$0xff] %vm527, 0.0
      %1574 = vst.msk [vmem:[#allocation2 + $0x170] sm:$0xff] %vm527, 0.0
      %1575 = vst.msk [vmem:[#allocation2 + $0x178] sm:$0xff] %vm527, 0.0
      %1576 = vst.msk [vmem:[#allocation2 + $0x180] sm:$0xff] %vm527, 0.0
      %1577 = vst.msk [vmem:[#allocation2 + $0x188] sm:$0xff] %vm527, 0.0
      %1578 = vst.msk [vmem:[#allocation2 + $0x190] sm:$0xff] %vm527, 0.0
      %1579 = vst.msk [vmem:[#allocation2 + $0x198] sm:$0xff] %vm527, 0.0
      %1580 = vst.msk [vmem:[#allocation2 + $0x1a0] sm:$0xff] %vm527, 0.0
      %1581 = vst.msk [vmem:[#allocation2 + $0x1a8] sm:$0xff] %vm527, 0.0
      %1582 = vst.msk [vmem:[#allocation2 + $0x1b0] sm:$0xff] %vm527, 0.0
      %1583 = vst.msk [vmem:[#allocation2 + $0x1b8] sm:$0xff] %vm527, 0.0
      %1584 = vst.msk [vmem:[#allocation2 + $0x1c0] sm:$0xff] %vm527, 0.0
      %1585 = vst.msk [vmem:[#allocation2 + $0x1c8] sm:$0xff] %vm527, 0.0
      %1586 = vst.msk [vmem:[#allocation2 + $0x1d0] sm:$0xff] %vm527, 0.0
      %1587 = vst.msk [vmem:[#allocation2 + $0x1d8] sm:$0xff] %vm527, 0.0
      %1588 = vst.msk [vmem:[#allocation2 + $0x1e0] sm:$0xff] %vm527, 0.0
      %1589 = vst.msk [vmem:[#allocation2 + $0x1e8] sm:$0xff] %vm527, 0.0
      %1590 = vst.msk [vmem:[#allocation2 + $0x1f0] sm:$0xff] %vm527, 0.0
      %1591 = vst.msk [vmem:[#allocation2 + $0x1f8] sm:$0xff] %vm527, 0.0
      %1592 = vst.msk [vmem:[#allocation2 + $0x200] sm:$0xff] %vm527, 0.0
      %1593 = vst.msk [vmem:[#allocation2 + $0x208] sm:$0xff] %vm527, 0.0
      %1594 = vst.msk [vmem:[#allocation2 + $0x210] sm:$0xff] %vm527, 0.0
      %1595 = vst.msk [vmem:[#allocation2 + $0x218] sm:$0xff] %vm527, 0.0
      %1596 = vst.msk [vmem:[#allocation2 + $0x220] sm:$0xff] %vm527, 0.0
      %1597 = vst.msk [vmem:[#allocation2 + $0x228] sm:$0xff] %vm527, 0.0
      %1598 = vst.msk [vmem:[#allocation2 + $0x230] sm:$0xff] %vm527, 0.0
      %1599 = vst.msk [vmem:[#allocation2 + $0x238] sm:$0xff] %vm527, 0.0
      %1600 = vst.msk [vmem:[#allocation2 + $0x240] sm:$0xff] %vm527, 0.0
      %1601 = vst.msk [vmem:[#allocation2 + $0x248] sm:$0xff] %vm527, 0.0
      %1602 = vst.msk [vmem:[#allocation2 + $0x250] sm:$0xff] %vm527, 0.0
      %1603 = vst.msk [vmem:[#allocation2 + $0x258] sm:$0xff] %vm527, 0.0
      %1604 = vst.msk [vmem:[#allocation2 + $0x260] sm:$0xff] %vm527, 0.0
      %1605 = vst.msk [vmem:[#allocation2 + $0x268] sm:$0xff] %vm527, 0.0
      %1606 = vst.msk [vmem:[#allocation2 + $0x270] sm:$0xff] %vm527, 0.0
      %1607 = vst.msk [vmem:[#allocation2 + $0x278] sm:$0xff] %vm527, 0.0
      %s1608 = scalar_lea.vmem [#allocation2], 64
      %1609 = vst.msk [vmem:[%s1608 + $0x8] sm:$0xff] %vm527, %v1433
      %1610 = vst.msk [vmem:[%s1608 + $0x10] sm:$0xff] %vm527, %v1436
      %s1611 = scalar_lea.vmem [#allocation2], 96
      %1612 = vst.msk [vmem:[%s1611 + $0x8] sm:$0xff] %vm527, %v1439
      %1613 = vst.msk [vmem:[%s1611 + $0x10] sm:$0xff] %vm527, %v1442
      %s1614 = scalar_lea.vmem [#allocation2], 128
      %1615 = vst.msk [vmem:[%s1614 + $0x8] sm:$0xff] %vm527, %v1445
      %1616 = vst.msk [vmem:[%s1614 + $0x10] sm:$0xff] %vm527, %v1448
      %s1617 = scalar_lea.vmem [#allocation2], 160
      %1618 = vst.msk [vmem:[%s1617 + $0x8] sm:$0xff] %vm527, %v1451
      %1619 = vst.msk [vmem:[%s1617 + $0x10] sm:$0xff] %vm527, %v1454
      %s1620 = scalar_lea.vmem [#allocation2], 192
      %1621 = vst.msk [vmem:[%s1620 + $0x8] sm:$0xff] %vm527, %v1457
      %1622 = vst.msk [vmem:[%s1620 + $0x10] sm:$0xff] %vm527, %v1460
      %s1623 = scalar_lea.vmem [#allocation2], 224
      %1624 = vst.msk [vmem:[%s1623 + $0x8] sm:$0xff] %vm527, %v1463
      %1625 = vst.msk [vmem:[%s1623 + $0x10] sm:$0xff] %vm527, %v1466
      %s1626 = scalar_lea.vmem [#allocation2], 256
      %1627 = vst.msk [vmem:[%s1626 + $0x8] sm:$0xff] %vm527, %v1469
      %1628 = vst.msk [vmem:[%s1626 + $0x10] sm:$0xff] %vm527, %v1472
      %s1629 = scalar_lea.vmem [#allocation2], 288
      %1630 = vst.msk [vmem:[%s1629 + $0x8] sm:$0xff] %vm527, %v1475
      %1631 = vst.msk [vmem:[%s1629 + $0x10] sm:$0xff] %vm527, %v1478
      %s1632 = scalar_lea.vmem [#allocation2], 320
      %1633 = vst.msk [vmem:[%s1632 + $0x8] sm:$0xff] %vm527, %v1481
      %1634 = vst.msk [vmem:[%s1632 + $0x10] sm:$0xff] %vm527, %v1484
      %s1635 = scalar_lea.vmem [#allocation2], 352
      %1636 = vst.msk [vmem:[%s1635 + $0x8] sm:$0xff] %vm527, %v1487
      %1637 = vst.msk [vmem:[%s1635 + $0x10] sm:$0xff] %vm527, %v1490
      %s1638 = scalar_lea.vmem [#allocation2], 384
      %1639 = vst.msk [vmem:[%s1638 + $0x8] sm:$0xff] %vm527, %v1493
      %1640 = vst.msk [vmem:[%s1638 + $0x10] sm:$0xff] %vm527, %v1496
      %s1641 = scalar_lea.vmem [#allocation2], 416
      %1642 = vst.msk [vmem:[%s1641 + $0x8] sm:$0xff] %vm527, %v1499
      %1643 = vst.msk [vmem:[%s1641 + $0x10] sm:$0xff] %vm527, %v1502
      %s1644 = scalar_lea.vmem [#allocation2], 448
      %1645 = vst.msk [vmem:[%s1644 + $0x8] sm:$0xff] %vm527, %v1505
      %1646 = vst.msk [vmem:[%s1644 + $0x10] sm:$0xff] %vm527, %v1508
      %s1647 = scalar_lea.vmem [#allocation2], 480
      %1648 = vst.msk [vmem:[%s1647 + $0x8] sm:$0xff] %vm527, %v1511
      %1649 = vst.msk [vmem:[%s1647 + $0x10] sm:$0xff] %vm527, %v1514
      %s1650 = scalar_lea.vmem [#allocation2], 512
      %1651 = vst.msk [vmem:[%s1650 + $0x8] sm:$0xff] %vm527, %v1517
      %1652 = vst.msk [vmem:[%s1650 + $0x10] sm:$0xff] %vm527, %v1520
      %s1653 = scalar_lea.vmem [#allocation2], 544
      %1654 = vst.msk [vmem:[%s1653 + $0x8] sm:$0xff] %vm527, %v1523
      %1655 = vst.msk [vmem:[%s1653 + $0x10] sm:$0xff] %vm527, %v1526
      %v1656 = vld [vmem:[#allocation2] sm:$0xff]
      %v1657 = vld [vmem:[#allocation2 + $0x8] sm:$0xff]
      %v1658 = vld [vmem:[#allocation2 + $0x10] sm:$0xff]
      %v1659 = vld [vmem:[#allocation2 + $0x18] sm:$0xff]
      %v1660 = vld [vmem:[#allocation2 + $0x20] sm:$0xff]
      %v1661 = vld [vmem:[#allocation2 + $0x28] sm:$0xff]
      %v1662 = vld [vmem:[#allocation2 + $0x30] sm:$0xff]
      %v1663 = vld [vmem:[#allocation2 + $0x38] sm:$0xff]
      %v1664 = vld [vmem:[#allocation2 + $0x40] sm:$0xff]
      %v1665 = vld [vmem:[#allocation2 + $0x48] sm:$0xff]
      %v1666 = vld [vmem:[#allocation2 + $0x50] sm:$0xff]
      %v1667 = vld [vmem:[#allocation2 + $0x58] sm:$0xff]
      %v1668 = vld [vmem:[#allocation2 + $0x60] sm:$0xff]
      %v1669 = vld [vmem:[#allocation2 + $0x68] sm:$0xff]
      %v1670 = vld [vmem:[#allocation2 + $0x70] sm:$0xff]
      %v1671 = vld [vmem:[#allocation2 + $0x78] sm:$0xff]
      %v1672 = vld [vmem:[#allocation2 + $0x80] sm:$0xff]
      %v1673 = vld [vmem:[#allocation2 + $0x88] sm:$0xff]
      %v1674 = vld [vmem:[#allocation2 + $0x90] sm:$0xff]
      %v1675 = vld [vmem:[#allocation2 + $0x98] sm:$0xff]
      %v1676 = vld [vmem:[#allocation2 + $0xa0] sm:$0xff]
      %v1677 = vld [vmem:[#allocation2 + $0xa8] sm:$0xff]
      %v1678 = vld [vmem:[#allocation2 + $0xb0] sm:$0xff]
      %v1679 = vld [vmem:[#allocation2 + $0xb8] sm:$0xff]
      %v1680 = vld [vmem:[#allocation2 + $0xc0] sm:$0xff]
      %v1681 = vld [vmem:[#allocation2 + $0xc8] sm:$0xff]
      %v1682 = vld [vmem:[#allocation2 + $0xd0] sm:$0xff]
      %v1683 = vld [vmem:[#allocation2 + $0xd8] sm:$0xff]
      %v1684 = vld [vmem:[#allocation2 + $0xe0] sm:$0xff]
      %v1685 = vld [vmem:[#allocation2 + $0xe8] sm:$0xff]
      %v1686 = vld [vmem:[#allocation2 + $0xf0] sm:$0xff]
      %v1687 = vld [vmem:[#allocation2 + $0xf8] sm:$0xff]
      %v1688 = vld [vmem:[#allocation2 + $0x100] sm:$0xff]
      %v1689 = vld [vmem:[#allocation2 + $0x108] sm:$0xff]
      %v1690 = vld [vmem:[#allocation2 + $0x110] sm:$0xff]
      %v1691 = vld [vmem:[#allocation2 + $0x118] sm:$0xff]
      %v1692 = vld [vmem:[#allocation2 + $0x120] sm:$0xff]
      %v1693 = vld [vmem:[#allocation2 + $0x128] sm:$0xff]
      %v1694 = vld [vmem:[#allocation2 + $0x130] sm:$0xff]
      %v1695 = vld [vmem:[#allocation2 + $0x138] sm:$0xff]
      %v1696 = vld [vmem:[#allocation2 + $0x140] sm:$0xff]
      %v1697 = vld [vmem:[#allocation2 + $0x148] sm:$0xff]
      %v1698 = vld [vmem:[#allocation2 + $0x150] sm:$0xff]
      %v1699 = vld [vmem:[#allocation2 + $0x158] sm:$0xff]
      %v1700 = vld [vmem:[#allocation2 + $0x160] sm:$0xff]
      %v1701 = vld [vmem:[#allocation2 + $0x168] sm:$0xff]
      %v1702 = vld [vmem:[#allocation2 + $0x170] sm:$0xff]
      %v1703 = vld [vmem:[#allocation2 + $0x178] sm:$0xff]
      %v1704 = vld [vmem:[#allocation2 + $0x180] sm:$0xff]
      %v1705 = vld [vmem:[#allocation2 + $0x188] sm:$0xff]
      %v1706 = vld [vmem:[#allocation2 + $0x190] sm:$0xff]
      %v1707 = vld [vmem:[#allocation2 + $0x198] sm:$0xff]
      %v1708 = vld [vmem:[#allocation2 + $0x1a0] sm:$0xff]
      %v1709 = vld [vmem:[#allocation2 + $0x1a8] sm:$0xff]
      %v1710 = vld [vmem:[#allocation2 + $0x1b0] sm:$0xff]
      %v1711 = vld [vmem:[#allocation2 + $0x1b8] sm:$0xff]
      %v1712 = vld [vmem:[#allocation2 + $0x1c0] sm:$0xff]
      %v1713 = vld [vmem:[#allocation2 + $0x1c8] sm:$0xff]
      %v1714 = vld [vmem:[#allocation2 + $0x1d0] sm:$0xff]
      %v1715 = vld [vmem:[#allocation2 + $0x1d8] sm:$0xff]
      %v1716 = vld [vmem:[#allocation2 + $0x1e0] sm:$0xff]
      %v1717 = vld [vmem:[#allocation2 + $0x1e8] sm:$0xff]
      %v1718 = vld [vmem:[#allocation2 + $0x1f0] sm:$0xff]
      %v1719 = vld [vmem:[#allocation2 + $0x1f8] sm:$0xff]
      %v1720 = vld [vmem:[#allocation2 + $0x200] sm:$0xff]
      %v1721 = vld [vmem:[#allocation2 + $0x208] sm:$0xff]
      %v1722 = vld [vmem:[#allocation2 + $0x210] sm:$0xff]
      %v1723 = vld [vmem:[#allocation2 + $0x218] sm:$0xff]
      %v1724 = vld [vmem:[#allocation2 + $0x220] sm:$0xff]
      %v1725 = vld [vmem:[#allocation2 + $0x228] sm:$0xff]
      %v1726 = vld [vmem:[#allocation2 + $0x230] sm:$0xff]
      %v1727 = vld [vmem:[#allocation2 + $0x238] sm:$0xff]
      %v1728 = vld [vmem:[#allocation2 + $0x240] sm:$0xff]
      %v1729 = vld [vmem:[#allocation2 + $0x248] sm:$0xff]
      %v1730 = vld [vmem:[#allocation2 + $0x250] sm:$0xff]
      %v1731 = vld [vmem:[#allocation2 + $0x258] sm:$0xff]
      %v1732 = vld [vmem:[#allocation2 + $0x260] sm:$0xff]
      %v1733 = vld [vmem:[#allocation2 + $0x268] sm:$0xff]
      %v1734 = vld [vmem:[#allocation2 + $0x270] sm:$0xff]
      %v1735 = vld [vmem:[#allocation2 + $0x278] sm:$0xff]
      %v1736 = vld [vmem:[%s5] sm:$0x1f]
      %v1737 = vld [vmem:[%s5 + $0x8] sm:$0x1f]
      %v1738 = vld [vmem:[%s5 + $0x10] sm:$0x1f]
      %v1739 = vld [vmem:[%s5 + $0x18] sm:$0x1f]
      %v1740 = vld [vmem:[%s5 + $0x20] sm:$0x1f]
      %v1741 = vperm.slane %v1736, 0
      %v1742 = vmul.f32 %v1656, %v1741
      %v1743 = vmul.f32 %v1657, %v1741
      %v1744 = vmul.f32 %v1658, %v1741
      %v1745 = vmul.f32 %v1660, %v1741
      %v1746 = vmul.f32 %v1661, %v1741
      %v1747 = vmul.f32 %v1662, %v1741
      %v1748 = vmul.f32 %v1664, %v1741
      %v1749 = vmul.f32 %v1665, %v1741
      %v1750 = vmul.f32 %v1666, %v1741
      %v1751 = vmul.f32 %v1668, %v1741
      %v1752 = vmul.f32 %v1669, %v1741
      %v1753 = vmul.f32 %v1670, %v1741
      %v1754 = vmul.f32 %v1672, %v1741
      %v1755 = vmul.f32 %v1673, %v1741
      %v1756 = vmul.f32 %v1674, %v1741
      %v1757 = vmul.f32 %v1676, %v1741
      %v1758 = vmul.f32 %v1677, %v1741
      %v1759 = vmul.f32 %v1678, %v1741
      %v1760 = vmul.f32 %v1680, %v1741
      %v1761 = vmul.f32 %v1681, %v1741
      %v1762 = vmul.f32 %v1682, %v1741
      %v1763 = vmul.f32 %v1684, %v1741
      %v1764 = vmul.f32 %v1685, %v1741
      %v1765 = vmul.f32 %v1686, %v1741
      %v1766 = vmul.f32 %v1688, %v1741
      %v1767 = vmul.f32 %v1689, %v1741
      %v1768 = vmul.f32 %v1690, %v1741
      %v1769 = vmul.f32 %v1692, %v1741
      %v1770 = vmul.f32 %v1693, %v1741
      %v1771 = vmul.f32 %v1694, %v1741
      %v1772 = vmul.f32 %v1696, %v1741
      %v1773 = vmul.f32 %v1697, %v1741
      %v1774 = vmul.f32 %v1698, %v1741
      %v1775 = vmul.f32 %v1700, %v1741
      %v1776 = vmul.f32 %v1701, %v1741
      %v1777 = vmul.f32 %v1702, %v1741
      %v1778 = vmul.f32 %v1704, %v1741
      %v1779 = vmul.f32 %v1705, %v1741
      %v1780 = vmul.f32 %v1706, %v1741
      %v1781 = vmul.f32 %v1708, %v1741
      %v1782 = vmul.f32 %v1709, %v1741
      %v1783 = vmul.f32 %v1710, %v1741
      %v1784 = vmul.f32 %v1712, %v1741
      %v1785 = vmul.f32 %v1713, %v1741
      %v1786 = vmul.f32 %v1714, %v1741
      %v1787 = vmul.f32 %v1716, %v1741
      %v1788 = vmul.f32 %v1717, %v1741
      %v1789 = vmul.f32 %v1718, %v1741
      %v1790 = vadd.f32 %v1742, 0.0
      %v1791 = vadd.f32 %v1743, 0.0
      %v1792 = vadd.f32 %v1744, 0.0
      %v1793 = vadd.f32 %v1745, 0.0
      %v1794 = vadd.f32 %v1746, 0.0
      %v1795 = vadd.f32 %v1747, 0.0
      %v1796 = vadd.f32 %v1748, 0.0
      %v1797 = vadd.f32 %v1749, 0.0
      %v1798 = vadd.f32 %v1750, 0.0
      %v1799 = vadd.f32 %v1751, 0.0
      %v1800 = vadd.f32 %v1752, 0.0
      %v1801 = vadd.f32 %v1753, 0.0
      %v1802 = vadd.f32 %v1754, 0.0
      %v1803 = vadd.f32 %v1755, 0.0
      %v1804 = vadd.f32 %v1756, 0.0
      %v1805 = vadd.f32 %v1757, 0.0
      %v1806 = vadd.f32 %v1758, 0.0
      %v1807 = vadd.f32 %v1759, 0.0
      %v1808 = vadd.f32 %v1760, 0.0
      %v1809 = vadd.f32 %v1761, 0.0
      %v1810 = vadd.f32 %v1762, 0.0
      %v1811 = vadd.f32 %v1763, 0.0
      %v1812 = vadd.f32 %v1764, 0.0
      %v1813 = vadd.f32 %v1765, 0.0
      %v1814 = vadd.f32 %v1766, 0.0
      %v1815 = vadd.f32 %v1767, 0.0
      %v1816 = vadd.f32 %v1768, 0.0
      %v1817 = vadd.f32 %v1769, 0.0
      %v1818 = vadd.f32 %v1770, 0.0
      %v1819 = vadd.f32 %v1771, 0.0
      %v1820 = vadd.f32 %v1772, 0.0
      %v1821 = vadd.f32 %v1773, 0.0
      %v1822 = vadd.f32 %v1774, 0.0
      %v1823 = vadd.f32 %v1775, 0.0
      %v1824 = vadd.f32 %v1776, 0.0
      %v1825 = vadd.f32 %v1777, 0.0
      %v1826 = vadd.f32 %v1778, 0.0
      %v1827 = vadd.f32 %v1779, 0.0
      %v1828 = vadd.f32 %v1780, 0.0
      %v1829 = vadd.f32 %v1781, 0.0
      %v1830 = vadd.f32 %v1782, 0.0
      %v1831 = vadd.f32 %v1783, 0.0
      %v1832 = vadd.f32 %v1784, 0.0
      %v1833 = vadd.f32 %v1785, 0.0
      %v1834 = vadd.f32 %v1786, 0.0
      %v1835 = vadd.f32 %v1787, 0.0
      %v1836 = vadd.f32 %v1788, 0.0
      %v1837 = vadd.f32 %v1789, 0.0
      %v1838 = vperm.slane %v1736, 1
      %v1839 = vmul.f32 %v1656, %v1838
      %v1840 = vmul.f32 %v1657, %v1838
      %v1841 = vmul.f32 %v1658, %v1838
      %v1842 = vmul.f32 %v1660, %v1838
      %v1843 = vmul.f32 %v1661, %v1838
      %v1844 = vmul.f32 %v1662, %v1838
      %v1845 = vmul.f32 %v1664, %v1838
      %v1846 = vmul.f32 %v1665, %v1838
      %v1847 = vmul.f32 %v1666, %v1838
      %v1848 = vmul.f32 %v1668, %v1838
      %v1849 = vmul.f32 %v1669, %v1838
      %v1850 = vmul.f32 %v1670, %v1838
      %v1851 = vmul.f32 %v1672, %v1838
      %v1852 = vmul.f32 %v1673, %v1838
      %v1853 = vmul.f32 %v1674, %v1838
      %v1854 = vmul.f32 %v1676, %v1838
      %v1855 = vmul.f32 %v1677, %v1838
      %v1856 = vmul.f32 %v1678, %v1838
      %v1857 = vmul.f32 %v1680, %v1838
      %v1858 = vmul.f32 %v1681, %v1838
      %v1859 = vmul.f32 %v1682, %v1838
      %v1860 = vmul.f32 %v1684, %v1838
      %v1861 = vmul.f32 %v1685, %v1838
      %v1862 = vmul.f32 %v1686, %v1838
      %v1863 = vmul.f32 %v1688, %v1838
      %v1864 = vmul.f32 %v1689, %v1838
      %v1865 = vmul.f32 %v1690, %v1838
      %v1866 = vmul.f32 %v1692, %v1838
      %v1867 = vmul.f32 %v1693, %v1838
      %v1868 = vmul.f32 %v1694, %v1838
      %v1869 = vmul.f32 %v1696, %v1838
      %v1870 = vmul.f32 %v1697, %v1838
      %v1871 = vmul.f32 %v1698, %v1838
      %v1872 = vmul.f32 %v1700, %v1838
      %v1873 = vmul.f32 %v1701, %v1838
      %v1874 = vmul.f32 %v1702, %v1838
      %v1875 = vmul.f32 %v1704, %v1838
      %v1876 = vmul.f32 %v1705, %v1838
      %v1877 = vmul.f32 %v1706, %v1838
      %v1878 = vmul.f32 %v1708, %v1838
      %v1879 = vmul.f32 %v1709, %v1838
      %v1880 = vmul.f32 %v1710, %v1838
      %v1881 = vmul.f32 %v1712, %v1838
      %v1882 = vmul.f32 %v1713, %v1838
      %v1883 = vmul.f32 %v1714, %v1838
      %v1884 = vmul.f32 %v1716, %v1838
      %v1885 = vmul.f32 %v1717, %v1838
      %v1886 = vmul.f32 %v1718, %v1838
      %vm1935 = vcmask 1046528
      %v1936 = vrot.slane %v1839, 1
      %v1937 = vrot.slane %v1840, 1
      %v1938 = vsel %vm1935, %v1936, %v1937
      %v1939 = vrot.slane %v1841, 1
      %v1940 = vsel %vm1935, %v1937, %v1939
      %v1941 = vrot.slane %v1842, 1
      %v1942 = vrot.slane %v1843, 1
      %v1943 = vsel %vm1935, %v1941, %v1942
      %v1944 = vrot.slane %v1844, 1
      %v1945 = vsel %vm1935, %v1942, %v1944
      %v1946 = vrot.slane %v1845, 1
      %v1947 = vrot.slane %v1846, 1
      %v1948 = vsel %vm1935, %v1946, %v1947
      %v1949 = vrot.slane %v1847, 1
      %v1950 = vsel %vm1935, %v1947, %v1949
      %v1951 = vrot.slane %v1848, 1
      %v1952 = vrot.slane %v1849, 1
      %v1953 = vsel %vm1935, %v1951, %v1952
      %v1954 = vrot.slane %v1850, 1
      %v1955 = vsel %vm1935, %v1952, %v1954
      %v1956 = vrot.slane %v1851, 1
      %v1957 = vrot.slane %v1852, 1
      %v1958 = vsel %vm1935, %v1956, %v1957
      %v1959 = vrot.slane %v1853, 1
      %v1960 = vsel %vm1935, %v1957, %v1959
      %v1961 = vrot.slane %v1854, 1
      %v1962 = vrot.slane %v1855, 1
      %v1963 = vsel %vm1935, %v1961, %v1962
      %v1964 = vrot.slane %v1856, 1
      %v1965 = vsel %vm1935, %v1962, %v1964
      %v1966 = vrot.slane %v1857, 1
      %v1967 = vrot.slane %v1858, 1
      %v1968 = vsel %vm1935, %v1966, %v1967
      %v1969 = vrot.slane %v1859, 1
      %v1970 = vsel %vm1935, %v1967, %v1969
      %v1971 = vrot.slane %v1860, 1
      %v1972 = vrot.slane %v1861, 1
      %v1973 = vsel %vm1935, %v1971, %v1972
      %v1974 = vrot.slane %v1862, 1
      %v1975 = vsel %vm1935, %v1972, %v1974
      %v1976 = vrot.slane %v1863, 1
      %v1977 = vrot.slane %v1864, 1
      %v1978 = vsel %vm1935, %v1976, %v1977
      %v1979 = vrot.slane %v1865, 1
      %v1980 = vsel %vm1935, %v1977, %v1979
      %v1981 = vrot.slane %v1866, 1
      %v1982 = vrot.slane %v1867, 1
      %v1983 = vsel %vm1935, %v1981, %v1982
      %v1984 = vrot.slane %v1868, 1
      %v1985 = vsel %vm1935, %v1982, %v1984
      %v1986 = vrot.slane %v1869, 1
      %v1987 = vrot.slane %v1870, 1
      %v1988 = vsel %vm1935, %v1986, %v1987
      %v1989 = vrot.slane %v1871, 1
      %v1990 = vsel %vm1935, %v1987, %v1989
      %v1991 = vrot.slane %v1872, 1
      %v1992 = vrot.slane %v1873, 1
      %v1993 = vsel %vm1935, %v1991, %v1992
      %v1994 = vrot.slane %v1874, 1
      %v1995 = vsel %vm1935, %v1992, %v1994
      %v1996 = vrot.slane %v1875, 1
      %v1997 = vrot.slane %v1876, 1
      %v1998 = vsel %vm1935, %v1996, %v1997
      %v1999 = vrot.slane %v1877, 1
      %v2000 = vsel %vm1935, %v1997, %v1999
      %v2001 = vrot.slane %v1878, 1
      %v2002 = vrot.slane %v1879, 1
      %v2003 = vsel %vm1935, %v2001, %v2002
      %v2004 = vrot.slane %v1880, 1
      %v2005 = vsel %vm1935, %v2002, %v2004
      %v2006 = vrot.slane %v1881, 1
      %v2007 = vrot.slane %v1882, 1
      %v2008 = vsel %vm1935, %v2006, %v2007
      %v2009 = vrot.slane %v1883, 1
      %v2010 = vsel %vm1935, %v2007, %v2009
      %v2011 = vrot.slane %v1884, 1
      %v2012 = vrot.slane %v1885, 1
      %v2013 = vsel %vm1935, %v2011, %v2012
      %v2014 = vrot.slane %v1886, 1
      %v2015 = vsel %vm1935, %v2012, %v2014
      %v2064 = vadd.f32 %v1790, %v1938
      %v2065 = vadd.f32 %v1791, %v1940
      %v2066 = vadd.f32 %v1792, %v1939
      %v2067 = vadd.f32 %v1793, %v1943
      %v2068 = vadd.f32 %v1794, %v1945
      %v2069 = vadd.f32 %v1795, %v1944
      %v2070 = vadd.f32 %v1796, %v1948
      %v2071 = vadd.f32 %v1797, %v1950
      %v2072 = vadd.f32 %v1798, %v1949
      %v2073 = vadd.f32 %v1799, %v1953
      %v2074 = vadd.f32 %v1800, %v1955
      %v2075 = vadd.f32 %v1801, %v1954
      %v2076 = vadd.f32 %v1802, %v1958
      %v2077 = vadd.f32 %v1803, %v1960
      %v2078 = vadd.f32 %v1804, %v1959
      %v2079 = vadd.f32 %v1805, %v1963
      %v2080 = vadd.f32 %v1806, %v1965
      %v2081 = vadd.f32 %v1807, %v1964
      %v2082 = vadd.f32 %v1808, %v1968
      %v2083 = vadd.f32 %v1809, %v1970
      %v2084 = vadd.f32 %v1810, %v1969
      %v2085 = vadd.f32 %v1811, %v1973
      %v2086 = vadd.f32 %v1812, %v1975
      %v2087 = vadd.f32 %v1813, %v1974
      %v2088 = vadd.f32 %v1814, %v1978
      %v2089 = vadd.f32 %v1815, %v1980
      %v2090 = vadd.f32 %v1816, %v1979
      %v2091 = vadd.f32 %v1817, %v1983
      %v2092 = vadd.f32 %v1818, %v1985
      %v2093 = vadd.f32 %v1819, %v1984
      %v2094 = vadd.f32 %v1820, %v1988
      %v2095 = vadd.f32 %v1821, %v1990
      %v2096 = vadd.f32 %v1822, %v1989
      %v2097 = vadd.f32 %v1823, %v1993
      %v2098 = vadd.f32 %v1824, %v1995
      %v2099 = vadd.f32 %v1825, %v1994
      %v2100 = vadd.f32 %v1826, %v1998
      %v2101 = vadd.f32 %v1827, %v2000
      %v2102 = vadd.f32 %v1828, %v1999
      %v2103 = vadd.f32 %v1829, %v2003
      %v2104 = vadd.f32 %v1830, %v2005
      %v2105 = vadd.f32 %v1831, %v2004
      %v2106 = vadd.f32 %v1832, %v2008
      %v2107 = vadd.f32 %v1833, %v2010
      %v2108 = vadd.f32 %v1834, %v2009
      %v2109 = vadd.f32 %v1835, %v2013
      %v2110 = vadd.f32 %v1836, %v2015
      %v2111 = vadd.f32 %v1837, %v2014
      %v2112 = vperm.slane %v1736, 2
      %v2113 = vmul.f32 %v1657, %v2112
      %v2114 = vmul.f32 %v1658, %v2112
      %v2115 = vmul.f32 %v1661, %v2112
      %v2116 = vmul.f32 %v1662, %v2112
      %v2117 = vmul.f32 %v1665, %v2112
      %v2118 = vmul.f32 %v1666, %v2112
      %v2119 = vmul.f32 %v1669, %v2112
      %v2120 = vmul.f32 %v1670, %v2112
      %v2121 = vmul.f32 %v1673, %v2112
      %v2122 = vmul.f32 %v1674, %v2112
      %v2123 = vmul.f32 %v1677, %v2112
      %v2124 = vmul.f32 %v1678, %v2112
      %v2125 = vmul.f32 %v1681, %v2112
      %v2126 = vmul.f32 %v1682, %v2112
      %v2127 = vmul.f32 %v1685, %v2112
      %v2128 = vmul.f32 %v1686, %v2112
      %v2129 = vmul.f32 %v1689, %v2112
      %v2130 = vmul.f32 %v1690, %v2112
      %v2131 = vmul.f32 %v1693, %v2112
      %v2132 = vmul.f32 %v1694, %v2112
      %v2133 = vmul.f32 %v1697, %v2112
      %v2134 = vmul.f32 %v1698, %v2112
      %v2135 = vmul.f32 %v1701, %v2112
      %v2136 = vmul.f32 %v1702, %v2112
      %v2137 = vmul.f32 %v1705, %v2112
      %v2138 = vmul.f32 %v1706, %v2112
      %v2139 = vmul.f32 %v1709, %v2112
      %v2140 = vmul.f32 %v1710, %v2112
      %v2141 = vmul.f32 %v1713, %v2112
      %v2142 = vmul.f32 %v1714, %v2112
      %v2143 = vmul.f32 %v1717, %v2112
      %v2144 = vmul.f32 %v1718, %v2112
      %vm2177 = vcmask 1045504
      %v2178 = vrot.slane %v2113, 2
      %v2179 = vrot.slane %v2114, 2
      %v2180 = vsel %vm2177, %v2178, %v2179
      %v2181 = vrot.slane %v2115, 2
      %v2182 = vrot.slane %v2116, 2
      %v2183 = vsel %vm2177, %v2181, %v2182
      %v2184 = vrot.slane %v2117, 2
      %v2185 = vrot.slane %v2118, 2
      %v2186 = vsel %vm2177, %v2184, %v2185
      %v2187 = vrot.slane %v2119, 2
      %v2188 = vrot.slane %v2120, 2
      %v2189 = vsel %vm2177, %v2187, %v2188
      %v2190 = vrot.slane %v2121, 2
      %v2191 = vrot.slane %v2122, 2
      %v2192 = vsel %vm2177, %v2190, %v2191
      %v2193 = vrot.slane %v2123, 2
      %v2194 = vrot.slane %v2124, 2
      %v2195 = vsel %vm2177, %v2193, %v2194
      %v2196 = vrot.slane %v2125, 2
      %v2197 = vrot.slane %v2126, 2
      %v2198 = vsel %vm2177, %v2196, %v2197
      %v2199 = vrot.slane %v2127, 2
      %v2200 = vrot.slane %v2128, 2
      %v2201 = vsel %vm2177, %v2199, %v2200
      %v2202 = vrot.slane %v2129, 2
      %v2203 = vrot.slane %v2130, 2
      %v2204 = vsel %vm2177, %v2202, %v2203
      %v2205 = vrot.slane %v2131, 2
      %v2206 = vrot.slane %v2132, 2
      %v2207 = vsel %vm2177, %v2205, %v2206
      %v2208 = vrot.slane %v2133, 2
      %v2209 = vrot.slane %v2134, 2
      %v2210 = vsel %vm2177, %v2208, %v2209
      %v2211 = vrot.slane %v2135, 2
      %v2212 = vrot.slane %v2136, 2
      %v2213 = vsel %vm2177, %v2211, %v2212
      %v2214 = vrot.slane %v2137, 2
      %v2215 = vrot.slane %v2138, 2
      %v2216 = vsel %vm2177, %v2214, %v2215
      %v2217 = vrot.slane %v2139, 2
      %v2218 = vrot.slane %v2140, 2
      %v2219 = vsel %vm2177, %v2217, %v2218
      %v2220 = vrot.slane %v2141, 2
      %v2221 = vrot.slane %v2142, 2
      %v2222 = vsel %vm2177, %v2220, %v2221
      %v2223 = vrot.slane %v2143, 2
      %v2224 = vrot.slane %v2144, 2
      %v2225 = vsel %vm2177, %v2223, %v2224
      %v2274 = vadd.f32 %v2064, %v2178
      %v2275 = vadd.f32 %v2065, %v2180
      %v2276 = vadd.f32 %v2066, %v2179
      %v2277 = vadd.f32 %v2067, %v2181
      %v2278 = vadd.f32 %v2068, %v2183
      %v2279 = vadd.f32 %v2069, %v2182
      %v2280 = vadd.f32 %v2070, %v2184
      %v2281 = vadd.f32 %v2071, %v2186
      %v2282 = vadd.f32 %v2072, %v2185
      %v2283 = vadd.f32 %v2073, %v2187
      %v2284 = vadd.f32 %v2074, %v2189
      %v2285 = vadd.f32 %v2075, %v2188
      %v2286 = vadd.f32 %v2076, %v2190
      %v2287 = vadd.f32 %v2077, %v2192
      %v2288 = vadd.f32 %v2078, %v2191
      %v2289 = vadd.f32 %v2079, %v2193
      %v2290 = vadd.f32 %v2080, %v2195
      %v2291 = vadd.f32 %v2081, %v2194
      %v2292 = vadd.f32 %v2082, %v2196
      %v2293 = vadd.f32 %v2083, %v2198
      %v2294 = vadd.f32 %v2084, %v2197
      %v2295 = vadd.f32 %v2085, %v2199
      %v2296 = vadd.f32 %v2086, %v2201
      %v2297 = vadd.f32 %v2087, %v2200
      %v2298 = vadd.f32 %v2088, %v2202
      %v2299 = vadd.f32 %v2089, %v2204
      %v2300 = vadd.f32 %v2090, %v2203
      %v2301 = vadd.f32 %v2091, %v2205
      %v2302 = vadd.f32 %v2092, %v2207
      %v2303 = vadd.f32 %v2093, %v2206
      %v2304 = vadd.f32 %v2094, %v2208
      %v2305 = vadd.f32 %v2095, %v2210
      %v2306 = vadd.f32 %v2096, %v2209
      %v2307 = vadd.f32 %v2097, %v2211
      %v2308 = vadd.f32 %v2098, %v2213
      %v2309 = vadd.f32 %v2099, %v2212
      %v2310 = vadd.f32 %v2100, %v2214
      %v2311 = vadd.f32 %v2101, %v2216
      %v2312 = vadd.f32 %v2102, %v2215
      %v2313 = vadd.f32 %v2103, %v2217
      %v2314 = vadd.f32 %v2104, %v2219
      %v2315 = vadd.f32 %v2105, %v2218
      %v2316 = vadd.f32 %v2106, %v2220
      %v2317 = vadd.f32 %v2107, %v2222
      %v2318 = vadd.f32 %v2108, %v2221
      %v2319 = vadd.f32 %v2109, %v2223
      %v2320 = vadd.f32 %v2110, %v2225
      %v2321 = vadd.f32 %v2111, %v2224
      %v2322 = vperm.slane %v1736, 3
      %v2323 = vmul.f32 %v1657, %v2322
      %v2324 = vmul.f32 %v1658, %v2322
      %v2325 = vmul.f32 %v1659, %v2322
      %v2326 = vmul.f32 %v1661, %v2322
      %v2327 = vmul.f32 %v1662, %v2322
      %v2328 = vmul.f32 %v1663, %v2322
      %v2329 = vmul.f32 %v1665, %v2322
      %v2330 = vmul.f32 %v1666, %v2322
      %v2331 = vmul.f32 %v1667, %v2322
      %v2332 = vmul.f32 %v1669, %v2322
      %v2333 = vmul.f32 %v1670, %v2322
      %v2334 = vmul.f32 %v1671, %v2322
      %v2335 = vmul.f32 %v1673, %v2322
      %v2336 = vmul.f32 %v1674, %v2322
      %v2337 = vmul.f32 %v1675, %v2322
      %v2338 = vmul.f32 %v1677, %v2322
      %v2339 = vmul.f32 %v1678, %v2322
      %v2340 = vmul.f32 %v1679, %v2322
      %v2341 = vmul.f32 %v1681, %v2322
      %v2342 = vmul.f32 %v1682, %v2322
      %v2343 = vmul.f32 %v1683, %v2322
      %v2344 = vmul.f32 %v1685, %v2322
      %v2345 = vmul.f32 %v1686, %v2322
      %v2346 = vmul.f32 %v1687, %v2322
      %v2347 = vmul.f32 %v1689, %v2322
      %v2348 = vmul.f32 %v1690, %v2322
      %v2349 = vmul.f32 %v1691, %v2322
      %v2350 = vmul.f32 %v1693, %v2322
      %v2351 = vmul.f32 %v1694, %v2322
      %v2352 = vmul.f32 %v1695, %v2322
      %v2353 = vmul.f32 %v1697, %v2322
      %v2354 = vmul.f32 %v1698, %v2322
      %v2355 = vmul.f32 %v1699, %v2322
      %v2356 = vmul.f32 %v1701, %v2322
      %v2357 = vmul.f32 %v1702, %v2322
      %v2358 = vmul.f32 %v1703, %v2322
      %v2359 = vmul.f32 %v1705, %v2322
      %v2360 = vmul.f32 %v1706, %v2322
      %v2361 = vmul.f32 %v1707, %v2322
      %v2362 = vmul.f32 %v1709, %v2322
      %v2363 = vmul.f32 %v1710, %v2322
      %v2364 = vmul.f32 %v1711, %v2322
      %v2365 = vmul.f32 %v1713, %v2322
      %v2366 = vmul.f32 %v1714, %v2322
      %v2367 = vmul.f32 %v1715, %v2322
      %v2368 = vmul.f32 %v1717, %v2322
      %v2369 = vmul.f32 %v1718, %v2322
      %v2370 = vmul.f32 %v1719, %v2322
      %vm2419 = vcmask 1044480
      %v2420 = vrot.slane %v2323, 3
      %v2421 = vrot.slane %v2324, 3
      %v2422 = vsel %vm2419, %v2420, %v2421
      %v2423 = vrot.slane %v2325, 3
      %v2424 = vsel %vm2419, %v2421, %v2423
      %v2425 = vrot.slane %v2326, 3
      %v2426 = vrot.slane %v2327, 3
      %v2427 = vsel %vm2419, %v2425, %v2426
      %v2428 = vrot.slane %v2328, 3
      %v2429 = vsel %vm2419, %v2426, %v2428
      %v2430 = vrot.slane %v2329, 3
      %v2431 = vrot.slane %v2330, 3
      %v2432 = vsel %vm2419, %v2430, %v2431
      %v2433 = vrot.slane %v2331, 3
      %v2434 = vsel %vm2419, %v2431, %v2433
      %v2435 = vrot.slane %v2332, 3
      %v2436 = vrot.slane %v2333, 3
      %v2437 = vsel %vm2419, %v2435, %v2436
      %v2438 = vrot.slane %v2334, 3
      %v2439 = vsel %vm2419, %v2436, %v2438
      %v2440 = vrot.slane %v2335, 3
      %v2441 = vrot.slane %v2336, 3
      %v2442 = vsel %vm2419, %v2440, %v2441
      %v2443 = vrot.slane %v2337, 3
      %v2444 = vsel %vm2419, %v2441, %v2443
      %v2445 = vrot.slane %v2338, 3
      %v2446 = vrot.slane %v2339, 3
      %v2447 = vsel %vm2419, %v2445, %v2446
      %v2448 = vrot.slane %v2340, 3
      %v2449 = vsel %vm2419, %v2446, %v2448
      %v2450 = vrot.slane %v2341, 3
      %v2451 = vrot.slane %v2342, 3
      %v2452 = vsel %vm2419, %v2450, %v2451
      %v2453 = vrot.slane %v2343, 3
      %v2454 = vsel %vm2419, %v2451, %v2453
      %v2455 = vrot.slane %v2344, 3
      %v2456 = vrot.slane %v2345, 3
      %v2457 = vsel %vm2419, %v2455, %v2456
      %v2458 = vrot.slane %v2346, 3
      %v2459 = vsel %vm2419, %v2456, %v2458
      %v2460 = vrot.slane %v2347, 3
      %v2461 = vrot.slane %v2348, 3
      %v2462 = vsel %vm2419, %v2460, %v2461
      %v2463 = vrot.slane %v2349, 3
      %v2464 = vsel %vm2419, %v2461, %v2463
      %v2465 = vrot.slane %v2350, 3
      %v2466 = vrot.slane %v2351, 3
      %v2467 = vsel %vm2419, %v2465, %v2466
      %v2468 = vrot.slane %v2352, 3
      %v2469 = vsel %vm2419, %v2466, %v2468
      %v2470 = vrot.slane %v2353, 3
      %v2471 = vrot.slane %v2354, 3
      %v2472 = vsel %vm2419, %v2470, %v2471
      %v2473 = vrot.slane %v2355, 3
      %v2474 = vsel %vm2419, %v2471, %v2473
      %v2475 = vrot.slane %v2356, 3
      %v2476 = vrot.slane %v2357, 3
      %v2477 = vsel %vm2419, %v2475, %v2476
      %v2478 = vrot.slane %v2358, 3
      %v2479 = vsel %vm2419, %v2476, %v2478
      %v2480 = vrot.slane %v2359, 3
      %v2481 = vrot.slane %v2360, 3
      %v2482 = vsel %vm2419, %v2480, %v2481
      %v2483 = vrot.slane %v2361, 3
      %v2484 = vsel %vm2419, %v2481, %v2483
      %v2485 = vrot.slane %v2362, 3
      %v2486 = vrot.slane %v2363, 3
      %v2487 = vsel %vm2419, %v2485, %v2486
      %v2488 = vrot.slane %v2364, 3
      %v2489 = vsel %vm2419, %v2486, %v2488
      %v2490 = vrot.slane %v2365, 3
      %v2491 = vrot.slane %v2366, 3
      %v2492 = vsel %vm2419, %v2490, %v2491
      %v2493 = vrot.slane %v2367, 3
      %v2494 = vsel %vm2419, %v2491, %v2493
      %v2495 = vrot.slane %v2368, 3
      %v2496 = vrot.slane %v2369, 3
      %v2497 = vsel %vm2419, %v2495, %v2496
      %v2498 = vrot.slane %v2370, 3
      %v2499 = vsel %vm2419, %v2496, %v2498
      %v2548 = vadd.f32 %v2274, %v2420
      %v2549 = vadd.f32 %v2275, %v2422
      %v2550 = vadd.f32 %v2276, %v2424
      %v2551 = vadd.f32 %v2277, %v2425
      %v2552 = vadd.f32 %v2278, %v2427
      %v2553 = vadd.f32 %v2279, %v2429
      %v2554 = vadd.f32 %v2280, %v2430
      %v2555 = vadd.f32 %v2281, %v2432
      %v2556 = vadd.f32 %v2282, %v2434
      %v2557 = vadd.f32 %v2283, %v2435
      %v2558 = vadd.f32 %v2284, %v2437
      %v2559 = vadd.f32 %v2285, %v2439
      %v2560 = vadd.f32 %v2286, %v2440
      %v2561 = vadd.f32 %v2287, %v2442
      %v2562 = vadd.f32 %v2288, %v2444
      %v2563 = vadd.f32 %v2289, %v2445
      %v2564 = vadd.f32 %v2290, %v2447
      %v2565 = vadd.f32 %v2291, %v2449
      %v2566 = vadd.f32 %v2292, %v2450
      %v2567 = vadd.f32 %v2293, %v2452
      %v2568 = vadd.f32 %v2294, %v2454
      %v2569 = vadd.f32 %v2295, %v2455
      %v2570 = vadd.f32 %v2296, %v2457
      %v2571 = vadd.f32 %v2297, %v2459
      %v2572 = vadd.f32 %v2298, %v2460
      %v2573 = vadd.f32 %v2299, %v2462
      %v2574 = vadd.f32 %v2300, %v2464
      %v2575 = vadd.f32 %v2301, %v2465
      %v2576 = vadd.f32 %v2302, %v2467
      %v2577 = vadd.f32 %v2303, %v2469
      %v2578 = vadd.f32 %v2304, %v2470
      %v2579 = vadd.f32 %v2305, %v2472
      %v2580 = vadd.f32 %v2306, %v2474
      %v2581 = vadd.f32 %v2307, %v2475
      %v2582 = vadd.f32 %v2308, %v2477
      %v2583 = vadd.f32 %v2309, %v2479
      %v2584 = vadd.f32 %v2310, %v2480
      %v2585 = vadd.f32 %v2311, %v2482
      %v2586 = vadd.f32 %v2312, %v2484
      %v2587 = vadd.f32 %v2313, %v2485
      %v2588 = vadd.f32 %v2314, %v2487
      %v2589 = vadd.f32 %v2315, %v2489
      %v2590 = vadd.f32 %v2316, %v2490
      %v2591 = vadd.f32 %v2317, %v2492
      %v2592 = vadd.f32 %v2318, %v2494
      %v2593 = vadd.f32 %v2319, %v2495
      %v2594 = vadd.f32 %v2320, %v2497
      %v2595 = vadd.f32 %v2321, %v2499
      %v2596 = vperm.slane %v1736, 4
      %v2597 = vmul.f32 %v1657, %v2596
      %v2598 = vmul.f32 %v1658, %v2596
      %v2599 = vmul.f32 %v1659, %v2596
      %v2600 = vmul.f32 %v1661, %v2596
      %v2601 = vmul.f32 %v1662, %v2596
      %v2602 = vmul.f32 %v1663, %v2596
      %v2603 = vmul.f32 %v1665, %v2596
      %v2604 = vmul.f32 %v1666, %v2596
      %v2605 = vmul.f32 %v1667, %v2596
      %v2606 = vmul.f32 %v1669, %v2596
      %v2607 = vmul.f32 %v1670, %v2596
      %v2608 = vmul.f32 %v1671, %v2596
      %v2609 = vmul.f32 %v1673, %v2596
      %v2610 = vmul.f32 %v1674, %v2596
      %v2611 = vmul.f32 %v1675, %v2596
      %v2612 = vmul.f32 %v1677, %v2596
      %v2613 = vmul.f32 %v1678, %v2596
      %v2614 = vmul.f32 %v1679, %v2596
      %v2615 = vmul.f32 %v1681, %v2596
      %v2616 = vmul.f32 %v1682, %v2596
      %v2617 = vmul.f32 %v1683, %v2596
      %v2618 = vmul.f32 %v1685, %v2596
      %v2619 = vmul.f32 %v1686, %v2596
      %v2620 = vmul.f32 %v1687, %v2596
      %v2621 = vmul.f32 %v1689, %v2596
      %v2622 = vmul.f32 %v1690, %v2596
      %v2623 = vmul.f32 %v1691, %v2596
      %v2624 = vmul.f32 %v1693, %v2596
      %v2625 = vmul.f32 %v1694, %v2596
      %v2626 = vmul.f32 %v1695, %v2596
      %v2627 = vmul.f32 %v1697, %v2596
      %v2628 = vmul.f32 %v1698, %v2596
      %v2629 = vmul.f32 %v1699, %v2596
      %v2630 = vmul.f32 %v1701, %v2596
      %v2631 = vmul.f32 %v1702, %v2596
      %v2632 = vmul.f32 %v1703, %v2596
      %v2633 = vmul.f32 %v1705, %v2596
      %v2634 = vmul.f32 %v1706, %v2596
      %v2635 = vmul.f32 %v1707, %v2596
      %v2636 = vmul.f32 %v1709, %v2596
      %v2637 = vmul.f32 %v1710, %v2596
      %v2638 = vmul.f32 %v1711, %v2596
      %v2639 = vmul.f32 %v1713, %v2596
      %v2640 = vmul.f32 %v1714, %v2596
      %v2641 = vmul.f32 %v1715, %v2596
      %v2642 = vmul.f32 %v1717, %v2596
      %v2643 = vmul.f32 %v1718, %v2596
      %v2644 = vmul.f32 %v1719, %v2596
      %vm2693 = vcmask 1043456
      %v2694 = vrot.slane %v2597, 4
      %v2695 = vrot.slane %v2598, 4
      %v2696 = vsel %vm2693, %v2694, %v2695
      %v2697 = vrot.slane %v2599, 4
      %v2698 = vsel %vm2693, %v2695, %v2697
      %v2699 = vrot.slane %v2600, 4
      %v2700 = vrot.slane %v2601, 4
      %v2701 = vsel %vm2693, %v2699, %v2700
      %v2702 = vrot.slane %v2602, 4
      %v2703 = vsel %vm2693, %v2700, %v2702
      %v2704 = vrot.slane %v2603, 4
      %v2705 = vrot.slane %v2604, 4
      %v2706 = vsel %vm2693, %v2704, %v2705
      %v2707 = vrot.slane %v2605, 4
      %v2708 = vsel %vm2693, %v2705, %v2707
      %v2709 = vrot.slane %v2606, 4
      %v2710 = vrot.slane %v2607, 4
      %v2711 = vsel %vm2693, %v2709, %v2710
      %v2712 = vrot.slane %v2608, 4
      %v2713 = vsel %vm2693, %v2710, %v2712
      %v2714 = vrot.slane %v2609, 4
      %v2715 = vrot.slane %v2610, 4
      %v2716 = vsel %vm2693, %v2714, %v2715
      %v2717 = vrot.slane %v2611, 4
      %v2718 = vsel %vm2693, %v2715, %v2717
      %v2719 = vrot.slane %v2612, 4
      %v2720 = vrot.slane %v2613, 4
      %v2721 = vsel %vm2693, %v2719, %v2720
      %v2722 = vrot.slane %v2614, 4
      %v2723 = vsel %vm2693, %v2720, %v2722
      %v2724 = vrot.slane %v2615, 4
      %v2725 = vrot.slane %v2616, 4
      %v2726 = vsel %vm2693, %v2724, %v2725
      %v2727 = vrot.slane %v2617, 4
      %v2728 = vsel %vm2693, %v2725, %v2727
      %v2729 = vrot.slane %v2618, 4
      %v2730 = vrot.slane %v2619, 4
      %v2731 = vsel %vm2693, %v2729, %v2730
      %v2732 = vrot.slane %v2620, 4
      %v2733 = vsel %vm2693, %v2730, %v2732
      %v2734 = vrot.slane %v2621, 4
      %v2735 = vrot.slane %v2622, 4
      %v2736 = vsel %vm2693, %v2734, %v2735
      %v2737 = vrot.slane %v2623, 4
      %v2738 = vsel %vm2693, %v2735, %v2737
      %v2739 = vrot.slane %v2624, 4
      %v2740 = vrot.slane %v2625, 4
      %v2741 = vsel %vm2693, %v2739, %v2740
      %v2742 = vrot.slane %v2626, 4
      %v2743 = vsel %vm2693, %v2740, %v2742
      %v2744 = vrot.slane %v2627, 4
      %v2745 = vrot.slane %v2628, 4
      %v2746 = vsel %vm2693, %v2744, %v2745
      %v2747 = vrot.slane %v2629, 4
      %v2748 = vsel %vm2693, %v2745, %v2747
      %v2749 = vrot.slane %v2630, 4
      %v2750 = vrot.slane %v2631, 4
      %v2751 = vsel %vm2693, %v2749, %v2750
      %v2752 = vrot.slane %v2632, 4
      %v2753 = vsel %vm2693, %v2750, %v2752
      %v2754 = vrot.slane %v2633, 4
      %v2755 = vrot.slane %v2634, 4
      %v2756 = vsel %vm2693, %v2754, %v2755
      %v2757 = vrot.slane %v2635, 4
      %v2758 = vsel %vm2693, %v2755, %v2757
      %v2759 = vrot.slane %v2636, 4
      %v2760 = vrot.slane %v2637, 4
      %v2761 = vsel %vm2693, %v2759, %v2760
      %v2762 = vrot.slane %v2638, 4
      %v2763 = vsel %vm2693, %v2760, %v2762
      %v2764 = vrot.slane %v2639, 4
      %v2765 = vrot.slane %v2640, 4
      %v2766 = vsel %vm2693, %v2764, %v2765
      %v2767 = vrot.slane %v2641, 4
      %v2768 = vsel %vm2693, %v2765, %v2767
      %v2769 = vrot.slane %v2642, 4
      %v2770 = vrot.slane %v2643, 4
      %v2771 = vsel %vm2693, %v2769, %v2770
      %v2772 = vrot.slane %v2644, 4
      %v2773 = vsel %vm2693, %v2770, %v2772
      %v2822 = vadd.f32 %v2548, %v2694
      %v2823 = vadd.f32 %v2549, %v2696
      %v2824 = vadd.f32 %v2550, %v2698
      %v2825 = vadd.f32 %v2551, %v2699
      %v2826 = vadd.f32 %v2552, %v2701
      %v2827 = vadd.f32 %v2553, %v2703
      %v2828 = vadd.f32 %v2554, %v2704
      %v2829 = vadd.f32 %v2555, %v2706
      %v2830 = vadd.f32 %v2556, %v2708
      %v2831 = vadd.f32 %v2557, %v2709
      %v2832 = vadd.f32 %v2558, %v2711
      %v2833 = vadd.f32 %v2559, %v2713
      %v2834 = vadd.f32 %v2560, %v2714
      %v2835 = vadd.f32 %v2561, %v2716
      %v2836 = vadd.f32 %v2562, %v2718
      %v2837 = vadd.f32 %v2563, %v2719
      %v2838 = vadd.f32 %v2564, %v2721
      %v2839 = vadd.f32 %v2565, %v2723
      %v2840 = vadd.f32 %v2566, %v2724
      %v2841 = vadd.f32 %v2567, %v2726
      %v2842 = vadd.f32 %v2568, %v2728
      %v2843 = vadd.f32 %v2569, %v2729
      %v2844 = vadd.f32 %v2570, %v2731
      %v2845 = vadd.f32 %v2571, %v2733
      %v2846 = vadd.f32 %v2572, %v2734
      %v2847 = vadd.f32 %v2573, %v2736
      %v2848 = vadd.f32 %v2574, %v2738
      %v2849 = vadd.f32 %v2575, %v2739
      %v2850 = vadd.f32 %v2576, %v2741
      %v2851 = vadd.f32 %v2577, %v2743
      %v2852 = vadd.f32 %v2578, %v2744
      %v2853 = vadd.f32 %v2579, %v2746
      %v2854 = vadd.f32 %v2580, %v2748
      %v2855 = vadd.f32 %v2581, %v2749
      %v2856 = vadd.f32 %v2582, %v2751
      %v2857 = vadd.f32 %v2583, %v2753
      %v2858 = vadd.f32 %v2584, %v2754
      %v2859 = vadd.f32 %v2585, %v2756
      %v2860 = vadd.f32 %v2586, %v2758
      %v2861 = vadd.f32 %v2587, %v2759
      %v2862 = vadd.f32 %v2588, %v2761
      %v2863 = vadd.f32 %v2589, %v2763
      %v2864 = vadd.f32 %v2590, %v2764
      %v2865 = vadd.f32 %v2591, %v2766
      %v2866 = vadd.f32 %v2592, %v2768
      %v2867 = vadd.f32 %v2593, %v2769
      %v2868 = vadd.f32 %v2594, %v2771
      %v2869 = vadd.f32 %v2595, %v2773
      %v2870 = vperm.slane %v1737, 0
      %v2871 = vmul.f32 %v1660, %v2870
      %v2872 = vmul.f32 %v1661, %v2870
      %v2873 = vmul.f32 %v1662, %v2870
      %v2874 = vmul.f32 %v1664, %v2870
      %v2875 = vmul.f32 %v1665, %v2870
      %v2876 = vmul.f32 %v1666, %v2870
      %v2877 = vmul.f32 %v1668, %v2870
      %v2878 = vmul.f32 %v1669, %v2870
      %v2879 = vmul.f32 %v1670, %v2870
      %v2880 = vmul.f32 %v1672, %v2870
      %v2881 = vmul.f32 %v1673, %v2870
      %v2882 = vmul.f32 %v1674, %v2870
      %v2883 = vmul.f32 %v1676, %v2870
      %v2884 = vmul.f32 %v1677, %v2870
      %v2885 = vmul.f32 %v1678, %v2870
      %v2886 = vmul.f32 %v1680, %v2870
      %v2887 = vmul.f32 %v1681, %v2870
      %v2888 = vmul.f32 %v1682, %v2870
      %v2889 = vmul.f32 %v1684, %v2870
      %v2890 = vmul.f32 %v1685, %v2870
      %v2891 = vmul.f32 %v1686, %v2870
      %v2892 = vmul.f32 %v1688, %v2870
      %v2893 = vmul.f32 %v1689, %v2870
      %v2894 = vmul.f32 %v1690, %v2870
      %v2895 = vmul.f32 %v1692, %v2870
      %v2896 = vmul.f32 %v1693, %v2870
      %v2897 = vmul.f32 %v1694, %v2870
      %v2898 = vmul.f32 %v1696, %v2870
      %v2899 = vmul.f32 %v1697, %v2870
      %v2900 = vmul.f32 %v1698, %v2870
      %v2901 = vmul.f32 %v1700, %v2870
      %v2902 = vmul.f32 %v1701, %v2870
      %v2903 = vmul.f32 %v1702, %v2870
      %v2904 = vmul.f32 %v1704, %v2870
      %v2905 = vmul.f32 %v1705, %v2870
      %v2906 = vmul.f32 %v1706, %v2870
      %v2907 = vmul.f32 %v1708, %v2870
      %v2908 = vmul.f32 %v1709, %v2870
      %v2909 = vmul.f32 %v1710, %v2870
      %v2910 = vmul.f32 %v1712, %v2870
      %v2911 = vmul.f32 %v1713, %v2870
      %v2912 = vmul.f32 %v1714, %v2870
      %v2913 = vmul.f32 %v1716, %v2870
      %v2914 = vmul.f32 %v1717, %v2870
      %v2915 = vmul.f32 %v1718, %v2870
      %v2916 = vmul.f32 %v1720, %v2870
      %v2917 = vmul.f32 %v1721, %v2870
      %v2918 = vmul.f32 %v1722, %v2870
      %v2919 = vadd.f32 %v2822, %v2871
      %v2920 = vadd.f32 %v2823, %v2872
      %v2921 = vadd.f32 %v2824, %v2873
      %v2922 = vadd.f32 %v2825, %v2874
      %v2923 = vadd.f32 %v2826, %v2875
      %v2924 = vadd.f32 %v2827, %v2876
      %v2925 = vadd.f32 %v2828, %v2877
      %v2926 = vadd.f32 %v2829, %v2878
      %v2927 = vadd.f32 %v2830, %v2879
      %v2928 = vadd.f32 %v2831, %v2880
      %v2929 = vadd.f32 %v2832, %v2881
      %v2930 = vadd.f32 %v2833, %v2882
      %v2931 = vadd.f32 %v2834, %v2883
      %v2932 = vadd.f32 %v2835, %v2884
      %v2933 = vadd.f32 %v2836, %v2885
      %v2934 = vadd.f32 %v2837, %v2886
      %v2935 = vadd.f32 %v2838, %v2887
      %v2936 = vadd.f32 %v2839, %v2888
      %v2937 = vadd.f32 %v2840, %v2889
      %v2938 = vadd.f32 %v2841, %v2890
      %v2939 = vadd.f32 %v2842, %v2891
      %v2940 = vadd.f32 %v2843, %v2892
      %v2941 = vadd.f32 %v2844, %v2893
      %v2942 = vadd.f32 %v2845, %v2894
      %v2943 = vadd.f32 %v2846, %v2895
      %v2944 = vadd.f32 %v2847, %v2896
      %v2945 = vadd.f32 %v2848, %v2897
      %v2946 = vadd.f32 %v2849, %v2898
      %v2947 = vadd.f32 %v2850, %v2899
      %v2948 = vadd.f32 %v2851, %v2900
      %v2949 = vadd.f32 %v2852, %v2901
      %v2950 = vadd.f32 %v2853, %v2902
      %v2951 = vadd.f32 %v2854, %v2903
      %v2952 = vadd.f32 %v2855, %v2904
      %v2953 = vadd.f32 %v2856, %v2905
      %v2954 = vadd.f32 %v2857, %v2906
      %v2955 = vadd.f32 %v2858, %v2907
      %v2956 = vadd.f32 %v2859, %v2908
      %v2957 = vadd.f32 %v2860, %v2909
      %v2958 = vadd.f32 %v2861, %v2910
      %v2959 = vadd.f32 %v2862, %v2911
      %v2960 = vadd.f32 %v2863, %v2912
      %v2961 = vadd.f32 %v2864, %v2913
      %v2962 = vadd.f32 %v2865, %v2914
      %v2963 = vadd.f32 %v2866, %v2915
      %v2964 = vadd.f32 %v2867, %v2916
      %v2965 = vadd.f32 %v2868, %v2917
      %v2966 = vadd.f32 %v2869, %v2918
      %v2967 = vperm.slane %v1737, 1
      %v2968 = vmul.f32 %v1660, %v2967
      %v2969 = vmul.f32 %v1661, %v2967
      %v2970 = vmul.f32 %v1662, %v2967
      %v2971 = vmul.f32 %v1664, %v2967
      %v2972 = vmul.f32 %v1665, %v2967
      %v2973 = vmul.f32 %v1666, %v2967
      %v2974 = vmul.f32 %v1668, %v2967
      %v2975 = vmul.f32 %v1669, %v2967
      %v2976 = vmul.f32 %v1670, %v2967
      %v2977 = vmul.f32 %v1672, %v2967
      %v2978 = vmul.f32 %v1673, %v2967
      %v2979 = vmul.f32 %v1674, %v2967
      %v2980 = vmul.f32 %v1676, %v2967
      %v2981 = vmul.f32 %v1677, %v2967
      %v2982 = vmul.f32 %v1678, %v2967
      %v2983 = vmul.f32 %v1680, %v2967
      %v2984 = vmul.f32 %v1681, %v2967
      %v2985 = vmul.f32 %v1682, %v2967
      %v2986 = vmul.f32 %v1684, %v2967
      %v2987 = vmul.f32 %v1685, %v2967
      %v2988 = vmul.f32 %v1686, %v2967
      %v2989 = vmul.f32 %v1688, %v2967
      %v2990 = vmul.f32 %v1689, %v2967
      %v2991 = vmul.f32 %v1690, %v2967
      %v2992 = vmul.f32 %v1692, %v2967
      %v2993 = vmul.f32 %v1693, %v2967
      %v2994 = vmul.f32 %v1694, %v2967
      %v2995 = vmul.f32 %v1696, %v2967
      %v2996 = vmul.f32 %v1697, %v2967
      %v2997 = vmul.f32 %v1698, %v2967
      %v2998 = vmul.f32 %v1700, %v2967
      %v2999 = vmul.f32 %v1701, %v2967
      %v3000 = vmul.f32 %v1702, %v2967
      %v3001 = vmul.f32 %v1704, %v2967
      %v3002 = vmul.f32 %v1705, %v2967
      %v3003 = vmul.f32 %v1706, %v2967
      %v3004 = vmul.f32 %v1708, %v2967
      %v3005 = vmul.f32 %v1709, %v2967
      %v3006 = vmul.f32 %v1710, %v2967
      %v3007 = vmul.f32 %v1712, %v2967
      %v3008 = vmul.f32 %v1713, %v2967
      %v3009 = vmul.f32 %v1714, %v2967
      %v3010 = vmul.f32 %v1716, %v2967
      %v3011 = vmul.f32 %v1717, %v2967
      %v3012 = vmul.f32 %v1718, %v2967
      %v3013 = vmul.f32 %v1720, %v2967
      %v3014 = vmul.f32 %v1721, %v2967
      %v3015 = vmul.f32 %v1722, %v2967
      %v3064 = vrot.slane %v2968, 1
      %v3065 = vrot.slane %v2969, 1
      %v3066 = vsel %vm1935, %v3064, %v3065
      %v3067 = vrot.slane %v2970, 1
      %v3068 = vsel %vm1935, %v3065, %v3067
      %v3069 = vrot.slane %v2971, 1
      %v3070 = vrot.slane %v2972, 1
      %v3071 = vsel %vm1935, %v3069, %v3070
      %v3072 = vrot.slane %v2973, 1
      %v3073 = vsel %vm1935, %v3070, %v3072
      %v3074 = vrot.slane %v2974, 1
      %v3075 = vrot.slane %v2975, 1
      %v3076 = vsel %vm1935, %v3074, %v3075
      %v3077 = vrot.slane %v2976, 1
      %v3078 = vsel %vm1935, %v3075, %v3077
      %v3079 = vrot.slane %v2977, 1
      %v3080 = vrot.slane %v2978, 1
      %v3081 = vsel %vm1935, %v3079, %v3080
      %v3082 = vrot.slane %v2979, 1
      %v3083 = vsel %vm1935, %v3080, %v3082
      %v3084 = vrot.slane %v2980, 1
      %v3085 = vrot.slane %v2981, 1
      %v3086 = vsel %vm1935, %v3084, %v3085
      %v3087 = vrot.slane %v2982, 1
      %v3088 = vsel %vm1935, %v3085, %v3087
      %v3089 = vrot.slane %v2983, 1
      %v3090 = vrot.slane %v2984, 1
      %v3091 = vsel %vm1935, %v3089, %v3090
      %v3092 = vrot.slane %v2985, 1
      %v3093 = vsel %vm1935, %v3090, %v3092
      %v3094 = vrot.slane %v2986, 1
      %v3095 = vrot.slane %v2987, 1
      %v3096 = vsel %vm1935, %v3094, %v3095
      %v3097 = vrot.slane %v2988, 1
      %v3098 = vsel %vm1935, %v3095, %v3097
      %v3099 = vrot.slane %v2989, 1
      %v3100 = vrot.slane %v2990, 1
      %v3101 = vsel %vm1935, %v3099, %v3100
      %v3102 = vrot.slane %v2991, 1
      %v3103 = vsel %vm1935, %v3100, %v3102
      %v3104 = vrot.slane %v2992, 1
      %v3105 = vrot.slane %v2993, 1
      %v3106 = vsel %vm1935, %v3104, %v3105
      %v3107 = vrot.slane %v2994, 1
      %v3108 = vsel %vm1935, %v3105, %v3107
      %v3109 = vrot.slane %v2995, 1
      %v3110 = vrot.slane %v2996, 1
      %v3111 = vsel %vm1935, %v3109, %v3110
      %v3112 = vrot.slane %v2997, 1
      %v3113 = vsel %vm1935, %v3110, %v3112
      %v3114 = vrot.slane %v2998, 1
      %v3115 = vrot.slane %v2999, 1
      %v3116 = vsel %vm1935, %v3114, %v3115
      %v3117 = vrot.slane %v3000, 1
      %v3118 = vsel %vm1935, %v3115, %v3117
      %v3119 = vrot.slane %v3001, 1
      %v3120 = vrot.slane %v3002, 1
      %v3121 = vsel %vm1935, %v3119, %v3120
      %v3122 = vrot.slane %v3003, 1
      %v3123 = vsel %vm1935, %v3120, %v3122
      %v3124 = vrot.slane %v3004, 1
      %v3125 = vrot.slane %v3005, 1
      %v3126 = vsel %vm1935, %v3124, %v3125
      %v3127 = vrot.slane %v3006, 1
      %v3128 = vsel %vm1935, %v3125, %v3127
      %v3129 = vrot.slane %v3007, 1
      %v3130 = vrot.slane %v3008, 1
      %v3131 = vsel %vm1935, %v3129, %v3130
      %v3132 = vrot.slane %v3009, 1
      %v3133 = vsel %vm1935, %v3130, %v3132
      %v3134 = vrot.slane %v3010, 1
      %v3135 = vrot.slane %v3011, 1
      %v3136 = vsel %vm1935, %v3134, %v3135
      %v3137 = vrot.slane %v3012, 1
      %v3138 = vsel %vm1935, %v3135, %v3137
      %v3139 = vrot.slane %v3013, 1
      %v3140 = vrot.slane %v3014, 1
      %v3141 = vsel %vm1935, %v3139, %v3140
      %v3142 = vrot.slane %v3015, 1
      %v3143 = vsel %vm1935, %v3140, %v3142
      %v3192 = vadd.f32 %v2919, %v3066
      %v3193 = vadd.f32 %v2920, %v3068
      %v3194 = vadd.f32 %v2921, %v3067
      %v3195 = vadd.f32 %v2922, %v3071
      %v3196 = vadd.f32 %v2923, %v3073
      %v3197 = vadd.f32 %v2924, %v3072
      %v3198 = vadd.f32 %v2925, %v3076
      %v3199 = vadd.f32 %v2926, %v3078
      %v3200 = vadd.f32 %v2927, %v3077
      %v3201 = vadd.f32 %v2928, %v3081
      %v3202 = vadd.f32 %v2929, %v3083
      %v3203 = vadd.f32 %v2930, %v3082
      %v3204 = vadd.f32 %v2931, %v3086
      %v3205 = vadd.f32 %v2932, %v3088
      %v3206 = vadd.f32 %v2933, %v3087
      %v3207 = vadd.f32 %v2934, %v3091
      %v3208 = vadd.f32 %v2935, %v3093
      %v3209 = vadd.f32 %v2936, %v3092
      %v3210 = vadd.f32 %v2937, %v3096
      %v3211 = vadd.f32 %v2938, %v3098
      %v3212 = vadd.f32 %v2939, %v3097
      %v3213 = vadd.f32 %v2940, %v3101
      %v3214 = vadd.f32 %v2941, %v3103
      %v3215 = vadd.f32 %v2942, %v3102
      %v3216 = vadd.f32 %v2943, %v3106
      %v3217 = vadd.f32 %v2944, %v3108
      %v3218 = vadd.f32 %v2945, %v3107
      %v3219 = vadd.f32 %v2946, %v3111
      %v3220 = vadd.f32 %v2947, %v3113
      %v3221 = vadd.f32 %v2948, %v3112
      %v3222 = vadd.f32 %v2949, %v3116
      %v3223 = vadd.f32 %v2950, %v3118
      %v3224 = vadd.f32 %v2951, %v3117
      %v3225 = vadd.f32 %v2952, %v3121
      %v3226 = vadd.f32 %v2953, %v3123
      %v3227 = vadd.f32 %v2954, %v3122
      %v3228 = vadd.f32 %v2955, %v3126
      %v3229 = vadd.f32 %v2956, %v3128
      %v3230 = vadd.f32 %v2957, %v3127
      %v3231 = vadd.f32 %v2958, %v3131
      %v3232 = vadd.f32 %v2959, %v3133
      %v3233 = vadd.f32 %v2960, %v3132
      %v3234 = vadd.f32 %v2961, %v3136
      %v3235 = vadd.f32 %v2962, %v3138
      %v3236 = vadd.f32 %v2963, %v3137
      %v3237 = vadd.f32 %v2964, %v3141
      %v3238 = vadd.f32 %v2965, %v3143
      %v3239 = vadd.f32 %v2966, %v3142
      %v3240 = vperm.slane %v1737, 2
      %v3241 = vmul.f32 %v1661, %v3240
      %v3242 = vmul.f32 %v1662, %v3240
      %v3243 = vmul.f32 %v1665, %v3240
      %v3244 = vmul.f32 %v1666, %v3240
      %v3245 = vmul.f32 %v1669, %v3240
      %v3246 = vmul.f32 %v1670, %v3240
      %v3247 = vmul.f32 %v1673, %v3240
      %v3248 = vmul.f32 %v1674, %v3240
      %v3249 = vmul.f32 %v1677, %v3240
      %v3250 = vmul.f32 %v1678, %v3240
      %v3251 = vmul.f32 %v1681, %v3240
      %v3252 = vmul.f32 %v1682, %v3240
      %v3253 = vmul.f32 %v1685, %v3240
      %v3254 = vmul.f32 %v1686, %v3240
      %v3255 = vmul.f32 %v1689, %v3240
      %v3256 = vmul.f32 %v1690, %v3240
      %v3257 = vmul.f32 %v1693, %v3240
      %v3258 = vmul.f32 %v1694, %v3240
      %v3259 = vmul.f32 %v1697, %v3240
      %v3260 = vmul.f32 %v1698, %v3240
      %v3261 = vmul.f32 %v1701, %v3240
      %v3262 = vmul.f32 %v1702, %v3240
      %v3263 = vmul.f32 %v1705, %v3240
      %v3264 = vmul.f32 %v1706, %v3240
      %v3265 = vmul.f32 %v1709, %v3240
      %v3266 = vmul.f32 %v1710, %v3240
      %v3267 = vmul.f32 %v1713, %v3240
      %v3268 = vmul.f32 %v1714, %v3240
      %v3269 = vmul.f32 %v1717, %v3240
      %v3270 = vmul.f32 %v1718, %v3240
      %v3271 = vmul.f32 %v1721, %v3240
      %v3272 = vmul.f32 %v1722, %v3240
      %v3305 = vrot.slane %v3241, 2
      %v3306 = vrot.slane %v3242, 2
      %v3307 = vsel %vm2177, %v3305, %v3306
      %v3308 = vrot.slane %v3243, 2
      %v3309 = vrot.slane %v3244, 2
      %v3310 = vsel %vm2177, %v3308, %v3309
      %v3311 = vrot.slane %v3245, 2
      %v3312 = vrot.slane %v3246, 2
      %v3313 = vsel %vm2177, %v3311, %v3312
      %v3314 = vrot.slane %v3247, 2
      %v3315 = vrot.slane %v3248, 2
      %v3316 = vsel %vm2177, %v3314, %v3315
      %v3317 = vrot.slane %v3249, 2
      %v3318 = vrot.slane %v3250, 2
      %v3319 = vsel %vm2177, %v3317, %v3318
      %v3320 = vrot.slane %v3251, 2
      %v3321 = vrot.slane %v3252, 2
      %v3322 = vsel %vm2177, %v3320, %v3321
      %v3323 = vrot.slane %v3253, 2
      %v3324 = vrot.slane %v3254, 2
      %v3325 = vsel %vm2177, %v3323, %v3324
      %v3326 = vrot.slane %v3255, 2
      %v3327 = vrot.slane %v3256, 2
      %v3328 = vsel %vm2177, %v3326, %v3327
      %v3329 = vrot.slane %v3257, 2
      %v3330 = vrot.slane %v3258, 2
      %v3331 = vsel %vm2177, %v3329, %v3330
      %v3332 = vrot.slane %v3259, 2
      %v3333 = vrot.slane %v3260, 2
      %v3334 = vsel %vm2177, %v3332, %v3333
      %v3335 = vrot.slane %v3261, 2
      %v3336 = vrot.slane %v3262, 2
      %v3337 = vsel %vm2177, %v3335, %v3336
      %v3338 = vrot.slane %v3263, 2
      %v3339 = vrot.slane %v3264, 2
      %v3340 = vsel %vm2177, %v3338, %v3339
      %v3341 = vrot.slane %v3265, 2
      %v3342 = vrot.slane %v3266, 2
      %v3343 = vsel %vm2177, %v3341, %v3342
      %v3344 = vrot.slane %v3267, 2
      %v3345 = vrot.slane %v3268, 2
      %v3346 = vsel %vm2177, %v3344, %v3345
      %v3347 = vrot.slane %v3269, 2
      %v3348 = vrot.slane %v3270, 2
      %v3349 = vsel %vm2177, %v3347, %v3348
      %v3350 = vrot.slane %v3271, 2
      %v3351 = vrot.slane %v3272, 2
      %v3352 = vsel %vm2177, %v3350, %v3351
      %v3401 = vadd.f32 %v3192, %v3305
      %v3402 = vadd.f32 %v3193, %v3307
      %v3403 = vadd.f32 %v3194, %v3306
      %v3404 = vadd.f32 %v3195, %v3308
      %v3405 = vadd.f32 %v3196, %v3310
      %v3406 = vadd.f32 %v3197, %v3309
      %v3407 = vadd.f32 %v3198, %v3311
      %v3408 = vadd.f32 %v3199, %v3313
      %v3409 = vadd.f32 %v3200, %v3312
      %v3410 = vadd.f32 %v3201, %v3314
      %v3411 = vadd.f32 %v3202, %v3316
      %v3412 = vadd.f32 %v3203, %v3315
      %v3413 = vadd.f32 %v3204, %v3317
      %v3414 = vadd.f32 %v3205, %v3319
      %v3415 = vadd.f32 %v3206, %v3318
      %v3416 = vadd.f32 %v3207, %v3320
      %v3417 = vadd.f32 %v3208, %v3322
      %v3418 = vadd.f32 %v3209, %v3321
      %v3419 = vadd.f32 %v3210, %v3323
      %v3420 = vadd.f32 %v3211, %v3325
      %v3421 = vadd.f32 %v3212, %v3324
      %v3422 = vadd.f32 %v3213, %v3326
      %v3423 = vadd.f32 %v3214, %v3328
      %v3424 = vadd.f32 %v3215, %v3327
      %v3425 = vadd.f32 %v3216, %v3329
      %v3426 = vadd.f32 %v3217, %v3331
      %v3427 = vadd.f32 %v3218, %v3330
      %v3428 = vadd.f32 %v3219, %v3332
      %v3429 = vadd.f32 %v3220, %v3334
      %v3430 = vadd.f32 %v3221, %v3333
      %v3431 = vadd.f32 %v3222, %v3335
      %v3432 = vadd.f32 %v3223, %v3337
      %v3433 = vadd.f32 %v3224, %v3336
      %v3434 = vadd.f32 %v3225, %v3338
      %v3435 = vadd.f32 %v3226, %v3340
      %v3436 = vadd.f32 %v3227, %v3339
      %v3437 = vadd.f32 %v3228, %v3341
      %v3438 = vadd.f32 %v3229, %v3343
      %v3439 = vadd.f32 %v3230, %v3342
      %v3440 = vadd.f32 %v3231, %v3344
      %v3441 = vadd.f32 %v3232, %v3346
      %v3442 = vadd.f32 %v3233, %v3345
      %v3443 = vadd.f32 %v3234, %v3347
      %v3444 = vadd.f32 %v3235, %v3349
      %v3445 = vadd.f32 %v3236, %v3348
      %v3446 = vadd.f32 %v3237, %v3350
      %v3447 = vadd.f32 %v3238, %v3352
      %v3448 = vadd.f32 %v3239, %v3351
      %v3449 = vperm.slane %v1737, 3
      %v3450 = vmul.f32 %v1661, %v3449
      %v3451 = vmul.f32 %v1662, %v3449
      %v3452 = vmul.f32 %v1663, %v3449
      %v3453 = vmul.f32 %v1665, %v3449
      %v3454 = vmul.f32 %v1666, %v3449
      %v3455 = vmul.f32 %v1667, %v3449
      %v3456 = vmul.f32 %v1669, %v3449
      %v3457 = vmul.f32 %v1670, %v3449
      %v3458 = vmul.f32 %v1671, %v3449
      %v3459 = vmul.f32 %v1673, %v3449
      %v3460 = vmul.f32 %v1674, %v3449
      %v3461 = vmul.f32 %v1675, %v3449
      %v3462 = vmul.f32 %v1677, %v3449
      %v3463 = vmul.f32 %v1678, %v3449
      %v3464 = vmul.f32 %v1679, %v3449
      %v3465 = vmul.f32 %v1681, %v3449
      %v3466 = vmul.f32 %v1682, %v3449
      %v3467 = vmul.f32 %v1683, %v3449
      %v3468 = vmul.f32 %v1685, %v3449
      %v3469 = vmul.f32 %v1686, %v3449
      %v3470 = vmul.f32 %v1687, %v3449
      %v3471 = vmul.f32 %v1689, %v3449
      %v3472 = vmul.f32 %v1690, %v3449
      %v3473 = vmul.f32 %v1691, %v3449
      %v3474 = vmul.f32 %v1693, %v3449
      %v3475 = vmul.f32 %v1694, %v3449
      %v3476 = vmul.f32 %v1695, %v3449
      %v3477 = vmul.f32 %v1697, %v3449
      %v3478 = vmul.f32 %v1698, %v3449
      %v3479 = vmul.f32 %v1699, %v3449
      %v3480 = vmul.f32 %v1701, %v3449
      %v3481 = vmul.f32 %v1702, %v3449
      %v3482 = vmul.f32 %v1703, %v3449
      %v3483 = vmul.f32 %v1705, %v3449
      %v3484 = vmul.f32 %v1706, %v3449
      %v3485 = vmul.f32 %v1707, %v3449
      %v3486 = vmul.f32 %v1709, %v3449
      %v3487 = vmul.f32 %v1710, %v3449
      %v3488 = vmul.f32 %v1711, %v3449
      %v3489 = vmul.f32 %v1713, %v3449
      %v3490 = vmul.f32 %v1714, %v3449
      %v3491 = vmul.f32 %v1715, %v3449
      %v3492 = vmul.f32 %v1717, %v3449
      %v3493 = vmul.f32 %v1718, %v3449
      %v3494 = vmul.f32 %v1719, %v3449
      %v3495 = vmul.f32 %v1721, %v3449
      %v3496 = vmul.f32 %v1722, %v3449
      %v3497 = vmul.f32 %v1723, %v3449
      %v3546 = vrot.slane %v3450, 3
      %v3547 = vrot.slane %v3451, 3
      %v3548 = vsel %vm2419, %v3546, %v3547
      %v3549 = vrot.slane %v3452, 3
      %v3550 = vsel %vm2419, %v3547, %v3549
      %v3551 = vrot.slane %v3453, 3
      %v3552 = vrot.slane %v3454, 3
      %v3553 = vsel %vm2419, %v3551, %v3552
      %v3554 = vrot.slane %v3455, 3
      %v3555 = vsel %vm2419, %v3552, %v3554
      %v3556 = vrot.slane %v3456, 3
      %v3557 = vrot.slane %v3457, 3
      %v3558 = vsel %vm2419, %v3556, %v3557
      %v3559 = vrot.slane %v3458, 3
      %v3560 = vsel %vm2419, %v3557, %v3559
      %v3561 = vrot.slane %v3459, 3
      %v3562 = vrot.slane %v3460, 3
      %v3563 = vsel %vm2419, %v3561, %v3562
      %v3564 = vrot.slane %v3461, 3
      %v3565 = vsel %vm2419, %v3562, %v3564
      %v3566 = vrot.slane %v3462, 3
      %v3567 = vrot.slane %v3463, 3
      %v3568 = vsel %vm2419, %v3566, %v3567
      %v3569 = vrot.slane %v3464, 3
      %v3570 = vsel %vm2419, %v3567, %v3569
      %v3571 = vrot.slane %v3465, 3
      %v3572 = vrot.slane %v3466, 3
      %v3573 = vsel %vm2419, %v3571, %v3572
      %v3574 = vrot.slane %v3467, 3
      %v3575 = vsel %vm2419, %v3572, %v3574
      %v3576 = vrot.slane %v3468, 3
      %v3577 = vrot.slane %v3469, 3
      %v3578 = vsel %vm2419, %v3576, %v3577
      %v3579 = vrot.slane %v3470, 3
      %v3580 = vsel %vm2419, %v3577, %v3579
      %v3581 = vrot.slane %v3471, 3
      %v3582 = vrot.slane %v3472, 3
      %v3583 = vsel %vm2419, %v3581, %v3582
      %v3584 = vrot.slane %v3473, 3
      %v3585 = vsel %vm2419, %v3582, %v3584
      %v3586 = vrot.slane %v3474, 3
      %v3587 = vrot.slane %v3475, 3
      %v3588 = vsel %vm2419, %v3586, %v3587
      %v3589 = vrot.slane %v3476, 3
      %v3590 = vsel %vm2419, %v3587, %v3589
      %v3591 = vrot.slane %v3477, 3
      %v3592 = vrot.slane %v3478, 3
      %v3593 = vsel %vm2419, %v3591, %v3592
      %v3594 = vrot.slane %v3479, 3
      %v3595 = vsel %vm2419, %v3592, %v3594
      %v3596 = vrot.slane %v3480, 3
      %v3597 = vrot.slane %v3481, 3
      %v3598 = vsel %vm2419, %v3596, %v3597
      %v3599 = vrot.slane %v3482, 3
      %v3600 = vsel %vm2419, %v3597, %v3599
      %v3601 = vrot.slane %v3483, 3
      %v3602 = vrot.slane %v3484, 3
      %v3603 = vsel %vm2419, %v3601, %v3602
      %v3604 = vrot.slane %v3485, 3
      %v3605 = vsel %vm2419, %v3602, %v3604
      %v3606 = vrot.slane %v3486, 3
      %v3607 = vrot.slane %v3487, 3
      %v3608 = vsel %vm2419, %v3606, %v3607
      %v3609 = vrot.slane %v3488, 3
      %v3610 = vsel %vm2419, %v3607, %v3609
      %v3611 = vrot.slane %v3489, 3
      %v3612 = vrot.slane %v3490, 3
      %v3613 = vsel %vm2419, %v3611, %v3612
      %v3614 = vrot.slane %v3491, 3
      %v3615 = vsel %vm2419, %v3612, %v3614
      %v3616 = vrot.slane %v3492, 3
      %v3617 = vrot.slane %v3493, 3
      %v3618 = vsel %vm2419, %v3616, %v3617
      %v3619 = vrot.slane %v3494, 3
      %v3620 = vsel %vm2419, %v3617, %v3619
      %v3621 = vrot.slane %v3495, 3
      %v3622 = vrot.slane %v3496, 3
      %v3623 = vsel %vm2419, %v3621, %v3622
      %v3624 = vrot.slane %v3497, 3
      %v3625 = vsel %vm2419, %v3622, %v3624
      %v3674 = vadd.f32 %v3401, %v3546
      %v3675 = vadd.f32 %v3402, %v3548
      %v3676 = vadd.f32 %v3403, %v3550
      %v3677 = vadd.f32 %v3404, %v3551
      %v3678 = vadd.f32 %v3405, %v3553
      %v3679 = vadd.f32 %v3406, %v3555
      %v3680 = vadd.f32 %v3407, %v3556
      %v3681 = vadd.f32 %v3408, %v3558
      %v3682 = vadd.f32 %v3409, %v3560
      %v3683 = vadd.f32 %v3410, %v3561
      %v3684 = vadd.f32 %v3411, %v3563
      %v3685 = vadd.f32 %v3412, %v3565
      %v3686 = vadd.f32 %v3413, %v3566
      %v3687 = vadd.f32 %v3414, %v3568
      %v3688 = vadd.f32 %v3415, %v3570
      %v3689 = vadd.f32 %v3416, %v3571
      %v3690 = vadd.f32 %v3417, %v3573
      %v3691 = vadd.f32 %v3418, %v3575
      %v3692 = vadd.f32 %v3419, %v3576
      %v3693 = vadd.f32 %v3420, %v3578
      %v3694 = vadd.f32 %v3421, %v3580
      %v3695 = vadd.f32 %v3422, %v3581
      %v3696 = vadd.f32 %v3423, %v3583
      %v3697 = vadd.f32 %v3424, %v3585
      %v3698 = vadd.f32 %v3425, %v3586
      %v3699 = vadd.f32 %v3426, %v3588
      %v3700 = vadd.f32 %v3427, %v3590
      %v3701 = vadd.f32 %v3428, %v3591
      %v3702 = vadd.f32 %v3429, %v3593
      %v3703 = vadd.f32 %v3430, %v3595
      %v3704 = vadd.f32 %v3431, %v3596
      %v3705 = vadd.f32 %v3432, %v3598
      %v3706 = vadd.f32 %v3433, %v3600
      %v3707 = vadd.f32 %v3434, %v3601
      %v3708 = vadd.f32 %v3435, %v3603
      %v3709 = vadd.f32 %v3436, %v3605
      %v3710 = vadd.f32 %v3437, %v3606
      %v3711 = vadd.f32 %v3438, %v3608
      %v3712 = vadd.f32 %v3439, %v3610
      %v3713 = vadd.f32 %v3440, %v3611
      %v3714 = vadd.f32 %v3441, %v3613
      %v3715 = vadd.f32 %v3442, %v3615
      %v3716 = vadd.f32 %v3443, %v3616
      %v3717 = vadd.f32 %v3444, %v3618
      %v3718 = vadd.f32 %v3445, %v3620
      %v3719 = vadd.f32 %v3446, %v3621
      %v3720 = vadd.f32 %v3447, %v3623
      %v3721 = vadd.f32 %v3448, %v3625
      %v3722 = vperm.slane %v1737, 4
      %v3723 = vmul.f32 %v1661, %v3722
      %v3724 = vmul.f32 %v1662, %v3722
      %v3725 = vmul.f32 %v1663, %v3722
      %v3726 = vmul.f32 %v1665, %v3722
      %v3727 = vmul.f32 %v1666, %v3722
      %v3728 = vmul.f32 %v1667, %v3722
      %v3729 = vmul.f32 %v1669, %v3722
      %v3730 = vmul.f32 %v1670, %v3722
      %v3731 = vmul.f32 %v1671, %v3722
      %v3732 = vmul.f32 %v1673, %v3722
      %v3733 = vmul.f32 %v1674, %v3722
      %v3734 = vmul.f32 %v1675, %v3722
      %v3735 = vmul.f32 %v1677, %v3722
      %v3736 = vmul.f32 %v1678, %v3722
      %v3737 = vmul.f32 %v1679, %v3722
      %v3738 = vmul.f32 %v1681, %v3722
      %v3739 = vmul.f32 %v1682, %v3722
      %v3740 = vmul.f32 %v1683, %v3722
      %v3741 = vmul.f32 %v1685, %v3722
      %v3742 = vmul.f32 %v1686, %v3722
      %v3743 = vmul.f32 %v1687, %v3722
      %v3744 = vmul.f32 %v1689, %v3722
      %v3745 = vmul.f32 %v1690, %v3722
      %v3746 = vmul.f32 %v1691, %v3722
      %v3747 = vmul.f32 %v1693, %v3722
      %v3748 = vmul.f32 %v1694, %v3722
      %v3749 = vmul.f32 %v1695, %v3722
      %v3750 = vmul.f32 %v1697, %v3722
      %v3751 = vmul.f32 %v1698, %v3722
      %v3752 = vmul.f32 %v1699, %v3722
      %v3753 = vmul.f32 %v1701, %v3722
      %v3754 = vmul.f32 %v1702, %v3722
      %v3755 = vmul.f32 %v1703, %v3722
      %v3756 = vmul.f32 %v1705, %v3722
      %v3757 = vmul.f32 %v1706, %v3722
      %v3758 = vmul.f32 %v1707, %v3722
      %v3759 = vmul.f32 %v1709, %v3722
      %v3760 = vmul.f32 %v1710, %v3722
      %v3761 = vmul.f32 %v1711, %v3722
      %v3762 = vmul.f32 %v1713, %v3722
      %v3763 = vmul.f32 %v1714, %v3722
      %v3764 = vmul.f32 %v1715, %v3722
      %v3765 = vmul.f32 %v1717, %v3722
      %v3766 = vmul.f32 %v1718, %v3722
      %v3767 = vmul.f32 %v1719, %v3722
      %v3768 = vmul.f32 %v1721, %v3722
      %v3769 = vmul.f32 %v1722, %v3722
      %v3770 = vmul.f32 %v1723, %v3722
      %v3819 = vrot.slane %v3723, 4
      %v3820 = vrot.slane %v3724, 4
      %v3821 = vsel %vm2693, %v3819, %v3820
      %v3822 = vrot.slane %v3725, 4
      %v3823 = vsel %vm2693, %v3820, %v3822
      %v3824 = vrot.slane %v3726, 4
      %v3825 = vrot.slane %v3727, 4
      %v3826 = vsel %vm2693, %v3824, %v3825
      %v3827 = vrot.slane %v3728, 4
      %v3828 = vsel %vm2693, %v3825, %v3827
      %v3829 = vrot.slane %v3729, 4
      %v3830 = vrot.slane %v3730, 4
      %v3831 = vsel %vm2693, %v3829, %v3830
      %v3832 = vrot.slane %v3731, 4
      %v3833 = vsel %vm2693, %v3830, %v3832
      %v3834 = vrot.slane %v3732, 4
      %v3835 = vrot.slane %v3733, 4
      %v3836 = vsel %vm2693, %v3834, %v3835
      %v3837 = vrot.slane %v3734, 4
      %v3838 = vsel %vm2693, %v3835, %v3837
      %v3839 = vrot.slane %v3735, 4
      %v3840 = vrot.slane %v3736, 4
      %v3841 = vsel %vm2693, %v3839, %v3840
      %v3842 = vrot.slane %v3737, 4
      %v3843 = vsel %vm2693, %v3840, %v3842
      %v3844 = vrot.slane %v3738, 4
      %v3845 = vrot.slane %v3739, 4
      %v3846 = vsel %vm2693, %v3844, %v3845
      %v3847 = vrot.slane %v3740, 4
      %v3848 = vsel %vm2693, %v3845, %v3847
      %v3849 = vrot.slane %v3741, 4
      %v3850 = vrot.slane %v3742, 4
      %v3851 = vsel %vm2693, %v3849, %v3850
      %v3852 = vrot.slane %v3743, 4
      %v3853 = vsel %vm2693, %v3850, %v3852
      %v3854 = vrot.slane %v3744, 4
      %v3855 = vrot.slane %v3745, 4
      %v3856 = vsel %vm2693, %v3854, %v3855
      %v3857 = vrot.slane %v3746, 4
      %v3858 = vsel %vm2693, %v3855, %v3857
      %v3859 = vrot.slane %v3747, 4
      %v3860 = vrot.slane %v3748, 4
      %v3861 = vsel %vm2693, %v3859, %v3860
      %v3862 = vrot.slane %v3749, 4
      %v3863 = vsel %vm2693, %v3860, %v3862
      %v3864 = vrot.slane %v3750, 4
      %v3865 = vrot.slane %v3751, 4
      %v3866 = vsel %vm2693, %v3864, %v3865
      %v3867 = vrot.slane %v3752, 4
      %v3868 = vsel %vm2693, %v3865, %v3867
      %v3869 = vrot.slane %v3753, 4
      %v3870 = vrot.slane %v3754, 4
      %v3871 = vsel %vm2693, %v3869, %v3870
      %v3872 = vrot.slane %v3755, 4
      %v3873 = vsel %vm2693, %v3870, %v3872
      %v3874 = vrot.slane %v3756, 4
      %v3875 = vrot.slane %v3757, 4
      %v3876 = vsel %vm2693, %v3874, %v3875
      %v3877 = vrot.slane %v3758, 4
      %v3878 = vsel %vm2693, %v3875, %v3877
      %v3879 = vrot.slane %v3759, 4
      %v3880 = vrot.slane %v3760, 4
      %v3881 = vsel %vm2693, %v3879, %v3880
      %v3882 = vrot.slane %v3761, 4
      %v3883 = vsel %vm2693, %v3880, %v3882
      %v3884 = vrot.slane %v3762, 4
      %v3885 = vrot.slane %v3763, 4
      %v3886 = vsel %vm2693, %v3884, %v3885
      %v3887 = vrot.slane %v3764, 4
      %v3888 = vsel %vm2693, %v3885, %v3887
      %v3889 = vrot.slane %v3765, 4
      %v3890 = vrot.slane %v3766, 4
      %v3891 = vsel %vm2693, %v3889, %v3890
      %v3892 = vrot.slane %v3767, 4
      %v3893 = vsel %vm2693, %v3890, %v3892
      %v3894 = vrot.slane %v3768, 4
      %v3895 = vrot.slane %v3769, 4
      %v3896 = vsel %vm2693, %v3894, %v3895
      %v3897 = vrot.slane %v3770, 4
      %v3898 = vsel %vm2693, %v3895, %v3897
      %v3947 = vadd.f32 %v3674, %v3819
      %v3948 = vadd.f32 %v3675, %v3821
      %v3949 = vadd.f32 %v3676, %v3823
      %v3950 = vadd.f32 %v3677, %v3824
      %v3951 = vadd.f32 %v3678, %v3826
      %v3952 = vadd.f32 %v3679, %v3828
      %v3953 = vadd.f32 %v3680, %v3829
      %v3954 = vadd.f32 %v3681, %v3831
      %v3955 = vadd.f32 %v3682, %v3833
      %v3956 = vadd.f32 %v3683, %v3834
      %v3957 = vadd.f32 %v3684, %v3836
      %v3958 = vadd.f32 %v3685, %v3838
      %v3959 = vadd.f32 %v3686, %v3839
      %v3960 = vadd.f32 %v3687, %v3841
      %v3961 = vadd.f32 %v3688, %v3843
      %v3962 = vadd.f32 %v3689, %v3844
      %v3963 = vadd.f32 %v3690, %v3846
      %v3964 = vadd.f32 %v3691, %v3848
      %v3965 = vadd.f32 %v3692, %v3849
      %v3966 = vadd.f32 %v3693, %v3851
      %v3967 = vadd.f32 %v3694, %v3853
      %v3968 = vadd.f32 %v3695, %v3854
      %v3969 = vadd.f32 %v3696, %v3856
      %v3970 = vadd.f32 %v3697, %v3858
      %v3971 = vadd.f32 %v3698, %v3859
      %v3972 = vadd.f32 %v3699, %v3861
      %v3973 = vadd.f32 %v3700, %v3863
      %v3974 = vadd.f32 %v3701, %v3864
      %v3975 = vadd.f32 %v3702, %v3866
      %v3976 = vadd.f32 %v3703, %v3868
      %v3977 = vadd.f32 %v3704, %v3869
      %v3978 = vadd.f32 %v3705, %v3871
      %v3979 = vadd.f32 %v3706, %v3873
      %v3980 = vadd.f32 %v3707, %v3874
      %v3981 = vadd.f32 %v3708, %v3876
      %v3982 = vadd.f32 %v3709, %v3878
      %v3983 = vadd.f32 %v3710, %v3879
      %v3984 = vadd.f32 %v3711, %v3881
      %v3985 = vadd.f32 %v3712, %v3883
      %v3986 = vadd.f32 %v3713, %v3884
      %v3987 = vadd.f32 %v3714, %v3886
      %v3988 = vadd.f32 %v3715, %v3888
      %v3989 = vadd.f32 %v3716, %v3889
      %v3990 = vadd.f32 %v3717, %v3891
      %v3991 = vadd.f32 %v3718, %v3893
      %v3992 = vadd.f32 %v3719, %v3894
      %v3993 = vadd.f32 %v3720, %v3896
      %v3994 = vadd.f32 %v3721, %v3898
      %v3995 = vperm.slane %v1738, 0
      %v3996 = vmul.f32 %v1664, %v3995
      %v3997 = vmul.f32 %v1665, %v3995
      %v3998 = vmul.f32 %v1666, %v3995
      %v3999 = vmul.f32 %v1668, %v3995
      %v4000 = vmul.f32 %v1669, %v3995
      %v4001 = vmul.f32 %v1670, %v3995
      %v4002 = vmul.f32 %v1672, %v3995
      %v4003 = vmul.f32 %v1673, %v3995
      %v4004 = vmul.f32 %v1674, %v3995
      %v4005 = vmul.f32 %v1676, %v3995
      %v4006 = vmul.f32 %v1677, %v3995
      %v4007 = vmul.f32 %v1678, %v3995
      %v4008 = vmul.f32 %v1680, %v3995
      %v4009 = vmul.f32 %v1681, %v3995
      %v4010 = vmul.f32 %v1682, %v3995
      %v4011 = vmul.f32 %v1684, %v3995
      %v4012 = vmul.f32 %v1685, %v3995
      %v4013 = vmul.f32 %v1686, %v3995
      %v4014 = vmul.f32 %v1688, %v3995
      %v4015 = vmul.f32 %v1689, %v3995
      %v4016 = vmul.f32 %v1690, %v3995
      %v4017 = vmul.f32 %v1692, %v3995
      %v4018 = vmul.f32 %v1693, %v3995
      %v4019 = vmul.f32 %v1694, %v3995
      %v4020 = vmul.f32 %v1696, %v3995
      %v4021 = vmul.f32 %v1697, %v3995
      %v4022 = vmul.f32 %v1698, %v3995
      %v4023 = vmul.f32 %v1700, %v3995
      %v4024 = vmul.f32 %v1701, %v3995
      %v4025 = vmul.f32 %v1702, %v3995
      %v4026 = vmul.f32 %v1704, %v3995
      %v4027 = vmul.f32 %v1705, %v3995
      %v4028 = vmul.f32 %v1706, %v3995
      %v4029 = vmul.f32 %v1708, %v3995
      %v4030 = vmul.f32 %v1709, %v3995
      %v4031 = vmul.f32 %v1710, %v3995
      %v4032 = vmul.f32 %v1712, %v3995
      %v4033 = vmul.f32 %v1713, %v3995
      %v4034 = vmul.f32 %v1714, %v3995
      %v4035 = vmul.f32 %v1716, %v3995
      %v4036 = vmul.f32 %v1717, %v3995
      %v4037 = vmul.f32 %v1718, %v3995
      %v4038 = vmul.f32 %v1720, %v3995
      %v4039 = vmul.f32 %v1721, %v3995
      %v4040 = vmul.f32 %v1722, %v3995
      %v4041 = vmul.f32 %v1724, %v3995
      %v4042 = vmul.f32 %v1725, %v3995
      %v4043 = vmul.f32 %v1726, %v3995
      %v4044 = vadd.f32 %v3947, %v3996
      %v4045 = vadd.f32 %v3948, %v3997
      %v4046 = vadd.f32 %v3949, %v3998
      %v4047 = vadd.f32 %v3950, %v3999
      %v4048 = vadd.f32 %v3951, %v4000
      %v4049 = vadd.f32 %v3952, %v4001
      %v4050 = vadd.f32 %v3953, %v4002
      %v4051 = vadd.f32 %v3954, %v4003
      %v4052 = vadd.f32 %v3955, %v4004
      %v4053 = vadd.f32 %v3956, %v4005
      %v4054 = vadd.f32 %v3957, %v4006
      %v4055 = vadd.f32 %v3958, %v4007
      %v4056 = vadd.f32 %v3959, %v4008
      %v4057 = vadd.f32 %v3960, %v4009
      %v4058 = vadd.f32 %v3961, %v4010
      %v4059 = vadd.f32 %v3962, %v4011
      %v4060 = vadd.f32 %v3963, %v4012
      %v4061 = vadd.f32 %v3964, %v4013
      %v4062 = vadd.f32 %v3965, %v4014
      %v4063 = vadd.f32 %v3966, %v4015
      %v4064 = vadd.f32 %v3967, %v4016
      %v4065 = vadd.f32 %v3968, %v4017
      %v4066 = vadd.f32 %v3969, %v4018
      %v4067 = vadd.f32 %v3970, %v4019
      %v4068 = vadd.f32 %v3971, %v4020
      %v4069 = vadd.f32 %v3972, %v4021
      %v4070 = vadd.f32 %v3973, %v4022
      %v4071 = vadd.f32 %v3974, %v4023
      %v4072 = vadd.f32 %v3975, %v4024
      %v4073 = vadd.f32 %v3976, %v4025
      %v4074 = vadd.f32 %v3977, %v4026
      %v4075 = vadd.f32 %v3978, %v4027
      %v4076 = vadd.f32 %v3979, %v4028
      %v4077 = vadd.f32 %v3980, %v4029
      %v4078 = vadd.f32 %v3981, %v4030
      %v4079 = vadd.f32 %v3982, %v4031
      %v4080 = vadd.f32 %v3983, %v4032
      %v4081 = vadd.f32 %v3984, %v4033
      %v4082 = vadd.f32 %v3985, %v4034
      %v4083 = vadd.f32 %v3986, %v4035
      %v4084 = vadd.f32 %v3987, %v4036
      %v4085 = vadd.f32 %v3988, %v4037
      %v4086 = vadd.f32 %v3989, %v4038
      %v4087 = vadd.f32 %v3990, %v4039
      %v4088 = vadd.f32 %v3991, %v4040
      %v4089 = vadd.f32 %v3992, %v4041
      %v4090 = vadd.f32 %v3993, %v4042
      %v4091 = vadd.f32 %v3994, %v4043
      %v4092 = vperm.slane %v1738, 1
      %v4093 = vmul.f32 %v1664, %v4092
      %v4094 = vmul.f32 %v1665, %v4092
      %v4095 = vmul.f32 %v1666, %v4092
      %v4096 = vmul.f32 %v1668, %v4092
      %v4097 = vmul.f32 %v1669, %v4092
      %v4098 = vmul.f32 %v1670, %v4092
      %v4099 = vmul.f32 %v1672, %v4092
      %v4100 = vmul.f32 %v1673, %v4092
      %v4101 = vmul.f32 %v1674, %v4092
      %v4102 = vmul.f32 %v1676, %v4092
      %v4103 = vmul.f32 %v1677, %v4092
      %v4104 = vmul.f32 %v1678, %v4092
      %v4105 = vmul.f32 %v1680, %v4092
      %v4106 = vmul.f32 %v1681, %v4092
      %v4107 = vmul.f32 %v1682, %v4092
      %v4108 = vmul.f32 %v1684, %v4092
      %v4109 = vmul.f32 %v1685, %v4092
      %v4110 = vmul.f32 %v1686, %v4092
      %v4111 = vmul.f32 %v1688, %v4092
      %v4112 = vmul.f32 %v1689, %v4092
      %v4113 = vmul.f32 %v1690, %v4092
      %v4114 = vmul.f32 %v1692, %v4092
      %v4115 = vmul.f32 %v1693, %v4092
      %v4116 = vmul.f32 %v1694, %v4092
      %v4117 = vmul.f32 %v1696, %v4092
      %v4118 = vmul.f32 %v1697, %v4092
      %v4119 = vmul.f32 %v1698, %v4092
      %v4120 = vmul.f32 %v1700, %v4092
      %v4121 = vmul.f32 %v1701, %v4092
      %v4122 = vmul.f32 %v1702, %v4092
      %v4123 = vmul.f32 %v1704, %v4092
      %v4124 = vmul.f32 %v1705, %v4092
      %v4125 = vmul.f32 %v1706, %v4092
      %v4126 = vmul.f32 %v1708, %v4092
      %v4127 = vmul.f32 %v1709, %v4092
      %v4128 = vmul.f32 %v1710, %v4092
      %v4129 = vmul.f32 %v1712, %v4092
      %v4130 = vmul.f32 %v1713, %v4092
      %v4131 = vmul.f32 %v1714, %v4092
      %v4132 = vmul.f32 %v1716, %v4092
      %v4133 = vmul.f32 %v1717, %v4092
      %v4134 = vmul.f32 %v1718, %v4092
      %v4135 = vmul.f32 %v1720, %v4092
      %v4136 = vmul.f32 %v1721, %v4092
      %v4137 = vmul.f32 %v1722, %v4092
      %v4138 = vmul.f32 %v1724, %v4092
      %v4139 = vmul.f32 %v1725, %v4092
      %v4140 = vmul.f32 %v1726, %v4092
      %v4189 = vrot.slane %v4093, 1
      %v4190 = vrot.slane %v4094, 1
      %v4191 = vsel %vm1935, %v4189, %v4190
      %v4192 = vrot.slane %v4095, 1
      %v4193 = vsel %vm1935, %v4190, %v4192
      %v4194 = vrot.slane %v4096, 1
      %v4195 = vrot.slane %v4097, 1
      %v4196 = vsel %vm1935, %v4194, %v4195
      %v4197 = vrot.slane %v4098, 1
      %v4198 = vsel %vm1935, %v4195, %v4197
      %v4199 = vrot.slane %v4099, 1
      %v4200 = vrot.slane %v4100, 1
      %v4201 = vsel %vm1935, %v4199, %v4200
      %v4202 = vrot.slane %v4101, 1
      %v4203 = vsel %vm1935, %v4200, %v4202
      %v4204 = vrot.slane %v4102, 1
      %v4205 = vrot.slane %v4103, 1
      %v4206 = vsel %vm1935, %v4204, %v4205
      %v4207 = vrot.slane %v4104, 1
      %v4208 = vsel %vm1935, %v4205, %v4207
      %v4209 = vrot.slane %v4105, 1
      %v4210 = vrot.slane %v4106, 1
      %v4211 = vsel %vm1935, %v4209, %v4210
      %v4212 = vrot.slane %v4107, 1
      %v4213 = vsel %vm1935, %v4210, %v4212
      %v4214 = vrot.slane %v4108, 1
      %v4215 = vrot.slane %v4109, 1
      %v4216 = vsel %vm1935, %v4214, %v4215
      %v4217 = vrot.slane %v4110, 1
      %v4218 = vsel %vm1935, %v4215, %v4217
      %v4219 = vrot.slane %v4111, 1
      %v4220 = vrot.slane %v4112, 1
      %v4221 = vsel %vm1935, %v4219, %v4220
      %v4222 = vrot.slane %v4113, 1
      %v4223 = vsel %vm1935, %v4220, %v4222
      %v4224 = vrot.slane %v4114, 1
      %v4225 = vrot.slane %v4115, 1
      %v4226 = vsel %vm1935, %v4224, %v4225
      %v4227 = vrot.slane %v4116, 1
      %v4228 = vsel %vm1935, %v4225, %v4227
      %v4229 = vrot.slane %v4117, 1
      %v4230 = vrot.slane %v4118, 1
      %v4231 = vsel %vm1935, %v4229, %v4230
      %v4232 = vrot.slane %v4119, 1
      %v4233 = vsel %vm1935, %v4230, %v4232
      %v4234 = vrot.slane %v4120, 1
      %v4235 = vrot.slane %v4121, 1
      %v4236 = vsel %vm1935, %v4234, %v4235
      %v4237 = vrot.slane %v4122, 1
      %v4238 = vsel %vm1935, %v4235, %v4237
      %v4239 = vrot.slane %v4123, 1
      %v4240 = vrot.slane %v4124, 1
      %v4241 = vsel %vm1935, %v4239, %v4240
      %v4242 = vrot.slane %v4125, 1
      %v4243 = vsel %vm1935, %v4240, %v4242
      %v4244 = vrot.slane %v4126, 1
      %v4245 = vrot.slane %v4127, 1
      %v4246 = vsel %vm1935, %v4244, %v4245
      %v4247 = vrot.slane %v4128, 1
      %v4248 = vsel %vm1935, %v4245, %v4247
      %v4249 = vrot.slane %v4129, 1
      %v4250 = vrot.slane %v4130, 1
      %v4251 = vsel %vm1935, %v4249, %v4250
      %v4252 = vrot.slane %v4131, 1
      %v4253 = vsel %vm1935, %v4250, %v4252
      %v4254 = vrot.slane %v4132, 1
      %v4255 = vrot.slane %v4133, 1
      %v4256 = vsel %vm1935, %v4254, %v4255
      %v4257 = vrot.slane %v4134, 1
      %v4258 = vsel %vm1935, %v4255, %v4257
      %v4259 = vrot.slane %v4135, 1
      %v4260 = vrot.slane %v4136, 1
      %v4261 = vsel %vm1935, %v4259, %v4260
      %v4262 = vrot.slane %v4137, 1
      %v4263 = vsel %vm1935, %v4260, %v4262
      %v4264 = vrot.slane %v4138, 1
      %v4265 = vrot.slane %v4139, 1
      %v4266 = vsel %vm1935, %v4264, %v4265
      %v4267 = vrot.slane %v4140, 1
      %v4268 = vsel %vm1935, %v4265, %v4267
      %v4317 = vadd.f32 %v4044, %v4191
      %v4318 = vadd.f32 %v4045, %v4193
      %v4319 = vadd.f32 %v4046, %v4192
      %v4320 = vadd.f32 %v4047, %v4196
      %v4321 = vadd.f32 %v4048, %v4198
      %v4322 = vadd.f32 %v4049, %v4197
      %v4323 = vadd.f32 %v4050, %v4201
      %v4324 = vadd.f32 %v4051, %v4203
      %v4325 = vadd.f32 %v4052, %v4202
      %v4326 = vadd.f32 %v4053, %v4206
      %v4327 = vadd.f32 %v4054, %v4208
      %v4328 = vadd.f32 %v4055, %v4207
      %v4329 = vadd.f32 %v4056, %v4211
      %v4330 = vadd.f32 %v4057, %v4213
      %v4331 = vadd.f32 %v4058, %v4212
      %v4332 = vadd.f32 %v4059, %v4216
      %v4333 = vadd.f32 %v4060, %v4218
      %v4334 = vadd.f32 %v4061, %v4217
      %v4335 = vadd.f32 %v4062, %v4221
      %v4336 = vadd.f32 %v4063, %v4223
      %v4337 = vadd.f32 %v4064, %v4222
      %v4338 = vadd.f32 %v4065, %v4226
      %v4339 = vadd.f32 %v4066, %v4228
      %v4340 = vadd.f32 %v4067, %v4227
      %v4341 = vadd.f32 %v4068, %v4231
      %v4342 = vadd.f32 %v4069, %v4233
      %v4343 = vadd.f32 %v4070, %v4232
      %v4344 = vadd.f32 %v4071, %v4236
      %v4345 = vadd.f32 %v4072, %v4238
      %v4346 = vadd.f32 %v4073, %v4237
      %v4347 = vadd.f32 %v4074, %v4241
      %v4348 = vadd.f32 %v4075, %v4243
      %v4349 = vadd.f32 %v4076, %v4242
      %v4350 = vadd.f32 %v4077, %v4246
      %v4351 = vadd.f32 %v4078, %v4248
      %v4352 = vadd.f32 %v4079, %v4247
      %v4353 = vadd.f32 %v4080, %v4251
      %v4354 = vadd.f32 %v4081, %v4253
      %v4355 = vadd.f32 %v4082, %v4252
      %v4356 = vadd.f32 %v4083, %v4256
      %v4357 = vadd.f32 %v4084, %v4258
      %v4358 = vadd.f32 %v4085, %v4257
      %v4359 = vadd.f32 %v4086, %v4261
      %v4360 = vadd.f32 %v4087, %v4263
      %v4361 = vadd.f32 %v4088, %v4262
      %v4362 = vadd.f32 %v4089, %v4266
      %v4363 = vadd.f32 %v4090, %v4268
      %v4364 = vadd.f32 %v4091, %v4267
      %v4365 = vperm.slane %v1738, 2
      %v4366 = vmul.f32 %v1665, %v4365
      %v4367 = vmul.f32 %v1666, %v4365
      %v4368 = vmul.f32 %v1669, %v4365
      %v4369 = vmul.f32 %v1670, %v4365
      %v4370 = vmul.f32 %v1673, %v4365
      %v4371 = vmul.f32 %v1674, %v4365
      %v4372 = vmul.f32 %v1677, %v4365
      %v4373 = vmul.f32 %v1678, %v4365
      %v4374 = vmul.f32 %v1681, %v4365
      %v4375 = vmul.f32 %v1682, %v4365
      %v4376 = vmul.f32 %v1685, %v4365
      %v4377 = vmul.f32 %v1686, %v4365
      %v4378 = vmul.f32 %v1689, %v4365
      %v4379 = vmul.f32 %v1690, %v4365
      %v4380 = vmul.f32 %v1693, %v4365
      %v4381 = vmul.f32 %v1694, %v4365
      %v4382 = vmul.f32 %v1697, %v4365
      %v4383 = vmul.f32 %v1698, %v4365
      %v4384 = vmul.f32 %v1701, %v4365
      %v4385 = vmul.f32 %v1702, %v4365
      %v4386 = vmul.f32 %v1705, %v4365
      %v4387 = vmul.f32 %v1706, %v4365
      %v4388 = vmul.f32 %v1709, %v4365
      %v4389 = vmul.f32 %v1710, %v4365
      %v4390 = vmul.f32 %v1713, %v4365
      %v4391 = vmul.f32 %v1714, %v4365
      %v4392 = vmul.f32 %v1717, %v4365
      %v4393 = vmul.f32 %v1718, %v4365
      %v4394 = vmul.f32 %v1721, %v4365
      %v4395 = vmul.f32 %v1722, %v4365
      %v4396 = vmul.f32 %v1725, %v4365
      %v4397 = vmul.f32 %v1726, %v4365
      %v4430 = vrot.slane %v4366, 2
      %v4431 = vrot.slane %v4367, 2
      %v4432 = vsel %vm2177, %v4430, %v4431
      %v4433 = vrot.slane %v4368, 2
      %v4434 = vrot.slane %v4369, 2
      %v4435 = vsel %vm2177, %v4433, %v4434
      %v4436 = vrot.slane %v4370, 2
      %v4437 = vrot.slane %v4371, 2
      %v4438 = vsel %vm2177, %v4436, %v4437
      %v4439 = vrot.slane %v4372, 2
      %v4440 = vrot.slane %v4373, 2
      %v4441 = vsel %vm2177, %v4439, %v4440
      %v4442 = vrot.slane %v4374, 2
      %v4443 = vrot.slane %v4375, 2
      %v4444 = vsel %vm2177, %v4442, %v4443
      %v4445 = vrot.slane %v4376, 2
      %v4446 = vrot.slane %v4377, 2
      %v4447 = vsel %vm2177, %v4445, %v4446
      %v4448 = vrot.slane %v4378, 2
      %v4449 = vrot.slane %v4379, 2
      %v4450 = vsel %vm2177, %v4448, %v4449
      %v4451 = vrot.slane %v4380, 2
      %v4452 = vrot.slane %v4381, 2
      %v4453 = vsel %vm2177, %v4451, %v4452
      %v4454 = vrot.slane %v4382, 2
      %v4455 = vrot.slane %v4383, 2
      %v4456 = vsel %vm2177, %v4454, %v4455
      %v4457 = vrot.slane %v4384, 2
      %v4458 = vrot.slane %v4385, 2
      %v4459 = vsel %vm2177, %v4457, %v4458
      %v4460 = vrot.slane %v4386, 2
      %v4461 = vrot.slane %v4387, 2
      %v4462 = vsel %vm2177, %v4460, %v4461
      %v4463 = vrot.slane %v4388, 2
      %v4464 = vrot.slane %v4389, 2
      %v4465 = vsel %vm2177, %v4463, %v4464
      %v4466 = vrot.slane %v4390, 2
      %v4467 = vrot.slane %v4391, 2
      %v4468 = vsel %vm2177, %v4466, %v4467
      %v4469 = vrot.slane %v4392, 2
      %v4470 = vrot.slane %v4393, 2
      %v4471 = vsel %vm2177, %v4469, %v4470
      %v4472 = vrot.slane %v4394, 2
      %v4473 = vrot.slane %v4395, 2
      %v4474 = vsel %vm2177, %v4472, %v4473
      %v4475 = vrot.slane %v4396, 2
      %v4476 = vrot.slane %v4397, 2
      %v4477 = vsel %vm2177, %v4475, %v4476
      %v4526 = vadd.f32 %v4317, %v4430
      %v4527 = vadd.f32 %v4318, %v4432
      %v4528 = vadd.f32 %v4319, %v4431
      %v4529 = vadd.f32 %v4320, %v4433
      %v4530 = vadd.f32 %v4321, %v4435
      %v4531 = vadd.f32 %v4322, %v4434
      %v4532 = vadd.f32 %v4323, %v4436
      %v4533 = vadd.f32 %v4324, %v4438
      %v4534 = vadd.f32 %v4325, %v4437
      %v4535 = vadd.f32 %v4326, %v4439
      %v4536 = vadd.f32 %v4327, %v4441
      %v4537 = vadd.f32 %v4328, %v4440
      %v4538 = vadd.f32 %v4329, %v4442
      %v4539 = vadd.f32 %v4330, %v4444
      %v4540 = vadd.f32 %v4331, %v4443
      %v4541 = vadd.f32 %v4332, %v4445
      %v4542 = vadd.f32 %v4333, %v4447
      %v4543 = vadd.f32 %v4334, %v4446
      %v4544 = vadd.f32 %v4335, %v4448
      %v4545 = vadd.f32 %v4336, %v4450
      %v4546 = vadd.f32 %v4337, %v4449
      %v4547 = vadd.f32 %v4338, %v4451
      %v4548 = vadd.f32 %v4339, %v4453
      %v4549 = vadd.f32 %v4340, %v4452
      %v4550 = vadd.f32 %v4341, %v4454
      %v4551 = vadd.f32 %v4342, %v4456
      %v4552 = vadd.f32 %v4343, %v4455
      %v4553 = vadd.f32 %v4344, %v4457
      %v4554 = vadd.f32 %v4345, %v4459
      %v4555 = vadd.f32 %v4346, %v4458
      %v4556 = vadd.f32 %v4347, %v4460
      %v4557 = vadd.f32 %v4348, %v4462
      %v4558 = vadd.f32 %v4349, %v4461
      %v4559 = vadd.f32 %v4350, %v4463
      %v4560 = vadd.f32 %v4351, %v4465
      %v4561 = vadd.f32 %v4352, %v4464
      %v4562 = vadd.f32 %v4353, %v4466
      %v4563 = vadd.f32 %v4354, %v4468
      %v4564 = vadd.f32 %v4355, %v4467
      %v4565 = vadd.f32 %v4356, %v4469
      %v4566 = vadd.f32 %v4357, %v4471
      %v4567 = vadd.f32 %v4358, %v4470
      %v4568 = vadd.f32 %v4359, %v4472
      %v4569 = vadd.f32 %v4360, %v4474
      %v4570 = vadd.f32 %v4361, %v4473
      %v4571 = vadd.f32 %v4362, %v4475
      %v4572 = vadd.f32 %v4363, %v4477
      %v4573 = vadd.f32 %v4364, %v4476
      %v4574 = vperm.slane %v1738, 3
      %v4575 = vmul.f32 %v1665, %v4574
      %v4576 = vmul.f32 %v1666, %v4574
      %v4577 = vmul.f32 %v1667, %v4574
      %v4578 = vmul.f32 %v1669, %v4574
      %v4579 = vmul.f32 %v1670, %v4574
      %v4580 = vmul.f32 %v1671, %v4574
      %v4581 = vmul.f32 %v1673, %v4574
      %v4582 = vmul.f32 %v1674, %v4574
      %v4583 = vmul.f32 %v1675, %v4574
      %v4584 = vmul.f32 %v1677, %v4574
      %v4585 = vmul.f32 %v1678, %v4574
      %v4586 = vmul.f32 %v1679, %v4574
      %v4587 = vmul.f32 %v1681, %v4574
      %v4588 = vmul.f32 %v1682, %v4574
      %v4589 = vmul.f32 %v1683, %v4574
      %v4590 = vmul.f32 %v1685, %v4574
      %v4591 = vmul.f32 %v1686, %v4574
      %v4592 = vmul.f32 %v1687, %v4574
      %v4593 = vmul.f32 %v1689, %v4574
      %v4594 = vmul.f32 %v1690, %v4574
      %v4595 = vmul.f32 %v1691, %v4574
      %v4596 = vmul.f32 %v1693, %v4574
      %v4597 = vmul.f32 %v1694, %v4574
      %v4598 = vmul.f32 %v1695, %v4574
      %v4599 = vmul.f32 %v1697, %v4574
      %v4600 = vmul.f32 %v1698, %v4574
      %v4601 = vmul.f32 %v1699, %v4574
      %v4602 = vmul.f32 %v1701, %v4574
      %v4603 = vmul.f32 %v1702, %v4574
      %v4604 = vmul.f32 %v1703, %v4574
      %v4605 = vmul.f32 %v1705, %v4574
      %v4606 = vmul.f32 %v1706, %v4574
      %v4607 = vmul.f32 %v1707, %v4574
      %v4608 = vmul.f32 %v1709, %v4574
      %v4609 = vmul.f32 %v1710, %v4574
      %v4610 = vmul.f32 %v1711, %v4574
      %v4611 = vmul.f32 %v1713, %v4574
      %v4612 = vmul.f32 %v1714, %v4574
      %v4613 = vmul.f32 %v1715, %v4574
      %v4614 = vmul.f32 %v1717, %v4574
      %v4615 = vmul.f32 %v1718, %v4574
      %v4616 = vmul.f32 %v1719, %v4574
      %v4617 = vmul.f32 %v1721, %v4574
      %v4618 = vmul.f32 %v1722, %v4574
      %v4619 = vmul.f32 %v1723, %v4574
      %v4620 = vmul.f32 %v1725, %v4574
      %v4621 = vmul.f32 %v1726, %v4574
      %v4622 = vmul.f32 %v1727, %v4574
      %v4671 = vrot.slane %v4575, 3
      %v4672 = vrot.slane %v4576, 3
      %v4673 = vsel %vm2419, %v4671, %v4672
      %v4674 = vrot.slane %v4577, 3
      %v4675 = vsel %vm2419, %v4672, %v4674
      %v4676 = vrot.slane %v4578, 3
      %v4677 = vrot.slane %v4579, 3
      %v4678 = vsel %vm2419, %v4676, %v4677
      %v4679 = vrot.slane %v4580, 3
      %v4680 = vsel %vm2419, %v4677, %v4679
      %v4681 = vrot.slane %v4581, 3
      %v4682 = vrot.slane %v4582, 3
      %v4683 = vsel %vm2419, %v4681, %v4682
      %v4684 = vrot.slane %v4583, 3
      %v4685 = vsel %vm2419, %v4682, %v4684
      %v4686 = vrot.slane %v4584, 3
      %v4687 = vrot.slane %v4585, 3
      %v4688 = vsel %vm2419, %v4686, %v4687
      %v4689 = vrot.slane %v4586, 3
      %v4690 = vsel %vm2419, %v4687, %v4689
      %v4691 = vrot.slane %v4587, 3
      %v4692 = vrot.slane %v4588, 3
      %v4693 = vsel %vm2419, %v4691, %v4692
      %v4694 = vrot.slane %v4589, 3
      %v4695 = vsel %vm2419, %v4692, %v4694
      %v4696 = vrot.slane %v4590, 3
      %v4697 = vrot.slane %v4591, 3
      %v4698 = vsel %vm2419, %v4696, %v4697
      %v4699 = vrot.slane %v4592, 3
      %v4700 = vsel %vm2419, %v4697, %v4699
      %v4701 = vrot.slane %v4593, 3
      %v4702 = vrot.slane %v4594, 3
      %v4703 = vsel %vm2419, %v4701, %v4702
      %v4704 = vrot.slane %v4595, 3
      %v4705 = vsel %vm2419, %v4702, %v4704
      %v4706 = vrot.slane %v4596, 3
      %v4707 = vrot.slane %v4597, 3
      %v4708 = vsel %vm2419, %v4706, %v4707
      %v4709 = vrot.slane %v4598, 3
      %v4710 = vsel %vm2419, %v4707, %v4709
      %v4711 = vrot.slane %v4599, 3
      %v4712 = vrot.slane %v4600, 3
      %v4713 = vsel %vm2419, %v4711, %v4712
      %v4714 = vrot.slane %v4601, 3
      %v4715 = vsel %vm2419, %v4712, %v4714
      %v4716 = vrot.slane %v4602, 3
      %v4717 = vrot.slane %v4603, 3
      %v4718 = vsel %vm2419, %v4716, %v4717
      %v4719 = vrot.slane %v4604, 3
      %v4720 = vsel %vm2419, %v4717, %v4719
      %v4721 = vrot.slane %v4605, 3
      %v4722 = vrot.slane %v4606, 3
      %v4723 = vsel %vm2419, %v4721, %v4722
      %v4724 = vrot.slane %v4607, 3
      %v4725 = vsel %vm2419, %v4722, %v4724
      %v4726 = vrot.slane %v4608, 3
      %v4727 = vrot.slane %v4609, 3
      %v4728 = vsel %vm2419, %v4726, %v4727
      %v4729 = vrot.slane %v4610, 3
      %v4730 = vsel %vm2419, %v4727, %v4729
      %v4731 = vrot.slane %v4611, 3
      %v4732 = vrot.slane %v4612, 3
      %v4733 = vsel %vm2419, %v4731, %v4732
      %v4734 = vrot.slane %v4613, 3
      %v4735 = vsel %vm2419, %v4732, %v4734
      %v4736 = vrot.slane %v4614, 3
      %v4737 = vrot.slane %v4615, 3
      %v4738 = vsel %vm2419, %v4736, %v4737
      %v4739 = vrot.slane %v4616, 3
      %v4740 = vsel %vm2419, %v4737, %v4739
      %v4741 = vrot.slane %v4617, 3
      %v4742 = vrot.slane %v4618, 3
      %v4743 = vsel %vm2419, %v4741, %v4742
      %v4744 = vrot.slane %v4619, 3
      %v4745 = vsel %vm2419, %v4742, %v4744
      %v4746 = vrot.slane %v4620, 3
      %v4747 = vrot.slane %v4621, 3
      %v4748 = vsel %vm2419, %v4746, %v4747
      %v4749 = vrot.slane %v4622, 3
      %v4750 = vsel %vm2419, %v4747, %v4749
      %v4799 = vadd.f32 %v4526, %v4671
      %v4800 = vadd.f32 %v4527, %v4673
      %v4801 = vadd.f32 %v4528, %v4675
      %v4802 = vadd.f32 %v4529, %v4676
      %v4803 = vadd.f32 %v4530, %v4678
      %v4804 = vadd.f32 %v4531, %v4680
      %v4805 = vadd.f32 %v4532, %v4681
      %v4806 = vadd.f32 %v4533, %v4683
      %v4807 = vadd.f32 %v4534, %v4685
      %v4808 = vadd.f32 %v4535, %v4686
      %v4809 = vadd.f32 %v4536, %v4688
      %v4810 = vadd.f32 %v4537, %v4690
      %v4811 = vadd.f32 %v4538, %v4691
      %v4812 = vadd.f32 %v4539, %v4693
      %v4813 = vadd.f32 %v4540, %v4695
      %v4814 = vadd.f32 %v4541, %v4696
      %v4815 = vadd.f32 %v4542, %v4698
      %v4816 = vadd.f32 %v4543, %v4700
      %v4817 = vadd.f32 %v4544, %v4701
      %v4818 = vadd.f32 %v4545, %v4703
      %v4819 = vadd.f32 %v4546, %v4705
      %v4820 = vadd.f32 %v4547, %v4706
      %v4821 = vadd.f32 %v4548, %v4708
      %v4822 = vadd.f32 %v4549, %v4710
      %v4823 = vadd.f32 %v4550, %v4711
      %v4824 = vadd.f32 %v4551, %v4713
      %v4825 = vadd.f32 %v4552, %v4715
      %v4826 = vadd.f32 %v4553, %v4716
      %v4827 = vadd.f32 %v4554, %v4718
      %v4828 = vadd.f32 %v4555, %v4720
      %v4829 = vadd.f32 %v4556, %v4721
      %v4830 = vadd.f32 %v4557, %v4723
      %v4831 = vadd.f32 %v4558, %v4725
      %v4832 = vadd.f32 %v4559, %v4726
      %v4833 = vadd.f32 %v4560, %v4728
      %v4834 = vadd.f32 %v4561, %v4730
      %v4835 = vadd.f32 %v4562, %v4731
      %v4836 = vadd.f32 %v4563, %v4733
      %v4837 = vadd.f32 %v4564, %v4735
      %v4838 = vadd.f32 %v4565, %v4736
      %v4839 = vadd.f32 %v4566, %v4738
      %v4840 = vadd.f32 %v4567, %v4740
      %v4841 = vadd.f32 %v4568, %v4741
      %v4842 = vadd.f32 %v4569, %v4743
      %v4843 = vadd.f32 %v4570, %v4745
      %v4844 = vadd.f32 %v4571, %v4746
      %v4845 = vadd.f32 %v4572, %v4748
      %v4846 = vadd.f32 %v4573, %v4750
      %v4847 = vperm.slane %v1738, 4
      %v4848 = vmul.f32 %v1665, %v4847
      %v4849 = vmul.f32 %v1666, %v4847
      %v4850 = vmul.f32 %v1667, %v4847
      %v4851 = vmul.f32 %v1669, %v4847
      %v4852 = vmul.f32 %v1670, %v4847
      %v4853 = vmul.f32 %v1671, %v4847
      %v4854 = vmul.f32 %v1673, %v4847
      %v4855 = vmul.f32 %v1674, %v4847
      %v4856 = vmul.f32 %v1675, %v4847
      %v4857 = vmul.f32 %v1677, %v4847
      %v4858 = vmul.f32 %v1678, %v4847
      %v4859 = vmul.f32 %v1679, %v4847
      %v4860 = vmul.f32 %v1681, %v4847
      %v4861 = vmul.f32 %v1682, %v4847
      %v4862 = vmul.f32 %v1683, %v4847
      %v4863 = vmul.f32 %v1685, %v4847
      %v4864 = vmul.f32 %v1686, %v4847
      %v4865 = vmul.f32 %v1687, %v4847
      %v4866 = vmul.f32 %v1689, %v4847
      %v4867 = vmul.f32 %v1690, %v4847
      %v4868 = vmul.f32 %v1691, %v4847
      %v4869 = vmul.f32 %v1693, %v4847
      %v4870 = vmul.f32 %v1694, %v4847
      %v4871 = vmul.f32 %v1695, %v4847
      %v4872 = vmul.f32 %v1697, %v4847
      %v4873 = vmul.f32 %v1698, %v4847
      %v4874 = vmul.f32 %v1699, %v4847
      %v4875 = vmul.f32 %v1701, %v4847
      %v4876 = vmul.f32 %v1702, %v4847
      %v4877 = vmul.f32 %v1703, %v4847
      %v4878 = vmul.f32 %v1705, %v4847
      %v4879 = vmul.f32 %v1706, %v4847
      %v4880 = vmul.f32 %v1707, %v4847
      %v4881 = vmul.f32 %v1709, %v4847
      %v4882 = vmul.f32 %v1710, %v4847
      %v4883 = vmul.f32 %v1711, %v4847
      %v4884 = vmul.f32 %v1713, %v4847
      %v4885 = vmul.f32 %v1714, %v4847
      %v4886 = vmul.f32 %v1715, %v4847
      %v4887 = vmul.f32 %v1717, %v4847
      %v4888 = vmul.f32 %v1718, %v4847
      %v4889 = vmul.f32 %v1719, %v4847
      %v4890 = vmul.f32 %v1721, %v4847
      %v4891 = vmul.f32 %v1722, %v4847
      %v4892 = vmul.f32 %v1723, %v4847
      %v4893 = vmul.f32 %v1725, %v4847
      %v4894 = vmul.f32 %v1726, %v4847
      %v4895 = vmul.f32 %v1727, %v4847
      %v4944 = vrot.slane %v4848, 4
      %v4945 = vrot.slane %v4849, 4
      %v4946 = vsel %vm2693, %v4944, %v4945
      %v4947 = vrot.slane %v4850, 4
      %v4948 = vsel %vm2693, %v4945, %v4947
      %v4949 = vrot.slane %v4851, 4
      %v4950 = vrot.slane %v4852, 4
      %v4951 = vsel %vm2693, %v4949, %v4950
      %v4952 = vrot.slane %v4853, 4
      %v4953 = vsel %vm2693, %v4950, %v4952
      %v4954 = vrot.slane %v4854, 4
      %v4955 = vrot.slane %v4855, 4
      %v4956 = vsel %vm2693, %v4954, %v4955
      %v4957 = vrot.slane %v4856, 4
      %v4958 = vsel %vm2693, %v4955, %v4957
      %v4959 = vrot.slane %v4857, 4
      %v4960 = vrot.slane %v4858, 4
      %v4961 = vsel %vm2693, %v4959, %v4960
      %v4962 = vrot.slane %v4859, 4
      %v4963 = vsel %vm2693, %v4960, %v4962
      %v4964 = vrot.slane %v4860, 4
      %v4965 = vrot.slane %v4861, 4
      %v4966 = vsel %vm2693, %v4964, %v4965
      %v4967 = vrot.slane %v4862, 4
      %v4968 = vsel %vm2693, %v4965, %v4967
      %v4969 = vrot.slane %v4863, 4
      %v4970 = vrot.slane %v4864, 4
      %v4971 = vsel %vm2693, %v4969, %v4970
      %v4972 = vrot.slane %v4865, 4
      %v4973 = vsel %vm2693, %v4970, %v4972
      %v4974 = vrot.slane %v4866, 4
      %v4975 = vrot.slane %v4867, 4
      %v4976 = vsel %vm2693, %v4974, %v4975
      %v4977 = vrot.slane %v4868, 4
      %v4978 = vsel %vm2693, %v4975, %v4977
      %v4979 = vrot.slane %v4869, 4
      %v4980 = vrot.slane %v4870, 4
      %v4981 = vsel %vm2693, %v4979, %v4980
      %v4982 = vrot.slane %v4871, 4
      %v4983 = vsel %vm2693, %v4980, %v4982
      %v4984 = vrot.slane %v4872, 4
      %v4985 = vrot.slane %v4873, 4
      %v4986 = vsel %vm2693, %v4984, %v4985
      %v4987 = vrot.slane %v4874, 4
      %v4988 = vsel %vm2693, %v4985, %v4987
      %v4989 = vrot.slane %v4875, 4
      %v4990 = vrot.slane %v4876, 4
      %v4991 = vsel %vm2693, %v4989, %v4990
      %v4992 = vrot.slane %v4877, 4
      %v4993 = vsel %vm2693, %v4990, %v4992
      %v4994 = vrot.slane %v4878, 4
      %v4995 = vrot.slane %v4879, 4
      %v4996 = vsel %vm2693, %v4994, %v4995
      %v4997 = vrot.slane %v4880, 4
      %v4998 = vsel %vm2693, %v4995, %v4997
      %v4999 = vrot.slane %v4881, 4
      %v5000 = vrot.slane %v4882, 4
      %v5001 = vsel %vm2693, %v4999, %v5000
      %v5002 = vrot.slane %v4883, 4
      %v5003 = vsel %vm2693, %v5000, %v5002
      %v5004 = vrot.slane %v4884, 4
      %v5005 = vrot.slane %v4885, 4
      %v5006 = vsel %vm2693, %v5004, %v5005
      %v5007 = vrot.slane %v4886, 4
      %v5008 = vsel %vm2693, %v5005, %v5007
      %v5009 = vrot.slane %v4887, 4
      %v5010 = vrot.slane %v4888, 4
      %v5011 = vsel %vm2693, %v5009, %v5010
      %v5012 = vrot.slane %v4889, 4
      %v5013 = vsel %vm2693, %v5010, %v5012
      %v5014 = vrot.slane %v4890, 4
      %v5015 = vrot.slane %v4891, 4
      %v5016 = vsel %vm2693, %v5014, %v5015
      %v5017 = vrot.slane %v4892, 4
      %v5018 = vsel %vm2693, %v5015, %v5017
      %v5019 = vrot.slane %v4893, 4
      %v5020 = vrot.slane %v4894, 4
      %v5021 = vsel %vm2693, %v5019, %v5020
      %v5022 = vrot.slane %v4895, 4
      %v5023 = vsel %vm2693, %v5020, %v5022
      %v5072 = vadd.f32 %v4799, %v4944
      %v5073 = vadd.f32 %v4800, %v4946
      %v5074 = vadd.f32 %v4801, %v4948
      %v5075 = vadd.f32 %v4802, %v4949
      %v5076 = vadd.f32 %v4803, %v4951
      %v5077 = vadd.f32 %v4804, %v4953
      %v5078 = vadd.f32 %v4805, %v4954
      %v5079 = vadd.f32 %v4806, %v4956
      %v5080 = vadd.f32 %v4807, %v4958
      %v5081 = vadd.f32 %v4808, %v4959
      %v5082 = vadd.f32 %v4809, %v4961
      %v5083 = vadd.f32 %v4810, %v4963
      %v5084 = vadd.f32 %v4811, %v4964
      %v5085 = vadd.f32 %v4812, %v4966
      %v5086 = vadd.f32 %v4813, %v4968
      %v5087 = vadd.f32 %v4814, %v4969
      %v5088 = vadd.f32 %v4815, %v4971
      %v5089 = vadd.f32 %v4816, %v4973
      %v5090 = vadd.f32 %v4817, %v4974
      %v5091 = vadd.f32 %v4818, %v4976
      %v5092 = vadd.f32 %v4819, %v4978
      %v5093 = vadd.f32 %v4820, %v4979
      %v5094 = vadd.f32 %v4821, %v4981
      %v5095 = vadd.f32 %v4822, %v4983
      %v5096 = vadd.f32 %v4823, %v4984
      %v5097 = vadd.f32 %v4824, %v4986
      %v5098 = vadd.f32 %v4825, %v4988
      %v5099 = vadd.f32 %v4826, %v4989
      %v5100 = vadd.f32 %v4827, %v4991
      %v5101 = vadd.f32 %v4828, %v4993
      %v5102 = vadd.f32 %v4829, %v4994
      %v5103 = vadd.f32 %v4830, %v4996
      %v5104 = vadd.f32 %v4831, %v4998
      %v5105 = vadd.f32 %v4832, %v4999
      %v5106 = vadd.f32 %v4833, %v5001
      %v5107 = vadd.f32 %v4834, %v5003
      %v5108 = vadd.f32 %v4835, %v5004
      %v5109 = vadd.f32 %v4836, %v5006
      %v5110 = vadd.f32 %v4837, %v5008
      %v5111 = vadd.f32 %v4838, %v5009
      %v5112 = vadd.f32 %v4839, %v5011
      %v5113 = vadd.f32 %v4840, %v5013
      %v5114 = vadd.f32 %v4841, %v5014
      %v5115 = vadd.f32 %v4842, %v5016
      %v5116 = vadd.f32 %v4843, %v5018
      %v5117 = vadd.f32 %v4844, %v5019
      %v5118 = vadd.f32 %v4845, %v5021
      %v5119 = vadd.f32 %v4846, %v5023
      %v5120 = vperm.slane %v1739, 0
      %v5121 = vmul.f32 %v1668, %v5120
      %v5122 = vmul.f32 %v1669, %v5120
      %v5123 = vmul.f32 %v1670, %v5120
      %v5124 = vmul.f32 %v1672, %v5120
      %v5125 = vmul.f32 %v1673, %v5120
      %v5126 = vmul.f32 %v1674, %v5120
      %v5127 = vmul.f32 %v1676, %v5120
      %v5128 = vmul.f32 %v1677, %v5120
      %v5129 = vmul.f32 %v1678, %v5120
      %v5130 = vmul.f32 %v1680, %v5120
      %v5131 = vmul.f32 %v1681, %v5120
      %v5132 = vmul.f32 %v1682, %v5120
      %v5133 = vmul.f32 %v1684, %v5120
      %v5134 = vmul.f32 %v1685, %v5120
      %v5135 = vmul.f32 %v1686, %v5120
      %v5136 = vmul.f32 %v1688, %v5120
      %v5137 = vmul.f32 %v1689, %v5120
      %v5138 = vmul.f32 %v1690, %v5120
      %v5139 = vmul.f32 %v1692, %v5120
      %v5140 = vmul.f32 %v1693, %v5120
      %v5141 = vmul.f32 %v1694, %v5120
      %v5142 = vmul.f32 %v1696, %v5120
      %v5143 = vmul.f32 %v1697, %v5120
      %v5144 = vmul.f32 %v1698, %v5120
      %v5145 = vmul.f32 %v1700, %v5120
      %v5146 = vmul.f32 %v1701, %v5120
      %v5147 = vmul.f32 %v1702, %v5120
      %v5148 = vmul.f32 %v1704, %v5120
      %v5149 = vmul.f32 %v1705, %v5120
      %v5150 = vmul.f32 %v1706, %v5120
      %v5151 = vmul.f32 %v1708, %v5120
      %v5152 = vmul.f32 %v1709, %v5120
      %v5153 = vmul.f32 %v1710, %v5120
      %v5154 = vmul.f32 %v1712, %v5120
      %v5155 = vmul.f32 %v1713, %v5120
      %v5156 = vmul.f32 %v1714, %v5120
      %v5157 = vmul.f32 %v1716, %v5120
      %v5158 = vmul.f32 %v1717, %v5120
      %v5159 = vmul.f32 %v1718, %v5120
      %v5160 = vmul.f32 %v1720, %v5120
      %v5161 = vmul.f32 %v1721, %v5120
      %v5162 = vmul.f32 %v1722, %v5120
      %v5163 = vmul.f32 %v1724, %v5120
      %v5164 = vmul.f32 %v1725, %v5120
      %v5165 = vmul.f32 %v1726, %v5120
      %v5166 = vmul.f32 %v1728, %v5120
      %v5167 = vmul.f32 %v1729, %v5120
      %v5168 = vmul.f32 %v1730, %v5120
      %v5169 = vadd.f32 %v5072, %v5121
      %v5170 = vadd.f32 %v5073, %v5122
      %v5171 = vadd.f32 %v5074, %v5123
      %v5172 = vadd.f32 %v5075, %v5124
      %v5173 = vadd.f32 %v5076, %v5125
      %v5174 = vadd.f32 %v5077, %v5126
      %v5175 = vadd.f32 %v5078, %v5127
      %v5176 = vadd.f32 %v5079, %v5128
      %v5177 = vadd.f32 %v5080, %v5129
      %v5178 = vadd.f32 %v5081, %v5130
      %v5179 = vadd.f32 %v5082, %v5131
      %v5180 = vadd.f32 %v5083, %v5132
      %v5181 = vadd.f32 %v5084, %v5133
      %v5182 = vadd.f32 %v5085, %v5134
      %v5183 = vadd.f32 %v5086, %v5135
      %v5184 = vadd.f32 %v5087, %v5136
      %v5185 = vadd.f32 %v5088, %v5137
      %v5186 = vadd.f32 %v5089, %v5138
      %v5187 = vadd.f32 %v5090, %v5139
      %v5188 = vadd.f32 %v5091, %v5140
      %v5189 = vadd.f32 %v5092, %v5141
      %v5190 = vadd.f32 %v5093, %v5142
      %v5191 = vadd.f32 %v5094, %v5143
      %v5192 = vadd.f32 %v5095, %v5144
      %v5193 = vadd.f32 %v5096, %v5145
      %v5194 = vadd.f32 %v5097, %v5146
      %v5195 = vadd.f32 %v5098, %v5147
      %v5196 = vadd.f32 %v5099, %v5148
      %v5197 = vadd.f32 %v5100, %v5149
      %v5198 = vadd.f32 %v5101, %v5150
      %v5199 = vadd.f32 %v5102, %v5151
      %v5200 = vadd.f32 %v5103, %v5152
      %v5201 = vadd.f32 %v5104, %v5153
      %v5202 = vadd.f32 %v5105, %v5154
      %v5203 = vadd.f32 %v5106, %v5155
      %v5204 = vadd.f32 %v5107, %v5156
      %v5205 = vadd.f32 %v5108, %v5157
      %v5206 = vadd.f32 %v5109, %v5158
      %v5207 = vadd.f32 %v5110, %v5159
      %v5208 = vadd.f32 %v5111, %v5160
      %v5209 = vadd.f32 %v5112, %v5161
      %v5210 = vadd.f32 %v5113, %v5162
      %v5211 = vadd.f32 %v5114, %v5163
      %v5212 = vadd.f32 %v5115, %v5164
      %v5213 = vadd.f32 %v5116, %v5165
      %v5214 = vadd.f32 %v5117, %v5166
      %v5215 = vadd.f32 %v5118, %v5167
      %v5216 = vadd.f32 %v5119, %v5168
      %v5217 = vperm.slane %v1739, 1
      %v5218 = vmul.f32 %v1668, %v5217
      %v5219 = vmul.f32 %v1669, %v5217
      %v5220 = vmul.f32 %v1670, %v5217
      %v5221 = vmul.f32 %v1672, %v5217
      %v5222 = vmul.f32 %v1673, %v5217
      %v5223 = vmul.f32 %v1674, %v5217
      %v5224 = vmul.f32 %v1676, %v5217
      %v5225 = vmul.f32 %v1677, %v5217
      %v5226 = vmul.f32 %v1678, %v5217
      %v5227 = vmul.f32 %v1680, %v5217
      %v5228 = vmul.f32 %v1681, %v5217
      %v5229 = vmul.f32 %v1682, %v5217
      %v5230 = vmul.f32 %v1684, %v5217
      %v5231 = vmul.f32 %v1685, %v5217
      %v5232 = vmul.f32 %v1686, %v5217
      %v5233 = vmul.f32 %v1688, %v5217
      %v5234 = vmul.f32 %v1689, %v5217
      %v5235 = vmul.f32 %v1690, %v5217
      %v5236 = vmul.f32 %v1692, %v5217
      %v5237 = vmul.f32 %v1693, %v5217
      %v5238 = vmul.f32 %v1694, %v5217
      %v5239 = vmul.f32 %v1696, %v5217
      %v5240 = vmul.f32 %v1697, %v5217
      %v5241 = vmul.f32 %v1698, %v5217
      %v5242 = vmul.f32 %v1700, %v5217
      %v5243 = vmul.f32 %v1701, %v5217
      %v5244 = vmul.f32 %v1702, %v5217
      %v5245 = vmul.f32 %v1704, %v5217
      %v5246 = vmul.f32 %v1705, %v5217
      %v5247 = vmul.f32 %v1706, %v5217
      %v5248 = vmul.f32 %v1708, %v5217
      %v5249 = vmul.f32 %v1709, %v5217
      %v5250 = vmul.f32 %v1710, %v5217
      %v5251 = vmul.f32 %v1712, %v5217
      %v5252 = vmul.f32 %v1713, %v5217
      %v5253 = vmul.f32 %v1714, %v5217
      %v5254 = vmul.f32 %v1716, %v5217
      %v5255 = vmul.f32 %v1717, %v5217
      %v5256 = vmul.f32 %v1718, %v5217
      %v5257 = vmul.f32 %v1720, %v5217
      %v5258 = vmul.f32 %v1721, %v5217
      %v5259 = vmul.f32 %v1722, %v5217
      %v5260 = vmul.f32 %v1724, %v5217
      %v5261 = vmul.f32 %v1725, %v5217
      %v5262 = vmul.f32 %v1726, %v5217
      %v5263 = vmul.f32 %v1728, %v5217
      %v5264 = vmul.f32 %v1729, %v5217
      %v5265 = vmul.f32 %v1730, %v5217
      %v5314 = vrot.slane %v5218, 1
      %v5315 = vrot.slane %v5219, 1
      %v5316 = vsel %vm1935, %v5314, %v5315
      %v5317 = vrot.slane %v5220, 1
      %v5318 = vsel %vm1935, %v5315, %v5317
      %v5319 = vrot.slane %v5221, 1
      %v5320 = vrot.slane %v5222, 1
      %v5321 = vsel %vm1935, %v5319, %v5320
      %v5322 = vrot.slane %v5223, 1
      %v5323 = vsel %vm1935, %v5320, %v5322
      %v5324 = vrot.slane %v5224, 1
      %v5325 = vrot.slane %v5225, 1
      %v5326 = vsel %vm1935, %v5324, %v5325
      %v5327 = vrot.slane %v5226, 1
      %v5328 = vsel %vm1935, %v5325, %v5327
      %v5329 = vrot.slane %v5227, 1
      %v5330 = vrot.slane %v5228, 1
      %v5331 = vsel %vm1935, %v5329, %v5330
      %v5332 = vrot.slane %v5229, 1
      %v5333 = vsel %vm1935, %v5330, %v5332
      %v5334 = vrot.slane %v5230, 1
      %v5335 = vrot.slane %v5231, 1
      %v5336 = vsel %vm1935, %v5334, %v5335
      %v5337 = vrot.slane %v5232, 1
      %v5338 = vsel %vm1935, %v5335, %v5337
      %v5339 = vrot.slane %v5233, 1
      %v5340 = vrot.slane %v5234, 1
      %v5341 = vsel %vm1935, %v5339, %v5340
      %v5342 = vrot.slane %v5235, 1
      %v5343 = vsel %vm1935, %v5340, %v5342
      %v5344 = vrot.slane %v5236, 1
      %v5345 = vrot.slane %v5237, 1
      %v5346 = vsel %vm1935, %v5344, %v5345
      %v5347 = vrot.slane %v5238, 1
      %v5348 = vsel %vm1935, %v5345, %v5347
      %v5349 = vrot.slane %v5239, 1
      %v5350 = vrot.slane %v5240, 1
      %v5351 = vsel %vm1935, %v5349, %v5350
      %v5352 = vrot.slane %v5241, 1
      %v5353 = vsel %vm1935, %v5350, %v5352
      %v5354 = vrot.slane %v5242, 1
      %v5355 = vrot.slane %v5243, 1
      %v5356 = vsel %vm1935, %v5354, %v5355
      %v5357 = vrot.slane %v5244, 1
      %v5358 = vsel %vm1935, %v5355, %v5357
      %v5359 = vrot.slane %v5245, 1
      %v5360 = vrot.slane %v5246, 1
      %v5361 = vsel %vm1935, %v5359, %v5360
      %v5362 = vrot.slane %v5247, 1
      %v5363 = vsel %vm1935, %v5360, %v5362
      %v5364 = vrot.slane %v5248, 1
      %v5365 = vrot.slane %v5249, 1
      %v5366 = vsel %vm1935, %v5364, %v5365
      %v5367 = vrot.slane %v5250, 1
      %v5368 = vsel %vm1935, %v5365, %v5367
      %v5369 = vrot.slane %v5251, 1
      %v5370 = vrot.slane %v5252, 1
      %v5371 = vsel %vm1935, %v5369, %v5370
      %v5372 = vrot.slane %v5253, 1
      %v5373 = vsel %vm1935, %v5370, %v5372
      %v5374 = vrot.slane %v5254, 1
      %v5375 = vrot.slane %v5255, 1
      %v5376 = vsel %vm1935, %v5374, %v5375
      %v5377 = vrot.slane %v5256, 1
      %v5378 = vsel %vm1935, %v5375, %v5377
      %v5379 = vrot.slane %v5257, 1
      %v5380 = vrot.slane %v5258, 1
      %v5381 = vsel %vm1935, %v5379, %v5380
      %v5382 = vrot.slane %v5259, 1
      %v5383 = vsel %vm1935, %v5380, %v5382
      %v5384 = vrot.slane %v5260, 1
      %v5385 = vrot.slane %v5261, 1
      %v5386 = vsel %vm1935, %v5384, %v5385
      %v5387 = vrot.slane %v5262, 1
      %v5388 = vsel %vm1935, %v5385, %v5387
      %v5389 = vrot.slane %v5263, 1
      %v5390 = vrot.slane %v5264, 1
      %v5391 = vsel %vm1935, %v5389, %v5390
      %v5392 = vrot.slane %v5265, 1
      %v5393 = vsel %vm1935, %v5390, %v5392
      %v5442 = vadd.f32 %v5169, %v5316
      %v5443 = vadd.f32 %v5170, %v5318
      %v5444 = vadd.f32 %v5171, %v5317
      %v5445 = vadd.f32 %v5172, %v5321
      %v5446 = vadd.f32 %v5173, %v5323
      %v5447 = vadd.f32 %v5174, %v5322
      %v5448 = vadd.f32 %v5175, %v5326
      %v5449 = vadd.f32 %v5176, %v5328
      %v5450 = vadd.f32 %v5177, %v5327
      %v5451 = vadd.f32 %v5178, %v5331
      %v5452 = vadd.f32 %v5179, %v5333
      %v5453 = vadd.f32 %v5180, %v5332
      %v5454 = vadd.f32 %v5181, %v5336
      %v5455 = vadd.f32 %v5182, %v5338
      %v5456 = vadd.f32 %v5183, %v5337
      %v5457 = vadd.f32 %v5184, %v5341
      %v5458 = vadd.f32 %v5185, %v5343
      %v5459 = vadd.f32 %v5186, %v5342
      %v5460 = vadd.f32 %v5187, %v5346
      %v5461 = vadd.f32 %v5188, %v5348
      %v5462 = vadd.f32 %v5189, %v5347
      %v5463 = vadd.f32 %v5190, %v5351
      %v5464 = vadd.f32 %v5191, %v5353
      %v5465 = vadd.f32 %v5192, %v5352
      %v5466 = vadd.f32 %v5193, %v5356
      %v5467 = vadd.f32 %v5194, %v5358
      %v5468 = vadd.f32 %v5195, %v5357
      %v5469 = vadd.f32 %v5196, %v5361
      %v5470 = vadd.f32 %v5197, %v5363
      %v5471 = vadd.f32 %v5198, %v5362
      %v5472 = vadd.f32 %v5199, %v5366
      %v5473 = vadd.f32 %v5200, %v5368
      %v5474 = vadd.f32 %v5201, %v5367
      %v5475 = vadd.f32 %v5202, %v5371
      %v5476 = vadd.f32 %v5203, %v5373
      %v5477 = vadd.f32 %v5204, %v5372
      %v5478 = vadd.f32 %v5205, %v5376
      %v5479 = vadd.f32 %v5206, %v5378
      %v5480 = vadd.f32 %v5207, %v5377
      %v5481 = vadd.f32 %v5208, %v5381
      %v5482 = vadd.f32 %v5209, %v5383
      %v5483 = vadd.f32 %v5210, %v5382
      %v5484 = vadd.f32 %v5211, %v5386
      %v5485 = vadd.f32 %v5212, %v5388
      %v5486 = vadd.f32 %v5213, %v5387
      %v5487 = vadd.f32 %v5214, %v5391
      %v5488 = vadd.f32 %v5215, %v5393
      %v5489 = vadd.f32 %v5216, %v5392
      %v5490 = vperm.slane %v1739, 2
      %v5491 = vmul.f32 %v1669, %v5490
      %v5492 = vmul.f32 %v1670, %v5490
      %v5493 = vmul.f32 %v1673, %v5490
      %v5494 = vmul.f32 %v1674, %v5490
      %v5495 = vmul.f32 %v1677, %v5490
      %v5496 = vmul.f32 %v1678, %v5490
      %v5497 = vmul.f32 %v1681, %v5490
      %v5498 = vmul.f32 %v1682, %v5490
      %v5499 = vmul.f32 %v1685, %v5490
      %v5500 = vmul.f32 %v1686, %v5490
      %v5501 = vmul.f32 %v1689, %v5490
      %v5502 = vmul.f32 %v1690, %v5490
      %v5503 = vmul.f32 %v1693, %v5490
      %v5504 = vmul.f32 %v1694, %v5490
      %v5505 = vmul.f32 %v1697, %v5490
      %v5506 = vmul.f32 %v1698, %v5490
      %v5507 = vmul.f32 %v1701, %v5490
      %v5508 = vmul.f32 %v1702, %v5490
      %v5509 = vmul.f32 %v1705, %v5490
      %v5510 = vmul.f32 %v1706, %v5490
      %v5511 = vmul.f32 %v1709, %v5490
      %v5512 = vmul.f32 %v1710, %v5490
      %v5513 = vmul.f32 %v1713, %v5490
      %v5514 = vmul.f32 %v1714, %v5490
      %v5515 = vmul.f32 %v1717, %v5490
      %v5516 = vmul.f32 %v1718, %v5490
      %v5517 = vmul.f32 %v1721, %v5490
      %v5518 = vmul.f32 %v1722, %v5490
      %v5519 = vmul.f32 %v1725, %v5490
      %v5520 = vmul.f32 %v1726, %v5490
      %v5521 = vmul.f32 %v1729, %v5490
      %v5522 = vmul.f32 %v1730, %v5490
      %v5555 = vrot.slane %v5491, 2
      %v5556 = vrot.slane %v5492, 2
      %v5557 = vsel %vm2177, %v5555, %v5556
      %v5558 = vrot.slane %v5493, 2
      %v5559 = vrot.slane %v5494, 2
      %v5560 = vsel %vm2177, %v5558, %v5559
      %v5561 = vrot.slane %v5495, 2
      %v5562 = vrot.slane %v5496, 2
      %v5563 = vsel %vm2177, %v5561, %v5562
      %v5564 = vrot.slane %v5497, 2
      %v5565 = vrot.slane %v5498, 2
      %v5566 = vsel %vm2177, %v5564, %v5565
      %v5567 = vrot.slane %v5499, 2
      %v5568 = vrot.slane %v5500, 2
      %v5569 = vsel %vm2177, %v5567, %v5568
      %v5570 = vrot.slane %v5501, 2
      %v5571 = vrot.slane %v5502, 2
      %v5572 = vsel %vm2177, %v5570, %v5571
      %v5573 = vrot.slane %v5503, 2
      %v5574 = vrot.slane %v5504, 2
      %v5575 = vsel %vm2177, %v5573, %v5574
      %v5576 = vrot.slane %v5505, 2
      %v5577 = vrot.slane %v5506, 2
      %v5578 = vsel %vm2177, %v5576, %v5577
      %v5579 = vrot.slane %v5507, 2
      %v5580 = vrot.slane %v5508, 2
      %v5581 = vsel %vm2177, %v5579, %v5580
      %v5582 = vrot.slane %v5509, 2
      %v5583 = vrot.slane %v5510, 2
      %v5584 = vsel %vm2177, %v5582, %v5583
      %v5585 = vrot.slane %v5511, 2
      %v5586 = vrot.slane %v5512, 2
      %v5587 = vsel %vm2177, %v5585, %v5586
      %v5588 = vrot.slane %v5513, 2
      %v5589 = vrot.slane %v5514, 2
      %v5590 = vsel %vm2177, %v5588, %v5589
      %v5591 = vrot.slane %v5515, 2
      %v5592 = vrot.slane %v5516, 2
      %v5593 = vsel %vm2177, %v5591, %v5592
      %v5594 = vrot.slane %v5517, 2
      %v5595 = vrot.slane %v5518, 2
      %v5596 = vsel %vm2177, %v5594, %v5595
      %v5597 = vrot.slane %v5519, 2
      %v5598 = vrot.slane %v5520, 2
      %v5599 = vsel %vm2177, %v5597, %v5598
      %v5600 = vrot.slane %v5521, 2
      %v5601 = vrot.slane %v5522, 2
      %v5602 = vsel %vm2177, %v5600, %v5601
      %v5651 = vadd.f32 %v5442, %v5555
      %v5652 = vadd.f32 %v5443, %v5557
      %v5653 = vadd.f32 %v5444, %v5556
      %v5654 = vadd.f32 %v5445, %v5558
      %v5655 = vadd.f32 %v5446, %v5560
      %v5656 = vadd.f32 %v5447, %v5559
      %v5657 = vadd.f32 %v5448, %v5561
      %v5658 = vadd.f32 %v5449, %v5563
      %v5659 = vadd.f32 %v5450, %v5562
      %v5660 = vadd.f32 %v5451, %v5564
      %v5661 = vadd.f32 %v5452, %v5566
      %v5662 = vadd.f32 %v5453, %v5565
      %v5663 = vadd.f32 %v5454, %v5567
      %v5664 = vadd.f32 %v5455, %v5569
      %v5665 = vadd.f32 %v5456, %v5568
      %v5666 = vadd.f32 %v5457, %v5570
      %v5667 = vadd.f32 %v5458, %v5572
      %v5668 = vadd.f32 %v5459, %v5571
      %v5669 = vadd.f32 %v5460, %v5573
      %v5670 = vadd.f32 %v5461, %v5575
      %v5671 = vadd.f32 %v5462, %v5574
      %v5672 = vadd.f32 %v5463, %v5576
      %v5673 = vadd.f32 %v5464, %v5578
      %v5674 = vadd.f32 %v5465, %v5577
      %v5675 = vadd.f32 %v5466, %v5579
      %v5676 = vadd.f32 %v5467, %v5581
      %v5677 = vadd.f32 %v5468, %v5580
      %v5678 = vadd.f32 %v5469, %v5582
      %v5679 = vadd.f32 %v5470, %v5584
      %v5680 = vadd.f32 %v5471, %v5583
      %v5681 = vadd.f32 %v5472, %v5585
      %v5682 = vadd.f32 %v5473, %v5587
      %v5683 = vadd.f32 %v5474, %v5586
      %v5684 = vadd.f32 %v5475, %v5588
      %v5685 = vadd.f32 %v5476, %v5590
      %v5686 = vadd.f32 %v5477, %v5589
      %v5687 = vadd.f32 %v5478, %v5591
      %v5688 = vadd.f32 %v5479, %v5593
      %v5689 = vadd.f32 %v5480, %v5592
      %v5690 = vadd.f32 %v5481, %v5594
      %v5691 = vadd.f32 %v5482, %v5596
      %v5692 = vadd.f32 %v5483, %v5595
      %v5693 = vadd.f32 %v5484, %v5597
      %v5694 = vadd.f32 %v5485, %v5599
      %v5695 = vadd.f32 %v5486, %v5598
      %v5696 = vadd.f32 %v5487, %v5600
      %v5697 = vadd.f32 %v5488, %v5602
      %v5698 = vadd.f32 %v5489, %v5601
      %v5699 = vperm.slane %v1739, 3
      %v5700 = vmul.f32 %v1669, %v5699
      %v5701 = vmul.f32 %v1670, %v5699
      %v5702 = vmul.f32 %v1671, %v5699
      %v5703 = vmul.f32 %v1673, %v5699
      %v5704 = vmul.f32 %v1674, %v5699
      %v5705 = vmul.f32 %v1675, %v5699
      %v5706 = vmul.f32 %v1677, %v5699
      %v5707 = vmul.f32 %v1678, %v5699
      %v5708 = vmul.f32 %v1679, %v5699
      %v5709 = vmul.f32 %v1681, %v5699
      %v5710 = vmul.f32 %v1682, %v5699
      %v5711 = vmul.f32 %v1683, %v5699
      %v5712 = vmul.f32 %v1685, %v5699
      %v5713 = vmul.f32 %v1686, %v5699
      %v5714 = vmul.f32 %v1687, %v5699
      %v5715 = vmul.f32 %v1689, %v5699
      %v5716 = vmul.f32 %v1690, %v5699
      %v5717 = vmul.f32 %v1691, %v5699
      %v5718 = vmul.f32 %v1693, %v5699
      %v5719 = vmul.f32 %v1694, %v5699
      %v5720 = vmul.f32 %v1695, %v5699
      %v5721 = vmul.f32 %v1697, %v5699
      %v5722 = vmul.f32 %v1698, %v5699
      %v5723 = vmul.f32 %v1699, %v5699
      %v5724 = vmul.f32 %v1701, %v5699
      %v5725 = vmul.f32 %v1702, %v5699
      %v5726 = vmul.f32 %v1703, %v5699
      %v5727 = vmul.f32 %v1705, %v5699
      %v5728 = vmul.f32 %v1706, %v5699
      %v5729 = vmul.f32 %v1707, %v5699
      %v5730 = vmul.f32 %v1709, %v5699
      %v5731 = vmul.f32 %v1710, %v5699
      %v5732 = vmul.f32 %v1711, %v5699
      %v5733 = vmul.f32 %v1713, %v5699
      %v5734 = vmul.f32 %v1714, %v5699
      %v5735 = vmul.f32 %v1715, %v5699
      %v5736 = vmul.f32 %v1717, %v5699
      %v5737 = vmul.f32 %v1718, %v5699
      %v5738 = vmul.f32 %v1719, %v5699
      %v5739 = vmul.f32 %v1721, %v5699
      %v5740 = vmul.f32 %v1722, %v5699
      %v5741 = vmul.f32 %v1723, %v5699
      %v5742 = vmul.f32 %v1725, %v5699
      %v5743 = vmul.f32 %v1726, %v5699
      %v5744 = vmul.f32 %v1727, %v5699
      %v5745 = vmul.f32 %v1729, %v5699
      %v5746 = vmul.f32 %v1730, %v5699
      %v5747 = vmul.f32 %v1731, %v5699
      %v5796 = vrot.slane %v5700, 3
      %v5797 = vrot.slane %v5701, 3
      %v5798 = vsel %vm2419, %v5796, %v5797
      %v5799 = vrot.slane %v5702, 3
      %v5800 = vsel %vm2419, %v5797, %v5799
      %v5801 = vrot.slane %v5703, 3
      %v5802 = vrot.slane %v5704, 3
      %v5803 = vsel %vm2419, %v5801, %v5802
      %v5804 = vrot.slane %v5705, 3
      %v5805 = vsel %vm2419, %v5802, %v5804
      %v5806 = vrot.slane %v5706, 3
      %v5807 = vrot.slane %v5707, 3
      %v5808 = vsel %vm2419, %v5806, %v5807
      %v5809 = vrot.slane %v5708, 3
      %v5810 = vsel %vm2419, %v5807, %v5809
      %v5811 = vrot.slane %v5709, 3
      %v5812 = vrot.slane %v5710, 3
      %v5813 = vsel %vm2419, %v5811, %v5812
      %v5814 = vrot.slane %v5711, 3
      %v5815 = vsel %vm2419, %v5812, %v5814
      %v5816 = vrot.slane %v5712, 3
      %v5817 = vrot.slane %v5713, 3
      %v5818 = vsel %vm2419, %v5816, %v5817
      %v5819 = vrot.slane %v5714, 3
      %v5820 = vsel %vm2419, %v5817, %v5819
      %v5821 = vrot.slane %v5715, 3
      %v5822 = vrot.slane %v5716, 3
      %v5823 = vsel %vm2419, %v5821, %v5822
      %v5824 = vrot.slane %v5717, 3
      %v5825 = vsel %vm2419, %v5822, %v5824
      %v5826 = vrot.slane %v5718, 3
      %v5827 = vrot.slane %v5719, 3
      %v5828 = vsel %vm2419, %v5826, %v5827
      %v5829 = vrot.slane %v5720, 3
      %v5830 = vsel %vm2419, %v5827, %v5829
      %v5831 = vrot.slane %v5721, 3
      %v5832 = vrot.slane %v5722, 3
      %v5833 = vsel %vm2419, %v5831, %v5832
      %v5834 = vrot.slane %v5723, 3
      %v5835 = vsel %vm2419, %v5832, %v5834
      %v5836 = vrot.slane %v5724, 3
      %v5837 = vrot.slane %v5725, 3
      %v5838 = vsel %vm2419, %v5836, %v5837
      %v5839 = vrot.slane %v5726, 3
      %v5840 = vsel %vm2419, %v5837, %v5839
      %v5841 = vrot.slane %v5727, 3
      %v5842 = vrot.slane %v5728, 3
      %v5843 = vsel %vm2419, %v5841, %v5842
      %v5844 = vrot.slane %v5729, 3
      %v5845 = vsel %vm2419, %v5842, %v5844
      %v5846 = vrot.slane %v5730, 3
      %v5847 = vrot.slane %v5731, 3
      %v5848 = vsel %vm2419, %v5846, %v5847
      %v5849 = vrot.slane %v5732, 3
      %v5850 = vsel %vm2419, %v5847, %v5849
      %v5851 = vrot.slane %v5733, 3
      %v5852 = vrot.slane %v5734, 3
      %v5853 = vsel %vm2419, %v5851, %v5852
      %v5854 = vrot.slane %v5735, 3
      %v5855 = vsel %vm2419, %v5852, %v5854
      %v5856 = vrot.slane %v5736, 3
      %v5857 = vrot.slane %v5737, 3
      %v5858 = vsel %vm2419, %v5856, %v5857
      %v5859 = vrot.slane %v5738, 3
      %v5860 = vsel %vm2419, %v5857, %v5859
      %v5861 = vrot.slane %v5739, 3
      %v5862 = vrot.slane %v5740, 3
      %v5863 = vsel %vm2419, %v5861, %v5862
      %v5864 = vrot.slane %v5741, 3
      %v5865 = vsel %vm2419, %v5862, %v5864
      %v5866 = vrot.slane %v5742, 3
      %v5867 = vrot.slane %v5743, 3
      %v5868 = vsel %vm2419, %v5866, %v5867
      %v5869 = vrot.slane %v5744, 3
      %v5870 = vsel %vm2419, %v5867, %v5869
      %v5871 = vrot.slane %v5745, 3
      %v5872 = vrot.slane %v5746, 3
      %v5873 = vsel %vm2419, %v5871, %v5872
      %v5874 = vrot.slane %v5747, 3
      %v5875 = vsel %vm2419, %v5872, %v5874
      %v5924 = vadd.f32 %v5651, %v5796
      %v5925 = vadd.f32 %v5652, %v5798
      %v5926 = vadd.f32 %v5653, %v5800
      %v5927 = vadd.f32 %v5654, %v5801
      %v5928 = vadd.f32 %v5655, %v5803
      %v5929 = vadd.f32 %v5656, %v5805
      %v5930 = vadd.f32 %v5657, %v5806
      %v5931 = vadd.f32 %v5658, %v5808
      %v5932 = vadd.f32 %v5659, %v5810
      %v5933 = vadd.f32 %v5660, %v5811
      %v5934 = vadd.f32 %v5661, %v5813
      %v5935 = vadd.f32 %v5662, %v5815
      %v5936 = vadd.f32 %v5663, %v5816
      %v5937 = vadd.f32 %v5664, %v5818
      %v5938 = vadd.f32 %v5665, %v5820
      %v5939 = vadd.f32 %v5666, %v5821
      %v5940 = vadd.f32 %v5667, %v5823
      %v5941 = vadd.f32 %v5668, %v5825
      %v5942 = vadd.f32 %v5669, %v5826
      %v5943 = vadd.f32 %v5670, %v5828
      %v5944 = vadd.f32 %v5671, %v5830
      %v5945 = vadd.f32 %v5672, %v5831
      %v5946 = vadd.f32 %v5673, %v5833
      %v5947 = vadd.f32 %v5674, %v5835
      %v5948 = vadd.f32 %v5675, %v5836
      %v5949 = vadd.f32 %v5676, %v5838
      %v5950 = vadd.f32 %v5677, %v5840
      %v5951 = vadd.f32 %v5678, %v5841
      %v5952 = vadd.f32 %v5679, %v5843
      %v5953 = vadd.f32 %v5680, %v5845
      %v5954 = vadd.f32 %v5681, %v5846
      %v5955 = vadd.f32 %v5682, %v5848
      %v5956 = vadd.f32 %v5683, %v5850
      %v5957 = vadd.f32 %v5684, %v5851
      %v5958 = vadd.f32 %v5685, %v5853
      %v5959 = vadd.f32 %v5686, %v5855
      %v5960 = vadd.f32 %v5687, %v5856
      %v5961 = vadd.f32 %v5688, %v5858
      %v5962 = vadd.f32 %v5689, %v5860
      %v5963 = vadd.f32 %v5690, %v5861
      %v5964 = vadd.f32 %v5691, %v5863
      %v5965 = vadd.f32 %v5692, %v5865
      %v5966 = vadd.f32 %v5693, %v5866
      %v5967 = vadd.f32 %v5694, %v5868
      %v5968 = vadd.f32 %v5695, %v5870
      %v5969 = vadd.f32 %v5696, %v5871
      %v5970 = vadd.f32 %v5697, %v5873
      %v5971 = vadd.f32 %v5698, %v5875
      %v5972 = vperm.slane %v1739, 4
      %v5973 = vmul.f32 %v1669, %v5972
      %v5974 = vmul.f32 %v1670, %v5972
      %v5975 = vmul.f32 %v1671, %v5972
      %v5976 = vmul.f32 %v1673, %v5972
      %v5977 = vmul.f32 %v1674, %v5972
      %v5978 = vmul.f32 %v1675, %v5972
      %v5979 = vmul.f32 %v1677, %v5972
      %v5980 = vmul.f32 %v1678, %v5972
      %v5981 = vmul.f32 %v1679, %v5972
      %v5982 = vmul.f32 %v1681, %v5972
      %v5983 = vmul.f32 %v1682, %v5972
      %v5984 = vmul.f32 %v1683, %v5972
      %v5985 = vmul.f32 %v1685, %v5972
      %v5986 = vmul.f32 %v1686, %v5972
      %v5987 = vmul.f32 %v1687, %v5972
      %v5988 = vmul.f32 %v1689, %v5972
      %v5989 = vmul.f32 %v1690, %v5972
      %v5990 = vmul.f32 %v1691, %v5972
      %v5991 = vmul.f32 %v1693, %v5972
      %v5992 = vmul.f32 %v1694, %v5972
      %v5993 = vmul.f32 %v1695, %v5972
      %v5994 = vmul.f32 %v1697, %v5972
      %v5995 = vmul.f32 %v1698, %v5972
      %v5996 = vmul.f32 %v1699, %v5972
      %v5997 = vmul.f32 %v1701, %v5972
      %v5998 = vmul.f32 %v1702, %v5972
      %v5999 = vmul.f32 %v1703, %v5972
      %v6000 = vmul.f32 %v1705, %v5972
      %v6001 = vmul.f32 %v1706, %v5972
      %v6002 = vmul.f32 %v1707, %v5972
      %v6003 = vmul.f32 %v1709, %v5972
      %v6004 = vmul.f32 %v1710, %v5972
      %v6005 = vmul.f32 %v1711, %v5972
      %v6006 = vmul.f32 %v1713, %v5972
      %v6007 = vmul.f32 %v1714, %v5972
      %v6008 = vmul.f32 %v1715, %v5972
      %v6009 = vmul.f32 %v1717, %v5972
      %v6010 = vmul.f32 %v1718, %v5972
      %v6011 = vmul.f32 %v1719, %v5972
      %v6012 = vmul.f32 %v1721, %v5972
      %v6013 = vmul.f32 %v1722, %v5972
      %v6014 = vmul.f32 %v1723, %v5972
      %v6015 = vmul.f32 %v1725, %v5972
      %v6016 = vmul.f32 %v1726, %v5972
      %v6017 = vmul.f32 %v1727, %v5972
      %v6018 = vmul.f32 %v1729, %v5972
      %v6019 = vmul.f32 %v1730, %v5972
      %v6020 = vmul.f32 %v1731, %v5972
      %v6069 = vrot.slane %v5973, 4
      %v6070 = vrot.slane %v5974, 4
      %v6071 = vsel %vm2693, %v6069, %v6070
      %v6072 = vrot.slane %v5975, 4
      %v6073 = vsel %vm2693, %v6070, %v6072
      %v6074 = vrot.slane %v5976, 4
      %v6075 = vrot.slane %v5977, 4
      %v6076 = vsel %vm2693, %v6074, %v6075
      %v6077 = vrot.slane %v5978, 4
      %v6078 = vsel %vm2693, %v6075, %v6077
      %v6079 = vrot.slane %v5979, 4
      %v6080 = vrot.slane %v5980, 4
      %v6081 = vsel %vm2693, %v6079, %v6080
      %v6082 = vrot.slane %v5981, 4
      %v6083 = vsel %vm2693, %v6080, %v6082
      %v6084 = vrot.slane %v5982, 4
      %v6085 = vrot.slane %v5983, 4
      %v6086 = vsel %vm2693, %v6084, %v6085
      %v6087 = vrot.slane %v5984, 4
      %v6088 = vsel %vm2693, %v6085, %v6087
      %v6089 = vrot.slane %v5985, 4
      %v6090 = vrot.slane %v5986, 4
      %v6091 = vsel %vm2693, %v6089, %v6090
      %v6092 = vrot.slane %v5987, 4
      %v6093 = vsel %vm2693, %v6090, %v6092
      %v6094 = vrot.slane %v5988, 4
      %v6095 = vrot.slane %v5989, 4
      %v6096 = vsel %vm2693, %v6094, %v6095
      %v6097 = vrot.slane %v5990, 4
      %v6098 = vsel %vm2693, %v6095, %v6097
      %v6099 = vrot.slane %v5991, 4
      %v6100 = vrot.slane %v5992, 4
      %v6101 = vsel %vm2693, %v6099, %v6100
      %v6102 = vrot.slane %v5993, 4
      %v6103 = vsel %vm2693, %v6100, %v6102
      %v6104 = vrot.slane %v5994, 4
      %v6105 = vrot.slane %v5995, 4
      %v6106 = vsel %vm2693, %v6104, %v6105
      %v6107 = vrot.slane %v5996, 4
      %v6108 = vsel %vm2693, %v6105, %v6107
      %v6109 = vrot.slane %v5997, 4
      %v6110 = vrot.slane %v5998, 4
      %v6111 = vsel %vm2693, %v6109, %v6110
      %v6112 = vrot.slane %v5999, 4
      %v6113 = vsel %vm2693, %v6110, %v6112
      %v6114 = vrot.slane %v6000, 4
      %v6115 = vrot.slane %v6001, 4
      %v6116 = vsel %vm2693, %v6114, %v6115
      %v6117 = vrot.slane %v6002, 4
      %v6118 = vsel %vm2693, %v6115, %v6117
      %v6119 = vrot.slane %v6003, 4
      %v6120 = vrot.slane %v6004, 4
      %v6121 = vsel %vm2693, %v6119, %v6120
      %v6122 = vrot.slane %v6005, 4
      %v6123 = vsel %vm2693, %v6120, %v6122
      %v6124 = vrot.slane %v6006, 4
      %v6125 = vrot.slane %v6007, 4
      %v6126 = vsel %vm2693, %v6124, %v6125
      %v6127 = vrot.slane %v6008, 4
      %v6128 = vsel %vm2693, %v6125, %v6127
      %v6129 = vrot.slane %v6009, 4
      %v6130 = vrot.slane %v6010, 4
      %v6131 = vsel %vm2693, %v6129, %v6130
      %v6132 = vrot.slane %v6011, 4
      %v6133 = vsel %vm2693, %v6130, %v6132
      %v6134 = vrot.slane %v6012, 4
      %v6135 = vrot.slane %v6013, 4
      %v6136 = vsel %vm2693, %v6134, %v6135
      %v6137 = vrot.slane %v6014, 4
      %v6138 = vsel %vm2693, %v6135, %v6137
      %v6139 = vrot.slane %v6015, 4
      %v6140 = vrot.slane %v6016, 4
      %v6141 = vsel %vm2693, %v6139, %v6140
      %v6142 = vrot.slane %v6017, 4
      %v6143 = vsel %vm2693, %v6140, %v6142
      %v6144 = vrot.slane %v6018, 4
      %v6145 = vrot.slane %v6019, 4
      %v6146 = vsel %vm2693, %v6144, %v6145
      %v6147 = vrot.slane %v6020, 4
      %v6148 = vsel %vm2693, %v6145, %v6147
      %v6197 = vadd.f32 %v5924, %v6069
      %v6198 = vadd.f32 %v5925, %v6071
      %v6199 = vadd.f32 %v5926, %v6073
      %v6200 = vadd.f32 %v5927, %v6074
      %v6201 = vadd.f32 %v5928, %v6076
      %v6202 = vadd.f32 %v5929, %v6078
      %v6203 = vadd.f32 %v5930, %v6079
      %v6204 = vadd.f32 %v5931, %v6081
      %v6205 = vadd.f32 %v5932, %v6083
      %v6206 = vadd.f32 %v5933, %v6084
      %v6207 = vadd.f32 %v5934, %v6086
      %v6208 = vadd.f32 %v5935, %v6088
      %v6209 = vadd.f32 %v5936, %v6089
      %v6210 = vadd.f32 %v5937, %v6091
      %v6211 = vadd.f32 %v5938, %v6093
      %v6212 = vadd.f32 %v5939, %v6094
      %v6213 = vadd.f32 %v5940, %v6096
      %v6214 = vadd.f32 %v5941, %v6098
      %v6215 = vadd.f32 %v5942, %v6099
      %v6216 = vadd.f32 %v5943, %v6101
      %v6217 = vadd.f32 %v5944, %v6103
      %v6218 = vadd.f32 %v5945, %v6104
      %v6219 = vadd.f32 %v5946, %v6106
      %v6220 = vadd.f32 %v5947, %v6108
      %v6221 = vadd.f32 %v5948, %v6109
      %v6222 = vadd.f32 %v5949, %v6111
      %v6223 = vadd.f32 %v5950, %v6113
      %v6224 = vadd.f32 %v5951, %v6114
      %v6225 = vadd.f32 %v5952, %v6116
      %v6226 = vadd.f32 %v5953, %v6118
      %v6227 = vadd.f32 %v5954, %v6119
      %v6228 = vadd.f32 %v5955, %v6121
      %v6229 = vadd.f32 %v5956, %v6123
      %v6230 = vadd.f32 %v5957, %v6124
      %v6231 = vadd.f32 %v5958, %v6126
      %v6232 = vadd.f32 %v5959, %v6128
      %v6233 = vadd.f32 %v5960, %v6129
      %v6234 = vadd.f32 %v5961, %v6131
      %v6235 = vadd.f32 %v5962, %v6133
      %v6236 = vadd.f32 %v5963, %v6134
      %v6237 = vadd.f32 %v5964, %v6136
      %v6238 = vadd.f32 %v5965, %v6138
      %v6239 = vadd.f32 %v5966, %v6139
      %v6240 = vadd.f32 %v5967, %v6141
      %v6241 = vadd.f32 %v5968, %v6143
      %v6242 = vadd.f32 %v5969, %v6144
      %v6243 = vadd.f32 %v5970, %v6146
      %v6244 = vadd.f32 %v5971, %v6148
      %v6245 = vperm.slane %v1740, 0
      %v6246 = vmul.f32 %v1672, %v6245
      %v6247 = vmul.f32 %v1673, %v6245
      %v6248 = vmul.f32 %v1674, %v6245
      %v6249 = vmul.f32 %v1676, %v6245
      %v6250 = vmul.f32 %v1677, %v6245
      %v6251 = vmul.f32 %v1678, %v6245
      %v6252 = vmul.f32 %v1680, %v6245
      %v6253 = vmul.f32 %v1681, %v6245
      %v6254 = vmul.f32 %v1682, %v6245
      %v6255 = vmul.f32 %v1684, %v6245
      %v6256 = vmul.f32 %v1685, %v6245
      %v6257 = vmul.f32 %v1686, %v6245
      %v6258 = vmul.f32 %v1688, %v6245
      %v6259 = vmul.f32 %v1689, %v6245
      %v6260 = vmul.f32 %v1690, %v6245
      %v6261 = vmul.f32 %v1692, %v6245
      %v6262 = vmul.f32 %v1693, %v6245
      %v6263 = vmul.f32 %v1694, %v6245
      %v6264 = vmul.f32 %v1696, %v6245
      %v6265 = vmul.f32 %v1697, %v6245
      %v6266 = vmul.f32 %v1698, %v6245
      %v6267 = vmul.f32 %v1700, %v6245
      %v6268 = vmul.f32 %v1701, %v6245
      %v6269 = vmul.f32 %v1702, %v6245
      %v6270 = vmul.f32 %v1704, %v6245
      %v6271 = vmul.f32 %v1705, %v6245
      %v6272 = vmul.f32 %v1706, %v6245
      %v6273 = vmul.f32 %v1708, %v6245
      %v6274 = vmul.f32 %v1709, %v6245
      %v6275 = vmul.f32 %v1710, %v6245
      %v6276 = vmul.f32 %v1712, %v6245
      %v6277 = vmul.f32 %v1713, %v6245
      %v6278 = vmul.f32 %v1714, %v6245
      %v6279 = vmul.f32 %v1716, %v6245
      %v6280 = vmul.f32 %v1717, %v6245
      %v6281 = vmul.f32 %v1718, %v6245
      %v6282 = vmul.f32 %v1720, %v6245
      %v6283 = vmul.f32 %v1721, %v6245
      %v6284 = vmul.f32 %v1722, %v6245
      %v6285 = vmul.f32 %v1724, %v6245
      %v6286 = vmul.f32 %v1725, %v6245
      %v6287 = vmul.f32 %v1726, %v6245
      %v6288 = vmul.f32 %v1728, %v6245
      %v6289 = vmul.f32 %v1729, %v6245
      %v6290 = vmul.f32 %v1730, %v6245
      %v6291 = vmul.f32 %v1732, %v6245
      %v6292 = vmul.f32 %v1733, %v6245
      %v6293 = vmul.f32 %v1734, %v6245
      %v6294 = vadd.f32 %v6197, %v6246
      %v6295 = vadd.f32 %v6198, %v6247
      %v6296 = vadd.f32 %v6199, %v6248
      %v6297 = vadd.f32 %v6200, %v6249
      %v6298 = vadd.f32 %v6201, %v6250
      %v6299 = vadd.f32 %v6202, %v6251
      %v6300 = vadd.f32 %v6203, %v6252
      %v6301 = vadd.f32 %v6204, %v6253
      %v6302 = vadd.f32 %v6205, %v6254
      %v6303 = vadd.f32 %v6206, %v6255
      %v6304 = vadd.f32 %v6207, %v6256
      %v6305 = vadd.f32 %v6208, %v6257
      %v6306 = vadd.f32 %v6209, %v6258
      %v6307 = vadd.f32 %v6210, %v6259
      %v6308 = vadd.f32 %v6211, %v6260
      %v6309 = vadd.f32 %v6212, %v6261
      %v6310 = vadd.f32 %v6213, %v6262
      %v6311 = vadd.f32 %v6214, %v6263
      %v6312 = vadd.f32 %v6215, %v6264
      %v6313 = vadd.f32 %v6216, %v6265
      %v6314 = vadd.f32 %v6217, %v6266
      %v6315 = vadd.f32 %v6218, %v6267
      %v6316 = vadd.f32 %v6219, %v6268
      %v6317 = vadd.f32 %v6220, %v6269
      %v6318 = vadd.f32 %v6221, %v6270
      %v6319 = vadd.f32 %v6222, %v6271
      %v6320 = vadd.f32 %v6223, %v6272
      %v6321 = vadd.f32 %v6224, %v6273
      %v6322 = vadd.f32 %v6225, %v6274
      %v6323 = vadd.f32 %v6226, %v6275
      %v6324 = vadd.f32 %v6227, %v6276
      %v6325 = vadd.f32 %v6228, %v6277
      %v6326 = vadd.f32 %v6229, %v6278
      %v6327 = vadd.f32 %v6230, %v6279
      %v6328 = vadd.f32 %v6231, %v6280
      %v6329 = vadd.f32 %v6232, %v6281
      %v6330 = vadd.f32 %v6233, %v6282
      %v6331 = vadd.f32 %v6234, %v6283
      %v6332 = vadd.f32 %v6235, %v6284
      %v6333 = vadd.f32 %v6236, %v6285
      %v6334 = vadd.f32 %v6237, %v6286
      %v6335 = vadd.f32 %v6238, %v6287
      %v6336 = vadd.f32 %v6239, %v6288
      %v6337 = vadd.f32 %v6240, %v6289
      %v6338 = vadd.f32 %v6241, %v6290
      %v6339 = vadd.f32 %v6242, %v6291
      %v6340 = vadd.f32 %v6243, %v6292
      %v6341 = vadd.f32 %v6244, %v6293
      %v6342 = vperm.slane %v1740, 1
      %v6343 = vmul.f32 %v1672, %v6342
      %v6344 = vmul.f32 %v1673, %v6342
      %v6345 = vmul.f32 %v1674, %v6342
      %v6346 = vmul.f32 %v1676, %v6342
      %v6347 = vmul.f32 %v1677, %v6342
      %v6348 = vmul.f32 %v1678, %v6342
      %v6349 = vmul.f32 %v1680, %v6342
      %v6350 = vmul.f32 %v1681, %v6342
      %v6351 = vmul.f32 %v1682, %v6342
      %v6352 = vmul.f32 %v1684, %v6342
      %v6353 = vmul.f32 %v1685, %v6342
      %v6354 = vmul.f32 %v1686, %v6342
      %v6355 = vmul.f32 %v1688, %v6342
      %v6356 = vmul.f32 %v1689, %v6342
      %v6357 = vmul.f32 %v1690, %v6342
      %v6358 = vmul.f32 %v1692, %v6342
      %v6359 = vmul.f32 %v1693, %v6342
      %v6360 = vmul.f32 %v1694, %v6342
      %v6361 = vmul.f32 %v1696, %v6342
      %v6362 = vmul.f32 %v1697, %v6342
      %v6363 = vmul.f32 %v1698, %v6342
      %v6364 = vmul.f32 %v1700, %v6342
      %v6365 = vmul.f32 %v1701, %v6342
      %v6366 = vmul.f32 %v1702, %v6342
      %v6367 = vmul.f32 %v1704, %v6342
      %v6368 = vmul.f32 %v1705, %v6342
      %v6369 = vmul.f32 %v1706, %v6342
      %v6370 = vmul.f32 %v1708, %v6342
      %v6371 = vmul.f32 %v1709, %v6342
      %v6372 = vmul.f32 %v1710, %v6342
      %v6373 = vmul.f32 %v1712, %v6342
      %v6374 = vmul.f32 %v1713, %v6342
      %v6375 = vmul.f32 %v1714, %v6342
      %v6376 = vmul.f32 %v1716, %v6342
      %v6377 = vmul.f32 %v1717, %v6342
      %v6378 = vmul.f32 %v1718, %v6342
      %v6379 = vmul.f32 %v1720, %v6342
      %v6380 = vmul.f32 %v1721, %v6342
      %v6381 = vmul.f32 %v1722, %v6342
      %v6382 = vmul.f32 %v1724, %v6342
      %v6383 = vmul.f32 %v1725, %v6342
      %v6384 = vmul.f32 %v1726, %v6342
      %v6385 = vmul.f32 %v1728, %v6342
      %v6386 = vmul.f32 %v1729, %v6342
      %v6387 = vmul.f32 %v1730, %v6342
      %v6388 = vmul.f32 %v1732, %v6342
      %v6389 = vmul.f32 %v1733, %v6342
      %v6390 = vmul.f32 %v1734, %v6342
      %v6439 = vrot.slane %v6343, 1
      %v6440 = vrot.slane %v6344, 1
      %v6441 = vsel %vm1935, %v6439, %v6440
      %v6442 = vrot.slane %v6345, 1
      %v6443 = vsel %vm1935, %v6440, %v6442
      %v6444 = vrot.slane %v6346, 1
      %v6445 = vrot.slane %v6347, 1
      %v6446 = vsel %vm1935, %v6444, %v6445
      %v6447 = vrot.slane %v6348, 1
      %v6448 = vsel %vm1935, %v6445, %v6447
      %v6449 = vrot.slane %v6349, 1
      %v6450 = vrot.slane %v6350, 1
      %v6451 = vsel %vm1935, %v6449, %v6450
      %v6452 = vrot.slane %v6351, 1
      %v6453 = vsel %vm1935, %v6450, %v6452
      %v6454 = vrot.slane %v6352, 1
      %v6455 = vrot.slane %v6353, 1
      %v6456 = vsel %vm1935, %v6454, %v6455
      %v6457 = vrot.slane %v6354, 1
      %v6458 = vsel %vm1935, %v6455, %v6457
      %v6459 = vrot.slane %v6355, 1
      %v6460 = vrot.slane %v6356, 1
      %v6461 = vsel %vm1935, %v6459, %v6460
      %v6462 = vrot.slane %v6357, 1
      %v6463 = vsel %vm1935, %v6460, %v6462
      %v6464 = vrot.slane %v6358, 1
      %v6465 = vrot.slane %v6359, 1
      %v6466 = vsel %vm1935, %v6464, %v6465
      %v6467 = vrot.slane %v6360, 1
      %v6468 = vsel %vm1935, %v6465, %v6467
      %v6469 = vrot.slane %v6361, 1
      %v6470 = vrot.slane %v6362, 1
      %v6471 = vsel %vm1935, %v6469, %v6470
      %v6472 = vrot.slane %v6363, 1
      %v6473 = vsel %vm1935, %v6470, %v6472
      %v6474 = vrot.slane %v6364, 1
      %v6475 = vrot.slane %v6365, 1
      %v6476 = vsel %vm1935, %v6474, %v6475
      %v6477 = vrot.slane %v6366, 1
      %v6478 = vsel %vm1935, %v6475, %v6477
      %v6479 = vrot.slane %v6367, 1
      %v6480 = vrot.slane %v6368, 1
      %v6481 = vsel %vm1935, %v6479, %v6480
      %v6482 = vrot.slane %v6369, 1
      %v6483 = vsel %vm1935, %v6480, %v6482
      %v6484 = vrot.slane %v6370, 1
      %v6485 = vrot.slane %v6371, 1
      %v6486 = vsel %vm1935, %v6484, %v6485
      %v6487 = vrot.slane %v6372, 1
      %v6488 = vsel %vm1935, %v6485, %v6487
      %v6489 = vrot.slane %v6373, 1
      %v6490 = vrot.slane %v6374, 1
      %v6491 = vsel %vm1935, %v6489, %v6490
      %v6492 = vrot.slane %v6375, 1
      %v6493 = vsel %vm1935, %v6490, %v6492
      %v6494 = vrot.slane %v6376, 1
      %v6495 = vrot.slane %v6377, 1
      %v6496 = vsel %vm1935, %v6494, %v6495
      %v6497 = vrot.slane %v6378, 1
      %v6498 = vsel %vm1935, %v6495, %v6497
      %v6499 = vrot.slane %v6379, 1
      %v6500 = vrot.slane %v6380, 1
      %v6501 = vsel %vm1935, %v6499, %v6500
      %v6502 = vrot.slane %v6381, 1
      %v6503 = vsel %vm1935, %v6500, %v6502
      %v6504 = vrot.slane %v6382, 1
      %v6505 = vrot.slane %v6383, 1
      %v6506 = vsel %vm1935, %v6504, %v6505
      %v6507 = vrot.slane %v6384, 1
      %v6508 = vsel %vm1935, %v6505, %v6507
      %v6509 = vrot.slane %v6385, 1
      %v6510 = vrot.slane %v6386, 1
      %v6511 = vsel %vm1935, %v6509, %v6510
      %v6512 = vrot.slane %v6387, 1
      %v6513 = vsel %vm1935, %v6510, %v6512
      %v6514 = vrot.slane %v6388, 1
      %v6515 = vrot.slane %v6389, 1
      %v6516 = vsel %vm1935, %v6514, %v6515
      %v6517 = vrot.slane %v6390, 1
      %v6518 = vsel %vm1935, %v6515, %v6517
      %v6567 = vadd.f32 %v6294, %v6441
      %v6568 = vadd.f32 %v6295, %v6443
      %v6569 = vadd.f32 %v6296, %v6442
      %v6570 = vadd.f32 %v6297, %v6446
      %v6571 = vadd.f32 %v6298, %v6448
      %v6572 = vadd.f32 %v6299, %v6447
      %v6573 = vadd.f32 %v6300, %v6451
      %v6574 = vadd.f32 %v6301, %v6453
      %v6575 = vadd.f32 %v6302, %v6452
      %v6576 = vadd.f32 %v6303, %v6456
      %v6577 = vadd.f32 %v6304, %v6458
      %v6578 = vadd.f32 %v6305, %v6457
      %v6579 = vadd.f32 %v6306, %v6461
      %v6580 = vadd.f32 %v6307, %v6463
      %v6581 = vadd.f32 %v6308, %v6462
      %v6582 = vadd.f32 %v6309, %v6466
      %v6583 = vadd.f32 %v6310, %v6468
      %v6584 = vadd.f32 %v6311, %v6467
      %v6585 = vadd.f32 %v6312, %v6471
      %v6586 = vadd.f32 %v6313, %v6473
      %v6587 = vadd.f32 %v6314, %v6472
      %v6588 = vadd.f32 %v6315, %v6476
      %v6589 = vadd.f32 %v6316, %v6478
      %v6590 = vadd.f32 %v6317, %v6477
      %v6591 = vadd.f32 %v6318, %v6481
      %v6592 = vadd.f32 %v6319, %v6483
      %v6593 = vadd.f32 %v6320, %v6482
      %v6594 = vadd.f32 %v6321, %v6486
      %v6595 = vadd.f32 %v6322, %v6488
      %v6596 = vadd.f32 %v6323, %v6487
      %v6597 = vadd.f32 %v6324, %v6491
      %v6598 = vadd.f32 %v6325, %v6493
      %v6599 = vadd.f32 %v6326, %v6492
      %v6600 = vadd.f32 %v6327, %v6496
      %v6601 = vadd.f32 %v6328, %v6498
      %v6602 = vadd.f32 %v6329, %v6497
      %v6603 = vadd.f32 %v6330, %v6501
      %v6604 = vadd.f32 %v6331, %v6503
      %v6605 = vadd.f32 %v6332, %v6502
      %v6606 = vadd.f32 %v6333, %v6506
      %v6607 = vadd.f32 %v6334, %v6508
      %v6608 = vadd.f32 %v6335, %v6507
      %v6609 = vadd.f32 %v6336, %v6511
      %v6610 = vadd.f32 %v6337, %v6513
      %v6611 = vadd.f32 %v6338, %v6512
      %v6612 = vadd.f32 %v6339, %v6516
      %v6613 = vadd.f32 %v6340, %v6518
      %v6614 = vadd.f32 %v6341, %v6517
      %v6615 = vperm.slane %v1740, 2
      %v6616 = vmul.f32 %v1673, %v6615
      %v6617 = vmul.f32 %v1674, %v6615
      %v6618 = vmul.f32 %v1677, %v6615
      %v6619 = vmul.f32 %v1678, %v6615
      %v6620 = vmul.f32 %v1681, %v6615
      %v6621 = vmul.f32 %v1682, %v6615
      %v6622 = vmul.f32 %v1685, %v6615
      %v6623 = vmul.f32 %v1686, %v6615
      %v6624 = vmul.f32 %v1689, %v6615
      %v6625 = vmul.f32 %v1690, %v6615
      %v6626 = vmul.f32 %v1693, %v6615
      %v6627 = vmul.f32 %v1694, %v6615
      %v6628 = vmul.f32 %v1697, %v6615
      %v6629 = vmul.f32 %v1698, %v6615
      %v6630 = vmul.f32 %v1701, %v6615
      %v6631 = vmul.f32 %v1702, %v6615
      %v6632 = vmul.f32 %v1705, %v6615
      %v6633 = vmul.f32 %v1706, %v6615
      %v6634 = vmul.f32 %v1709, %v6615
      %v6635 = vmul.f32 %v1710, %v6615
      %v6636 = vmul.f32 %v1713, %v6615
      %v6637 = vmul.f32 %v1714, %v6615
      %v6638 = vmul.f32 %v1717, %v6615
      %v6639 = vmul.f32 %v1718, %v6615
      %v6640 = vmul.f32 %v1721, %v6615
      %v6641 = vmul.f32 %v1722, %v6615
      %v6642 = vmul.f32 %v1725, %v6615
      %v6643 = vmul.f32 %v1726, %v6615
      %v6644 = vmul.f32 %v1729, %v6615
      %v6645 = vmul.f32 %v1730, %v6615
      %v6646 = vmul.f32 %v1733, %v6615
      %v6647 = vmul.f32 %v1734, %v6615
      %v6680 = vrot.slane %v6616, 2
      %v6681 = vrot.slane %v6617, 2
      %v6682 = vsel %vm2177, %v6680, %v6681
      %v6683 = vrot.slane %v6618, 2
      %v6684 = vrot.slane %v6619, 2
      %v6685 = vsel %vm2177, %v6683, %v6684
      %v6686 = vrot.slane %v6620, 2
      %v6687 = vrot.slane %v6621, 2
      %v6688 = vsel %vm2177, %v6686, %v6687
      %v6689 = vrot.slane %v6622, 2
      %v6690 = vrot.slane %v6623, 2
      %v6691 = vsel %vm2177, %v6689, %v6690
      %v6692 = vrot.slane %v6624, 2
      %v6693 = vrot.slane %v6625, 2
      %v6694 = vsel %vm2177, %v6692, %v6693
      %v6695 = vrot.slane %v6626, 2
      %v6696 = vrot.slane %v6627, 2
      %v6697 = vsel %vm2177, %v6695, %v6696
      %v6698 = vrot.slane %v6628, 2
      %v6699 = vrot.slane %v6629, 2
      %v6700 = vsel %vm2177, %v6698, %v6699
      %v6701 = vrot.slane %v6630, 2
      %v6702 = vrot.slane %v6631, 2
      %v6703 = vsel %vm2177, %v6701, %v6702
      %v6704 = vrot.slane %v6632, 2
      %v6705 = vrot.slane %v6633, 2
      %v6706 = vsel %vm2177, %v6704, %v6705
      %v6707 = vrot.slane %v6634, 2
      %v6708 = vrot.slane %v6635, 2
      %v6709 = vsel %vm2177, %v6707, %v6708
      %v6710 = vrot.slane %v6636, 2
      %v6711 = vrot.slane %v6637, 2
      %v6712 = vsel %vm2177, %v6710, %v6711
      %v6713 = vrot.slane %v6638, 2
      %v6714 = vrot.slane %v6639, 2
      %v6715 = vsel %vm2177, %v6713, %v6714
      %v6716 = vrot.slane %v6640, 2
      %v6717 = vrot.slane %v6641, 2
      %v6718 = vsel %vm2177, %v6716, %v6717
      %v6719 = vrot.slane %v6642, 2
      %v6720 = vrot.slane %v6643, 2
      %v6721 = vsel %vm2177, %v6719, %v6720
      %v6722 = vrot.slane %v6644, 2
      %v6723 = vrot.slane %v6645, 2
      %v6724 = vsel %vm2177, %v6722, %v6723
      %v6725 = vrot.slane %v6646, 2
      %v6726 = vrot.slane %v6647, 2
      %v6727 = vsel %vm2177, %v6725, %v6726
      %v6776 = vadd.f32 %v6567, %v6680
      %v6777 = vadd.f32 %v6568, %v6682
      %v6778 = vadd.f32 %v6569, %v6681
      %v6779 = vadd.f32 %v6570, %v6683
      %v6780 = vadd.f32 %v6571, %v6685
      %v6781 = vadd.f32 %v6572, %v6684
      %v6782 = vadd.f32 %v6573, %v6686
      %v6783 = vadd.f32 %v6574, %v6688
      %v6784 = vadd.f32 %v6575, %v6687
      %v6785 = vadd.f32 %v6576, %v6689
      %v6786 = vadd.f32 %v6577, %v6691
      %v6787 = vadd.f32 %v6578, %v6690
      %v6788 = vadd.f32 %v6579, %v6692
      %v6789 = vadd.f32 %v6580, %v6694
      %v6790 = vadd.f32 %v6581, %v6693
      %v6791 = vadd.f32 %v6582, %v6695
      %v6792 = vadd.f32 %v6583, %v6697
      %v6793 = vadd.f32 %v6584, %v6696
      %v6794 = vadd.f32 %v6585, %v6698
      %v6795 = vadd.f32 %v6586, %v6700
      %v6796 = vadd.f32 %v6587, %v6699
      %v6797 = vadd.f32 %v6588, %v6701
      %v6798 = vadd.f32 %v6589, %v6703
      %v6799 = vadd.f32 %v6590, %v6702
      %v6800 = vadd.f32 %v6591, %v6704
      %v6801 = vadd.f32 %v6592, %v6706
      %v6802 = vadd.f32 %v6593, %v6705
      %v6803 = vadd.f32 %v6594, %v6707
      %v6804 = vadd.f32 %v6595, %v6709
      %v6805 = vadd.f32 %v6596, %v6708
      %v6806 = vadd.f32 %v6597, %v6710
      %v6807 = vadd.f32 %v6598, %v6712
      %v6808 = vadd.f32 %v6599, %v6711
      %v6809 = vadd.f32 %v6600, %v6713
      %v6810 = vadd.f32 %v6601, %v6715
      %v6811 = vadd.f32 %v6602, %v6714
      %v6812 = vadd.f32 %v6603, %v6716
      %v6813 = vadd.f32 %v6604, %v6718
      %v6814 = vadd.f32 %v6605, %v6717
      %v6815 = vadd.f32 %v6606, %v6719
      %v6816 = vadd.f32 %v6607, %v6721
      %v6817 = vadd.f32 %v6608, %v6720
      %v6818 = vadd.f32 %v6609, %v6722
      %v6819 = vadd.f32 %v6610, %v6724
      %v6820 = vadd.f32 %v6611, %v6723
      %v6821 = vadd.f32 %v6612, %v6725
      %v6822 = vadd.f32 %v6613, %v6727
      %v6823 = vadd.f32 %v6614, %v6726
      %v6824 = vperm.slane %v1740, 3
      %v6825 = vmul.f32 %v1673, %v6824
      %v6826 = vmul.f32 %v1674, %v6824
      %v6827 = vmul.f32 %v1675, %v6824
      %v6828 = vmul.f32 %v1677, %v6824
      %v6829 = vmul.f32 %v1678, %v6824
      %v6830 = vmul.f32 %v1679, %v6824
      %v6831 = vmul.f32 %v1681, %v6824
      %v6832 = vmul.f32 %v1682, %v6824
      %v6833 = vmul.f32 %v1683, %v6824
      %v6834 = vmul.f32 %v1685, %v6824
      %v6835 = vmul.f32 %v1686, %v6824
      %v6836 = vmul.f32 %v1687, %v6824
      %v6837 = vmul.f32 %v1689, %v6824
      %v6838 = vmul.f32 %v1690, %v6824
      %v6839 = vmul.f32 %v1691, %v6824
      %v6840 = vmul.f32 %v1693, %v6824
      %v6841 = vmul.f32 %v1694, %v6824
      %v6842 = vmul.f32 %v1695, %v6824
      %v6843 = vmul.f32 %v1697, %v6824
      %v6844 = vmul.f32 %v1698, %v6824
      %v6845 = vmul.f32 %v1699, %v6824
      %v6846 = vmul.f32 %v1701, %v6824
      %v6847 = vmul.f32 %v1702, %v6824
      %v6848 = vmul.f32 %v1703, %v6824
      %v6849 = vmul.f32 %v1705, %v6824
      %v6850 = vmul.f32 %v1706, %v6824
      %v6851 = vmul.f32 %v1707, %v6824
      %v6852 = vmul.f32 %v1709, %v6824
      %v6853 = vmul.f32 %v1710, %v6824
      %v6854 = vmul.f32 %v1711, %v6824
      %v6855 = vmul.f32 %v1713, %v6824
      %v6856 = vmul.f32 %v1714, %v6824
      %v6857 = vmul.f32 %v1715, %v6824
      %v6858 = vmul.f32 %v1717, %v6824
      %v6859 = vmul.f32 %v1718, %v6824
      %v6860 = vmul.f32 %v1719, %v6824
      %v6861 = vmul.f32 %v1721, %v6824
      %v6862 = vmul.f32 %v1722, %v6824
      %v6863 = vmul.f32 %v1723, %v6824
      %v6864 = vmul.f32 %v1725, %v6824
      %v6865 = vmul.f32 %v1726, %v6824
      %v6866 = vmul.f32 %v1727, %v6824
      %v6867 = vmul.f32 %v1729, %v6824
      %v6868 = vmul.f32 %v1730, %v6824
      %v6869 = vmul.f32 %v1731, %v6824
      %v6870 = vmul.f32 %v1733, %v6824
      %v6871 = vmul.f32 %v1734, %v6824
      %v6872 = vmul.f32 %v1735, %v6824
      %v6921 = vrot.slane %v6825, 3
      %v6922 = vrot.slane %v6826, 3
      %v6923 = vsel %vm2419, %v6921, %v6922
      %v6924 = vrot.slane %v6827, 3
      %v6925 = vsel %vm2419, %v6922, %v6924
      %v6926 = vrot.slane %v6828, 3
      %v6927 = vrot.slane %v6829, 3
      %v6928 = vsel %vm2419, %v6926, %v6927
      %v6929 = vrot.slane %v6830, 3
      %v6930 = vsel %vm2419, %v6927, %v6929
      %v6931 = vrot.slane %v6831, 3
      %v6932 = vrot.slane %v6832, 3
      %v6933 = vsel %vm2419, %v6931, %v6932
      %v6934 = vrot.slane %v6833, 3
      %v6935 = vsel %vm2419, %v6932, %v6934
      %v6936 = vrot.slane %v6834, 3
      %v6937 = vrot.slane %v6835, 3
      %v6938 = vsel %vm2419, %v6936, %v6937
      %v6939 = vrot.slane %v6836, 3
      %v6940 = vsel %vm2419, %v6937, %v6939
      %v6941 = vrot.slane %v6837, 3
      %v6942 = vrot.slane %v6838, 3
      %v6943 = vsel %vm2419, %v6941, %v6942
      %v6944 = vrot.slane %v6839, 3
      %v6945 = vsel %vm2419, %v6942, %v6944
      %v6946 = vrot.slane %v6840, 3
      %v6947 = vrot.slane %v6841, 3
      %v6948 = vsel %vm2419, %v6946, %v6947
      %v6949 = vrot.slane %v6842, 3
      %v6950 = vsel %vm2419, %v6947, %v6949
      %v6951 = vrot.slane %v6843, 3
      %v6952 = vrot.slane %v6844, 3
      %v6953 = vsel %vm2419, %v6951, %v6952
      %v6954 = vrot.slane %v6845, 3
      %v6955 = vsel %vm2419, %v6952, %v6954
      %v6956 = vrot.slane %v6846, 3
      %v6957 = vrot.slane %v6847, 3
      %v6958 = vsel %vm2419, %v6956, %v6957
      %v6959 = vrot.slane %v6848, 3
      %v6960 = vsel %vm2419, %v6957, %v6959
      %v6961 = vrot.slane %v6849, 3
      %v6962 = vrot.slane %v6850, 3
      %v6963 = vsel %vm2419, %v6961, %v6962
      %v6964 = vrot.slane %v6851, 3
      %v6965 = vsel %vm2419, %v6962, %v6964
      %v6966 = vrot.slane %v6852, 3
      %v6967 = vrot.slane %v6853, 3
      %v6968 = vsel %vm2419, %v6966, %v6967
      %v6969 = vrot.slane %v6854, 3
      %v6970 = vsel %vm2419, %v6967, %v6969
      %v6971 = vrot.slane %v6855, 3
      %v6972 = vrot.slane %v6856, 3
      %v6973 = vsel %vm2419, %v6971, %v6972
      %v6974 = vrot.slane %v6857, 3
      %v6975 = vsel %vm2419, %v6972, %v6974
      %v6976 = vrot.slane %v6858, 3
      %v6977 = vrot.slane %v6859, 3
      %v6978 = vsel %vm2419, %v6976, %v6977
      %v6979 = vrot.slane %v6860, 3
      %v6980 = vsel %vm2419, %v6977, %v6979
      %v6981 = vrot.slane %v6861, 3
      %v6982 = vrot.slane %v6862, 3
      %v6983 = vsel %vm2419, %v6981, %v6982
      %v6984 = vrot.slane %v6863, 3
      %v6985 = vsel %vm2419, %v6982, %v6984
      %v6986 = vrot.slane %v6864, 3
      %v6987 = vrot.slane %v6865, 3
      %v6988 = vsel %vm2419, %v6986, %v6987
      %v6989 = vrot.slane %v6866, 3
      %v6990 = vsel %vm2419, %v6987, %v6989
      %v6991 = vrot.slane %v6867, 3
      %v6992 = vrot.slane %v6868, 3
      %v6993 = vsel %vm2419, %v6991, %v6992
      %v6994 = vrot.slane %v6869, 3
      %v6995 = vsel %vm2419, %v6992, %v6994
      %v6996 = vrot.slane %v6870, 3
      %v6997 = vrot.slane %v6871, 3
      %v6998 = vsel %vm2419, %v6996, %v6997
      %v6999 = vrot.slane %v6872, 3
      %v7000 = vsel %vm2419, %v6997, %v6999
      %v7049 = vadd.f32 %v6776, %v6921
      %v7050 = vadd.f32 %v6777, %v6923
      %v7051 = vadd.f32 %v6778, %v6925
      %v7052 = vadd.f32 %v6779, %v6926
      %v7053 = vadd.f32 %v6780, %v6928
      %v7054 = vadd.f32 %v6781, %v6930
      %v7055 = vadd.f32 %v6782, %v6931
      %v7056 = vadd.f32 %v6783, %v6933
      %v7057 = vadd.f32 %v6784, %v6935
      %v7058 = vadd.f32 %v6785, %v6936
      %v7059 = vadd.f32 %v6786, %v6938
      %v7060 = vadd.f32 %v6787, %v6940
      %v7061 = vadd.f32 %v6788, %v6941
      %v7062 = vadd.f32 %v6789, %v6943
      %v7063 = vadd.f32 %v6790, %v6945
      %v7064 = vadd.f32 %v6791, %v6946
      %v7065 = vadd.f32 %v6792, %v6948
      %v7066 = vadd.f32 %v6793, %v6950
      %v7067 = vadd.f32 %v6794, %v6951
      %v7068 = vadd.f32 %v6795, %v6953
      %v7069 = vadd.f32 %v6796, %v6955
      %v7070 = vadd.f32 %v6797, %v6956
      %v7071 = vadd.f32 %v6798, %v6958
      %v7072 = vadd.f32 %v6799, %v6960
      %v7073 = vadd.f32 %v6800, %v6961
      %v7074 = vadd.f32 %v6801, %v6963
      %v7075 = vadd.f32 %v6802, %v6965
      %v7076 = vadd.f32 %v6803, %v6966
      %v7077 = vadd.f32 %v6804, %v6968
      %v7078 = vadd.f32 %v6805, %v6970
      %v7079 = vadd.f32 %v6806, %v6971
      %v7080 = vadd.f32 %v6807, %v6973
      %v7081 = vadd.f32 %v6808, %v6975
      %v7082 = vadd.f32 %v6809, %v6976
      %v7083 = vadd.f32 %v6810, %v6978
      %v7084 = vadd.f32 %v6811, %v6980
      %v7085 = vadd.f32 %v6812, %v6981
      %v7086 = vadd.f32 %v6813, %v6983
      %v7087 = vadd.f32 %v6814, %v6985
      %v7088 = vadd.f32 %v6815, %v6986
      %v7089 = vadd.f32 %v6816, %v6988
      %v7090 = vadd.f32 %v6817, %v6990
      %v7091 = vadd.f32 %v6818, %v6991
      %v7092 = vadd.f32 %v6819, %v6993
      %v7093 = vadd.f32 %v6820, %v6995
      %v7094 = vadd.f32 %v6821, %v6996
      %v7095 = vadd.f32 %v6822, %v6998
      %v7096 = vadd.f32 %v6823, %v7000
      %v7097 = vperm.slane %v1740, 4
      %v7098 = vmul.f32 %v1673, %v7097
      %v7099 = vmul.f32 %v1674, %v7097
      %v7100 = vmul.f32 %v1675, %v7097
      %v7101 = vmul.f32 %v1677, %v7097
      %v7102 = vmul.f32 %v1678, %v7097
      %v7103 = vmul.f32 %v1679, %v7097
      %v7104 = vmul.f32 %v1681, %v7097
      %v7105 = vmul.f32 %v1682, %v7097
      %v7106 = vmul.f32 %v1683, %v7097
      %v7107 = vmul.f32 %v1685, %v7097
      %v7108 = vmul.f32 %v1686, %v7097
      %v7109 = vmul.f32 %v1687, %v7097
      %v7110 = vmul.f32 %v1689, %v7097
      %v7111 = vmul.f32 %v1690, %v7097
      %v7112 = vmul.f32 %v1691, %v7097
      %v7113 = vmul.f32 %v1693, %v7097
      %v7114 = vmul.f32 %v1694, %v7097
      %v7115 = vmul.f32 %v1695, %v7097
      %v7116 = vmul.f32 %v1697, %v7097
      %v7117 = vmul.f32 %v1698, %v7097
      %v7118 = vmul.f32 %v1699, %v7097
      %v7119 = vmul.f32 %v1701, %v7097
      %v7120 = vmul.f32 %v1702, %v7097
      %v7121 = vmul.f32 %v1703, %v7097
      %v7122 = vmul.f32 %v1705, %v7097
      %v7123 = vmul.f32 %v1706, %v7097
      %v7124 = vmul.f32 %v1707, %v7097
      %v7125 = vmul.f32 %v1709, %v7097
      %v7126 = vmul.f32 %v1710, %v7097
      %v7127 = vmul.f32 %v1711, %v7097
      %v7128 = vmul.f32 %v1713, %v7097
      %v7129 = vmul.f32 %v1714, %v7097
      %v7130 = vmul.f32 %v1715, %v7097
      %v7131 = vmul.f32 %v1717, %v7097
      %v7132 = vmul.f32 %v1718, %v7097
      %v7133 = vmul.f32 %v1719, %v7097
      %v7134 = vmul.f32 %v1721, %v7097
      %v7135 = vmul.f32 %v1722, %v7097
      %v7136 = vmul.f32 %v1723, %v7097
      %v7137 = vmul.f32 %v1725, %v7097
      %v7138 = vmul.f32 %v1726, %v7097
      %v7139 = vmul.f32 %v1727, %v7097
      %v7140 = vmul.f32 %v1729, %v7097
      %v7141 = vmul.f32 %v1730, %v7097
      %v7142 = vmul.f32 %v1731, %v7097
      %v7143 = vmul.f32 %v1733, %v7097
      %v7144 = vmul.f32 %v1734, %v7097
      %v7145 = vmul.f32 %v1735, %v7097
      %v7194 = vrot.slane %v7098, 4
      %v7195 = vrot.slane %v7099, 4
      %v7196 = vsel %vm2693, %v7194, %v7195
      %v7197 = vrot.slane %v7100, 4
      %v7198 = vsel %vm2693, %v7195, %v7197
      %v7199 = vrot.slane %v7101, 4
      %v7200 = vrot.slane %v7102, 4
      %v7201 = vsel %vm2693, %v7199, %v7200
      %v7202 = vrot.slane %v7103, 4
      %v7203 = vsel %vm2693, %v7200, %v7202
      %v7204 = vrot.slane %v7104, 4
      %v7205 = vrot.slane %v7105, 4
      %v7206 = vsel %vm2693, %v7204, %v7205
      %v7207 = vrot.slane %v7106, 4
      %v7208 = vsel %vm2693, %v7205, %v7207
      %v7209 = vrot.slane %v7107, 4
      %v7210 = vrot.slane %v7108, 4
      %v7211 = vsel %vm2693, %v7209, %v7210
      %v7212 = vrot.slane %v7109, 4
      %v7213 = vsel %vm2693, %v7210, %v7212
      %v7214 = vrot.slane %v7110, 4
      %v7215 = vrot.slane %v7111, 4
      %v7216 = vsel %vm2693, %v7214, %v7215
      %v7217 = vrot.slane %v7112, 4
      %v7218 = vsel %vm2693, %v7215, %v7217
      %v7219 = vrot.slane %v7113, 4
      %v7220 = vrot.slane %v7114, 4
      %v7221 = vsel %vm2693, %v7219, %v7220
      %v7222 = vrot.slane %v7115, 4
      %v7223 = vsel %vm2693, %v7220, %v7222
      %v7224 = vrot.slane %v7116, 4
      %v7225 = vrot.slane %v7117, 4
      %v7226 = vsel %vm2693, %v7224, %v7225
      %v7227 = vrot.slane %v7118, 4
      %v7228 = vsel %vm2693, %v7225, %v7227
      %v7229 = vrot.slane %v7119, 4
      %v7230 = vrot.slane %v7120, 4
      %v7231 = vsel %vm2693, %v7229, %v7230
      %v7232 = vrot.slane %v7121, 4
      %v7233 = vsel %vm2693, %v7230, %v7232
      %v7234 = vrot.slane %v7122, 4
      %v7235 = vrot.slane %v7123, 4
      %v7236 = vsel %vm2693, %v7234, %v7235
      %v7237 = vrot.slane %v7124, 4
      %v7238 = vsel %vm2693, %v7235, %v7237
      %v7239 = vrot.slane %v7125, 4
      %v7240 = vrot.slane %v7126, 4
      %v7241 = vsel %vm2693, %v7239, %v7240
      %v7242 = vrot.slane %v7127, 4
      %v7243 = vsel %vm2693, %v7240, %v7242
      %v7244 = vrot.slane %v7128, 4
      %v7245 = vrot.slane %v7129, 4
      %v7246 = vsel %vm2693, %v7244, %v7245
      %v7247 = vrot.slane %v7130, 4
      %v7248 = vsel %vm2693, %v7245, %v7247
      %v7249 = vrot.slane %v7131, 4
      %v7250 = vrot.slane %v7132, 4
      %v7251 = vsel %vm2693, %v7249, %v7250
      %v7252 = vrot.slane %v7133, 4
      %v7253 = vsel %vm2693, %v7250, %v7252
      %v7254 = vrot.slane %v7134, 4
      %v7255 = vrot.slane %v7135, 4
      %v7256 = vsel %vm2693, %v7254, %v7255
      %v7257 = vrot.slane %v7136, 4
      %v7258 = vsel %vm2693, %v7255, %v7257
      %v7259 = vrot.slane %v7137, 4
      %v7260 = vrot.slane %v7138, 4
      %v7261 = vsel %vm2693, %v7259, %v7260
      %v7262 = vrot.slane %v7139, 4
      %v7263 = vsel %vm2693, %v7260, %v7262
      %v7264 = vrot.slane %v7140, 4
      %v7265 = vrot.slane %v7141, 4
      %v7266 = vsel %vm2693, %v7264, %v7265
      %v7267 = vrot.slane %v7142, 4
      %v7268 = vsel %vm2693, %v7265, %v7267
      %v7269 = vrot.slane %v7143, 4
      %v7270 = vrot.slane %v7144, 4
      %v7271 = vsel %vm2693, %v7269, %v7270
      %v7272 = vrot.slane %v7145, 4
      %v7273 = vsel %vm2693, %v7270, %v7272
      %v7322 = vadd.f32 %v7049, %v7194
      %v7323 = vadd.f32 %v7050, %v7196
      %v7324 = vadd.f32 %v7051, %v7198
      %v7325 = vadd.f32 %v7052, %v7199
      %v7326 = vadd.f32 %v7053, %v7201
      %v7327 = vadd.f32 %v7054, %v7203
      %v7328 = vadd.f32 %v7055, %v7204
      %v7329 = vadd.f32 %v7056, %v7206
      %v7330 = vadd.f32 %v7057, %v7208
      %v7331 = vadd.f32 %v7058, %v7209
      %v7332 = vadd.f32 %v7059, %v7211
      %v7333 = vadd.f32 %v7060, %v7213
      %v7334 = vadd.f32 %v7061, %v7214
      %v7335 = vadd.f32 %v7062, %v7216
      %v7336 = vadd.f32 %v7063, %v7218
      %v7337 = vadd.f32 %v7064, %v7219
      %v7338 = vadd.f32 %v7065, %v7221
      %v7339 = vadd.f32 %v7066, %v7223
      %v7340 = vadd.f32 %v7067, %v7224
      %v7341 = vadd.f32 %v7068, %v7226
      %v7342 = vadd.f32 %v7069, %v7228
      %v7343 = vadd.f32 %v7070, %v7229
      %v7344 = vadd.f32 %v7071, %v7231
      %v7345 = vadd.f32 %v7072, %v7233
      %v7346 = vadd.f32 %v7073, %v7234
      %v7347 = vadd.f32 %v7074, %v7236
      %v7348 = vadd.f32 %v7075, %v7238
      %v7349 = vadd.f32 %v7076, %v7239
      %v7350 = vadd.f32 %v7077, %v7241
      %v7351 = vadd.f32 %v7078, %v7243
      %v7352 = vadd.f32 %v7079, %v7244
      %v7353 = vadd.f32 %v7080, %v7246
      %v7354 = vadd.f32 %v7081, %v7248
      %v7355 = vadd.f32 %v7082, %v7249
      %v7356 = vadd.f32 %v7083, %v7251
      %v7357 = vadd.f32 %v7084, %v7253
      %v7358 = vadd.f32 %v7085, %v7254
      %v7359 = vadd.f32 %v7086, %v7256
      %v7360 = vadd.f32 %v7087, %v7258
      %v7361 = vadd.f32 %v7088, %v7259
      %v7362 = vadd.f32 %v7089, %v7261
      %v7363 = vadd.f32 %v7090, %v7263
      %v7364 = vadd.f32 %v7091, %v7264
      %v7365 = vadd.f32 %v7092, %v7266
      %v7366 = vadd.f32 %v7093, %v7268
      %v7367 = vadd.f32 %v7094, %v7269
      %v7368 = vadd.f32 %v7095, %v7271
      %v7369 = vadd.f32 %v7096, %v7273
      %vm7370 = vcmask 261126
      %7371 = vst.msk [vmem:[#allocation3 - $0x6] sm:$0xc0] %vm7370, %v7322
      %7372 = vst.msk [vmem:[#allocation3 + $0x2] sm:$0xff] %vm527, %v7323
      %vm7373 = vcmask 259072
      %7374 = vst.msk [vmem:[#allocation3 + $0xa] sm:$0x3f] %vm7373, %v7324
      %7375 = vst.msk [vmem:[#allocation3 + $0xa] sm:$0xc0] %vm7370, %v7325
      %7376 = vst.msk [vmem:[#allocation3 + $0x12] sm:$0xff] %vm527, %v7326
      %7377 = vst.msk [vmem:[#allocation3 + $0x1a] sm:$0x3f] %vm7373, %v7327
      %7378 = vst.msk [vmem:[#allocation3 + $0x1a] sm:$0xc0] %vm7370, %v7328
      %7379 = vst.msk [vmem:[#allocation3 + $0x22] sm:$0xff] %vm527, %v7329
      %7380 = vst.msk [vmem:[#allocation3 + $0x2a] sm:$0x3f] %vm7373, %v7330
      %7381 = vst.msk [vmem:[#allocation3 + $0x2a] sm:$0xc0] %vm7370, %v7331
      %7382 = vst.msk [vmem:[#allocation3 + $0x32] sm:$0xff] %vm527, %v7332
      %7383 = vst.msk [vmem:[#allocation3 + $0x3a] sm:$0x3f] %vm7373, %v7333
      %7384 = vst.msk [vmem:[#allocation3 + $0x3a] sm:$0xc0] %vm7370, %v7334
      %7385 = vst.msk [vmem:[#allocation3 + $0x42] sm:$0xff] %vm527, %v7335
      %7386 = vst.msk [vmem:[#allocation3 + $0x4a] sm:$0x3f] %vm7373, %v7336
      %7387 = vst.msk [vmem:[#allocation3 + $0x4a] sm:$0xc0] %vm7370, %v7337
      %7388 = vst.msk [vmem:[#allocation3 + $0x52] sm:$0xff] %vm527, %v7338
      %7389 = vst.msk [vmem:[#allocation3 + $0x5a] sm:$0x3f] %vm7373, %v7339
      %7390 = vst.msk [vmem:[#allocation3 + $0x5a] sm:$0xc0] %vm7370, %v7340
      %7391 = vst.msk [vmem:[#allocation3 + $0x62] sm:$0xff] %vm527, %v7341
      %7392 = vst.msk [vmem:[#allocation3 + $0x6a] sm:$0x3f] %vm7373, %v7342
      %7393 = vst.msk [vmem:[#allocation3 + $0x6a] sm:$0xc0] %vm7370, %v7343
      %7394 = vst.msk [vmem:[#allocation3 + $0x72] sm:$0xff] %vm527, %v7344
      %7395 = vst.msk [vmem:[#allocation3 + $0x7a] sm:$0x3f] %vm7373, %v7345
      %7396 = vst.msk [vmem:[#allocation3 + $0x7a] sm:$0xc0] %vm7370, %v7346
      %7397 = vst.msk [vmem:[#allocation3 + $0x82] sm:$0xff] %vm527, %v7347
      %7398 = vst.msk [vmem:[#allocation3 + $0x8a] sm:$0x3f] %vm7373, %v7348
      %7399 = vst.msk [vmem:[#allocation3 + $0x8a] sm:$0xc0] %vm7370, %v7349
      %7400 = vst.msk [vmem:[#allocation3 + $0x92] sm:$0xff] %vm527, %v7350
      %7401 = vst.msk [vmem:[#allocation3 + $0x9a] sm:$0x3f] %vm7373, %v7351
      %7402 = vst.msk [vmem:[#allocation3 + $0x9a] sm:$0xc0] %vm7370, %v7352
      %7403 = vst.msk [vmem:[#allocation3 + $0xa2] sm:$0xff] %vm527, %v7353
      %7404 = vst.msk [vmem:[#allocation3 + $0xaa] sm:$0x3f] %vm7373, %v7354
      %7405 = vst.msk [vmem:[#allocation3 + $0xaa] sm:$0xc0] %vm7370, %v7355
      %7406 = vst.msk [vmem:[#allocation3 + $0xb2] sm:$0xff] %vm527, %v7356
      %7407 = vst.msk [vmem:[#allocation3 + $0xba] sm:$0x3f] %vm7373, %v7357
      %7408 = vst.msk [vmem:[#allocation3 + $0xba] sm:$0xc0] %vm7370, %v7358
      %7409 = vst.msk [vmem:[#allocation3 + $0xc2] sm:$0xff] %vm527, %v7359
      %7410 = vst.msk [vmem:[#allocation3 + $0xca] sm:$0x3f] %vm7373, %v7360
      %7411 = vst.msk [vmem:[#allocation3 + $0xca] sm:$0xc0] %vm7370, %v7361
      %7412 = vst.msk [vmem:[#allocation3 + $0xd2] sm:$0xff] %vm527, %v7362
      %7413 = vst.msk [vmem:[#allocation3 + $0xda] sm:$0x3f] %vm7373, %v7363
      %7414 = vst.msk [vmem:[#allocation3 + $0xda] sm:$0xc0] %vm7370, %v7364
      %7415 = vst.msk [vmem:[#allocation3 + $0xe2] sm:$0xff] %vm527, %v7365
      %7416 = vst.msk [vmem:[#allocation3 + $0xea] sm:$0x3f] %vm7373, %v7366
      %7417 = vst.msk [vmem:[#allocation3 + $0xea] sm:$0xc0] %vm7370, %v7367
      %7418 = vst.msk [vmem:[#allocation3 + $0xf2] sm:$0xff] %vm527, %v7368
      %7419 = vst.msk [vmem:[#allocation3 + $0xfa] sm:$0x3f] %vm7373, %v7369
      %v7420 = vld [vmem:[#allocation3] sm:$0xff]
      %v7421 = vld [vmem:[#allocation3 + $0x8] sm:$0xff]
      %v7422 = vld [vmem:[#allocation3 + $0x10] sm:$0xff]
      %v7423 = vld [vmem:[#allocation3 + $0x18] sm:$0xff]
      %v7424 = vld [vmem:[#allocation3 + $0x20] sm:$0xff]
      %v7425 = vld [vmem:[#allocation3 + $0x28] sm:$0xff]
      %v7426 = vld [vmem:[#allocation3 + $0x30] sm:$0xff]
      %v7427 = vld [vmem:[#allocation3 + $0x38] sm:$0xff]
      %v7428 = vld [vmem:[#allocation3 + $0x40] sm:$0xff]
      %v7429 = vld [vmem:[#allocation3 + $0x48] sm:$0xff]
      %v7430 = vld [vmem:[#allocation3 + $0x50] sm:$0xff]
      %v7431 = vld [vmem:[#allocation3 + $0x58] sm:$0xff]
      %v7432 = vld [vmem:[#allocation3 + $0x60] sm:$0xff]
      %v7433 = vld [vmem:[#allocation3 + $0x68] sm:$0xff]
      %v7434 = vld [vmem:[#allocation3 + $0x70] sm:$0xff]
      %v7435 = vld [vmem:[#allocation3 + $0x78] sm:$0xff]
      %v7436 = vld [vmem:[#allocation3 + $0x80] sm:$0xff]
      %v7437 = vld [vmem:[#allocation3 + $0x88] sm:$0xff]
      %v7438 = vld [vmem:[#allocation3 + $0x90] sm:$0xff]
      %v7439 = vld [vmem:[#allocation3 + $0x98] sm:$0xff]
      %v7440 = vld [vmem:[#allocation3 + $0xa0] sm:$0xff]
      %v7441 = vld [vmem:[#allocation3 + $0xa8] sm:$0xff]
      %v7442 = vld [vmem:[#allocation3 + $0xb0] sm:$0xff]
      %v7443 = vld [vmem:[#allocation3 + $0xb8] sm:$0xff]
      %v7444 = vld [vmem:[#allocation3 + $0xc0] sm:$0xff]
      %v7445 = vld [vmem:[#allocation3 + $0xc8] sm:$0xff]
      %v7446 = vld [vmem:[#allocation3 + $0xd0] sm:$0xff]
      %v7447 = vld [vmem:[#allocation3 + $0xd8] sm:$0xff]
      %v7448 = vld [vmem:[#allocation3 + $0xe0] sm:$0xff]
      %v7449 = vld [vmem:[#allocation3 + $0xe8] sm:$0xff]
      %v7450 = vld [vmem:[#allocation3 + $0xf0] sm:$0xff]
      %v7451 = vld [vmem:[#allocation3 + $0xf8] sm:$0xff]
      %v7452 = vld [vmem:[%s6] sm:$0x1]
      %v7454 = vperm.slane %v7452, 0
      %v7456 = vadd.f32 %v7420, %v7454
      %v7457 = vadd.f32 %v7421, %v7454
      %v7458 = vadd.f32 %v7422, %v7454
      %v7459 = vadd.f32 %v7423, %v7454
      %v7460 = vadd.f32 %v7424, %v7454
      %v7461 = vadd.f32 %v7425, %v7454
      %v7462 = vadd.f32 %v7426, %v7454
      %v7463 = vadd.f32 %v7427, %v7454
      %v7464 = vadd.f32 %v7428, %v7454
      %v7465 = vadd.f32 %v7429, %v7454
      %v7466 = vadd.f32 %v7430, %v7454
      %v7467 = vadd.f32 %v7431, %v7454
      %v7468 = vadd.f32 %v7432, %v7454
      %v7469 = vadd.f32 %v7433, %v7454
      %v7470 = vadd.f32 %v7434, %v7454
      %v7471 = vadd.f32 %v7435, %v7454
      %v7472 = vadd.f32 %v7436, %v7454
      %v7473 = vadd.f32 %v7437, %v7454
      %v7474 = vadd.f32 %v7438, %v7454
      %v7475 = vadd.f32 %v7439, %v7454
      %v7476 = vadd.f32 %v7440, %v7454
      %v7477 = vadd.f32 %v7441, %v7454
      %v7478 = vadd.f32 %v7442, %v7454
      %v7479 = vadd.f32 %v7443, %v7454
      %v7480 = vadd.f32 %v7444, %v7454
      %v7481 = vadd.f32 %v7445, %v7454
      %v7482 = vadd.f32 %v7446, %v7454
      %v7483 = vadd.f32 %v7447, %v7454
      %v7484 = vadd.f32 %v7448, %v7454
      %v7485 = vadd.f32 %v7449, %v7454
      %v7486 = vadd.f32 %v7450, %v7454
      %v7487 = vadd.f32 %v7451, %v7454
      %v7488 = vld [vmem:[%s7] sm:$0xff]
      %v7489 = vld [vmem:[%s7 + $0x8] sm:$0xff]
      %v7490 = vld [vmem:[%s7 + $0x10] sm:$0xff]
      %v7491 = vld [vmem:[%s7 + $0x18] sm:$0xff]
      %v7492 = vld [vmem:[%s8] sm:$0x1]
      %v7494 = vperm.slane %v7492, 0
      %v7497 = vsel %vm527, %v7456, 0
      %v7500 = vsel %vm527, %v7457, 0
      %v7503 = vsel %vm527, %v7458, 0
      %v7506 = vsel %vm527, %v7459, 0
      %v7509 = vsel %vm527, %v7460, 0
      %v7512 = vsel %vm527, %v7461, 0
      %v7515 = vsel %vm527, %v7462, 0
      %v7518 = vsel %vm527, %v7463, 0
      %v7521 = vsel %vm527, %v7464, 0
      %v7524 = vsel %vm527, %v7465, 0
      %v7527 = vsel %vm527, %v7466, 0
      %v7530 = vsel %vm527, %v7467, 0
      %v7533 = vsel %vm527, %v7468, 0
      %v7536 = vsel %vm527, %v7469, 0
      %v7539 = vsel %vm527, %v7470, 0
      %v7542 = vsel %vm527, %v7471, 0
      %v7545 = vsel %vm527, %v7472, 0
      %v7548 = vsel %vm527, %v7473, 0
      %v7551 = vsel %vm527, %v7474, 0
      %v7554 = vsel %vm527, %v7475, 0
      %v7557 = vsel %vm527, %v7476, 0
      %v7560 = vsel %vm527, %v7477, 0
      %v7563 = vsel %vm527, %v7478, 0
      %v7566 = vsel %vm527, %v7479, 0
      %v7569 = vsel %vm527, %v7480, 0
      %v7572 = vsel %vm527, %v7481, 0
      %v7575 = vsel %vm527, %v7482, 0
      %v7578 = vsel %vm527, %v7483, 0
      %v7581 = vsel %vm527, %v7484, 0
      %v7584 = vsel %vm527, %v7485, 0
      %v7587 = vsel %vm527, %v7486, 0
      %v7590 = vsel %vm527, %v7487, 0
      %7592 = vmatpush.msra.mxu0 0.0
      %7593 = vmatpush.msra.mxu0 0.0
      %7594 = vmatpush.msra.mxu0 0.0
      %7595 = vmatpush.msra.mxu0 0.0
      %7596 = vmatpush.msra.mxu0 0.0
      %7597 = vmatpush.msra.mxu0 0.0
      %7598 = vmatpush.msra.mxu0 0.0
      %7599 = vmatpush.msra.mxu0 0.0
      %7600 = vmatpush.msra.mxu0 0.0
      %7601 = vmatpush.msra.mxu0 0.0
      %7602 = vmatpush.msra.mxu0 0.0
      %7603 = vmatpush.msra.mxu0 0.0
      %7604 = vmatpush.msra.mxu0 %v7491
      %7605 = vmatpush.msra.mxu0 %v7490
      %7606 = vmatpush.msra.mxu0 %v7489
      %7607 = vmatpush.msra.mxu0 %v7488
      %7608 = vmatmul.f32.gmra.mxu0 %v7497
      %v7609 = vpop.f32.mrf.mxu0
      %v7610 = vadd.f32 %v7494, %v7609
      %7611 = vmatmul.f32.gmra.mxu0 %v7500
      %v7612 = vpop.f32.mrf.mxu0
      %v7613 = vadd.f32 %v7494, %v7612
      %7614 = vmatmul.f32.gmra.mxu0 %v7503
      %v7615 = vpop.f32.mrf.mxu0
      %v7616 = vadd.f32 %v7494, %v7615
      %7617 = vmatmul.f32.gmra.mxu0 %v7506
      %v7618 = vpop.f32.mrf.mxu0
      %v7619 = vadd.f32 %v7494, %v7618
      %7620 = vmatmul.f32.gmra.mxu0 %v7509
      %v7621 = vpop.f32.mrf.mxu0
      %v7622 = vadd.f32 %v7494, %v7621
      %7623 = vmatmul.f32.gmra.mxu0 %v7512
      %v7624 = vpop.f32.mrf.mxu0
      %v7625 = vadd.f32 %v7494, %v7624
      %7626 = vmatmul.f32.gmra.mxu0 %v7515
      %v7627 = vpop.f32.mrf.mxu0
      %v7628 = vadd.f32 %v7494, %v7627
      %7629 = vmatmul.f32.gmra.mxu0 %v7518
      %v7630 = vpop.f32.mrf.mxu0
      %v7631 = vadd.f32 %v7494, %v7630
      %7632 = vmatmul.f32.gmra.mxu0 %v7521
      %v7633 = vpop.f32.mrf.mxu0
      %v7634 = vadd.f32 %v7494, %v7633
      %7635 = vmatmul.f32.gmra.mxu0 %v7524
      %v7636 = vpop.f32.mrf.mxu0
      %v7637 = vadd.f32 %v7494, %v7636
      %7638 = vmatmul.f32.gmra.mxu0 %v7527
      %v7639 = vpop.f32.mrf.mxu0
      %v7640 = vadd.f32 %v7494, %v7639
      %7641 = vmatmul.f32.gmra.mxu0 %v7530
      %v7642 = vpop.f32.mrf.mxu0
      %v7643 = vadd.f32 %v7494, %v7642
      %7644 = vmatmul.f32.gmra.mxu0 %v7533
      %v7645 = vpop.f32.mrf.mxu0
      %v7646 = vadd.f32 %v7494, %v7645
      %7647 = vmatmul.f32.gmra.mxu0 %v7536
      %v7648 = vpop.f32.mrf.mxu0
      %v7649 = vadd.f32 %v7494, %v7648
      %7650 = vmatmul.f32.gmra.mxu0 %v7539
      %v7651 = vpop.f32.mrf.mxu0
      %v7652 = vadd.f32 %v7494, %v7651
      %7653 = vmatmul.f32.gmra.mxu0 %v7542
      %v7654 = vpop.f32.mrf.mxu0
      %v7655 = vadd.f32 %v7494, %v7654
      %7656 = vmatmul.f32.gmra.mxu0 %v7545
      %v7657 = vpop.f32.mrf.mxu0
      %v7658 = vadd.f32 %v7494, %v7657
      %7659 = vmatmul.f32.gmra.mxu0 %v7548
      %v7660 = vpop.f32.mrf.mxu0
      %v7661 = vadd.f32 %v7494, %v7660
      %7662 = vmatmul.f32.gmra.mxu0 %v7551
      %v7663 = vpop.f32.mrf.mxu0
      %v7664 = vadd.f32 %v7494, %v7663
      %7665 = vmatmul.f32.gmra.mxu0 %v7554
      %v7666 = vpop.f32.mrf.mxu0
      %v7667 = vadd.f32 %v7494, %v7666
      %7668 = vmatmul.f32.gmra.mxu0 %v7557
      %v7669 = vpop.f32.mrf.mxu0
      %v7670 = vadd.f32 %v7494, %v7669
      %7671 = vmatmul.f32.gmra.mxu0 %v7560
      %v7672 = vpop.f32.mrf.mxu0
      %v7673 = vadd.f32 %v7494, %v7672
      %7674 = vmatmul.f32.gmra.mxu0 %v7563
      %v7675 = vpop.f32.mrf.mxu0
      %v7676 = vadd.f32 %v7494, %v7675
      %7677 = vmatmul.f32.gmra.mxu0 %v7566
      %v7678 = vpop.f32.mrf.mxu0
      %v7679 = vadd.f32 %v7494, %v7678
      %7680 = vmatmul.f32.gmra.mxu0 %v7569
      %v7681 = vpop.f32.mrf.mxu0
      %v7682 = vadd.f32 %v7494, %v7681
      %7683 = vmatmul.f32.gmra.mxu0 %v7572
      %v7684 = vpop.f32.mrf.mxu0
      %v7685 = vadd.f32 %v7494, %v7684
      %7686 = vmatmul.f32.gmra.mxu0 %v7575
      %v7687 = vpop.f32.mrf.mxu0
      %v7688 = vadd.f32 %v7494, %v7687
      %7689 = vmatmul.f32.gmra.mxu0 %v7578
      %v7690 = vpop.f32.mrf.mxu0
      %v7691 = vadd.f32 %v7494, %v7690
      %7692 = vmatmul.f32.gmra.mxu0 %v7581
      %v7693 = vpop.f32.mrf.mxu0
      %v7694 = vadd.f32 %v7494, %v7693
      %7695 = vmatmul.f32.gmra.mxu0 %v7584
      %v7696 = vpop.f32.mrf.mxu0
      %v7697 = vadd.f32 %v7494, %v7696
      %7698 = vmatmul.f32.gmra.mxu0 %v7587
      %v7699 = vpop.f32.mrf.mxu0
      %v7700 = vadd.f32 %v7494, %v7699
      %7701 = vmatmul.f32.gmra.mxu0 %v7590
      %v7702 = vpop.f32.mrf.mxu0
      %v7703 = vadd.f32 %v7494, %v7702
      %7704 = vdwg.mxu0
      %v7705 = vadd.f32 %v495, %v7610
      %v7706 = vadd.f32 %v496, %v7613
      %v7707 = vadd.f32 %v497, %v7616
      %v7708 = vadd.f32 %v498, %v7619
      %v7709 = vadd.f32 %v499, %v7622
      %v7710 = vadd.f32 %v500, %v7625
      %v7711 = vadd.f32 %v501, %v7628
      %v7712 = vadd.f32 %v502, %v7631
      %v7713 = vadd.f32 %v503, %v7634
      %v7714 = vadd.f32 %v504, %v7637
      %v7715 = vadd.f32 %v505, %v7640
      %v7716 = vadd.f32 %v506, %v7643
      %v7717 = vadd.f32 %v507, %v7646
      %v7718 = vadd.f32 %v508, %v7649
      %v7719 = vadd.f32 %v509, %v7652
      %v7720 = vadd.f32 %v510, %v7655
      %v7721 = vadd.f32 %v511, %v7658
      %v7722 = vadd.f32 %v512, %v7661
      %v7723 = vadd.f32 %v513, %v7664
      %v7724 = vadd.f32 %v514, %v7667
      %v7725 = vadd.f32 %v515, %v7670
      %v7726 = vadd.f32 %v516, %v7673
      %v7727 = vadd.f32 %v517, %v7676
      %v7728 = vadd.f32 %v518, %v7679
      %v7729 = vadd.f32 %v519, %v7682
      %v7730 = vadd.f32 %v520, %v7685
      %v7731 = vadd.f32 %v521, %v7688
      %v7732 = vadd.f32 %v522, %v7691
      %v7733 = vadd.f32 %v523, %v7694
      %v7734 = vadd.f32 %v524, %v7697
      %v7735 = vadd.f32 %v525, %v7700
      %v7736 = vadd.f32 %v526, %v7703
      %v7737 = vsel %vm527, %v7705, 0.0
      %7738 = vadd.xlane.f32.xlu0 %v7737
      %v7739 = vpop.xlane.xlu0 %7738
      %v7740 = vsel %vm527, %v7706, 0.0
      %7741 = vadd.xlane.f32.xlu0 %v7740
      %v7742 = vpop.xlane.xlu0 %7741
      %v7743 = vsel %vm527, %v7707, 0.0
      %7744 = vadd.xlane.f32.xlu0 %v7743
      %v7745 = vpop.xlane.xlu0 %7744
      %v7746 = vsel %vm527, %v7708, 0.0
      %7747 = vadd.xlane.f32.xlu0 %v7746
      %v7748 = vpop.xlane.xlu0 %7747
      %v7749 = vsel %vm527, %v7709, 0.0
      %7750 = vadd.xlane.f32.xlu0 %v7749
      %v7751 = vpop.xlane.xlu0 %7750
      %v7752 = vsel %vm527, %v7710, 0.0
      %7753 = vadd.xlane.f32.xlu0 %v7752
      %v7754 = vpop.xlane.xlu0 %7753
      %v7755 = vsel %vm527, %v7711, 0.0
      %7756 = vadd.xlane.f32.xlu0 %v7755
      %v7757 = vpop.xlane.xlu0 %7756
      %v7758 = vsel %vm527, %v7712, 0.0
      %7759 = vadd.xlane.f32.xlu0 %v7758
      %v7760 = vpop.xlane.xlu0 %7759
      %v7761 = vsel %vm527, %v7713, 0.0
      %7762 = vadd.xlane.f32.xlu0 %v7761
      %v7763 = vpop.xlane.xlu0 %7762
      %v7764 = vsel %vm527, %v7714, 0.0
      %7765 = vadd.xlane.f32.xlu0 %v7764
      %v7766 = vpop.xlane.xlu0 %7765
      %v7767 = vsel %vm527, %v7715, 0.0
      %7768 = vadd.xlane.f32.xlu0 %v7767
      %v7769 = vpop.xlane.xlu0 %7768
      %v7770 = vsel %vm527, %v7716, 0.0
      %7771 = vadd.xlane.f32.xlu0 %v7770
      %v7772 = vpop.xlane.xlu0 %7771
      %v7773 = vsel %vm527, %v7717, 0.0
      %7774 = vadd.xlane.f32.xlu0 %v7773
      %v7775 = vpop.xlane.xlu0 %7774
      %v7776 = vsel %vm527, %v7718, 0.0
      %7777 = vadd.xlane.f32.xlu0 %v7776
      %v7778 = vpop.xlane.xlu0 %7777
      %v7779 = vsel %vm527, %v7719, 0.0
      %7780 = vadd.xlane.f32.xlu0 %v7779
      %v7781 = vpop.xlane.xlu0 %7780
      %v7782 = vsel %vm527, %v7720, 0.0
      %7783 = vadd.xlane.f32.xlu0 %v7782
      %v7784 = vpop.xlane.xlu0 %7783
      %v7785 = vsel %vm527, %v7721, 0.0
      %7786 = vadd.xlane.f32.xlu0 %v7785
      %v7787 = vpop.xlane.xlu0 %7786
      %v7788 = vsel %vm527, %v7722, 0.0
      %7789 = vadd.xlane.f32.xlu0 %v7788
      %v7790 = vpop.xlane.xlu0 %7789
      %v7791 = vsel %vm527, %v7723, 0.0
      %7792 = vadd.xlane.f32.xlu0 %v7791
      %v7793 = vpop.xlane.xlu0 %7792
      %v7794 = vsel %vm527, %v7724, 0.0
      %7795 = vadd.xlane.f32.xlu0 %v7794
      %v7796 = vpop.xlane.xlu0 %7795
      %v7797 = vsel %vm527, %v7725, 0.0
      %7798 = vadd.xlane.f32.xlu0 %v7797
      %v7799 = vpop.xlane.xlu0 %7798
      %v7800 = vsel %vm527, %v7726, 0.0
      %7801 = vadd.xlane.f32.xlu0 %v7800
      %v7802 = vpop.xlane.xlu0 %7801
      %v7803 = vsel %vm527, %v7727, 0.0
      %7804 = vadd.xlane.f32.xlu0 %v7803
      %v7805 = vpop.xlane.xlu0 %7804
      %v7806 = vsel %vm527, %v7728, 0.0
      %7807 = vadd.xlane.f32.xlu0 %v7806
      %v7808 = vpop.xlane.xlu0 %7807
      %v7809 = vsel %vm527, %v7729, 0.0
      %7810 = vadd.xlane.f32.xlu0 %v7809
      %v7811 = vpop.xlane.xlu0 %7810
      %v7812 = vsel %vm527, %v7730, 0.0
      %7813 = vadd.xlane.f32.xlu0 %v7812
      %v7814 = vpop.xlane.xlu0 %7813
      %v7815 = vsel %vm527, %v7731, 0.0
      %7816 = vadd.xlane.f32.xlu0 %v7815
      %v7817 = vpop.xlane.xlu0 %7816
      %v7818 = vsel %vm527, %v7732, 0.0
      %7819 = vadd.xlane.f32.xlu0 %v7818
      %v7820 = vpop.xlane.xlu0 %7819
      %v7821 = vsel %vm527, %v7733, 0.0
      %7822 = vadd.xlane.f32.xlu0 %v7821
      %v7823 = vpop.xlane.xlu0 %7822
      %v7824 = vsel %vm527, %v7734, 0.0
      %7825 = vadd.xlane.f32.xlu0 %v7824
      %v7826 = vpop.xlane.xlu0 %7825
      %v7827 = vsel %vm527, %v7735, 0.0
      %7828 = vadd.xlane.f32.xlu0 %v7827
      %v7829 = vpop.xlane.xlu0 %7828
      %v7830 = vsel %vm527, %v7736, 0.0
      %7831 = vadd.xlane.f32.xlu0 %v7830
      %v7832 = vpop.xlane.xlu0 %7831
      %v7833 = vmul.f32 %v7739, %v630
      %v7834 = vmul.f32 %v7742, %v630
      %v7835 = vmul.f32 %v7745, %v630
      %v7836 = vmul.f32 %v7748, %v630
      %v7837 = vmul.f32 %v7751, %v630
      %v7838 = vmul.f32 %v7754, %v630
      %v7839 = vmul.f32 %v7757, %v630
      %v7840 = vmul.f32 %v7760, %v630
      %v7841 = vmul.f32 %v7763, %v630
      %v7842 = vmul.f32 %v7766, %v630
      %v7843 = vmul.f32 %v7769, %v630
      %v7844 = vmul.f32 %v7772, %v630
      %v7845 = vmul.f32 %v7775, %v630
      %v7846 = vmul.f32 %v7778, %v630
      %v7847 = vmul.f32 %v7781, %v630
      %v7848 = vmul.f32 %v7784, %v630
      %v7849 = vmul.f32 %v7787, %v630
      %v7850 = vmul.f32 %v7790, %v630
      %v7851 = vmul.f32 %v7793, %v630
      %v7852 = vmul.f32 %v7796, %v630
      %v7853 = vmul.f32 %v7799, %v630
      %v7854 = vmul.f32 %v7802, %v630
      %v7855 = vmul.f32 %v7805, %v630
      %v7856 = vmul.f32 %v7808, %v630
      %v7857 = vmul.f32 %v7811, %v630
      %v7858 = vmul.f32 %v7814, %v630
      %v7859 = vmul.f32 %v7817, %v630
      %v7860 = vmul.f32 %v7820, %v630
      %v7861 = vmul.f32 %v7823, %v630
      %v7862 = vmul.f32 %v7826, %v630
      %v7863 = vmul.f32 %v7829, %v630
      %v7864 = vmul.f32 %v7832, %v630
      %v7865 = vsub.f32 %v7705, %v7833
      %v7866 = vsub.f32 %v7706, %v7834
      %v7867 = vsub.f32 %v7707, %v7835
      %v7868 = vsub.f32 %v7708, %v7836
      %v7869 = vsub.f32 %v7709, %v7837
      %v7870 = vsub.f32 %v7710, %v7838
      %v7871 = vsub.f32 %v7711, %v7839
      %v7872 = vsub.f32 %v7712, %v7840
      %v7873 = vsub.f32 %v7713, %v7841
      %v7874 = vsub.f32 %v7714, %v7842
      %v7875 = vsub.f32 %v7715, %v7843
      %v7876 = vsub.f32 %v7716, %v7844
      %v7877 = vsub.f32 %v7717, %v7845
      %v7878 = vsub.f32 %v7718, %v7846
      %v7879 = vsub.f32 %v7719, %v7847
      %v7880 = vsub.f32 %v7720, %v7848
      %v7881 = vsub.f32 %v7721, %v7849
      %v7882 = vsub.f32 %v7722, %v7850
      %v7883 = vsub.f32 %v7723, %v7851
      %v7884 = vsub.f32 %v7724, %v7852
      %v7885 = vsub.f32 %v7725, %v7853
      %v7886 = vsub.f32 %v7726, %v7854
      %v7887 = vsub.f32 %v7727, %v7855
      %v7888 = vsub.f32 %v7728, %v7856
      %v7889 = vsub.f32 %v7729, %v7857
      %v7890 = vsub.f32 %v7730, %v7858
      %v7891 = vsub.f32 %v7731, %v7859
      %v7892 = vsub.f32 %v7732, %v7860
      %v7893 = vsub.f32 %v7733, %v7861
      %v7894 = vsub.f32 %v7734, %v7862
      %v7895 = vsub.f32 %v7735, %v7863
      %v7896 = vsub.f32 %v7736, %v7864
      %v7897 = vmul.f32 %v7865, %v7865
      %v7898 = vmul.f32 %v7866, %v7866
      %v7899 = vmul.f32 %v7867, %v7867
      %v7900 = vmul.f32 %v7868, %v7868
      %v7901 = vmul.f32 %v7869, %v7869
      %v7902 = vmul.f32 %v7870, %v7870
      %v7903 = vmul.f32 %v7871, %v7871
      %v7904 = vmul.f32 %v7872, %v7872
      %v7905 = vmul.f32 %v7873, %v7873
      %v7906 = vmul.f32 %v7874, %v7874
      %v7907 = vmul.f32 %v7875, %v7875
      %v7908 = vmul.f32 %v7876, %v7876
      %v7909 = vmul.f32 %v7877, %v7877
      %v7910 = vmul.f32 %v7878, %v7878
      %v7911 = vmul.f32 %v7879, %v7879
      %v7912 = vmul.f32 %v7880, %v7880
      %v7913 = vmul.f32 %v7881, %v7881
      %v7914 = vmul.f32 %v7882, %v7882
      %v7915 = vmul.f32 %v7883, %v7883
      %v7916 = vmul.f32 %v7884, %v7884
      %v7917 = vmul.f32 %v7885, %v7885
      %v7918 = vmul.f32 %v7886, %v7886
      %v7919 = vmul.f32 %v7887, %v7887
      %v7920 = vmul.f32 %v7888, %v7888
      %v7921 = vmul.f32 %v7889, %v7889
      %v7922 = vmul.f32 %v7890, %v7890
      %v7923 = vmul.f32 %v7891, %v7891
      %v7924 = vmul.f32 %v7892, %v7892
      %v7925 = vmul.f32 %v7893, %v7893
      %v7926 = vmul.f32 %v7894, %v7894
      %v7927 = vmul.f32 %v7895, %v7895
      %v7928 = vmul.f32 %v7896, %v7896
      %v7929 = vsel %vm527, %v7897, 0.0
      %7930 = vadd.xlane.f32.xlu0 %v7929
      %v7931 = vpop.xlane.xlu0 %7930
      %v7932 = vsel %vm527, %v7898, 0.0
      %7933 = vadd.xlane.f32.xlu0 %v7932
      %v7934 = vpop.xlane.xlu0 %7933
      %v7935 = vsel %vm527, %v7899, 0.0
      %7936 = vadd.xlane.f32.xlu0 %v7935
      %v7937 = vpop.xlane.xlu0 %7936
      %v7938 = vsel %vm527, %v7900, 0.0
      %7939 = vadd.xlane.f32.xlu0 %v7938
      %v7940 = vpop.xlane.xlu0 %7939
      %v7941 = vsel %vm527, %v7901, 0.0
      %7942 = vadd.xlane.f32.xlu0 %v7941
      %v7943 = vpop.xlane.xlu0 %7942
      %v7944 = vsel %vm527, %v7902, 0.0
      %7945 = vadd.xlane.f32.xlu0 %v7944
      %v7946 = vpop.xlane.xlu0 %7945
      %v7947 = vsel %vm527, %v7903, 0.0
      %7948 = vadd.xlane.f32.xlu0 %v7947
      %v7949 = vpop.xlane.xlu0 %7948
      %v7950 = vsel %vm527, %v7904, 0.0
      %7951 = vadd.xlane.f32.xlu0 %v7950
      %v7952 = vpop.xlane.xlu0 %7951
      %v7953 = vsel %vm527, %v7905, 0.0
      %7954 = vadd.xlane.f32.xlu0 %v7953
      %v7955 = vpop.xlane.xlu0 %7954
      %v7956 = vsel %vm527, %v7906, 0.0
      %7957 = vadd.xlane.f32.xlu0 %v7956
      %v7958 = vpop.xlane.xlu0 %7957
      %v7959 = vsel %vm527, %v7907, 0.0
      %7960 = vadd.xlane.f32.xlu0 %v7959
      %v7961 = vpop.xlane.xlu0 %7960
      %v7962 = vsel %vm527, %v7908, 0.0
      %7963 = vadd.xlane.f32.xlu0 %v7962
      %v7964 = vpop.xlane.xlu0 %7963
      %v7965 = vsel %vm527, %v7909, 0.0
      %7966 = vadd.xlane.f32.xlu0 %v7965
      %v7967 = vpop.xlane.xlu0 %7966
      %v7968 = vsel %vm527, %v7910, 0.0
      %7969 = vadd.xlane.f32.xlu0 %v7968
      %v7970 = vpop.xlane.xlu0 %7969
      %v7971 = vsel %vm527, %v7911, 0.0
      %7972 = vadd.xlane.f32.xlu0 %v7971
      %v7973 = vpop.xlane.xlu0 %7972
      %v7974 = vsel %vm527, %v7912, 0.0
      %7975 = vadd.xlane.f32.xlu0 %v7974
      %v7976 = vpop.xlane.xlu0 %7975
      %v7977 = vsel %vm527, %v7913, 0.0
      %7978 = vadd.xlane.f32.xlu0 %v7977
      %v7979 = vpop.xlane.xlu0 %7978
      %v7980 = vsel %vm527, %v7914, 0.0
      %7981 = vadd.xlane.f32.xlu0 %v7980
      %v7982 = vpop.xlane.xlu0 %7981
      %v7983 = vsel %vm527, %v7915, 0.0
      %7984 = vadd.xlane.f32.xlu0 %v7983
      %v7985 = vpop.xlane.xlu0 %7984
      %v7986 = vsel %vm527, %v7916, 0.0
      %7987 = vadd.xlane.f32.xlu0 %v7986
      %v7988 = vpop.xlane.xlu0 %7987
      %v7989 = vsel %vm527, %v7917, 0.0
      %7990 = vadd.xlane.f32.xlu0 %v7989
      %v7991 = vpop.xlane.xlu0 %7990
      %v7992 = vsel %vm527, %v7918, 0.0
      %7993 = vadd.xlane.f32.xlu0 %v7992
      %v7994 = vpop.xlane.xlu0 %7993
      %v7995 = vsel %vm527, %v7919, 0.0
      %7996 = vadd.xlane.f32.xlu0 %v7995
      %v7997 = vpop.xlane.xlu0 %7996
      %v7998 = vsel %vm527, %v7920, 0.0
      %7999 = vadd.xlane.f32.xlu0 %v7998
      %v8000 = vpop.xlane.xlu0 %7999
      %v8001 = vsel %vm527, %v7921, 0.0
      %8002 = vadd.xlane.f32.xlu0 %v8001
      %v8003 = vpop.xlane.xlu0 %8002
      %v8004 = vsel %vm527, %v7922, 0.0
      %8005 = vadd.xlane.f32.xlu0 %v8004
      %v8006 = vpop.xlane.xlu0 %8005
      %v8007 = vsel %vm527, %v7923, 0.0
      %8008 = vadd.xlane.f32.xlu0 %v8007
      %v8009 = vpop.xlane.xlu0 %8008
      %v8010 = vsel %vm527, %v7924, 0.0
      %8011 = vadd.xlane.f32.xlu0 %v8010
      %v8012 = vpop.xlane.xlu0 %8011
      %v8013 = vsel %vm527, %v7925, 0.0
      %8014 = vadd.xlane.f32.xlu0 %v8013
      %v8015 = vpop.xlane.xlu0 %8014
      %v8016 = vsel %vm527, %v7926, 0.0
      %8017 = vadd.xlane.f32.xlu0 %v8016
      %v8018 = vpop.xlane.xlu0 %8017
      %v8019 = vsel %vm527, %v7927, 0.0
      %8020 = vadd.xlane.f32.xlu0 %v8019
      %v8021 = vpop.xlane.xlu0 %8020
      %v8022 = vsel %vm527, %v7928, 0.0
      %8023 = vadd.xlane.f32.xlu0 %v8022
      %v8024 = vpop.xlane.xlu0 %8023
      %v8025 = vmul.f32 %v7931, %v630
      %v8026 = vmul.f32 %v7934, %v630
      %v8027 = vmul.f32 %v7937, %v630
      %v8028 = vmul.f32 %v7940, %v630
      %v8029 = vmul.f32 %v7943, %v630
      %v8030 = vmul.f32 %v7946, %v630
      %v8031 = vmul.f32 %v7949, %v630
      %v8032 = vmul.f32 %v7952, %v630
      %v8033 = vmul.f32 %v7955, %v630
      %v8034 = vmul.f32 %v7958, %v630
      %v8035 = vmul.f32 %v7961, %v630
      %v8036 = vmul.f32 %v7964, %v630
      %v8037 = vmul.f32 %v7967, %v630
      %v8038 = vmul.f32 %v7970, %v630
      %v8039 = vmul.f32 %v7973, %v630
      %v8040 = vmul.f32 %v7976, %v630
      %v8041 = vmul.f32 %v7979, %v630
      %v8042 = vmul.f32 %v7982, %v630
      %v8043 = vmul.f32 %v7985, %v630
      %v8044 = vmul.f32 %v7988, %v630
      %v8045 = vmul.f32 %v7991, %v630
      %v8046 = vmul.f32 %v7994, %v630
      %v8047 = vmul.f32 %v7997, %v630
      %v8048 = vmul.f32 %v8000, %v630
      %v8049 = vmul.f32 %v8003, %v630
      %v8050 = vmul.f32 %v8006, %v630
      %v8051 = vmul.f32 %v8009, %v630
      %v8052 = vmul.f32 %v8012, %v630
      %v8053 = vmul.f32 %v8015, %v630
      %v8054 = vmul.f32 %v8018, %v630
      %v8055 = vmul.f32 %v8021, %v630
      %v8056 = vmul.f32 %v8024, %v630
      %v8057 = vadd.f32 %v8025, 1e-05
      %v8058 = vadd.f32 %v8026, 1e-05
      %v8059 = vadd.f32 %v8027, 1e-05
      %v8060 = vadd.f32 %v8028, 1e-05
      %v8061 = vadd.f32 %v8029, 1e-05
      %v8062 = vadd.f32 %v8030, 1e-05
      %v8063 = vadd.f32 %v8031, 1e-05
      %v8064 = vadd.f32 %v8032, 1e-05
      %v8065 = vadd.f32 %v8033, 1e-05
      %v8066 = vadd.f32 %v8034, 1e-05
      %v8067 = vadd.f32 %v8035, 1e-05
      %v8068 = vadd.f32 %v8036, 1e-05
      %v8069 = vadd.f32 %v8037, 1e-05
      %v8070 = vadd.f32 %v8038, 1e-05
      %v8071 = vadd.f32 %v8039, 1e-05
      %v8072 = vadd.f32 %v8040, 1e-05
      %v8073 = vadd.f32 %v8041, 1e-05
      %v8074 = vadd.f32 %v8042, 1e-05
      %v8075 = vadd.f32 %v8043, 1e-05
      %v8076 = vadd.f32 %v8044, 1e-05
      %v8077 = vadd.f32 %v8045, 1e-05
      %v8078 = vadd.f32 %v8046, 1e-05
      %v8079 = vadd.f32 %v8047, 1e-05
      %v8080 = vadd.f32 %v8048, 1e-05
      %v8081 = vadd.f32 %v8049, 1e-05
      %v8082 = vadd.f32 %v8050, 1e-05
      %v8083 = vadd.f32 %v8051, 1e-05
      %v8084 = vadd.f32 %v8052, 1e-05
      %v8085 = vadd.f32 %v8053, 1e-05
      %v8086 = vadd.f32 %v8054, 1e-05
      %v8087 = vadd.f32 %v8055, 1e-05
      %v8088 = vadd.f32 %v8056, 1e-05
      %v8089 = vrsqrt.pop %v8057
      %v8090 = vmul.f32 %v8089, %v8057
      %v8091 = vmul.f32 %v8090, %v8089
      %v8092 = vmul.f32 0.5, %v8091
      %v8093 = vsub.f32 1.5, %v8092
      %v8094 = vmul.f32 %v8089, %v8093
      %vm8095 = vweird.f32 %v8057
      %vm8096 = vweird.f32 %v8089
      %vm8097 = vmor %vm8095, %vm8096
      %v8098 = vsel %vm8097, %v8089, %v8094
      %v8099 = vrsqrt.pop %v8058
      %v8100 = vmul.f32 %v8099, %v8058
      %v8101 = vmul.f32 %v8100, %v8099
      %v8102 = vmul.f32 0.5, %v8101
      %v8103 = vsub.f32 1.5, %v8102
      %v8104 = vmul.f32 %v8099, %v8103
      %vm8105 = vweird.f32 %v8058
      %vm8106 = vweird.f32 %v8099
      %vm8107 = vmor %vm8105, %vm8106
      %v8108 = vsel %vm8107, %v8099, %v8104
      %v8109 = vrsqrt.pop %v8059
      %v8110 = vmul.f32 %v8109, %v8059
      %v8111 = vmul.f32 %v8110, %v8109
      %v8112 = vmul.f32 0.5, %v8111
      %v8113 = vsub.f32 1.5, %v8112
      %v8114 = vmul.f32 %v8109, %v8113
      %vm8115 = vweird.f32 %v8059
      %vm8116 = vweird.f32 %v8109
      %vm8117 = vmor %vm8115, %vm8116
      %v8118 = vsel %vm8117, %v8109, %v8114
      %v8119 = vrsqrt.pop %v8060
      %v8120 = vmul.f32 %v8119, %v8060
      %v8121 = vmul.f32 %v8120, %v8119
      %v8122 = vmul.f32 0.5, %v8121
      %v8123 = vsub.f32 1.5, %v8122
      %v8124 = vmul.f32 %v8119, %v8123
      %vm8125 = vweird.f32 %v8060
      %vm8126 = vweird.f32 %v8119
      %vm8127 = vmor %vm8125, %vm8126
      %v8128 = vsel %vm8127, %v8119, %v8124
      %v8129 = vrsqrt.pop %v8061
      %v8130 = vmul.f32 %v8129, %v8061
      %v8131 = vmul.f32 %v8130, %v8129
      %v8132 = vmul.f32 0.5, %v8131
      %v8133 = vsub.f32 1.5, %v8132
      %v8134 = vmul.f32 %v8129, %v8133
      %vm8135 = vweird.f32 %v8061
      %vm8136 = vweird.f32 %v8129
      %vm8137 = vmor %vm8135, %vm8136
      %v8138 = vsel %vm8137, %v8129, %v8134
      %v8139 = vrsqrt.pop %v8062
      %v8140 = vmul.f32 %v8139, %v8062
      %v8141 = vmul.f32 %v8140, %v8139
      %v8142 = vmul.f32 0.5, %v8141
      %v8143 = vsub.f32 1.5, %v8142
      %v8144 = vmul.f32 %v8139, %v8143
      %vm8145 = vweird.f32 %v8062
      %vm8146 = vweird.f32 %v8139
      %vm8147 = vmor %vm8145, %vm8146
      %v8148 = vsel %vm8147, %v8139, %v8144
      %v8149 = vrsqrt.pop %v8063
      %v8150 = vmul.f32 %v8149, %v8063
      %v8151 = vmul.f32 %v8150, %v8149
      %v8152 = vmul.f32 0.5, %v8151
      %v8153 = vsub.f32 1.5, %v8152
      %v8154 = vmul.f32 %v8149, %v8153
      %vm8155 = vweird.f32 %v8063
      %vm8156 = vweird.f32 %v8149
      %vm8157 = vmor %vm8155, %vm8156
      %v8158 = vsel %vm8157, %v8149, %v8154
      %v8159 = vrsqrt.pop %v8064
      %v8160 = vmul.f32 %v8159, %v8064
      %v8161 = vmul.f32 %v8160, %v8159
      %v8162 = vmul.f32 0.5, %v8161
      %v8163 = vsub.f32 1.5, %v8162
      %v8164 = vmul.f32 %v8159, %v8163
      %vm8165 = vweird.f32 %v8064
      %vm8166 = vweird.f32 %v8159
      %vm8167 = vmor %vm8165, %vm8166
      %v8168 = vsel %vm8167, %v8159, %v8164
      %v8169 = vrsqrt.pop %v8065
      %v8170 = vmul.f32 %v8169, %v8065
      %v8171 = vmul.f32 %v8170, %v8169
      %v8172 = vmul.f32 0.5, %v8171
      %v8173 = vsub.f32 1.5, %v8172
      %v8174 = vmul.f32 %v8169, %v8173
      %vm8175 = vweird.f32 %v8065
      %vm8176 = vweird.f32 %v8169
      %vm8177 = vmor %vm8175, %vm8176
      %v8178 = vsel %vm8177, %v8169, %v8174
      %v8179 = vrsqrt.pop %v8066
      %v8180 = vmul.f32 %v8179, %v8066
      %v8181 = vmul.f32 %v8180, %v8179
      %v8182 = vmul.f32 0.5, %v8181
      %v8183 = vsub.f32 1.5, %v8182
      %v8184 = vmul.f32 %v8179, %v8183
      %vm8185 = vweird.f32 %v8066
      %vm8186 = vweird.f32 %v8179
      %vm8187 = vmor %vm8185, %vm8186
      %v8188 = vsel %vm8187, %v8179, %v8184
      %v8189 = vrsqrt.pop %v8067
      %v8190 = vmul.f32 %v8189, %v8067
      %v8191 = vmul.f32 %v8190, %v8189
      %v8192 = vmul.f32 0.5, %v8191
      %v8193 = vsub.f32 1.5, %v8192
      %v8194 = vmul.f32 %v8189, %v8193
      %vm8195 = vweird.f32 %v8067
      %vm8196 = vweird.f32 %v8189
      %vm8197 = vmor %vm8195, %vm8196
      %v8198 = vsel %vm8197, %v8189, %v8194
      %v8199 = vrsqrt.pop %v8068
      %v8200 = vmul.f32 %v8199, %v8068
      %v8201 = vmul.f32 %v8200, %v8199
      %v8202 = vmul.f32 0.5, %v8201
      %v8203 = vsub.f32 1.5, %v8202
      %v8204 = vmul.f32 %v8199, %v8203
      %vm8205 = vweird.f32 %v8068
      %vm8206 = vweird.f32 %v8199
      %vm8207 = vmor %vm8205, %vm8206
      %v8208 = vsel %vm8207, %v8199, %v8204
      %v8209 = vrsqrt.pop %v8069
      %v8210 = vmul.f32 %v8209, %v8069
      %v8211 = vmul.f32 %v8210, %v8209
      %v8212 = vmul.f32 0.5, %v8211
      %v8213 = vsub.f32 1.5, %v8212
      %v8214 = vmul.f32 %v8209, %v8213
      %vm8215 = vweird.f32 %v8069
      %vm8216 = vweird.f32 %v8209
      %vm8217 = vmor %vm8215, %vm8216
      %v8218 = vsel %vm8217, %v8209, %v8214
      %v8219 = vrsqrt.pop %v8070
      %v8220 = vmul.f32 %v8219, %v8070
      %v8221 = vmul.f32 %v8220, %v8219
      %v8222 = vmul.f32 0.5, %v8221
      %v8223 = vsub.f32 1.5, %v8222
      %v8224 = vmul.f32 %v8219, %v8223
      %vm8225 = vweird.f32 %v8070
      %vm8226 = vweird.f32 %v8219
      %vm8227 = vmor %vm8225, %vm8226
      %v8228 = vsel %vm8227, %v8219, %v8224
      %v8229 = vrsqrt.pop %v8071
      %v8230 = vmul.f32 %v8229, %v8071
      %v8231 = vmul.f32 %v8230, %v8229
      %v8232 = vmul.f32 0.5, %v8231
      %v8233 = vsub.f32 1.5, %v8232
      %v8234 = vmul.f32 %v8229, %v8233
      %vm8235 = vweird.f32 %v8071
      %vm8236 = vweird.f32 %v8229
      %vm8237 = vmor %vm8235, %vm8236
      %v8238 = vsel %vm8237, %v8229, %v8234
      %v8239 = vrsqrt.pop %v8072
      %v8240 = vmul.f32 %v8239, %v8072
      %v8241 = vmul.f32 %v8240, %v8239
      %v8242 = vmul.f32 0.5, %v8241
      %v8243 = vsub.f32 1.5, %v8242
      %v8244 = vmul.f32 %v8239, %v8243
      %vm8245 = vweird.f32 %v8072
      %vm8246 = vweird.f32 %v8239
      %vm8247 = vmor %vm8245, %vm8246
      %v8248 = vsel %vm8247, %v8239, %v8244
      %v8249 = vrsqrt.pop %v8073
      %v8250 = vmul.f32 %v8249, %v8073
      %v8251 = vmul.f32 %v8250, %v8249
      %v8252 = vmul.f32 0.5, %v8251
      %v8253 = vsub.f32 1.5, %v8252
      %v8254 = vmul.f32 %v8249, %v8253
      %vm8255 = vweird.f32 %v8073
      %vm8256 = vweird.f32 %v8249
      %vm8257 = vmor %vm8255, %vm8256
      %v8258 = vsel %vm8257, %v8249, %v8254
      %v8259 = vrsqrt.pop %v8074
      %v8260 = vmul.f32 %v8259, %v8074
      %v8261 = vmul.f32 %v8260, %v8259
      %v8262 = vmul.f32 0.5, %v8261
      %v8263 = vsub.f32 1.5, %v8262
      %v8264 = vmul.f32 %v8259, %v8263
      %vm8265 = vweird.f32 %v8074
      %vm8266 = vweird.f32 %v8259
      %vm8267 = vmor %vm8265, %vm8266
      %v8268 = vsel %vm8267, %v8259, %v8264
      %v8269 = vrsqrt.pop %v8075
      %v8270 = vmul.f32 %v8269, %v8075
      %v8271 = vmul.f32 %v8270, %v8269
      %v8272 = vmul.f32 0.5, %v8271
      %v8273 = vsub.f32 1.5, %v8272
      %v8274 = vmul.f32 %v8269, %v8273
      %vm8275 = vweird.f32 %v8075
      %vm8276 = vweird.f32 %v8269
      %vm8277 = vmor %vm8275, %vm8276
      %v8278 = vsel %vm8277, %v8269, %v8274
      %v8279 = vrsqrt.pop %v8076
      %v8280 = vmul.f32 %v8279, %v8076
      %v8281 = vmul.f32 %v8280, %v8279
      %v8282 = vmul.f32 0.5, %v8281
      %v8283 = vsub.f32 1.5, %v8282
      %v8284 = vmul.f32 %v8279, %v8283
      %vm8285 = vweird.f32 %v8076
      %vm8286 = vweird.f32 %v8279
      %vm8287 = vmor %vm8285, %vm8286
      %v8288 = vsel %vm8287, %v8279, %v8284
      %v8289 = vrsqrt.pop %v8077
      %v8290 = vmul.f32 %v8289, %v8077
      %v8291 = vmul.f32 %v8290, %v8289
      %v8292 = vmul.f32 0.5, %v8291
      %v8293 = vsub.f32 1.5, %v8292
      %v8294 = vmul.f32 %v8289, %v8293
      %vm8295 = vweird.f32 %v8077
      %vm8296 = vweird.f32 %v8289
      %vm8297 = vmor %vm8295, %vm8296
      %v8298 = vsel %vm8297, %v8289, %v8294
      %v8299 = vrsqrt.pop %v8078
      %v8300 = vmul.f32 %v8299, %v8078
      %v8301 = vmul.f32 %v8300, %v8299
      %v8302 = vmul.f32 0.5, %v8301
      %v8303 = vsub.f32 1.5, %v8302
      %v8304 = vmul.f32 %v8299, %v8303
      %vm8305 = vweird.f32 %v8078
      %vm8306 = vweird.f32 %v8299
      %vm8307 = vmor %vm8305, %vm8306
      %v8308 = vsel %vm8307, %v8299, %v8304
      %v8309 = vrsqrt.pop %v8079
      %v8310 = vmul.f32 %v8309, %v8079
      %v8311 = vmul.f32 %v8310, %v8309
      %v8312 = vmul.f32 0.5, %v8311
      %v8313 = vsub.f32 1.5, %v8312
      %v8314 = vmul.f32 %v8309, %v8313
      %vm8315 = vweird.f32 %v8079
      %vm8316 = vweird.f32 %v8309
      %vm8317 = vmor %vm8315, %vm8316
      %v8318 = vsel %vm8317, %v8309, %v8314
      %v8319 = vrsqrt.pop %v8080
      %v8320 = vmul.f32 %v8319, %v8080
      %v8321 = vmul.f32 %v8320, %v8319
      %v8322 = vmul.f32 0.5, %v8321
      %v8323 = vsub.f32 1.5, %v8322
      %v8324 = vmul.f32 %v8319, %v8323
      %vm8325 = vweird.f32 %v8080
      %vm8326 = vweird.f32 %v8319
      %vm8327 = vmor %vm8325, %vm8326
      %v8328 = vsel %vm8327, %v8319, %v8324
      %v8329 = vrsqrt.pop %v8081
      %v8330 = vmul.f32 %v8329, %v8081
      %v8331 = vmul.f32 %v8330, %v8329
      %v8332 = vmul.f32 0.5, %v8331
      %v8333 = vsub.f32 1.5, %v8332
      %v8334 = vmul.f32 %v8329, %v8333
      %vm8335 = vweird.f32 %v8081
      %vm8336 = vweird.f32 %v8329
      %vm8337 = vmor %vm8335, %vm8336
      %v8338 = vsel %vm8337, %v8329, %v8334
      %v8339 = vrsqrt.pop %v8082
      %v8340 = vmul.f32 %v8339, %v8082
      %v8341 = vmul.f32 %v8340, %v8339
      %v8342 = vmul.f32 0.5, %v8341
      %v8343 = vsub.f32 1.5, %v8342
      %v8344 = vmul.f32 %v8339, %v8343
      %vm8345 = vweird.f32 %v8082
      %vm8346 = vweird.f32 %v8339
      %vm8347 = vmor %vm8345, %vm8346
      %v8348 = vsel %vm8347, %v8339, %v8344
      %v8349 = vrsqrt.pop %v8083
      %v8350 = vmul.f32 %v8349, %v8083
      %v8351 = vmul.f32 %v8350, %v8349
      %v8352 = vmul.f32 0.5, %v8351
      %v8353 = vsub.f32 1.5, %v8352
      %v8354 = vmul.f32 %v8349, %v8353
      %vm8355 = vweird.f32 %v8083
      %vm8356 = vweird.f32 %v8349
      %vm8357 = vmor %vm8355, %vm8356
      %v8358 = vsel %vm8357, %v8349, %v8354
      %v8359 = vrsqrt.pop %v8084
      %v8360 = vmul.f32 %v8359, %v8084
      %v8361 = vmul.f32 %v8360, %v8359
      %v8362 = vmul.f32 0.5, %v8361
      %v8363 = vsub.f32 1.5, %v8362
      %v8364 = vmul.f32 %v8359, %v8363
      %vm8365 = vweird.f32 %v8084
      %vm8366 = vweird.f32 %v8359
      %vm8367 = vmor %vm8365, %vm8366
      %v8368 = vsel %vm8367, %v8359, %v8364
      %v8369 = vrsqrt.pop %v8085
      %v8370 = vmul.f32 %v8369, %v8085
      %v8371 = vmul.f32 %v8370, %v8369
      %v8372 = vmul.f32 0.5, %v8371
      %v8373 = vsub.f32 1.5, %v8372
      %v8374 = vmul.f32 %v8369, %v8373
      %vm8375 = vweird.f32 %v8085
      %vm8376 = vweird.f32 %v8369
      %vm8377 = vmor %vm8375, %vm8376
      %v8378 = vsel %vm8377, %v8369, %v8374
      %v8379 = vrsqrt.pop %v8086
      %v8380 = vmul.f32 %v8379, %v8086
      %v8381 = vmul.f32 %v8380, %v8379
      %v8382 = vmul.f32 0.5, %v8381
      %v8383 = vsub.f32 1.5, %v8382
      %v8384 = vmul.f32 %v8379, %v8383
      %vm8385 = vweird.f32 %v8086
      %vm8386 = vweird.f32 %v8379
      %vm8387 = vmor %vm8385, %vm8386
      %v8388 = vsel %vm8387, %v8379, %v8384
      %v8389 = vrsqrt.pop %v8087
      %v8390 = vmul.f32 %v8389, %v8087
      %v8391 = vmul.f32 %v8390, %v8389
      %v8392 = vmul.f32 0.5, %v8391
      %v8393 = vsub.f32 1.5, %v8392
      %v8394 = vmul.f32 %v8389, %v8393
      %vm8395 = vweird.f32 %v8087
      %vm8396 = vweird.f32 %v8389
      %vm8397 = vmor %vm8395, %vm8396
      %v8398 = vsel %vm8397, %v8389, %v8394
      %v8399 = vrsqrt.pop %v8088
      %v8400 = vmul.f32 %v8399, %v8088
      %v8401 = vmul.f32 %v8400, %v8399
      %v8402 = vmul.f32 0.5, %v8401
      %v8403 = vsub.f32 1.5, %v8402
      %v8404 = vmul.f32 %v8399, %v8403
      %vm8405 = vweird.f32 %v8088
      %vm8406 = vweird.f32 %v8399
      %vm8407 = vmor %vm8405, %vm8406
      %v8408 = vsel %vm8407, %v8399, %v8404
      %v8409 = vmul.f32 %v7865, %v8098
      %v8410 = vmul.f32 %v7866, %v8108
      %v8411 = vmul.f32 %v7867, %v8118
      %v8412 = vmul.f32 %v7868, %v8128
      %v8413 = vmul.f32 %v7869, %v8138
      %v8414 = vmul.f32 %v7870, %v8148
      %v8415 = vmul.f32 %v7871, %v8158
      %v8416 = vmul.f32 %v7872, %v8168
      %v8417 = vmul.f32 %v7873, %v8178
      %v8418 = vmul.f32 %v7874, %v8188
      %v8419 = vmul.f32 %v7875, %v8198
      %v8420 = vmul.f32 %v7876, %v8208
      %v8421 = vmul.f32 %v7877, %v8218
      %v8422 = vmul.f32 %v7878, %v8228
      %v8423 = vmul.f32 %v7879, %v8238
      %v8424 = vmul.f32 %v7880, %v8248
      %v8425 = vmul.f32 %v7881, %v8258
      %v8426 = vmul.f32 %v7882, %v8268
      %v8427 = vmul.f32 %v7883, %v8278
      %v8428 = vmul.f32 %v7884, %v8288
      %v8429 = vmul.f32 %v7885, %v8298
      %v8430 = vmul.f32 %v7886, %v8308
      %v8431 = vmul.f32 %v7887, %v8318
      %v8432 = vmul.f32 %v7888, %v8328
      %v8433 = vmul.f32 %v7889, %v8338
      %v8434 = vmul.f32 %v7890, %v8348
      %v8435 = vmul.f32 %v7891, %v8358
      %v8436 = vmul.f32 %v7892, %v8368
      %v8437 = vmul.f32 %v7893, %v8378
      %v8438 = vmul.f32 %v7894, %v8388
      %v8439 = vmul.f32 %v7895, %v8398
      %v8440 = vmul.f32 %v7896, %v8408
      %v8441 = vld [vmem:[%s9] sm:$0x1]
      %v8443 = vperm.slane %v8441, 0
      %v8445 = vmul.f32 %v8409, %v8443
      %v8446 = vmul.f32 %v8410, %v8443
      %v8447 = vmul.f32 %v8411, %v8443
      %v8448 = vmul.f32 %v8412, %v8443
      %v8449 = vmul.f32 %v8413, %v8443
      %v8450 = vmul.f32 %v8414, %v8443
      %v8451 = vmul.f32 %v8415, %v8443
      %v8452 = vmul.f32 %v8416, %v8443
      %v8453 = vmul.f32 %v8417, %v8443
      %v8454 = vmul.f32 %v8418, %v8443
      %v8455 = vmul.f32 %v8419, %v8443
      %v8456 = vmul.f32 %v8420, %v8443
      %v8457 = vmul.f32 %v8421, %v8443
      %v8458 = vmul.f32 %v8422, %v8443
      %v8459 = vmul.f32 %v8423, %v8443
      %v8460 = vmul.f32 %v8424, %v8443
      %v8461 = vmul.f32 %v8425, %v8443
      %v8462 = vmul.f32 %v8426, %v8443
      %v8463 = vmul.f32 %v8427, %v8443
      %v8464 = vmul.f32 %v8428, %v8443
      %v8465 = vmul.f32 %v8429, %v8443
      %v8466 = vmul.f32 %v8430, %v8443
      %v8467 = vmul.f32 %v8431, %v8443
      %v8468 = vmul.f32 %v8432, %v8443
      %v8469 = vmul.f32 %v8433, %v8443
      %v8470 = vmul.f32 %v8434, %v8443
      %v8471 = vmul.f32 %v8435, %v8443
      %v8472 = vmul.f32 %v8436, %v8443
      %v8473 = vmul.f32 %v8437, %v8443
      %v8474 = vmul.f32 %v8438, %v8443
      %v8475 = vmul.f32 %v8439, %v8443
      %v8476 = vmul.f32 %v8440, %v8443
      %v8477 = vld [vmem:[%s10] sm:$0x1]
      %v8479 = vperm.slane %v8477, 0
      %v8481 = vadd.f32 %v8445, %v8479
      %v8482 = vadd.f32 %v8446, %v8479
      %v8483 = vadd.f32 %v8447, %v8479
      %v8484 = vadd.f32 %v8448, %v8479
      %v8485 = vadd.f32 %v8449, %v8479
      %v8486 = vadd.f32 %v8450, %v8479
      %v8487 = vadd.f32 %v8451, %v8479
      %v8488 = vadd.f32 %v8452, %v8479
      %v8489 = vadd.f32 %v8453, %v8479
      %v8490 = vadd.f32 %v8454, %v8479
      %v8491 = vadd.f32 %v8455, %v8479
      %v8492 = vadd.f32 %v8456, %v8479
      %v8493 = vadd.f32 %v8457, %v8479
      %v8494 = vadd.f32 %v8458, %v8479
      %v8495 = vadd.f32 %v8459, %v8479
      %v8496 = vadd.f32 %v8460, %v8479
      %v8497 = vadd.f32 %v8461, %v8479
      %v8498 = vadd.f32 %v8462, %v8479
      %v8499 = vadd.f32 %v8463, %v8479
      %v8500 = vadd.f32 %v8464, %v8479
      %v8501 = vadd.f32 %v8465, %v8479
      %v8502 = vadd.f32 %v8466, %v8479
      %v8503 = vadd.f32 %v8467, %v8479
      %v8504 = vadd.f32 %v8468, %v8479
      %v8505 = vadd.f32 %v8469, %v8479
      %v8506 = vadd.f32 %v8470, %v8479
      %v8507 = vadd.f32 %v8471, %v8479
      %v8508 = vadd.f32 %v8472, %v8479
      %v8509 = vadd.f32 %v8473, %v8479
      %v8510 = vadd.f32 %v8474, %v8479
      %v8511 = vadd.f32 %v8475, %v8479
      %v8512 = vadd.f32 %v8476, %v8479
      %v8513 = vld [vmem:[%s11] sm:$0xff]
      %v8514 = vld [vmem:[%s11 + $0x8] sm:$0xff]
      %v8515 = vld [vmem:[%s11 + $0x10] sm:$0xff]
      %v8516 = vld [vmem:[%s11 + $0x18] sm:$0xff]
      %v8517 = vld [vmem:[%s12] sm:$0x1]
      %v8519 = vperm.slane %v8517, 0
      %v8522 = vsel %vm527, %v8481, 0
      %v8525 = vsel %vm527, %v8482, 0
      %v8528 = vsel %vm527, %v8483, 0
      %v8531 = vsel %vm527, %v8484, 0
      %v8534 = vsel %vm527, %v8485, 0
      %v8537 = vsel %vm527, %v8486, 0
      %v8540 = vsel %vm527, %v8487, 0
      %v8543 = vsel %vm527, %v8488, 0
      %v8546 = vsel %vm527, %v8489, 0
      %v8549 = vsel %vm527, %v8490, 0
      %v8552 = vsel %vm527, %v8491, 0
      %v8555 = vsel %vm527, %v8492, 0
      %v8558 = vsel %vm527, %v8493, 0
      %v8561 = vsel %vm527, %v8494, 0
      %v8564 = vsel %vm527, %v8495, 0
      %v8567 = vsel %vm527, %v8496, 0
      %v8570 = vsel %vm527, %v8497, 0
      %v8573 = vsel %vm527, %v8498, 0
      %v8576 = vsel %vm527, %v8499, 0
      %v8579 = vsel %vm527, %v8500, 0
      %v8582 = vsel %vm527, %v8501, 0
      %v8585 = vsel %vm527, %v8502, 0
      %v8588 = vsel %vm527, %v8503, 0
      %v8591 = vsel %vm527, %v8504, 0
      %v8594 = vsel %vm527, %v8505, 0
      %v8597 = vsel %vm527, %v8506, 0
      %v8600 = vsel %vm527, %v8507, 0
      %v8603 = vsel %vm527, %v8508, 0
      %v8606 = vsel %vm527, %v8509, 0
      %v8609 = vsel %vm527, %v8510, 0
      %v8612 = vsel %vm527, %v8511, 0
      %v8615 = vsel %vm527, %v8512, 0
      %8617 = vmatpush.msra.mxu0 0.0
      %8618 = vmatpush.msra.mxu0 0.0
      %8619 = vmatpush.msra.mxu0 0.0
      %8620 = vmatpush.msra.mxu0 0.0
      %8621 = vmatpush.msra.mxu0 0.0
      %8622 = vmatpush.msra.mxu0 0.0
      %8623 = vmatpush.msra.mxu0 0.0
      %8624 = vmatpush.msra.mxu0 0.0
      %8625 = vmatpush.msra.mxu0 0.0
      %8626 = vmatpush.msra.mxu0 0.0
      %8627 = vmatpush.msra.mxu0 0.0
      %8628 = vmatpush.msra.mxu0 0.0
      %8629 = vmatpush.msra.mxu0 %v8516
      %8630 = vmatpush.msra.mxu0 %v8515
      %8631 = vmatpush.msra.mxu0 %v8514
      %8632 = vmatpush.msra.mxu0 %v8513
      %8633 = vmatmul.f32.gmra.mxu0 %v8522
      %v8634 = vpop.f32.mrf.mxu0
      %v8635 = vadd.f32 %v8519, %v8634
      %8636 = vmatmul.f32.gmra.mxu0 %v8525
      %v8637 = vpop.f32.mrf.mxu0
      %v8638 = vadd.f32 %v8519, %v8637
      %8639 = vmatmul.f32.gmra.mxu0 %v8528
      %v8640 = vpop.f32.mrf.mxu0
      %v8641 = vadd.f32 %v8519, %v8640
      %8642 = vmatmul.f32.gmra.mxu0 %v8531
      %v8643 = vpop.f32.mrf.mxu0
      %v8644 = vadd.f32 %v8519, %v8643
      %8645 = vmatmul.f32.gmra.mxu0 %v8534
      %v8646 = vpop.f32.mrf.mxu0
      %v8647 = vadd.f32 %v8519, %v8646
      %8648 = vmatmul.f32.gmra.mxu0 %v8537
      %v8649 = vpop.f32.mrf.mxu0
      %v8650 = vadd.f32 %v8519, %v8649
      %8651 = vmatmul.f32.gmra.mxu0 %v8540
      %v8652 = vpop.f32.mrf.mxu0
      %v8653 = vadd.f32 %v8519, %v8652
      %8654 = vmatmul.f32.gmra.mxu0 %v8543
      %v8655 = vpop.f32.mrf.mxu0
      %v8656 = vadd.f32 %v8519, %v8655
      %8657 = vmatmul.f32.gmra.mxu0 %v8546
      %v8658 = vpop.f32.mrf.mxu0
      %v8659 = vadd.f32 %v8519, %v8658
      %8660 = vmatmul.f32.gmra.mxu0 %v8549
      %v8661 = vpop.f32.mrf.mxu0
      %v8662 = vadd.f32 %v8519, %v8661
      %8663 = vmatmul.f32.gmra.mxu0 %v8552
      %v8664 = vpop.f32.mrf.mxu0
      %v8665 = vadd.f32 %v8519, %v8664
      %8666 = vmatmul.f32.gmra.mxu0 %v8555
      %v8667 = vpop.f32.mrf.mxu0
      %v8668 = vadd.f32 %v8519, %v8667
      %8669 = vmatmul.f32.gmra.mxu0 %v8558
      %v8670 = vpop.f32.mrf.mxu0
      %v8671 = vadd.f32 %v8519, %v8670
      %8672 = vmatmul.f32.gmra.mxu0 %v8561
      %v8673 = vpop.f32.mrf.mxu0
      %v8674 = vadd.f32 %v8519, %v8673
      %8675 = vmatmul.f32.gmra.mxu0 %v8564
      %v8676 = vpop.f32.mrf.mxu0
      %v8677 = vadd.f32 %v8519, %v8676
      %8678 = vmatmul.f32.gmra.mxu0 %v8567
      %v8679 = vpop.f32.mrf.mxu0
      %v8680 = vadd.f32 %v8519, %v8679
      %8681 = vmatmul.f32.gmra.mxu0 %v8570
      %v8682 = vpop.f32.mrf.mxu0
      %v8683 = vadd.f32 %v8519, %v8682
      %8684 = vmatmul.f32.gmra.mxu0 %v8573
      %v8685 = vpop.f32.mrf.mxu0
      %v8686 = vadd.f32 %v8519, %v8685
      %8687 = vmatmul.f32.gmra.mxu0 %v8576
      %v8688 = vpop.f32.mrf.mxu0
      %v8689 = vadd.f32 %v8519, %v8688
      %8690 = vmatmul.f32.gmra.mxu0 %v8579
      %v8691 = vpop.f32.mrf.mxu0
      %v8692 = vadd.f32 %v8519, %v8691
      %8693 = vmatmul.f32.gmra.mxu0 %v8582
      %v8694 = vpop.f32.mrf.mxu0
      %v8695 = vadd.f32 %v8519, %v8694
      %8696 = vmatmul.f32.gmra.mxu0 %v8585
      %v8697 = vpop.f32.mrf.mxu0
      %v8698 = vadd.f32 %v8519, %v8697
      %8699 = vmatmul.f32.gmra.mxu0 %v8588
      %v8700 = vpop.f32.mrf.mxu0
      %v8701 = vadd.f32 %v8519, %v8700
      %8702 = vmatmul.f32.gmra.mxu0 %v8591
      %v8703 = vpop.f32.mrf.mxu0
      %v8704 = vadd.f32 %v8519, %v8703
      %8705 = vmatmul.f32.gmra.mxu0 %v8594
      %v8706 = vpop.f32.mrf.mxu0
      %v8707 = vadd.f32 %v8519, %v8706
      %8708 = vmatmul.f32.gmra.mxu0 %v8597
      %v8709 = vpop.f32.mrf.mxu0
      %v8710 = vadd.f32 %v8519, %v8709
      %8711 = vmatmul.f32.gmra.mxu0 %v8600
      %v8712 = vpop.f32.mrf.mxu0
      %v8713 = vadd.f32 %v8519, %v8712
      %8714 = vmatmul.f32.gmra.mxu0 %v8603
      %v8715 = vpop.f32.mrf.mxu0
      %v8716 = vadd.f32 %v8519, %v8715
      %8717 = vmatmul.f32.gmra.mxu0 %v8606
      %v8718 = vpop.f32.mrf.mxu0
      %v8719 = vadd.f32 %v8519, %v8718
      %8720 = vmatmul.f32.gmra.mxu0 %v8609
      %v8721 = vpop.f32.mrf.mxu0
      %v8722 = vadd.f32 %v8519, %v8721
      %8723 = vmatmul.f32.gmra.mxu0 %v8612
      %v8724 = vpop.f32.mrf.mxu0
      %v8725 = vadd.f32 %v8519, %v8724
      %8726 = vmatmul.f32.gmra.mxu0 %v8615
      %v8727 = vpop.f32.mrf.mxu0
      %v8728 = vadd.f32 %v8519, %v8727
      %8729 = vdwg.mxu0
      %v8730 = vmul.f32 %v8635, 0.5
      %v8731 = vmul.f32 %v8638, 0.5
      %v8732 = vmul.f32 %v8641, 0.5
      %v8733 = vmul.f32 %v8644, 0.5
      %v8734 = vmul.f32 %v8647, 0.5
      %v8735 = vmul.f32 %v8650, 0.5
      %v8736 = vmul.f32 %v8653, 0.5
      %v8737 = vmul.f32 %v8656, 0.5
      %v8738 = vmul.f32 %v8659, 0.5
      %v8739 = vmul.f32 %v8662, 0.5
      %v8740 = vmul.f32 %v8665, 0.5
      %v8741 = vmul.f32 %v8668, 0.5
      %v8742 = vmul.f32 %v8671, 0.5
      %v8743 = vmul.f32 %v8674, 0.5
      %v8744 = vmul.f32 %v8677, 0.5
      %v8745 = vmul.f32 %v8680, 0.5
      %v8746 = vmul.f32 %v8683, 0.5
      %v8747 = vmul.f32 %v8686, 0.5
      %v8748 = vmul.f32 %v8689, 0.5
      %v8749 = vmul.f32 %v8692, 0.5
      %v8750 = vmul.f32 %v8695, 0.5
      %v8751 = vmul.f32 %v8698, 0.5
      %v8752 = vmul.f32 %v8701, 0.5
      %v8753 = vmul.f32 %v8704, 0.5
      %v8754 = vmul.f32 %v8707, 0.5
      %v8755 = vmul.f32 %v8710, 0.5
      %v8756 = vmul.f32 %v8713, 0.5
      %v8757 = vmul.f32 %v8716, 0.5
      %v8758 = vmul.f32 %v8719, 0.5
      %v8759 = vmul.f32 %v8722, 0.5
      %v8760 = vmul.f32 %v8725, 0.5
      %v8761 = vmul.f32 %v8728, 0.5
      %v8762 = vmul.f32 %v8635, 0.70710677
      %v8763 = vmul.f32 %v8638, 0.70710677
      %v8764 = vmul.f32 %v8641, 0.70710677
      %v8765 = vmul.f32 %v8644, 0.70710677
      %v8766 = vmul.f32 %v8647, 0.70710677
      %v8767 = vmul.f32 %v8650, 0.70710677
      %v8768 = vmul.f32 %v8653, 0.70710677
      %v8769 = vmul.f32 %v8656, 0.70710677
      %v8770 = vmul.f32 %v8659, 0.70710677
      %v8771 = vmul.f32 %v8662, 0.70710677
      %v8772 = vmul.f32 %v8665, 0.70710677
      %v8773 = vmul.f32 %v8668, 0.70710677
      %v8774 = vmul.f32 %v8671, 0.70710677
      %v8775 = vmul.f32 %v8674, 0.70710677
      %v8776 = vmul.f32 %v8677, 0.70710677
      %v8777 = vmul.f32 %v8680, 0.70710677
      %v8778 = vmul.f32 %v8683, 0.70710677
      %v8779 = vmul.f32 %v8686, 0.70710677
      %v8780 = vmul.f32 %v8689, 0.70710677
      %v8781 = vmul.f32 %v8692, 0.70710677
      %v8782 = vmul.f32 %v8695, 0.70710677
      %v8783 = vmul.f32 %v8698, 0.70710677
      %v8784 = vmul.f32 %v8701, 0.70710677
      %v8785 = vmul.f32 %v8704, 0.70710677
      %v8786 = vmul.f32 %v8707, 0.70710677
      %v8787 = vmul.f32 %v8710, 0.70710677
      %v8788 = vmul.f32 %v8713, 0.70710677
      %v8789 = vmul.f32 %v8716, 0.70710677
      %v8790 = vmul.f32 %v8719, 0.70710677
      %v8791 = vmul.f32 %v8722, 0.70710677
      %v8792 = vmul.f32 %v8725, 0.70710677
      %v8793 = vmul.f32 %v8728, 0.70710677
      %v8794 = vmul.f32 %v8762, %v8762
      %v8795 = vmin.f32 16.0, %v8794
      %v8796 = vmul.f32 %v8795, 2.1237322e-06
      %v8797 = vadd.f32 %v8796, 0.00028619796
      %v8798 = vmul.f32 %v8795, %v8797
      %v8799 = vadd.f32 %v8798, 0.0036580483
      %v8800 = vmul.f32 %v8795, %v8799
      %v8801 = vadd.f32 %v8800, 0.05243302
      %v8802 = vmul.f32 %v8795, %v8801
      %v8803 = vadd.f32 %v8802, 0.18741608
      %v8804 = vmul.f32 %v8795, %v8803
      %v8805 = vadd.f32 %v8804, 1.1283791
      %v8806 = vmul.f32 %v8762, %v8805
      %v8807 = vmul.f32 %v8795, 3.8918573e-05
      %v8808 = vadd.f32 %v8807, 0.001143296
      %v8809 = vmul.f32 %v8795, %v8808
      %v8810 = vadd.f32 %v8809, 0.014752088
      %v8811 = vmul.f32 %v8795, %v8810
      %v8812 = vadd.f32 %v8811, 0.112945676
      %v8813 = vmul.f32 %v8795, %v8812
      %v8814 = vadd.f32 %v8813, 0.4994258
      %v8815 = vmul.f32 %v8795, %v8814
      %v8816 = vadd.f32 %v8815, 1.0
      %v8817 = vrcp.pop %v8816
      %v8818 = vmul.f32 %v8816, %v8817
      %v8819 = vsub.f32 1.0, %v8818
      %v8820 = vmul.f32 %v8817, %v8819
      %v8821 = vadd.f32 %v8817, %v8820
      %vm8822 = vweird.f32 %v8816
      %vm8823 = vweird.f32 %v8817
      %vm8824 = vmor %vm8822, %vm8823
      %v8825 = vsel %vm8824, %v8817, %v8821
      %v8826 = vand.u32 2147483647, %v8816
      %vm8827 = vcmp.eq.f32.partialorder %v8826, 8.507059e+37
      %v8828 = vand.u32 %v8816, 2147483648
      %v8829 = vor.u32 1.1754944e-38, %v8828
      %v8830 = vsel %vm8827, %v8829, %v8825
      %v8831 = vmul.f32 %v8806, %v8830
      %v8832 = vmin.f32 %v8831, 1.0
      %v8833 = vmax.f32 %v8832, -1.0
      %v8834 = vmul.f32 %v8763, %v8763
      %v8835 = vmin.f32 16.0, %v8834
      %v8836 = vmul.f32 %v8835, 2.1237322e-06
      %v8837 = vadd.f32 %v8836, 0.00028619796
      %v8838 = vmul.f32 %v8835, %v8837
      %v8839 = vadd.f32 %v8838, 0.0036580483
      %v8840 = vmul.f32 %v8835, %v8839
      %v8841 = vadd.f32 %v8840, 0.05243302
      %v8842 = vmul.f32 %v8835, %v8841
      %v8843 = vadd.f32 %v8842, 0.18741608
      %v8844 = vmul.f32 %v8835, %v8843
      %v8845 = vadd.f32 %v8844, 1.1283791
      %v8846 = vmul.f32 %v8763, %v8845
      %v8847 = vmul.f32 %v8835, 3.8918573e-05
      %v8848 = vadd.f32 %v8847, 0.001143296
      %v8849 = vmul.f32 %v8835, %v8848
      %v8850 = vadd.f32 %v8849, 0.014752088
      %v8851 = vmul.f32 %v8835, %v8850
      %v8852 = vadd.f32 %v8851, 0.112945676
      %v8853 = vmul.f32 %v8835, %v8852
      %v8854 = vadd.f32 %v8853, 0.4994258
      %v8855 = vmul.f32 %v8835, %v8854
      %v8856 = vadd.f32 %v8855, 1.0
      %v8857 = vrcp.pop %v8856
      %v8858 = vmul.f32 %v8856, %v8857
      %v8859 = vsub.f32 1.0, %v8858
      %v8860 = vmul.f32 %v8857, %v8859
      %v8861 = vadd.f32 %v8857, %v8860
      %vm8862 = vweird.f32 %v8856
      %vm8863 = vweird.f32 %v8857
      %vm8864 = vmor %vm8862, %vm8863
      %v8865 = vsel %vm8864, %v8857, %v8861
      %v8866 = vand.u32 2147483647, %v8856
      %vm8867 = vcmp.eq.f32.partialorder %v8866, 8.507059e+37
      %v8868 = vand.u32 %v8856, 2147483648
      %v8869 = vor.u32 1.1754944e-38, %v8868
      %v8870 = vsel %vm8867, %v8869, %v8865
      %v8871 = vmul.f32 %v8846, %v8870
      %v8872 = vmin.f32 %v8871, 1.0
      %v8873 = vmax.f32 %v8872, -1.0
      %v8874 = vmul.f32 %v8764, %v8764
      %v8875 = vmin.f32 16.0, %v8874
      %v8876 = vmul.f32 %v8875, 2.1237322e-06
      %v8877 = vadd.f32 %v8876, 0.00028619796
      %v8878 = vmul.f32 %v8875, %v8877
      %v8879 = vadd.f32 %v8878, 0.0036580483
      %v8880 = vmul.f32 %v8875, %v8879
      %v8881 = vadd.f32 %v8880, 0.05243302
      %v8882 = vmul.f32 %v8875, %v8881
      %v8883 = vadd.f32 %v8882, 0.18741608
      %v8884 = vmul.f32 %v8875, %v8883
      %v8885 = vadd.f32 %v8884, 1.1283791
      %v8886 = vmul.f32 %v8764, %v8885
      %v8887 = vmul.f32 %v8875, 3.8918573e-05
      %v8888 = vadd.f32 %v8887, 0.001143296
      %v8889 = vmul.f32 %v8875, %v8888
      %v8890 = vadd.f32 %v8889, 0.014752088
      %v8891 = vmul.f32 %v8875, %v8890
      %v8892 = vadd.f32 %v8891, 0.112945676
      %v8893 = vmul.f32 %v8875, %v8892
      %v8894 = vadd.f32 %v8893, 0.4994258
      %v8895 = vmul.f32 %v8875, %v8894
      %v8896 = vadd.f32 %v8895, 1.0
      %v8897 = vrcp.pop %v8896
      %v8898 = vmul.f32 %v8896, %v8897
      %v8899 = vsub.f32 1.0, %v8898
      %v8900 = vmul.f32 %v8897, %v8899
      %v8901 = vadd.f32 %v8897, %v8900
      %vm8902 = vweird.f32 %v8896
      %vm8903 = vweird.f32 %v8897
      %vm8904 = vmor %vm8902, %vm8903
      %v8905 = vsel %vm8904, %v8897, %v8901
      %v8906 = vand.u32 2147483647, %v8896
      %vm8907 = vcmp.eq.f32.partialorder %v8906, 8.507059e+37
      %v8908 = vand.u32 %v8896, 2147483648
      %v8909 = vor.u32 1.1754944e-38, %v8908
      %v8910 = vsel %vm8907, %v8909, %v8905
      %v8911 = vmul.f32 %v8886, %v8910
      %v8912 = vmin.f32 %v8911, 1.0
      %v8913 = vmax.f32 %v8912, -1.0
      %v8914 = vmul.f32 %v8765, %v8765
      %v8915 = vmin.f32 16.0, %v8914
      %v8916 = vmul.f32 %v8915, 2.1237322e-06
      %v8917 = vadd.f32 %v8916, 0.00028619796
      %v8918 = vmul.f32 %v8915, %v8917
      %v8919 = vadd.f32 %v8918, 0.0036580483
      %v8920 = vmul.f32 %v8915, %v8919
      %v8921 = vadd.f32 %v8920, 0.05243302
      %v8922 = vmul.f32 %v8915, %v8921
      %v8923 = vadd.f32 %v8922, 0.18741608
      %v8924 = vmul.f32 %v8915, %v8923
      %v8925 = vadd.f32 %v8924, 1.1283791
      %v8926 = vmul.f32 %v8765, %v8925
      %v8927 = vmul.f32 %v8915, 3.8918573e-05
      %v8928 = vadd.f32 %v8927, 0.001143296
      %v8929 = vmul.f32 %v8915, %v8928
      %v8930 = vadd.f32 %v8929, 0.014752088
      %v8931 = vmul.f32 %v8915, %v8930
      %v8932 = vadd.f32 %v8931, 0.112945676
      %v8933 = vmul.f32 %v8915, %v8932
      %v8934 = vadd.f32 %v8933, 0.4994258
      %v8935 = vmul.f32 %v8915, %v8934
      %v8936 = vadd.f32 %v8935, 1.0
      %v8937 = vrcp.pop %v8936
      %v8938 = vmul.f32 %v8936, %v8937
      %v8939 = vsub.f32 1.0, %v8938
      %v8940 = vmul.f32 %v8937, %v8939
      %v8941 = vadd.f32 %v8937, %v8940
      %vm8942 = vweird.f32 %v8936
      %vm8943 = vweird.f32 %v8937
      %vm8944 = vmor %vm8942, %vm8943
      %v8945 = vsel %vm8944, %v8937, %v8941
      %v8946 = vand.u32 2147483647, %v8936
      %vm8947 = vcmp.eq.f32.partialorder %v8946, 8.507059e+37
      %v8948 = vand.u32 %v8936, 2147483648
      %v8949 = vor.u32 1.1754944e-38, %v8948
      %v8950 = vsel %vm8947, %v8949, %v8945
      %v8951 = vmul.f32 %v8926, %v8950
      %v8952 = vmin.f32 %v8951, 1.0
      %v8953 = vmax.f32 %v8952, -1.0
      %v8954 = vmul.f32 %v8766, %v8766
      %v8955 = vmin.f32 16.0, %v8954
      %v8956 = vmul.f32 %v8955, 2.1237322e-06
      %v8957 = vadd.f32 %v8956, 0.00028619796
      %v8958 = vmul.f32 %v8955, %v8957
      %v8959 = vadd.f32 %v8958, 0.0036580483
      %v8960 = vmul.f32 %v8955, %v8959
      %v8961 = vadd.f32 %v8960, 0.05243302
      %v8962 = vmul.f32 %v8955, %v8961
      %v8963 = vadd.f32 %v8962, 0.18741608
      %v8964 = vmul.f32 %v8955, %v8963
      %v8965 = vadd.f32 %v8964, 1.1283791
      %v8966 = vmul.f32 %v8766, %v8965
      %v8967 = vmul.f32 %v8955, 3.8918573e-05
      %v8968 = vadd.f32 %v8967, 0.001143296
      %v8969 = vmul.f32 %v8955, %v8968
      %v8970 = vadd.f32 %v8969, 0.014752088
      %v8971 = vmul.f32 %v8955, %v8970
      %v8972 = vadd.f32 %v8971, 0.112945676
      %v8973 = vmul.f32 %v8955, %v8972
      %v8974 = vadd.f32 %v8973, 0.4994258
      %v8975 = vmul.f32 %v8955, %v8974
      %v8976 = vadd.f32 %v8975, 1.0
      %v8977 = vrcp.pop %v8976
      %v8978 = vmul.f32 %v8976, %v8977
      %v8979 = vsub.f32 1.0, %v8978
      %v8980 = vmul.f32 %v8977, %v8979
      %v8981 = vadd.f32 %v8977, %v8980
      %vm8982 = vweird.f32 %v8976
      %vm8983 = vweird.f32 %v8977
      %vm8984 = vmor %vm8982, %vm8983
      %v8985 = vsel %vm8984, %v8977, %v8981
      %v8986 = vand.u32 2147483647, %v8976
      %vm8987 = vcmp.eq.f32.partialorder %v8986, 8.507059e+37
      %v8988 = vand.u32 %v8976, 2147483648
      %v8989 = vor.u32 1.1754944e-38, %v8988
      %v8990 = vsel %vm8987, %v8989, %v8985
      %v8991 = vmul.f32 %v8966, %v8990
      %v8992 = vmin.f32 %v8991, 1.0
      %v8993 = vmax.f32 %v8992, -1.0
      %v8994 = vmul.f32 %v8767, %v8767
      %v8995 = vmin.f32 16.0, %v8994
      %v8996 = vmul.f32 %v8995, 2.1237322e-06
      %v8997 = vadd.f32 %v8996, 0.00028619796
      %v8998 = vmul.f32 %v8995, %v8997
      %v8999 = vadd.f32 %v8998, 0.0036580483
      %v9000 = vmul.f32 %v8995, %v8999
      %v9001 = vadd.f32 %v9000, 0.05243302
      %v9002 = vmul.f32 %v8995, %v9001
      %v9003 = vadd.f32 %v9002, 0.18741608
      %v9004 = vmul.f32 %v8995, %v9003
      %v9005 = vadd.f32 %v9004, 1.1283791
      %v9006 = vmul.f32 %v8767, %v9005
      %v9007 = vmul.f32 %v8995, 3.8918573e-05
      %v9008 = vadd.f32 %v9007, 0.001143296
      %v9009 = vmul.f32 %v8995, %v9008
      %v9010 = vadd.f32 %v9009, 0.014752088
      %v9011 = vmul.f32 %v8995, %v9010
      %v9012 = vadd.f32 %v9011, 0.112945676
      %v9013 = vmul.f32 %v8995, %v9012
      %v9014 = vadd.f32 %v9013, 0.4994258
      %v9015 = vmul.f32 %v8995, %v9014
      %v9016 = vadd.f32 %v9015, 1.0
      %v9017 = vrcp.pop %v9016
      %v9018 = vmul.f32 %v9016, %v9017
      %v9019 = vsub.f32 1.0, %v9018
      %v9020 = vmul.f32 %v9017, %v9019
      %v9021 = vadd.f32 %v9017, %v9020
      %vm9022 = vweird.f32 %v9016
      %vm9023 = vweird.f32 %v9017
      %vm9024 = vmor %vm9022, %vm9023
      %v9025 = vsel %vm9024, %v9017, %v9021
      %v9026 = vand.u32 2147483647, %v9016
      %vm9027 = vcmp.eq.f32.partialorder %v9026, 8.507059e+37
      %v9028 = vand.u32 %v9016, 2147483648
      %v9029 = vor.u32 1.1754944e-38, %v9028
      %v9030 = vsel %vm9027, %v9029, %v9025
      %v9031 = vmul.f32 %v9006, %v9030
      %v9032 = vmin.f32 %v9031, 1.0
      %v9033 = vmax.f32 %v9032, -1.0
      %v9034 = vmul.f32 %v8768, %v8768
      %v9035 = vmin.f32 16.0, %v9034
      %v9036 = vmul.f32 %v9035, 2.1237322e-06
      %v9037 = vadd.f32 %v9036, 0.00028619796
      %v9038 = vmul.f32 %v9035, %v9037
      %v9039 = vadd.f32 %v9038, 0.0036580483
      %v9040 = vmul.f32 %v9035, %v9039
      %v9041 = vadd.f32 %v9040, 0.05243302
      %v9042 = vmul.f32 %v9035, %v9041
      %v9043 = vadd.f32 %v9042, 0.18741608
      %v9044 = vmul.f32 %v9035, %v9043
      %v9045 = vadd.f32 %v9044, 1.1283791
      %v9046 = vmul.f32 %v8768, %v9045
      %v9047 = vmul.f32 %v9035, 3.8918573e-05
      %v9048 = vadd.f32 %v9047, 0.001143296
      %v9049 = vmul.f32 %v9035, %v9048
      %v9050 = vadd.f32 %v9049, 0.014752088
      %v9051 = vmul.f32 %v9035, %v9050
      %v9052 = vadd.f32 %v9051, 0.112945676
      %v9053 = vmul.f32 %v9035, %v9052
      %v9054 = vadd.f32 %v9053, 0.4994258
      %v9055 = vmul.f32 %v9035, %v9054
      %v9056 = vadd.f32 %v9055, 1.0
      %v9057 = vrcp.pop %v9056
      %v9058 = vmul.f32 %v9056, %v9057
      %v9059 = vsub.f32 1.0, %v9058
      %v9060 = vmul.f32 %v9057, %v9059
      %v9061 = vadd.f32 %v9057, %v9060
      %vm9062 = vweird.f32 %v9056
      %vm9063 = vweird.f32 %v9057
      %vm9064 = vmor %vm9062, %vm9063
      %v9065 = vsel %vm9064, %v9057, %v9061
      %v9066 = vand.u32 2147483647, %v9056
      %vm9067 = vcmp.eq.f32.partialorder %v9066, 8.507059e+37
      %v9068 = vand.u32 %v9056, 2147483648
      %v9069 = vor.u32 1.1754944e-38, %v9068
      %v9070 = vsel %vm9067, %v9069, %v9065
      %v9071 = vmul.f32 %v9046, %v9070
      %v9072 = vmin.f32 %v9071, 1.0
      %v9073 = vmax.f32 %v9072, -1.0
      %v9074 = vmul.f32 %v8769, %v8769
      %v9075 = vmin.f32 16.0, %v9074
      %v9076 = vmul.f32 %v9075, 2.1237322e-06
      %v9077 = vadd.f32 %v9076, 0.00028619796
      %v9078 = vmul.f32 %v9075, %v9077
      %v9079 = vadd.f32 %v9078, 0.0036580483
      %v9080 = vmul.f32 %v9075, %v9079
      %v9081 = vadd.f32 %v9080, 0.05243302
      %v9082 = vmul.f32 %v9075, %v9081
      %v9083 = vadd.f32 %v9082, 0.18741608
      %v9084 = vmul.f32 %v9075, %v9083
      %v9085 = vadd.f32 %v9084, 1.1283791
      %v9086 = vmul.f32 %v8769, %v9085
      %v9087 = vmul.f32 %v9075, 3.8918573e-05
      %v9088 = vadd.f32 %v9087, 0.001143296
      %v9089 = vmul.f32 %v9075, %v9088
      %v9090 = vadd.f32 %v9089, 0.014752088
      %v9091 = vmul.f32 %v9075, %v9090
      %v9092 = vadd.f32 %v9091, 0.112945676
      %v9093 = vmul.f32 %v9075, %v9092
      %v9094 = vadd.f32 %v9093, 0.4994258
      %v9095 = vmul.f32 %v9075, %v9094
      %v9096 = vadd.f32 %v9095, 1.0
      %v9097 = vrcp.pop %v9096
      %v9098 = vmul.f32 %v9096, %v9097
      %v9099 = vsub.f32 1.0, %v9098
      %v9100 = vmul.f32 %v9097, %v9099
      %v9101 = vadd.f32 %v9097, %v9100
      %vm9102 = vweird.f32 %v9096
      %vm9103 = vweird.f32 %v9097
      %vm9104 = vmor %vm9102, %vm9103
      %v9105 = vsel %vm9104, %v9097, %v9101
      %v9106 = vand.u32 2147483647, %v9096
      %vm9107 = vcmp.eq.f32.partialorder %v9106, 8.507059e+37
      %v9108 = vand.u32 %v9096, 2147483648
      %v9109 = vor.u32 1.1754944e-38, %v9108
      %v9110 = vsel %vm9107, %v9109, %v9105
      %v9111 = vmul.f32 %v9086, %v9110
      %v9112 = vmin.f32 %v9111, 1.0
      %v9113 = vmax.f32 %v9112, -1.0
      %v9114 = vmul.f32 %v8770, %v8770
      %v9115 = vmin.f32 16.0, %v9114
      %v9116 = vmul.f32 %v9115, 2.1237322e-06
      %v9117 = vadd.f32 %v9116, 0.00028619796
      %v9118 = vmul.f32 %v9115, %v9117
      %v9119 = vadd.f32 %v9118, 0.0036580483
      %v9120 = vmul.f32 %v9115, %v9119
      %v9121 = vadd.f32 %v9120, 0.05243302
      %v9122 = vmul.f32 %v9115, %v9121
      %v9123 = vadd.f32 %v9122, 0.18741608
      %v9124 = vmul.f32 %v9115, %v9123
      %v9125 = vadd.f32 %v9124, 1.1283791
      %v9126 = vmul.f32 %v8770, %v9125
      %v9127 = vmul.f32 %v9115, 3.8918573e-05
      %v9128 = vadd.f32 %v9127, 0.001143296
      %v9129 = vmul.f32 %v9115, %v9128
      %v9130 = vadd.f32 %v9129, 0.014752088
      %v9131 = vmul.f32 %v9115, %v9130
      %v9132 = vadd.f32 %v9131, 0.112945676
      %v9133 = vmul.f32 %v9115, %v9132
      %v9134 = vadd.f32 %v9133, 0.4994258
      %v9135 = vmul.f32 %v9115, %v9134
      %v9136 = vadd.f32 %v9135, 1.0
      %v9137 = vrcp.pop %v9136
      %v9138 = vmul.f32 %v9136, %v9137
      %v9139 = vsub.f32 1.0, %v9138
      %v9140 = vmul.f32 %v9137, %v9139
      %v9141 = vadd.f32 %v9137, %v9140
      %vm9142 = vweird.f32 %v9136
      %vm9143 = vweird.f32 %v9137
      %vm9144 = vmor %vm9142, %vm9143
      %v9145 = vsel %vm9144, %v9137, %v9141
      %v9146 = vand.u32 2147483647, %v9136
      %vm9147 = vcmp.eq.f32.partialorder %v9146, 8.507059e+37
      %v9148 = vand.u32 %v9136, 2147483648
      %v9149 = vor.u32 1.1754944e-38, %v9148
      %v9150 = vsel %vm9147, %v9149, %v9145
      %v9151 = vmul.f32 %v9126, %v9150
      %v9152 = vmin.f32 %v9151, 1.0
      %v9153 = vmax.f32 %v9152, -1.0
      %v9154 = vmul.f32 %v8771, %v8771
      %v9155 = vmin.f32 16.0, %v9154
      %v9156 = vmul.f32 %v9155, 2.1237322e-06
      %v9157 = vadd.f32 %v9156, 0.00028619796
      %v9158 = vmul.f32 %v9155, %v9157
      %v9159 = vadd.f32 %v9158, 0.0036580483
      %v9160 = vmul.f32 %v9155, %v9159
      %v9161 = vadd.f32 %v9160, 0.05243302
      %v9162 = vmul.f32 %v9155, %v9161
      %v9163 = vadd.f32 %v9162, 0.18741608
      %v9164 = vmul.f32 %v9155, %v9163
      %v9165 = vadd.f32 %v9164, 1.1283791
      %v9166 = vmul.f32 %v8771, %v9165
      %v9167 = vmul.f32 %v9155, 3.8918573e-05
      %v9168 = vadd.f32 %v9167, 0.001143296
      %v9169 = vmul.f32 %v9155, %v9168
      %v9170 = vadd.f32 %v9169, 0.014752088
      %v9171 = vmul.f32 %v9155, %v9170
      %v9172 = vadd.f32 %v9171, 0.112945676
      %v9173 = vmul.f32 %v9155, %v9172
      %v9174 = vadd.f32 %v9173, 0.4994258
      %v9175 = vmul.f32 %v9155, %v9174
      %v9176 = vadd.f32 %v9175, 1.0
      %v9177 = vrcp.pop %v9176
      %v9178 = vmul.f32 %v9176, %v9177
      %v9179 = vsub.f32 1.0, %v9178
      %v9180 = vmul.f32 %v9177, %v9179
      %v9181 = vadd.f32 %v9177, %v9180
      %vm9182 = vweird.f32 %v9176
      %vm9183 = vweird.f32 %v9177
      %vm9184 = vmor %vm9182, %vm9183
      %v9185 = vsel %vm9184, %v9177, %v9181
      %v9186 = vand.u32 2147483647, %v9176
      %vm9187 = vcmp.eq.f32.partialorder %v9186, 8.507059e+37
      %v9188 = vand.u32 %v9176, 2147483648
      %v9189 = vor.u32 1.1754944e-38, %v9188
      %v9190 = vsel %vm9187, %v9189, %v9185
      %v9191 = vmul.f32 %v9166, %v9190
      %v9192 = vmin.f32 %v9191, 1.0
      %v9193 = vmax.f32 %v9192, -1.0
      %v9194 = vmul.f32 %v8772, %v8772
      %v9195 = vmin.f32 16.0, %v9194
      %v9196 = vmul.f32 %v9195, 2.1237322e-06
      %v9197 = vadd.f32 %v9196, 0.00028619796
      %v9198 = vmul.f32 %v9195, %v9197
      %v9199 = vadd.f32 %v9198, 0.0036580483
      %v9200 = vmul.f32 %v9195, %v9199
      %v9201 = vadd.f32 %v9200, 0.05243302
      %v9202 = vmul.f32 %v9195, %v9201
      %v9203 = vadd.f32 %v9202, 0.18741608
      %v9204 = vmul.f32 %v9195, %v9203
      %v9205 = vadd.f32 %v9204, 1.1283791
      %v9206 = vmul.f32 %v8772, %v9205
      %v9207 = vmul.f32 %v9195, 3.8918573e-05
      %v9208 = vadd.f32 %v9207, 0.001143296
      %v9209 = vmul.f32 %v9195, %v9208
      %v9210 = vadd.f32 %v9209, 0.014752088
      %v9211 = vmul.f32 %v9195, %v9210
      %v9212 = vadd.f32 %v9211, 0.112945676
      %v9213 = vmul.f32 %v9195, %v9212
      %v9214 = vadd.f32 %v9213, 0.4994258
      %v9215 = vmul.f32 %v9195, %v9214
      %v9216 = vadd.f32 %v9215, 1.0
      %v9217 = vrcp.pop %v9216
      %v9218 = vmul.f32 %v9216, %v9217
      %v9219 = vsub.f32 1.0, %v9218
      %v9220 = vmul.f32 %v9217, %v9219
      %v9221 = vadd.f32 %v9217, %v9220
      %vm9222 = vweird.f32 %v9216
      %vm9223 = vweird.f32 %v9217
      %vm9224 = vmor %vm9222, %vm9223
      %v9225 = vsel %vm9224, %v9217, %v9221
      %v9226 = vand.u32 2147483647, %v9216
      %vm9227 = vcmp.eq.f32.partialorder %v9226, 8.507059e+37
      %v9228 = vand.u32 %v9216, 2147483648
      %v9229 = vor.u32 1.1754944e-38, %v9228
      %v9230 = vsel %vm9227, %v9229, %v9225
      %v9231 = vmul.f32 %v9206, %v9230
      %v9232 = vmin.f32 %v9231, 1.0
      %v9233 = vmax.f32 %v9232, -1.0
      %v9234 = vmul.f32 %v8773, %v8773
      %v9235 = vmin.f32 16.0, %v9234
      %v9236 = vmul.f32 %v9235, 2.1237322e-06
      %v9237 = vadd.f32 %v9236, 0.00028619796
      %v9238 = vmul.f32 %v9235, %v9237
      %v9239 = vadd.f32 %v9238, 0.0036580483
      %v9240 = vmul.f32 %v9235, %v9239
      %v9241 = vadd.f32 %v9240, 0.05243302
      %v9242 = vmul.f32 %v9235, %v9241
      %v9243 = vadd.f32 %v9242, 0.18741608
      %v9244 = vmul.f32 %v9235, %v9243
      %v9245 = vadd.f32 %v9244, 1.1283791
      %v9246 = vmul.f32 %v8773, %v9245
      %v9247 = vmul.f32 %v9235, 3.8918573e-05
      %v9248 = vadd.f32 %v9247, 0.001143296
      %v9249 = vmul.f32 %v9235, %v9248
      %v9250 = vadd.f32 %v9249, 0.014752088
      %v9251 = vmul.f32 %v9235, %v9250
      %v9252 = vadd.f32 %v9251, 0.112945676
      %v9253 = vmul.f32 %v9235, %v9252
      %v9254 = vadd.f32 %v9253, 0.4994258
      %v9255 = vmul.f32 %v9235, %v9254
      %v9256 = vadd.f32 %v9255, 1.0
      %v9257 = vrcp.pop %v9256
      %v9258 = vmul.f32 %v9256, %v9257
      %v9259 = vsub.f32 1.0, %v9258
      %v9260 = vmul.f32 %v9257, %v9259
      %v9261 = vadd.f32 %v9257, %v9260
      %vm9262 = vweird.f32 %v9256
      %vm9263 = vweird.f32 %v9257
      %vm9264 = vmor %vm9262, %vm9263
      %v9265 = vsel %vm9264, %v9257, %v9261
      %v9266 = vand.u32 2147483647, %v9256
      %vm9267 = vcmp.eq.f32.partialorder %v9266, 8.507059e+37
      %v9268 = vand.u32 %v9256, 2147483648
      %v9269 = vor.u32 1.1754944e-38, %v9268
      %v9270 = vsel %vm9267, %v9269, %v9265
      %v9271 = vmul.f32 %v9246, %v9270
      %v9272 = vmin.f32 %v9271, 1.0
      %v9273 = vmax.f32 %v9272, -1.0
      %v9274 = vmul.f32 %v8774, %v8774
      %v9275 = vmin.f32 16.0, %v9274
      %v9276 = vmul.f32 %v9275, 2.1237322e-06
      %v9277 = vadd.f32 %v9276, 0.00028619796
      %v9278 = vmul.f32 %v9275, %v9277
      %v9279 = vadd.f32 %v9278, 0.0036580483
      %v9280 = vmul.f32 %v9275, %v9279
      %v9281 = vadd.f32 %v9280, 0.05243302
      %v9282 = vmul.f32 %v9275, %v9281
      %v9283 = vadd.f32 %v9282, 0.18741608
      %v9284 = vmul.f32 %v9275, %v9283
      %v9285 = vadd.f32 %v9284, 1.1283791
      %v9286 = vmul.f32 %v8774, %v9285
      %v9287 = vmul.f32 %v9275, 3.8918573e-05
      %v9288 = vadd.f32 %v9287, 0.001143296
      %v9289 = vmul.f32 %v9275, %v9288
      %v9290 = vadd.f32 %v9289, 0.014752088
      %v9291 = vmul.f32 %v9275, %v9290
      %v9292 = vadd.f32 %v9291, 0.112945676
      %v9293 = vmul.f32 %v9275, %v9292
      %v9294 = vadd.f32 %v9293, 0.4994258
      %v9295 = vmul.f32 %v9275, %v9294
      %v9296 = vadd.f32 %v9295, 1.0
      %v9297 = vrcp.pop %v9296
      %v9298 = vmul.f32 %v9296, %v9297
      %v9299 = vsub.f32 1.0, %v9298
      %v9300 = vmul.f32 %v9297, %v9299
      %v9301 = vadd.f32 %v9297, %v9300
      %vm9302 = vweird.f32 %v9296
      %vm9303 = vweird.f32 %v9297
      %vm9304 = vmor %vm9302, %vm9303
      %v9305 = vsel %vm9304, %v9297, %v9301
      %v9306 = vand.u32 2147483647, %v9296
      %vm9307 = vcmp.eq.f32.partialorder %v9306, 8.507059e+37
      %v9308 = vand.u32 %v9296, 2147483648
      %v9309 = vor.u32 1.1754944e-38, %v9308
      %v9310 = vsel %vm9307, %v9309, %v9305
      %v9311 = vmul.f32 %v9286, %v9310
      %v9312 = vmin.f32 %v9311, 1.0
      %v9313 = vmax.f32 %v9312, -1.0
      %v9314 = vmul.f32 %v8775, %v8775
      %v9315 = vmin.f32 16.0, %v9314
      %v9316 = vmul.f32 %v9315, 2.1237322e-06
      %v9317 = vadd.f32 %v9316, 0.00028619796
      %v9318 = vmul.f32 %v9315, %v9317
      %v9319 = vadd.f32 %v9318, 0.0036580483
      %v9320 = vmul.f32 %v9315, %v9319
      %v9321 = vadd.f32 %v9320, 0.05243302
      %v9322 = vmul.f32 %v9315, %v9321
      %v9323 = vadd.f32 %v9322, 0.18741608
      %v9324 = vmul.f32 %v9315, %v9323
      %v9325 = vadd.f32 %v9324, 1.1283791
      %v9326 = vmul.f32 %v8775, %v9325
      %v9327 = vmul.f32 %v9315, 3.8918573e-05
      %v9328 = vadd.f32 %v9327, 0.001143296
      %v9329 = vmul.f32 %v9315, %v9328
      %v9330 = vadd.f32 %v9329, 0.014752088
      %v9331 = vmul.f32 %v9315, %v9330
      %v9332 = vadd.f32 %v9331, 0.112945676
      %v9333 = vmul.f32 %v9315, %v9332
      %v9334 = vadd.f32 %v9333, 0.4994258
      %v9335 = vmul.f32 %v9315, %v9334
      %v9336 = vadd.f32 %v9335, 1.0
      %v9337 = vrcp.pop %v9336
      %v9338 = vmul.f32 %v9336, %v9337
      %v9339 = vsub.f32 1.0, %v9338
      %v9340 = vmul.f32 %v9337, %v9339
      %v9341 = vadd.f32 %v9337, %v9340
      %vm9342 = vweird.f32 %v9336
      %vm9343 = vweird.f32 %v9337
      %vm9344 = vmor %vm9342, %vm9343
      %v9345 = vsel %vm9344, %v9337, %v9341
      %v9346 = vand.u32 2147483647, %v9336
      %vm9347 = vcmp.eq.f32.partialorder %v9346, 8.507059e+37
      %v9348 = vand.u32 %v9336, 2147483648
      %v9349 = vor.u32 1.1754944e-38, %v9348
      %v9350 = vsel %vm9347, %v9349, %v9345
      %v9351 = vmul.f32 %v9326, %v9350
      %v9352 = vmin.f32 %v9351, 1.0
      %v9353 = vmax.f32 %v9352, -1.0
      %v9354 = vmul.f32 %v8776, %v8776
      %v9355 = vmin.f32 16.0, %v9354
      %v9356 = vmul.f32 %v9355, 2.1237322e-06
      %v9357 = vadd.f32 %v9356, 0.00028619796
      %v9358 = vmul.f32 %v9355, %v9357
      %v9359 = vadd.f32 %v9358, 0.0036580483
      %v9360 = vmul.f32 %v9355, %v9359
      %v9361 = vadd.f32 %v9360, 0.05243302
      %v9362 = vmul.f32 %v9355, %v9361
      %v9363 = vadd.f32 %v9362, 0.18741608
      %v9364 = vmul.f32 %v9355, %v9363
      %v9365 = vadd.f32 %v9364, 1.1283791
      %v9366 = vmul.f32 %v8776, %v9365
      %v9367 = vmul.f32 %v9355, 3.8918573e-05
      %v9368 = vadd.f32 %v9367, 0.001143296
      %v9369 = vmul.f32 %v9355, %v9368
      %v9370 = vadd.f32 %v9369, 0.014752088
      %v9371 = vmul.f32 %v9355, %v9370
      %v9372 = vadd.f32 %v9371, 0.112945676
      %v9373 = vmul.f32 %v9355, %v9372
      %v9374 = vadd.f32 %v9373, 0.4994258
      %v9375 = vmul.f32 %v9355, %v9374
      %v9376 = vadd.f32 %v9375, 1.0
      %v9377 = vrcp.pop %v9376
      %v9378 = vmul.f32 %v9376, %v9377
      %v9379 = vsub.f32 1.0, %v9378
      %v9380 = vmul.f32 %v9377, %v9379
      %v9381 = vadd.f32 %v9377, %v9380
      %vm9382 = vweird.f32 %v9376
      %vm9383 = vweird.f32 %v9377
      %vm9384 = vmor %vm9382, %vm9383
      %v9385 = vsel %vm9384, %v9377, %v9381
      %v9386 = vand.u32 2147483647, %v9376
      %vm9387 = vcmp.eq.f32.partialorder %v9386, 8.507059e+37
      %v9388 = vand.u32 %v9376, 2147483648
      %v9389 = vor.u32 1.1754944e-38, %v9388
      %v9390 = vsel %vm9387, %v9389, %v9385
      %v9391 = vmul.f32 %v9366, %v9390
      %v9392 = vmin.f32 %v9391, 1.0
      %v9393 = vmax.f32 %v9392, -1.0
      %v9394 = vmul.f32 %v8777, %v8777
      %v9395 = vmin.f32 16.0, %v9394
      %v9396 = vmul.f32 %v9395, 2.1237322e-06
      %v9397 = vadd.f32 %v9396, 0.00028619796
      %v9398 = vmul.f32 %v9395, %v9397
      %v9399 = vadd.f32 %v9398, 0.0036580483
      %v9400 = vmul.f32 %v9395, %v9399
      %v9401 = vadd.f32 %v9400, 0.05243302
      %v9402 = vmul.f32 %v9395, %v9401
      %v9403 = vadd.f32 %v9402, 0.18741608
      %v9404 = vmul.f32 %v9395, %v9403
      %v9405 = vadd.f32 %v9404, 1.1283791
      %v9406 = vmul.f32 %v8777, %v9405
      %v9407 = vmul.f32 %v9395, 3.8918573e-05
      %v9408 = vadd.f32 %v9407, 0.001143296
      %v9409 = vmul.f32 %v9395, %v9408
      %v9410 = vadd.f32 %v9409, 0.014752088
      %v9411 = vmul.f32 %v9395, %v9410
      %v9412 = vadd.f32 %v9411, 0.112945676
      %v9413 = vmul.f32 %v9395, %v9412
      %v9414 = vadd.f32 %v9413, 0.4994258
      %v9415 = vmul.f32 %v9395, %v9414
      %v9416 = vadd.f32 %v9415, 1.0
      %v9417 = vrcp.pop %v9416
      %v9418 = vmul.f32 %v9416, %v9417
      %v9419 = vsub.f32 1.0, %v9418
      %v9420 = vmul.f32 %v9417, %v9419
      %v9421 = vadd.f32 %v9417, %v9420
      %vm9422 = vweird.f32 %v9416
      %vm9423 = vweird.f32 %v9417
      %vm9424 = vmor %vm9422, %vm9423
      %v9425 = vsel %vm9424, %v9417, %v9421
      %v9426 = vand.u32 2147483647, %v9416
      %vm9427 = vcmp.eq.f32.partialorder %v9426, 8.507059e+37
      %v9428 = vand.u32 %v9416, 2147483648
      %v9429 = vor.u32 1.1754944e-38, %v9428
      %v9430 = vsel %vm9427, %v9429, %v9425
      %v9431 = vmul.f32 %v9406, %v9430
      %v9432 = vmin.f32 %v9431, 1.0
      %v9433 = vmax.f32 %v9432, -1.0
      %v9434 = vmul.f32 %v8778, %v8778
      %v9435 = vmin.f32 16.0, %v9434
      %v9436 = vmul.f32 %v9435, 2.1237322e-06
      %v9437 = vadd.f32 %v9436, 0.00028619796
      %v9438 = vmul.f32 %v9435, %v9437
      %v9439 = vadd.f32 %v9438, 0.0036580483
      %v9440 = vmul.f32 %v9435, %v9439
      %v9441 = vadd.f32 %v9440, 0.05243302
      %v9442 = vmul.f32 %v9435, %v9441
      %v9443 = vadd.f32 %v9442, 0.18741608
      %v9444 = vmul.f32 %v9435, %v9443
      %v9445 = vadd.f32 %v9444, 1.1283791
      %v9446 = vmul.f32 %v8778, %v9445
      %v9447 = vmul.f32 %v9435, 3.8918573e-05
      %v9448 = vadd.f32 %v9447, 0.001143296
      %v9449 = vmul.f32 %v9435, %v9448
      %v9450 = vadd.f32 %v9449, 0.014752088
      %v9451 = vmul.f32 %v9435, %v9450
      %v9452 = vadd.f32 %v9451, 0.112945676
      %v9453 = vmul.f32 %v9435, %v9452
      %v9454 = vadd.f32 %v9453, 0.4994258
      %v9455 = vmul.f32 %v9435, %v9454
      %v9456 = vadd.f32 %v9455, 1.0
      %v9457 = vrcp.pop %v9456
      %v9458 = vmul.f32 %v9456, %v9457
      %v9459 = vsub.f32 1.0, %v9458
      %v9460 = vmul.f32 %v9457, %v9459
      %v9461 = vadd.f32 %v9457, %v9460
      %vm9462 = vweird.f32 %v9456
      %vm9463 = vweird.f32 %v9457
      %vm9464 = vmor %vm9462, %vm9463
      %v9465 = vsel %vm9464, %v9457, %v9461
      %v9466 = vand.u32 2147483647, %v9456
      %vm9467 = vcmp.eq.f32.partialorder %v9466, 8.507059e+37
      %v9468 = vand.u32 %v9456, 2147483648
      %v9469 = vor.u32 1.1754944e-38, %v9468
      %v9470 = vsel %vm9467, %v9469, %v9465
      %v9471 = vmul.f32 %v9446, %v9470
      %v9472 = vmin.f32 %v9471, 1.0
      %v9473 = vmax.f32 %v9472, -1.0
      %v9474 = vmul.f32 %v8779, %v8779
      %v9475 = vmin.f32 16.0, %v9474
      %v9476 = vmul.f32 %v9475, 2.1237322e-06
      %v9477 = vadd.f32 %v9476, 0.00028619796
      %v9478 = vmul.f32 %v9475, %v9477
      %v9479 = vadd.f32 %v9478, 0.0036580483
      %v9480 = vmul.f32 %v9475, %v9479
      %v9481 = vadd.f32 %v9480, 0.05243302
      %v9482 = vmul.f32 %v9475, %v9481
      %v9483 = vadd.f32 %v9482, 0.18741608
      %v9484 = vmul.f32 %v9475, %v9483
      %v9485 = vadd.f32 %v9484, 1.1283791
      %v9486 = vmul.f32 %v8779, %v9485
      %v9487 = vmul.f32 %v9475, 3.8918573e-05
      %v9488 = vadd.f32 %v9487, 0.001143296
      %v9489 = vmul.f32 %v9475, %v9488
      %v9490 = vadd.f32 %v9489, 0.014752088
      %v9491 = vmul.f32 %v9475, %v9490
      %v9492 = vadd.f32 %v9491, 0.112945676
      %v9493 = vmul.f32 %v9475, %v9492
      %v9494 = vadd.f32 %v9493, 0.4994258
      %v9495 = vmul.f32 %v9475, %v9494
      %v9496 = vadd.f32 %v9495, 1.0
      %v9497 = vrcp.pop %v9496
      %v9498 = vmul.f32 %v9496, %v9497
      %v9499 = vsub.f32 1.0, %v9498
      %v9500 = vmul.f32 %v9497, %v9499
      %v9501 = vadd.f32 %v9497, %v9500
      %vm9502 = vweird.f32 %v9496
      %vm9503 = vweird.f32 %v9497
      %vm9504 = vmor %vm9502, %vm9503
      %v9505 = vsel %vm9504, %v9497, %v9501
      %v9506 = vand.u32 2147483647, %v9496
      %vm9507 = vcmp.eq.f32.partialorder %v9506, 8.507059e+37
      %v9508 = vand.u32 %v9496, 2147483648
      %v9509 = vor.u32 1.1754944e-38, %v9508
      %v9510 = vsel %vm9507, %v9509, %v9505
      %v9511 = vmul.f32 %v9486, %v9510
      %v9512 = vmin.f32 %v9511, 1.0
      %v9513 = vmax.f32 %v9512, -1.0
      %v9514 = vmul.f32 %v8780, %v8780
      %v9515 = vmin.f32 16.0, %v9514
      %v9516 = vmul.f32 %v9515, 2.1237322e-06
      %v9517 = vadd.f32 %v9516, 0.00028619796
      %v9518 = vmul.f32 %v9515, %v9517
      %v9519 = vadd.f32 %v9518, 0.0036580483
      %v9520 = vmul.f32 %v9515, %v9519
      %v9521 = vadd.f32 %v9520, 0.05243302
      %v9522 = vmul.f32 %v9515, %v9521
      %v9523 = vadd.f32 %v9522, 0.18741608
      %v9524 = vmul.f32 %v9515, %v9523
      %v9525 = vadd.f32 %v9524, 1.1283791
      %v9526 = vmul.f32 %v8780, %v9525
      %v9527 = vmul.f32 %v9515, 3.8918573e-05
      %v9528 = vadd.f32 %v9527, 0.001143296
      %v9529 = vmul.f32 %v9515, %v9528
      %v9530 = vadd.f32 %v9529, 0.014752088
      %v9531 = vmul.f32 %v9515, %v9530
      %v9532 = vadd.f32 %v9531, 0.112945676
      %v9533 = vmul.f32 %v9515, %v9532
      %v9534 = vadd.f32 %v9533, 0.4994258
      %v9535 = vmul.f32 %v9515, %v9534
      %v9536 = vadd.f32 %v9535, 1.0
      %v9537 = vrcp.pop %v9536
      %v9538 = vmul.f32 %v9536, %v9537
      %v9539 = vsub.f32 1.0, %v9538
      %v9540 = vmul.f32 %v9537, %v9539
      %v9541 = vadd.f32 %v9537, %v9540
      %vm9542 = vweird.f32 %v9536
      %vm9543 = vweird.f32 %v9537
      %vm9544 = vmor %vm9542, %vm9543
      %v9545 = vsel %vm9544, %v9537, %v9541
      %v9546 = vand.u32 2147483647, %v9536
      %vm9547 = vcmp.eq.f32.partialorder %v9546, 8.507059e+37
      %v9548 = vand.u32 %v9536, 2147483648
      %v9549 = vor.u32 1.1754944e-38, %v9548
      %v9550 = vsel %vm9547, %v9549, %v9545
      %v9551 = vmul.f32 %v9526, %v9550
      %v9552 = vmin.f32 %v9551, 1.0
      %v9553 = vmax.f32 %v9552, -1.0
      %v9554 = vmul.f32 %v8781, %v8781
      %v9555 = vmin.f32 16.0, %v9554
      %v9556 = vmul.f32 %v9555, 2.1237322e-06
      %v9557 = vadd.f32 %v9556, 0.00028619796
      %v9558 = vmul.f32 %v9555, %v9557
      %v9559 = vadd.f32 %v9558, 0.0036580483
      %v9560 = vmul.f32 %v9555, %v9559
      %v9561 = vadd.f32 %v9560, 0.05243302
      %v9562 = vmul.f32 %v9555, %v9561
      %v9563 = vadd.f32 %v9562, 0.18741608
      %v9564 = vmul.f32 %v9555, %v9563
      %v9565 = vadd.f32 %v9564, 1.1283791
      %v9566 = vmul.f32 %v8781, %v9565
      %v9567 = vmul.f32 %v9555, 3.8918573e-05
      %v9568 = vadd.f32 %v9567, 0.001143296
      %v9569 = vmul.f32 %v9555, %v9568
      %v9570 = vadd.f32 %v9569, 0.014752088
      %v9571 = vmul.f32 %v9555, %v9570
      %v9572 = vadd.f32 %v9571, 0.112945676
      %v9573 = vmul.f32 %v9555, %v9572
      %v9574 = vadd.f32 %v9573, 0.4994258
      %v9575 = vmul.f32 %v9555, %v9574
      %v9576 = vadd.f32 %v9575, 1.0
      %v9577 = vrcp.pop %v9576
      %v9578 = vmul.f32 %v9576, %v9577
      %v9579 = vsub.f32 1.0, %v9578
      %v9580 = vmul.f32 %v9577, %v9579
      %v9581 = vadd.f32 %v9577, %v9580
      %vm9582 = vweird.f32 %v9576
      %vm9583 = vweird.f32 %v9577
      %vm9584 = vmor %vm9582, %vm9583
      %v9585 = vsel %vm9584, %v9577, %v9581
      %v9586 = vand.u32 2147483647, %v9576
      %vm9587 = vcmp.eq.f32.partialorder %v9586, 8.507059e+37
      %v9588 = vand.u32 %v9576, 2147483648
      %v9589 = vor.u32 1.1754944e-38, %v9588
      %v9590 = vsel %vm9587, %v9589, %v9585
      %v9591 = vmul.f32 %v9566, %v9590
      %v9592 = vmin.f32 %v9591, 1.0
      %v9593 = vmax.f32 %v9592, -1.0
      %v9594 = vmul.f32 %v8782, %v8782
      %v9595 = vmin.f32 16.0, %v9594
      %v9596 = vmul.f32 %v9595, 2.1237322e-06
      %v9597 = vadd.f32 %v9596, 0.00028619796
      %v9598 = vmul.f32 %v9595, %v9597
      %v9599 = vadd.f32 %v9598, 0.0036580483
      %v9600 = vmul.f32 %v9595, %v9599
      %v9601 = vadd.f32 %v9600, 0.05243302
      %v9602 = vmul.f32 %v9595, %v9601
      %v9603 = vadd.f32 %v9602, 0.18741608
      %v9604 = vmul.f32 %v9595, %v9603
      %v9605 = vadd.f32 %v9604, 1.1283791
      %v9606 = vmul.f32 %v8782, %v9605
      %v9607 = vmul.f32 %v9595, 3.8918573e-05
      %v9608 = vadd.f32 %v9607, 0.001143296
      %v9609 = vmul.f32 %v9595, %v9608
      %v9610 = vadd.f32 %v9609, 0.014752088
      %v9611 = vmul.f32 %v9595, %v9610
      %v9612 = vadd.f32 %v9611, 0.112945676
      %v9613 = vmul.f32 %v9595, %v9612
      %v9614 = vadd.f32 %v9613, 0.4994258
      %v9615 = vmul.f32 %v9595, %v9614
      %v9616 = vadd.f32 %v9615, 1.0
      %v9617 = vrcp.pop %v9616
      %v9618 = vmul.f32 %v9616, %v9617
      %v9619 = vsub.f32 1.0, %v9618
      %v9620 = vmul.f32 %v9617, %v9619
      %v9621 = vadd.f32 %v9617, %v9620
      %vm9622 = vweird.f32 %v9616
      %vm9623 = vweird.f32 %v9617
      %vm9624 = vmor %vm9622, %vm9623
      %v9625 = vsel %vm9624, %v9617, %v9621
      %v9626 = vand.u32 2147483647, %v9616
      %vm9627 = vcmp.eq.f32.partialorder %v9626, 8.507059e+37
      %v9628 = vand.u32 %v9616, 2147483648
      %v9629 = vor.u32 1.1754944e-38, %v9628
      %v9630 = vsel %vm9627, %v9629, %v9625
      %v9631 = vmul.f32 %v9606, %v9630
      %v9632 = vmin.f32 %v9631, 1.0
      %v9633 = vmax.f32 %v9632, -1.0
      %v9634 = vmul.f32 %v8783, %v8783
      %v9635 = vmin.f32 16.0, %v9634
      %v9636 = vmul.f32 %v9635, 2.1237322e-06
      %v9637 = vadd.f32 %v9636, 0.00028619796
      %v9638 = vmul.f32 %v9635, %v9637
      %v9639 = vadd.f32 %v9638, 0.0036580483
      %v9640 = vmul.f32 %v9635, %v9639
      %v9641 = vadd.f32 %v9640, 0.05243302
      %v9642 = vmul.f32 %v9635, %v9641
      %v9643 = vadd.f32 %v9642, 0.18741608
      %v9644 = vmul.f32 %v9635, %v9643
      %v9645 = vadd.f32 %v9644, 1.1283791
      %v9646 = vmul.f32 %v8783, %v9645
      %v9647 = vmul.f32 %v9635, 3.8918573e-05
      %v9648 = vadd.f32 %v9647, 0.001143296
      %v9649 = vmul.f32 %v9635, %v9648
      %v9650 = vadd.f32 %v9649, 0.014752088
      %v9651 = vmul.f32 %v9635, %v9650
      %v9652 = vadd.f32 %v9651, 0.112945676
      %v9653 = vmul.f32 %v9635, %v9652
      %v9654 = vadd.f32 %v9653, 0.4994258
      %v9655 = vmul.f32 %v9635, %v9654
      %v9656 = vadd.f32 %v9655, 1.0
      %v9657 = vrcp.pop %v9656
      %v9658 = vmul.f32 %v9656, %v9657
      %v9659 = vsub.f32 1.0, %v9658
      %v9660 = vmul.f32 %v9657, %v9659
      %v9661 = vadd.f32 %v9657, %v9660
      %vm9662 = vweird.f32 %v9656
      %vm9663 = vweird.f32 %v9657
      %vm9664 = vmor %vm9662, %vm9663
      %v9665 = vsel %vm9664, %v9657, %v9661
      %v9666 = vand.u32 2147483647, %v9656
      %vm9667 = vcmp.eq.f32.partialorder %v9666, 8.507059e+37
      %v9668 = vand.u32 %v9656, 2147483648
      %v9669 = vor.u32 1.1754944e-38, %v9668
      %v9670 = vsel %vm9667, %v9669, %v9665
      %v9671 = vmul.f32 %v9646, %v9670
      %v9672 = vmin.f32 %v9671, 1.0
      %v9673 = vmax.f32 %v9672, -1.0
      %v9674 = vmul.f32 %v8784, %v8784
      %v9675 = vmin.f32 16.0, %v9674
      %v9676 = vmul.f32 %v9675, 2.1237322e-06
      %v9677 = vadd.f32 %v9676, 0.00028619796
      %v9678 = vmul.f32 %v9675, %v9677
      %v9679 = vadd.f32 %v9678, 0.0036580483
      %v9680 = vmul.f32 %v9675, %v9679
      %v9681 = vadd.f32 %v9680, 0.05243302
      %v9682 = vmul.f32 %v9675, %v9681
      %v9683 = vadd.f32 %v9682, 0.18741608
      %v9684 = vmul.f32 %v9675, %v9683
      %v9685 = vadd.f32 %v9684, 1.1283791
      %v9686 = vmul.f32 %v8784, %v9685
      %v9687 = vmul.f32 %v9675, 3.8918573e-05
      %v9688 = vadd.f32 %v9687, 0.001143296
      %v9689 = vmul.f32 %v9675, %v9688
      %v9690 = vadd.f32 %v9689, 0.014752088
      %v9691 = vmul.f32 %v9675, %v9690
      %v9692 = vadd.f32 %v9691, 0.112945676
      %v9693 = vmul.f32 %v9675, %v9692
      %v9694 = vadd.f32 %v9693, 0.4994258
      %v9695 = vmul.f32 %v9675, %v9694
      %v9696 = vadd.f32 %v9695, 1.0
      %v9697 = vrcp.pop %v9696
      %v9698 = vmul.f32 %v9696, %v9697
      %v9699 = vsub.f32 1.0, %v9698
      %v9700 = vmul.f32 %v9697, %v9699
      %v9701 = vadd.f32 %v9697, %v9700
      %vm9702 = vweird.f32 %v9696
      %vm9703 = vweird.f32 %v9697
      %vm9704 = vmor %vm9702, %vm9703
      %v9705 = vsel %vm9704, %v9697, %v9701
      %v9706 = vand.u32 2147483647, %v9696
      %vm9707 = vcmp.eq.f32.partialorder %v9706, 8.507059e+37
      %v9708 = vand.u32 %v9696, 2147483648
      %v9709 = vor.u32 1.1754944e-38, %v9708
      %v9710 = vsel %vm9707, %v9709, %v9705
      %v9711 = vmul.f32 %v9686, %v9710
      %v9712 = vmin.f32 %v9711, 1.0
      %v9713 = vmax.f32 %v9712, -1.0
      %v9714 = vmul.f32 %v8785, %v8785
      %v9715 = vmin.f32 16.0, %v9714
      %v9716 = vmul.f32 %v9715, 2.1237322e-06
      %v9717 = vadd.f32 %v9716, 0.00028619796
      %v9718 = vmul.f32 %v9715, %v9717
      %v9719 = vadd.f32 %v9718, 0.0036580483
      %v9720 = vmul.f32 %v9715, %v9719
      %v9721 = vadd.f32 %v9720, 0.05243302
      %v9722 = vmul.f32 %v9715, %v9721
      %v9723 = vadd.f32 %v9722, 0.18741608
      %v9724 = vmul.f32 %v9715, %v9723
      %v9725 = vadd.f32 %v9724, 1.1283791
      %v9726 = vmul.f32 %v8785, %v9725
      %v9727 = vmul.f32 %v9715, 3.8918573e-05
      %v9728 = vadd.f32 %v9727, 0.001143296
      %v9729 = vmul.f32 %v9715, %v9728
      %v9730 = vadd.f32 %v9729, 0.014752088
      %v9731 = vmul.f32 %v9715, %v9730
      %v9732 = vadd.f32 %v9731, 0.112945676
      %v9733 = vmul.f32 %v9715, %v9732
      %v9734 = vadd.f32 %v9733, 0.4994258
      %v9735 = vmul.f32 %v9715, %v9734
      %v9736 = vadd.f32 %v9735, 1.0
      %v9737 = vrcp.pop %v9736
      %v9738 = vmul.f32 %v9736, %v9737
      %v9739 = vsub.f32 1.0, %v9738
      %v9740 = vmul.f32 %v9737, %v9739
      %v9741 = vadd.f32 %v9737, %v9740
      %vm9742 = vweird.f32 %v9736
      %vm9743 = vweird.f32 %v9737
      %vm9744 = vmor %vm9742, %vm9743
      %v9745 = vsel %vm9744, %v9737, %v9741
      %v9746 = vand.u32 2147483647, %v9736
      %vm9747 = vcmp.eq.f32.partialorder %v9746, 8.507059e+37
      %v9748 = vand.u32 %v9736, 2147483648
      %v9749 = vor.u32 1.1754944e-38, %v9748
      %v9750 = vsel %vm9747, %v9749, %v9745
      %v9751 = vmul.f32 %v9726, %v9750
      %v9752 = vmin.f32 %v9751, 1.0
      %v9753 = vmax.f32 %v9752, -1.0
      %v9754 = vmul.f32 %v8786, %v8786
      %v9755 = vmin.f32 16.0, %v9754
      %v9756 = vmul.f32 %v9755, 2.1237322e-06
      %v9757 = vadd.f32 %v9756, 0.00028619796
      %v9758 = vmul.f32 %v9755, %v9757
      %v9759 = vadd.f32 %v9758, 0.0036580483
      %v9760 = vmul.f32 %v9755, %v9759
      %v9761 = vadd.f32 %v9760, 0.05243302
      %v9762 = vmul.f32 %v9755, %v9761
      %v9763 = vadd.f32 %v9762, 0.18741608
      %v9764 = vmul.f32 %v9755, %v9763
      %v9765 = vadd.f32 %v9764, 1.1283791
      %v9766 = vmul.f32 %v8786, %v9765
      %v9767 = vmul.f32 %v9755, 3.8918573e-05
      %v9768 = vadd.f32 %v9767, 0.001143296
      %v9769 = vmul.f32 %v9755, %v9768
      %v9770 = vadd.f32 %v9769, 0.014752088
      %v9771 = vmul.f32 %v9755, %v9770
      %v9772 = vadd.f32 %v9771, 0.112945676
      %v9773 = vmul.f32 %v9755, %v9772
      %v9774 = vadd.f32 %v9773, 0.4994258
      %v9775 = vmul.f32 %v9755, %v9774
      %v9776 = vadd.f32 %v9775, 1.0
      %v9777 = vrcp.pop %v9776
      %v9778 = vmul.f32 %v9776, %v9777
      %v9779 = vsub.f32 1.0, %v9778
      %v9780 = vmul.f32 %v9777, %v9779
      %v9781 = vadd.f32 %v9777, %v9780
      %vm9782 = vweird.f32 %v9776
      %vm9783 = vweird.f32 %v9777
      %vm9784 = vmor %vm9782, %vm9783
      %v9785 = vsel %vm9784, %v9777, %v9781
      %v9786 = vand.u32 2147483647, %v9776
      %vm9787 = vcmp.eq.f32.partialorder %v9786, 8.507059e+37
      %v9788 = vand.u32 %v9776, 2147483648
      %v9789 = vor.u32 1.1754944e-38, %v9788
      %v9790 = vsel %vm9787, %v9789, %v9785
      %v9791 = vmul.f32 %v9766, %v9790
      %v9792 = vmin.f32 %v9791, 1.0
      %v9793 = vmax.f32 %v9792, -1.0
      %v9794 = vmul.f32 %v8787, %v8787
      %v9795 = vmin.f32 16.0, %v9794
      %v9796 = vmul.f32 %v9795, 2.1237322e-06
      %v9797 = vadd.f32 %v9796, 0.00028619796
      %v9798 = vmul.f32 %v9795, %v9797
      %v9799 = vadd.f32 %v9798, 0.0036580483
      %v9800 = vmul.f32 %v9795, %v9799
      %v9801 = vadd.f32 %v9800, 0.05243302
      %v9802 = vmul.f32 %v9795, %v9801
      %v9803 = vadd.f32 %v9802, 0.18741608
      %v9804 = vmul.f32 %v9795, %v9803
      %v9805 = vadd.f32 %v9804, 1.1283791
      %v9806 = vmul.f32 %v8787, %v9805
      %v9807 = vmul.f32 %v9795, 3.8918573e-05
      %v9808 = vadd.f32 %v9807, 0.001143296
      %v9809 = vmul.f32 %v9795, %v9808
      %v9810 = vadd.f32 %v9809, 0.014752088
      %v9811 = vmul.f32 %v9795, %v9810
      %v9812 = vadd.f32 %v9811, 0.112945676
      %v9813 = vmul.f32 %v9795, %v9812
      %v9814 = vadd.f32 %v9813, 0.4994258
      %v9815 = vmul.f32 %v9795, %v9814
      %v9816 = vadd.f32 %v9815, 1.0
      %v9817 = vrcp.pop %v9816
      %v9818 = vmul.f32 %v9816, %v9817
      %v9819 = vsub.f32 1.0, %v9818
      %v9820 = vmul.f32 %v9817, %v9819
      %v9821 = vadd.f32 %v9817, %v9820
      %vm9822 = vweird.f32 %v9816
      %vm9823 = vweird.f32 %v9817
      %vm9824 = vmor %vm9822, %vm9823
      %v9825 = vsel %vm9824, %v9817, %v9821
      %v9826 = vand.u32 2147483647, %v9816
      %vm9827 = vcmp.eq.f32.partialorder %v9826, 8.507059e+37
      %v9828 = vand.u32 %v9816, 2147483648
      %v9829 = vor.u32 1.1754944e-38, %v9828
      %v9830 = vsel %vm9827, %v9829, %v9825
      %v9831 = vmul.f32 %v9806, %v9830
      %v9832 = vmin.f32 %v9831, 1.0
      %v9833 = vmax.f32 %v9832, -1.0
      %v9834 = vmul.f32 %v8788, %v8788
      %v9835 = vmin.f32 16.0, %v9834
      %v9836 = vmul.f32 %v9835, 2.1237322e-06
      %v9837 = vadd.f32 %v9836, 0.00028619796
      %v9838 = vmul.f32 %v9835, %v9837
      %v9839 = vadd.f32 %v9838, 0.0036580483
      %v9840 = vmul.f32 %v9835, %v9839
      %v9841 = vadd.f32 %v9840, 0.05243302
      %v9842 = vmul.f32 %v9835, %v9841
      %v9843 = vadd.f32 %v9842, 0.18741608
      %v9844 = vmul.f32 %v9835, %v9843
      %v9845 = vadd.f32 %v9844, 1.1283791
      %v9846 = vmul.f32 %v8788, %v9845
      %v9847 = vmul.f32 %v9835, 3.8918573e-05
      %v9848 = vadd.f32 %v9847, 0.001143296
      %v9849 = vmul.f32 %v9835, %v9848
      %v9850 = vadd.f32 %v9849, 0.014752088
      %v9851 = vmul.f32 %v9835, %v9850
      %v9852 = vadd.f32 %v9851, 0.112945676
      %v9853 = vmul.f32 %v9835, %v9852
      %v9854 = vadd.f32 %v9853, 0.4994258
      %v9855 = vmul.f32 %v9835, %v9854
      %v9856 = vadd.f32 %v9855, 1.0
      %v9857 = vrcp.pop %v9856
      %v9858 = vmul.f32 %v9856, %v9857
      %v9859 = vsub.f32 1.0, %v9858
      %v9860 = vmul.f32 %v9857, %v9859
      %v9861 = vadd.f32 %v9857, %v9860
      %vm9862 = vweird.f32 %v9856
      %vm9863 = vweird.f32 %v9857
      %vm9864 = vmor %vm9862, %vm9863
      %v9865 = vsel %vm9864, %v9857, %v9861
      %v9866 = vand.u32 2147483647, %v9856
      %vm9867 = vcmp.eq.f32.partialorder %v9866, 8.507059e+37
      %v9868 = vand.u32 %v9856, 2147483648
      %v9869 = vor.u32 1.1754944e-38, %v9868
      %v9870 = vsel %vm9867, %v9869, %v9865
      %v9871 = vmul.f32 %v9846, %v9870
      %v9872 = vmin.f32 %v9871, 1.0
      %v9873 = vmax.f32 %v9872, -1.0
      %v9874 = vmul.f32 %v8789, %v8789
      %v9875 = vmin.f32 16.0, %v9874
      %v9876 = vmul.f32 %v9875, 2.1237322e-06
      %v9877 = vadd.f32 %v9876, 0.00028619796
      %v9878 = vmul.f32 %v9875, %v9877
      %v9879 = vadd.f32 %v9878, 0.0036580483
      %v9880 = vmul.f32 %v9875, %v9879
      %v9881 = vadd.f32 %v9880, 0.05243302
      %v9882 = vmul.f32 %v9875, %v9881
      %v9883 = vadd.f32 %v9882, 0.18741608
      %v9884 = vmul.f32 %v9875, %v9883
      %v9885 = vadd.f32 %v9884, 1.1283791
      %v9886 = vmul.f32 %v8789, %v9885
      %v9887 = vmul.f32 %v9875, 3.8918573e-05
      %v9888 = vadd.f32 %v9887, 0.001143296
      %v9889 = vmul.f32 %v9875, %v9888
      %v9890 = vadd.f32 %v9889, 0.014752088
      %v9891 = vmul.f32 %v9875, %v9890
      %v9892 = vadd.f32 %v9891, 0.112945676
      %v9893 = vmul.f32 %v9875, %v9892
      %v9894 = vadd.f32 %v9893, 0.4994258
      %v9895 = vmul.f32 %v9875, %v9894
      %v9896 = vadd.f32 %v9895, 1.0
      %v9897 = vrcp.pop %v9896
      %v9898 = vmul.f32 %v9896, %v9897
      %v9899 = vsub.f32 1.0, %v9898
      %v9900 = vmul.f32 %v9897, %v9899
      %v9901 = vadd.f32 %v9897, %v9900
      %vm9902 = vweird.f32 %v9896
      %vm9903 = vweird.f32 %v9897
      %vm9904 = vmor %vm9902, %vm9903
      %v9905 = vsel %vm9904, %v9897, %v9901
      %v9906 = vand.u32 2147483647, %v9896
      %vm9907 = vcmp.eq.f32.partialorder %v9906, 8.507059e+37
      %v9908 = vand.u32 %v9896, 2147483648
      %v9909 = vor.u32 1.1754944e-38, %v9908
      %v9910 = vsel %vm9907, %v9909, %v9905
      %v9911 = vmul.f32 %v9886, %v9910
      %v9912 = vmin.f32 %v9911, 1.0
      %v9913 = vmax.f32 %v9912, -1.0
      %v9914 = vmul.f32 %v8790, %v8790
      %v9915 = vmin.f32 16.0, %v9914
      %v9916 = vmul.f32 %v9915, 2.1237322e-06
      %v9917 = vadd.f32 %v9916, 0.00028619796
      %v9918 = vmul.f32 %v9915, %v9917
      %v9919 = vadd.f32 %v9918, 0.0036580483
      %v9920 = vmul.f32 %v9915, %v9919
      %v9921 = vadd.f32 %v9920, 0.05243302
      %v9922 = vmul.f32 %v9915, %v9921
      %v9923 = vadd.f32 %v9922, 0.18741608
      %v9924 = vmul.f32 %v9915, %v9923
      %v9925 = vadd.f32 %v9924, 1.1283791
      %v9926 = vmul.f32 %v8790, %v9925
      %v9927 = vmul.f32 %v9915, 3.8918573e-05
      %v9928 = vadd.f32 %v9927, 0.001143296
      %v9929 = vmul.f32 %v9915, %v9928
      %v9930 = vadd.f32 %v9929, 0.014752088
      %v9931 = vmul.f32 %v9915, %v9930
      %v9932 = vadd.f32 %v9931, 0.112945676
      %v9933 = vmul.f32 %v9915, %v9932
      %v9934 = vadd.f32 %v9933, 0.4994258
      %v9935 = vmul.f32 %v9915, %v9934
      %v9936 = vadd.f32 %v9935, 1.0
      %v9937 = vrcp.pop %v9936
      %v9938 = vmul.f32 %v9936, %v9937
      %v9939 = vsub.f32 1.0, %v9938
      %v9940 = vmul.f32 %v9937, %v9939
      %v9941 = vadd.f32 %v9937, %v9940
      %vm9942 = vweird.f32 %v9936
      %vm9943 = vweird.f32 %v9937
      %vm9944 = vmor %vm9942, %vm9943
      %v9945 = vsel %vm9944, %v9937, %v9941
      %v9946 = vand.u32 2147483647, %v9936
      %vm9947 = vcmp.eq.f32.partialorder %v9946, 8.507059e+37
      %v9948 = vand.u32 %v9936, 2147483648
      %v9949 = vor.u32 1.1754944e-38, %v9948
      %v9950 = vsel %vm9947, %v9949, %v9945
      %v9951 = vmul.f32 %v9926, %v9950
      %v9952 = vmin.f32 %v9951, 1.0
      %v9953 = vmax.f32 %v9952, -1.0
      %v9954 = vmul.f32 %v8791, %v8791
      %v9955 = vmin.f32 16.0, %v9954
      %v9956 = vmul.f32 %v9955, 2.1237322e-06
      %v9957 = vadd.f32 %v9956, 0.00028619796
      %v9958 = vmul.f32 %v9955, %v9957
      %v9959 = vadd.f32 %v9958, 0.0036580483
      %v9960 = vmul.f32 %v9955, %v9959
      %v9961 = vadd.f32 %v9960, 0.05243302
      %v9962 = vmul.f32 %v9955, %v9961
      %v9963 = vadd.f32 %v9962, 0.18741608
      %v9964 = vmul.f32 %v9955, %v9963
      %v9965 = vadd.f32 %v9964, 1.1283791
      %v9966 = vmul.f32 %v8791, %v9965
      %v9967 = vmul.f32 %v9955, 3.8918573e-05
      %v9968 = vadd.f32 %v9967, 0.001143296
      %v9969 = vmul.f32 %v9955, %v9968
      %v9970 = vadd.f32 %v9969, 0.014752088
      %v9971 = vmul.f32 %v9955, %v9970
      %v9972 = vadd.f32 %v9971, 0.112945676
      %v9973 = vmul.f32 %v9955, %v9972
      %v9974 = vadd.f32 %v9973, 0.4994258
      %v9975 = vmul.f32 %v9955, %v9974
      %v9976 = vadd.f32 %v9975, 1.0
      %v9977 = vrcp.pop %v9976
      %v9978 = vmul.f32 %v9976, %v9977
      %v9979 = vsub.f32 1.0, %v9978
      %v9980 = vmul.f32 %v9977, %v9979
      %v9981 = vadd.f32 %v9977, %v9980
      %vm9982 = vweird.f32 %v9976
      %vm9983 = vweird.f32 %v9977
      %vm9984 = vmor %vm9982, %vm9983
      %v9985 = vsel %vm9984, %v9977, %v9981
      %v9986 = vand.u32 2147483647, %v9976
      %vm9987 = vcmp.eq.f32.partialorder %v9986, 8.507059e+37
      %v9988 = vand.u32 %v9976, 2147483648
      %v9989 = vor.u32 1.1754944e-38, %v9988
      %v9990 = vsel %vm9987, %v9989, %v9985
      %v9991 = vmul.f32 %v9966, %v9990
      %v9992 = vmin.f32 %v9991, 1.0
      %v9993 = vmax.f32 %v9992, -1.0
      %v9994 = vmul.f32 %v8792, %v8792
      %v9995 = vmin.f32 16.0, %v9994
      %v9996 = vmul.f32 %v9995, 2.1237322e-06
      %v9997 = vadd.f32 %v9996, 0.00028619796
      %v9998 = vmul.f32 %v9995, %v9997
      %v9999 = vadd.f32 %v9998, 0.0036580483
      %v10000 = vmul.f32 %v9995, %v9999
      %v10001 = vadd.f32 %v10000, 0.05243302
      %v10002 = vmul.f32 %v9995, %v10001
      %v10003 = vadd.f32 %v10002, 0.18741608
      %v10004 = vmul.f32 %v9995, %v10003
      %v10005 = vadd.f32 %v10004, 1.1283791
      %v10006 = vmul.f32 %v8792, %v10005
      %v10007 = vmul.f32 %v9995, 3.8918573e-05
      %v10008 = vadd.f32 %v10007, 0.001143296
      %v10009 = vmul.f32 %v9995, %v10008
      %v10010 = vadd.f32 %v10009, 0.014752088
      %v10011 = vmul.f32 %v9995, %v10010
      %v10012 = vadd.f32 %v10011, 0.112945676
      %v10013 = vmul.f32 %v9995, %v10012
      %v10014 = vadd.f32 %v10013, 0.4994258
      %v10015 = vmul.f32 %v9995, %v10014
      %v10016 = vadd.f32 %v10015, 1.0
      %v10017 = vrcp.pop %v10016
      %v10018 = vmul.f32 %v10016, %v10017
      %v10019 = vsub.f32 1.0, %v10018
      %v10020 = vmul.f32 %v10017, %v10019
      %v10021 = vadd.f32 %v10017, %v10020
      %vm10022 = vweird.f32 %v10016
      %vm10023 = vweird.f32 %v10017
      %vm10024 = vmor %vm10022, %vm10023
      %v10025 = vsel %vm10024, %v10017, %v10021
      %v10026 = vand.u32 2147483647, %v10016
      %vm10027 = vcmp.eq.f32.partialorder %v10026, 8.507059e+37
      %v10028 = vand.u32 %v10016, 2147483648
      %v10029 = vor.u32 1.1754944e-38, %v10028
      %v10030 = vsel %vm10027, %v10029, %v10025
      %v10031 = vmul.f32 %v10006, %v10030
      %v10032 = vmin.f32 %v10031, 1.0
      %v10033 = vmax.f32 %v10032, -1.0
      %v10034 = vmul.f32 %v8793, %v8793
      %v10035 = vmin.f32 16.0, %v10034
      %v10036 = vmul.f32 %v10035, 2.1237322e-06
      %v10037 = vadd.f32 %v10036, 0.00028619796
      %v10038 = vmul.f32 %v10035, %v10037
      %v10039 = vadd.f32 %v10038, 0.0036580483
      %v10040 = vmul.f32 %v10035, %v10039
      %v10041 = vadd.f32 %v10040, 0.05243302
      %v10042 = vmul.f32 %v10035, %v10041
      %v10043 = vadd.f32 %v10042, 0.18741608
      %v10044 = vmul.f32 %v10035, %v10043
      %v10045 = vadd.f32 %v10044, 1.1283791
      %v10046 = vmul.f32 %v8793, %v10045
      %v10047 = vmul.f32 %v10035, 3.8918573e-05
      %v10048 = vadd.f32 %v10047, 0.001143296
      %v10049 = vmul.f32 %v10035, %v10048
      %v10050 = vadd.f32 %v10049, 0.014752088
      %v10051 = vmul.f32 %v10035, %v10050
      %v10052 = vadd.f32 %v10051, 0.112945676
      %v10053 = vmul.f32 %v10035, %v10052
      %v10054 = vadd.f32 %v10053, 0.4994258
      %v10055 = vmul.f32 %v10035, %v10054
      %v10056 = vadd.f32 %v10055, 1.0
      %v10057 = vrcp.pop %v10056
      %v10058 = vmul.f32 %v10056, %v10057
      %v10059 = vsub.f32 1.0, %v10058
      %v10060 = vmul.f32 %v10057, %v10059
      %v10061 = vadd.f32 %v10057, %v10060
      %vm10062 = vweird.f32 %v10056
      %vm10063 = vweird.f32 %v10057
      %vm10064 = vmor %vm10062, %vm10063
      %v10065 = vsel %vm10064, %v10057, %v10061
      %v10066 = vand.u32 2147483647, %v10056
      %vm10067 = vcmp.eq.f32.partialorder %v10066, 8.507059e+37
      %v10068 = vand.u32 %v10056, 2147483648
      %v10069 = vor.u32 1.1754944e-38, %v10068
      %v10070 = vsel %vm10067, %v10069, %v10065
      %v10071 = vmul.f32 %v10046, %v10070
      %v10072 = vmin.f32 %v10071, 1.0
      %v10073 = vmax.f32 %v10072, -1.0
      %v10074 = vadd.f32 %v8833, 1.0
      %v10075 = vadd.f32 %v8873, 1.0
      %v10076 = vadd.f32 %v8913, 1.0
      %v10077 = vadd.f32 %v8953, 1.0
      %v10078 = vadd.f32 %v8993, 1.0
      %v10079 = vadd.f32 %v9033, 1.0
      %v10080 = vadd.f32 %v9073, 1.0
      %v10081 = vadd.f32 %v9113, 1.0
      %v10082 = vadd.f32 %v9153, 1.0
      %v10083 = vadd.f32 %v9193, 1.0
      %v10084 = vadd.f32 %v9233, 1.0
      %v10085 = vadd.f32 %v9273, 1.0
      %v10086 = vadd.f32 %v9313, 1.0
      %v10087 = vadd.f32 %v9353, 1.0
      %v10088 = vadd.f32 %v9393, 1.0
      %v10089 = vadd.f32 %v9433, 1.0
      %v10090 = vadd.f32 %v9473, 1.0
      %v10091 = vadd.f32 %v9513, 1.0
      %v10092 = vadd.f32 %v9553, 1.0
      %v10093 = vadd.f32 %v9593, 1.0
      %v10094 = vadd.f32 %v9633, 1.0
      %v10095 = vadd.f32 %v9673, 1.0
      %v10096 = vadd.f32 %v9713, 1.0
      %v10097 = vadd.f32 %v9753, 1.0
      %v10098 = vadd.f32 %v9793, 1.0
      %v10099 = vadd.f32 %v9833, 1.0
      %v10100 = vadd.f32 %v9873, 1.0
      %v10101 = vadd.f32 %v9913, 1.0
      %v10102 = vadd.f32 %v9953, 1.0
      %v10103 = vadd.f32 %v9993, 1.0
      %v10104 = vadd.f32 %v10033, 1.0
      %v10105 = vadd.f32 %v10073, 1.0
      %v10106 = vmul.f32 %v8730, %v10074
      %v10107 = vmul.f32 %v8731, %v10075
      %v10108 = vmul.f32 %v8732, %v10076
      %v10109 = vmul.f32 %v8733, %v10077
      %v10110 = vmul.f32 %v8734, %v10078
      %v10111 = vmul.f32 %v8735, %v10079
      %v10112 = vmul.f32 %v8736, %v10080
      %v10113 = vmul.f32 %v8737, %v10081
      %v10114 = vmul.f32 %v8738, %v10082
      %v10115 = vmul.f32 %v8739, %v10083
      %v10116 = vmul.f32 %v8740, %v10084
      %v10117 = vmul.f32 %v8741, %v10085
      %v10118 = vmul.f32 %v8742, %v10086
      %v10119 = vmul.f32 %v8743, %v10087
      %v10120 = vmul.f32 %v8744, %v10088
      %v10121 = vmul.f32 %v8745, %v10089
      %v10122 = vmul.f32 %v8746, %v10090
      %v10123 = vmul.f32 %v8747, %v10091
      %v10124 = vmul.f32 %v8748, %v10092
      %v10125 = vmul.f32 %v8749, %v10093
      %v10126 = vmul.f32 %v8750, %v10094
      %v10127 = vmul.f32 %v8751, %v10095
      %v10128 = vmul.f32 %v8752, %v10096
      %v10129 = vmul.f32 %v8753, %v10097
      %v10130 = vmul.f32 %v8754, %v10098
      %v10131 = vmul.f32 %v8755, %v10099
      %v10132 = vmul.f32 %v8756, %v10100
      %v10133 = vmul.f32 %v8757, %v10101
      %v10134 = vmul.f32 %v8758, %v10102
      %v10135 = vmul.f32 %v8759, %v10103
      %v10136 = vmul.f32 %v8760, %v10104
      %v10137 = vmul.f32 %v8761, %v10105
      %v10138 = vld [vmem:[%s13] sm:$0xff]
      %v10139 = vld [vmem:[%s13 + $0x8] sm:$0xff]
      %v10140 = vld [vmem:[%s13 + $0x10] sm:$0xff]
      %v10141 = vld [vmem:[%s13 + $0x18] sm:$0xff]
      %v10142 = vld [vmem:[%s13 + $0x20] sm:$0xff]
      %v10143 = vld [vmem:[%s13 + $0x28] sm:$0xff]
      %v10144 = vld [vmem:[%s13 + $0x30] sm:$0xff]
      %v10145 = vld [vmem:[%s13 + $0x38] sm:$0xff]
      %v10146 = vld [vmem:[%s13 + $0x40] sm:$0xff]
      %v10147 = vld [vmem:[%s13 + $0x48] sm:$0xff]
      %v10148 = vld [vmem:[%s13 + $0x50] sm:$0xff]
      %v10149 = vld [vmem:[%s13 + $0x58] sm:$0xff]
      %v10150 = vld [vmem:[%s13 + $0x60] sm:$0xff]
      %v10151 = vld [vmem:[%s13 + $0x68] sm:$0xff]
      %v10152 = vld [vmem:[%s13 + $0x70] sm:$0xff]
      %v10153 = vld [vmem:[%s13 + $0x78] sm:$0xff]
      %v10154 = vld [vmem:[%s14] sm:$0x1]
      %v10156 = vperm.slane %v10154, 0
      %10158 = vmatpush.msra.mxu0 %v10153
      %10159 = vmatpush.msra.mxu0 %v10152
      %10160 = vmatpush.msra.mxu0 %v10151
      %10161 = vmatpush.msra.mxu0 %v10150
      %10162 = vmatpush.msra.mxu0 %v10149
      %10163 = vmatpush.msra.mxu0 %v10148
      %10164 = vmatpush.msra.mxu0 %v10147
      %10165 = vmatpush.msra.mxu0 %v10146
      %10166 = vmatpush.msra.mxu0 %v10145
      %10167 = vmatpush.msra.mxu0 %v10144
      %10168 = vmatpush.msra.mxu0 %v10143
      %10169 = vmatpush.msra.mxu0 %v10142
      %10170 = vmatpush.msra.mxu0 %v10141
      %10171 = vmatpush.msra.mxu0 %v10140
      %10172 = vmatpush.msra.mxu0 %v10139
      %10173 = vmatpush.msra.mxu0 %v10138
      %10174 = vmatmul.f32.gmra.mxu0 %v10106
      %v10175 = vpop.f32.mrf.mxu0
      %v10176 = vadd.f32 %v10156, %v10175
      %10177 = vmatmul.f32.gmra.mxu0 %v10107
      %v10178 = vpop.f32.mrf.mxu0
      %v10179 = vadd.f32 %v10156, %v10178
      %10180 = vmatmul.f32.gmra.mxu0 %v10108
      %v10181 = vpop.f32.mrf.mxu0
      %v10182 = vadd.f32 %v10156, %v10181
      %10183 = vmatmul.f32.gmra.mxu0 %v10109
      %v10184 = vpop.f32.mrf.mxu0
      %v10185 = vadd.f32 %v10156, %v10184
      %10186 = vmatmul.f32.gmra.mxu0 %v10110
      %v10187 = vpop.f32.mrf.mxu0
      %v10188 = vadd.f32 %v10156, %v10187
      %10189 = vmatmul.f32.gmra.mxu0 %v10111
      %v10190 = vpop.f32.mrf.mxu0
      %v10191 = vadd.f32 %v10156, %v10190
      %10192 = vmatmul.f32.gmra.mxu0 %v10112
      %v10193 = vpop.f32.mrf.mxu0
      %v10194 = vadd.f32 %v10156, %v10193
      %10195 = vmatmul.f32.gmra.mxu0 %v10113
      %v10196 = vpop.f32.mrf.mxu0
      %v10197 = vadd.f32 %v10156, %v10196
      %10198 = vmatmul.f32.gmra.mxu0 %v10114
      %v10199 = vpop.f32.mrf.mxu0
      %v10200 = vadd.f32 %v10156, %v10199
      %10201 = vmatmul.f32.gmra.mxu0 %v10115
      %v10202 = vpop.f32.mrf.mxu0
      %v10203 = vadd.f32 %v10156, %v10202
      %10204 = vmatmul.f32.gmra.mxu0 %v10116
      %v10205 = vpop.f32.mrf.mxu0
      %v10206 = vadd.f32 %v10156, %v10205
      %10207 = vmatmul.f32.gmra.mxu0 %v10117
      %v10208 = vpop.f32.mrf.mxu0
      %v10209 = vadd.f32 %v10156, %v10208
      %10210 = vmatmul.f32.gmra.mxu0 %v10118
      %v10211 = vpop.f32.mrf.mxu0
      %v10212 = vadd.f32 %v10156, %v10211
      %10213 = vmatmul.f32.gmra.mxu0 %v10119
      %v10214 = vpop.f32.mrf.mxu0
      %v10215 = vadd.f32 %v10156, %v10214
      %10216 = vmatmul.f32.gmra.mxu0 %v10120
      %v10217 = vpop.f32.mrf.mxu0
      %v10218 = vadd.f32 %v10156, %v10217
      %10219 = vmatmul.f32.gmra.mxu0 %v10121
      %v10220 = vpop.f32.mrf.mxu0
      %v10221 = vadd.f32 %v10156, %v10220
      %10222 = vmatmul.f32.gmra.mxu0 %v10122
      %v10223 = vpop.f32.mrf.mxu0
      %v10224 = vadd.f32 %v10156, %v10223
      %10225 = vmatmul.f32.gmra.mxu0 %v10123
      %v10226 = vpop.f32.mrf.mxu0
      %v10227 = vadd.f32 %v10156, %v10226
      %10228 = vmatmul.f32.gmra.mxu0 %v10124
      %v10229 = vpop.f32.mrf.mxu0
      %v10230 = vadd.f32 %v10156, %v10229
      %10231 = vmatmul.f32.gmra.mxu0 %v10125
      %v10232 = vpop.f32.mrf.mxu0
      %v10233 = vadd.f32 %v10156, %v10232
      %10234 = vmatmul.f32.gmra.mxu0 %v10126
      %v10235 = vpop.f32.mrf.mxu0
      %v10236 = vadd.f32 %v10156, %v10235
      %10237 = vmatmul.f32.gmra.mxu0 %v10127
      %v10238 = vpop.f32.mrf.mxu0
      %v10239 = vadd.f32 %v10156, %v10238
      %10240 = vmatmul.f32.gmra.mxu0 %v10128
      %v10241 = vpop.f32.mrf.mxu0
      %v10242 = vadd.f32 %v10156, %v10241
      %10243 = vmatmul.f32.gmra.mxu0 %v10129
      %v10244 = vpop.f32.mrf.mxu0
      %v10245 = vadd.f32 %v10156, %v10244
      %10246 = vmatmul.f32.gmra.mxu0 %v10130
      %v10247 = vpop.f32.mrf.mxu0
      %v10248 = vadd.f32 %v10156, %v10247
      %10249 = vmatmul.f32.gmra.mxu0 %v10131
      %v10250 = vpop.f32.mrf.mxu0
      %v10251 = vadd.f32 %v10156, %v10250
      %10252 = vmatmul.f32.gmra.mxu0 %v10132
      %v10253 = vpop.f32.mrf.mxu0
      %v10254 = vadd.f32 %v10156, %v10253
      %10255 = vmatmul.f32.gmra.mxu0 %v10133
      %v10256 = vpop.f32.mrf.mxu0
      %v10257 = vadd.f32 %v10156, %v10256
      %10258 = vmatmul.f32.gmra.mxu0 %v10134
      %v10259 = vpop.f32.mrf.mxu0
      %v10260 = vadd.f32 %v10156, %v10259
      %10261 = vmatmul.f32.gmra.mxu0 %v10135
      %v10262 = vpop.f32.mrf.mxu0
      %v10263 = vadd.f32 %v10156, %v10262
      %10264 = vmatmul.f32.gmra.mxu0 %v10136
      %v10265 = vpop.f32.mrf.mxu0
      %v10266 = vadd.f32 %v10156, %v10265
      %10267 = vmatmul.f32.gmra.mxu0 %v10137
      %v10268 = vpop.f32.mrf.mxu0
      %v10269 = vadd.f32 %v10156, %v10268
      %10270 = vdwg.mxu0
      %v10271 = vadd.f32 %v7705, %v10176
      %v10272 = vadd.f32 %v7706, %v10179
      %v10273 = vadd.f32 %v7707, %v10182
      %v10274 = vadd.f32 %v7708, %v10185
      %v10275 = vadd.f32 %v7709, %v10188
      %v10276 = vadd.f32 %v7710, %v10191
      %v10277 = vadd.f32 %v7711, %v10194
      %v10278 = vadd.f32 %v7712, %v10197
      %v10279 = vadd.f32 %v7713, %v10200
      %v10280 = vadd.f32 %v7714, %v10203
      %v10281 = vadd.f32 %v7715, %v10206
      %v10282 = vadd.f32 %v7716, %v10209
      %v10283 = vadd.f32 %v7717, %v10212
      %v10284 = vadd.f32 %v7718, %v10215
      %v10285 = vadd.f32 %v7719, %v10218
      %v10286 = vadd.f32 %v7720, %v10221
      %v10287 = vadd.f32 %v7721, %v10224
      %v10288 = vadd.f32 %v7722, %v10227
      %v10289 = vadd.f32 %v7723, %v10230
      %v10290 = vadd.f32 %v7724, %v10233
      %v10291 = vadd.f32 %v7725, %v10236
      %v10292 = vadd.f32 %v7726, %v10239
      %v10293 = vadd.f32 %v7727, %v10242
      %v10294 = vadd.f32 %v7728, %v10245
      %v10295 = vadd.f32 %v7729, %v10248
      %v10296 = vadd.f32 %v7730, %v10251
      %v10297 = vadd.f32 %v7731, %v10254
      %v10298 = vadd.f32 %v7732, %v10257
      %v10299 = vadd.f32 %v7733, %v10260
      %v10300 = vadd.f32 %v7734, %v10263
      %v10301 = vadd.f32 %v7735, %v10266
      %v10302 = vadd.f32 %v7736, %v10269
      %10303 = vst.msk [vmem:[%s494] sm:$0xff] %vm527, %v10271
      %10304 = vst.msk [vmem:[%s494 + $0x8] sm:$0xff] %vm527, %v10272
      %10305 = vst.msk [vmem:[%s494 + $0x10] sm:$0xff] %vm527, %v10273
      %10306 = vst.msk [vmem:[%s494 + $0x18] sm:$0xff] %vm527, %v10274
      %10307 = vst.msk [vmem:[%s494 + $0x20] sm:$0xff] %vm527, %v10275
      %10308 = vst.msk [vmem:[%s494 + $0x28] sm:$0xff] %vm527, %v10276
      %10309 = vst.msk [vmem:[%s494 + $0x30] sm:$0xff] %vm527, %v10277
      %10310 = vst.msk [vmem:[%s494 + $0x38] sm:$0xff] %vm527, %v10278
      %10311 = vst.msk [vmem:[%s494 + $0x40] sm:$0xff] %vm527, %v10279
      %10312 = vst.msk [vmem:[%s494 + $0x48] sm:$0xff] %vm527, %v10280
      %10313 = vst.msk [vmem:[%s494 + $0x50] sm:$0xff] %vm527, %v10281
      %10314 = vst.msk [vmem:[%s494 + $0x58] sm:$0xff] %vm527, %v10282
      %10315 = vst.msk [vmem:[%s494 + $0x60] sm:$0xff] %vm527, %v10283
      %10316 = vst.msk [vmem:[%s494 + $0x68] sm:$0xff] %vm527, %v10284
      %10317 = vst.msk [vmem:[%s494 + $0x70] sm:$0xff] %vm527, %v10285
      %10318 = vst.msk [vmem:[%s494 + $0x78] sm:$0xff] %vm527, %v10286
      %10319 = vst.msk [vmem:[%s494 + $0x80] sm:$0xff] %vm527, %v10287
      %10320 = vst.msk [vmem:[%s494 + $0x88] sm:$0xff] %vm527, %v10288
      %10321 = vst.msk [vmem:[%s494 + $0x90] sm:$0xff] %vm527, %v10289
      %10322 = vst.msk [vmem:[%s494 + $0x98] sm:$0xff] %vm527, %v10290
      %10323 = vst.msk [vmem:[%s494 + $0xa0] sm:$0xff] %vm527, %v10291
      %10324 = vst.msk [vmem:[%s494 + $0xa8] sm:$0xff] %vm527, %v10292
      %10325 = vst.msk [vmem:[%s494 + $0xb0] sm:$0xff] %vm527, %v10293
      %10326 = vst.msk [vmem:[%s494 + $0xb8] sm:$0xff] %vm527, %v10294
      %10327 = vst.msk [vmem:[%s494 + $0xc0] sm:$0xff] %vm527, %v10295
      %10328 = vst.msk [vmem:[%s494 + $0xc8] sm:$0xff] %vm527, %v10296
      %10329 = vst.msk [vmem:[%s494 + $0xd0] sm:$0xff] %vm527, %v10297
      %10330 = vst.msk [vmem:[%s494 + $0xd8] sm:$0xff] %vm527, %v10298
      %10331 = vst.msk [vmem:[%s494 + $0xe0] sm:$0xff] %vm527, %v10299
      %10332 = vst.msk [vmem:[%s494 + $0xe8] sm:$0xff] %vm527, %v10300
      %10333 = vst.msk [vmem:[%s494 + $0xf0] sm:$0xff] %vm527, %v10301
      %10334 = vst.msk [vmem:[%s494 + $0xf8] sm:$0xff] %vm527, %v10302
      %p10335 = scmp.lt.s32.totalorder %s26, 1
      %s10336 = scalar_select %p10335, %s26, 1
      %s10337 = smul.addr %s10336, 32
      %s10338 = smul.addr %s10337, 8
      %s10339 = scalar_lea.vmem %s15, %s10338
      // Predicated region
      $region81: #{cblock_forward.1} parent=79 // pred_check
        %p10340 = pneg %p364
      $region82: #{cblock_forward.1} parent=79 // pred_check_branch
        %10342 = sbr.rel (%p10340) target = $region84
      $region83: #{cblock_forward.1} parent=79 // pred_region
        _
      $region84: #{cblock_forward.1} parent=79 // pred_fallthru
        _
    $region80: #{cblock_forward.1} parent=5 // pred_fallthru
      _
    %p10343 = scmp.le.s32.totalorder 2, %s21
    // Predicated region
    $region85: #{cblock_forward.1} parent=5 // pred_check
      %p10344 = pneg %p10343
    $region86: #{cblock_forward.1} parent=5 // pred_check_branch
      %10346 = sbr.rel (%p10344) target = $region88
    $region87: #{cblock_forward.1} parent=5 // pred_region
      %s10347 = ssub.s32 %s21, 2
      // Predicated region
      $region89: #{cblock_forward.1} parent=87 // pred_check
        %p10348 = pneg %p370
      $region90: #{cblock_forward.1} parent=87 // pred_check_branch
        %10350 = sbr.rel (%p10348) target = $region92
      $region91: #{cblock_forward.1} parent=87 // pred_region
        %p10351 = scmp.lt.s32.totalorder %s27, 1
        %s10352 = scalar_select %p10351, %s27, 1
        %s10353 = smul.addr %s10352, 32
        %s10354 = smul.addr %s10353, 8
        %s10355 = scalar_lea.vmem %s15, %s10354
      $region92: #{cblock_forward.1} parent=87 // pred_fallthru
        _
    $region88: #{cblock_forward.1} parent=5 // pred_fallthru
      _
  $region6: #{cblock_forward.1} parent=0 // loop_footer
    %s25 = sadd.s32 1, %s21
  $region7: #{cblock_forward.1} parent=0 // loop_footer_branch
    %20 = sbr.rel target = $region3
  $region8: #{cblock_forward.1} parent=0 // loop_exit
    _

</llo_original>
